<compile_context>
chip_gen: v7x
topology: tpu7x:2x2x1
jax: 0.10.0
libtpu: 0.0.40
codegen_flags: <defaults>
</compile_context>

<pallas_src>
import functools

import jax
import jax.numpy as jnp
from jax.experimental import pallas as pl
from jax.experimental.pallas import tpu as pltpu


# ----------------------------------------------------------------------------
# Pallas kernels
# ----------------------------------------------------------------------------
def matmul_bias_relu_kernel(a_ref, w_ref, b_ref, o_ref):
    """One row-tile of an im2col'd conv layer: relu(A @ W + b).

    A / W are bf16 (halved DMA + VMEM); accumulation, bias and ReLU are f32;
    the result is stored in o_ref's dtype (bf16 feature maps).
    """
    acc = jnp.dot(a_ref[...], w_ref[...], preferred_element_type=jnp.float32)
    o_ref[...] = jnp.maximum(acc + b_ref[...], 0.0).astype(o_ref.dtype)


def _gru_kernel(x_ref, wih_ref, whh_ref, bih_ref, bhh_ref, h0_ref, out_ref,
                *, seq_len, batch, hidden):
    """Whole GRU sequence in a single grid step, gates fused into 3H-wide matmuls.

    PyTorch nn.GRU equations (gate order r, z, n):
      r = sigmoid(W_ir x + b_ir + W_hr h + b_hr)
      z = sigmoid(W_iz x + b_iz + W_hz h + b_hz)
      n = tanh(W_in x + b_in + r * (W_hn h + b_hn))
      h' = (1 - z) * n + z * h

    x_ref:   (T*B, D)  bf16, time-major rows (row = t*B + b)
    wih_ref: (D, 3H)   bf16, fused per-gate input weights  [r | z | n]
    whh_ref: (H, 3H)   f32,  fused per-gate recurrent weights
    bih_ref: (1, 3H)   f32
    bhh_ref: (1, 3H)   f32
    h0_ref:  (B, H)    f32
    out_ref: (T*B, H)  f32, time-major rows
    """
    H = hidden
    # Hoisted, fused input projection for ALL timesteps: one MXU op off the serial
    # recurrent dependency chain.  bf16 x bf16 -> f32 accumulate.
    gi_all = (jnp.dot(x_ref[...], wih_ref[...], preferred_element_type=jnp.float32)
              + bih_ref[...])                                        # (T*B, 3H) f32

    whh = whh_ref[...]                                               # (H, 3H) f32
    bhh = bhh_ref[...]                                               # (1, 3H) f32
    h = h0_ref[...]                                                  # (B, H)  f32

    # TODO(synk): for long sequences, spill gi_all to VMEM scratch and run the
    # recurrence with lax.fori_loop; the full Python unroll is fine at small T.
    for t in range(seq_len):
        gi = gi_all[t * batch:(t + 1) * batch, :]                    # (B, 3H) static slice
        gh = jnp.dot(h, whh, preferred_element_type=jnp.float32) + bhh   # (B, 3H)
        r = jax.nn.sigmoid(gi[:, 0:H] + gh[:, 0:H])
        z = jax.nn.sigmoid(gi[:, H:2 * H] + gh[:, H:2 * H])
        n = jnp.tanh(gi[:, 2 * H:3 * H] + r * gh[:, 2 * H:3 * H])
        h = (1.0 - z) * n + z * h
        out_ref[t * batch:(t + 1) * batch, :] = h


# ----------------------------------------------------------------------------
# Pallas wrappers
# ----------------------------------------------------------------------------
def _round_up(x, m):
    return ((x + m - 1) // m) * m


def conv_relu_pallas(patches, w2d, b2d, num_row_tiles=1):
    """patches: (R, K) bf16 im2col rows ((kh,kw,C) order), w2d: (K, OC) bf16,
    b2d: (1, OC) f32 -> (R, OC) bf16.

    num_row_tiles > 1 pads R up to num_row_tiles equal, 16-aligned row tiles so the
    grid axis can be megacore-sharded (v7x) / pipelined (v6e, v5e); the handful of
    zero pad rows are sliced off afterwards.
    """
    R, K = patches.shape
    OC = w2d.shape[1]
    if num_row_tiles > 1:
        tm = _round_up(pl.cdiv(R, num_row_tiles), 16)
        Rp = tm * num_row_tiles
        if Rp != R:
            patches = jnp.pad(patches, ((0, Rp - R), (0, 0)))
    else:
        tm, Rp = R, R

    out = pl.pallas_call(
        matmul_bias_relu_kernel,
        out_shape=jax.ShapeDtypeStruct((Rp, OC), jnp.bfloat16),
        grid=(Rp // tm,),
        in_specs=[
            pl.BlockSpec((tm, K), lambda i: (i, 0)),
            pl.BlockSpec((K, OC), lambda i: (0, 0)),
            pl.BlockSpec((1, OC), lambda i: (0, 0)),
        ],
        out_specs=pl.BlockSpec((tm, OC), lambda i: (i, 0)),
        # Row tiles are independent -> "parallel" shards across v7x's two TensorCores.
        compiler_params=pltpu.CompilerParams(dimension_semantics=("parallel",)),
    )(patches, w2d, b2d)
    return out[:R] if Rp != R else out


def gru_pallas(x2d, w_ih, w_hh, b_ih, b_hh, h0, seq_len, batch):
    """x2d: (T*B, D) bf16 time-major rows; returns hidden (T*B, H) f32. One grid step."""
    TB, D = x2d.shape
    H = h0.shape[-1]
    G = 3 * H
    kernel = functools.partial(_gru_kernel, seq_len=seq_len, batch=batch, hidden=H)
    return pl.pallas_call(
        kernel,
        out_shape=jax.ShapeDtypeStruct((TB, H), jnp.float32),
        grid=(1,),
        in_specs=[
            pl.BlockSpec((TB, D), lambda i: (0, 0)),
            pl.BlockSpec((D, G), lambda i: (0, 0)),
            pl.BlockSpec((H, G), lambda i: (0, 0)),
            pl.BlockSpec((1, G), lambda i: (0, 0)),
            pl.BlockSpec((1, G), lambda i: (0, 0)),
            pl.BlockSpec((batch, H), lambda i: (0, 0)),
        ],
        out_specs=pl.BlockSpec((TB, H), lambda i: (0, 0)),
        compiler_params=pltpu.CompilerParams(dimension_semantics=("arbitrary",)),
    )(x2d, w_ih, w_hh, b_ih, b_hh, h0)


# ----------------------------------------------------------------------------
# Glue: im2col, parameter setup, full forward
# ----------------------------------------------------------------------------
def im2col_nhwc(x, k=3, s=2):
    """x: (N, H, W, C) -> patches (N*OH*OW, k*k*C) with feature order (kh, kw, C).

    The conv weights were permuted once at setup to match this order, so no
    6-D activation transpose is needed between layers.
    """
    N, H, W, C = x.shape
    OH = (H - k) // s + 1
    OW = (W - k) // s + 1
    cols = [x[:, kh:kh + s * (OH - 1) + 1:s, kw:kw + s * (OW - 1) + 1:s, :]
            for kh in range(k) for kw in range(k)]
    p = jnp.stack(cols, axis=3)                      # (N, OH, OW, k*k, C)
    return p.reshape(N * OH * OW, k * k * C), OH, OW


def init_params(key, input_dim=80, hidden_dim=32, n_action=6, embed_dim=16):
    """Deterministic synthetic parameters, pre-laid-out for the kernels.

    PyTorch-shaped tensors are created first and converted ONCE:
      conv  (OC, C, KH, KW)   -> (KH*KW*C, OC) bf16   [matches (kh,kw,C) patch order]
      gru   weight_ih (3H, D) -> (D, 3H) bf16         [fused gates r|z|n]
            weight_hh (3H, H) -> (H, 3H) f32
            biases    (3H,)   -> (1, 3H) f32
    """
    ks = jax.random.split(key, 16)

    def xavier(k, shape):
        fan_in = int(jnp.prod(jnp.array(shape[1:]))) if len(shape) > 1 else shape[0]
        fan_out = shape[0]
        lim = (6.0 / (fan_in + fan_out)) ** 0.5
        return jax.random.uniform(k, shape, jnp.float32, -lim, lim)

    conv_channels = [(1, 32), (32, 32), (32, 32), (32, 16)]
    conv_w2d, conv_b2d = [], []
    for i, (cin, cout) in enumerate(conv_channels):
        w = xavier(ks[i], (cout, cin, 3, 3))                       # PyTorch (OC, C, KH, KW)
        b = 0.01 * jax.random.normal(ks[4 + i], (cout,), jnp.float32)
        conv_w2d.append(jnp.transpose(w, (2, 3, 1, 0))
                        .reshape(9 * cin, cout).astype(jnp.bfloat16))
        conv_b2d.append(b.reshape(1, cout))                        # f32 bias

    cnn_out_dim = 4 * 4 * 16 + embed_dim                           # 272 for input_dim 80/84
    embed = xavier(ks[8], (n_action, embed_dim)).astype(jnp.bfloat16)

    w_ih = xavier(ks[9], (3 * hidden_dim, cnn_out_dim))            # PyTorch (3H, D), gates r,z,n
    w_hh = xavier(ks[10], (3 * hidden_dim, hidden_dim))
    b_ih = 0.01 * jax.random.normal(ks[11], (3 * hidden_dim,), jnp.float32)
    b_hh = 0.01 * jax.random.normal(ks[12], (3 * hidden_dim,), jnp.float32)

    gru = dict(
        w_ih=jnp.transpose(w_ih).astype(jnp.bfloat16),             # (D, 3H) bf16 fused gates
        w_hh=jnp.transpose(w_hh),                                  # (H, 3H) f32 (tiny, serial path)
        b_ih=b_ih.reshape(1, 3 * hidden_dim),
        b_hh=b_hh.reshape(1, 3 * hidden_dim),
    )
    return dict(conv_w2d=conv_w2d, conv_b2d=conv_b2d, embed=embed, gru=gru,
                cnn_out_dim=cnn_out_dim, hidden_dim=hidden_dim,
                input_dim=input_dim, embed_dim=embed_dim)


def cnn_rnn_encoder_forward(params, x, y, h0=None):
    """
    x: (B, T, 1, S, S) float32 observations (NCHW per frame, like PyTorch).
    y: (B, T) int32 actions.
    returns step_embed: (B, T, hidden_dim) float32.
    """
    B, T = x.shape[0], x.shape[1]
    S = params["input_dim"]
    H = params["hidden_dim"]

    # TODO(synk): normalize=False (module default); normalization branch not implemented.
    # C == 1, so NCHW -> NHWC is a pure reshape (no copy); cast to bf16 for MXU operands.
    feat = x.reshape(B * T, S, S, 1).astype(jnp.bfloat16)

    for w2d, b2d in zip(params["conv_w2d"], params["conv_b2d"]):
        oc = w2d.shape[1]
        patches, OH, OW = im2col_nhwc(feat, k=3, s=2)       # bf16, (kh,kw,C) feature order
        n_tiles = 2 if patches.shape[0] >= 2048 else 1      # layers 1-2: 2 parallel row tiles
        out = conv_relu_pallas(patches, w2d, b2d, num_row_tiles=n_tiles)
        feat = out.reshape(B * T, OH, OW, oc)               # NHWC bf16

    # Flatten in PyTorch NCHW order (C, H, W) — tiny (B*T, 4, 4, 16) transpose.
    obs_encoded = jnp.transpose(feat, (0, 3, 1, 2)).reshape(B, T, -1)      # (B, T, 256) bf16

    act_encoded = jnp.take(params["embed"], y, axis=0)                     # (B, T, 16) bf16
    cnn_encoded = jnp.concatenate([obs_encoded, act_encoded], axis=-1)     # (B, T, 272) bf16

    if h0 is None:
        h0 = jnp.zeros((B, H), jnp.float32)
    else:
        h0 = jnp.asarray(h0, jnp.float32).reshape(B, H)

    g = params["gru"]
    x2d = jnp.transpose(cnn_encoded, (1, 0, 2)).reshape(T * B, -1)         # time-major rows
    hidden2d = gru_pallas(x2d, g["w_ih"], g["w_hh"], g["b_ih"], g["b_hh"], h0, T, B)
    return jnp.transpose(hidden2d.reshape(T, B, H), (1, 0, 2))             # (B, T, H) f32


# ----------------------------------------------------------------------------
if __name__ == "__main__":
    key = jax.random.PRNGKey(0)
    B, T, S = 2, 4, 80          # input_dim=80 -> CNN spatial 80->39->19->9->4
    hidden_dim, n_action, embed_dim = 32, 6, 16

    kx, ky, kp = jax.random.split(key, 3)
    x = jax.random.normal(kx, (B, T, 1, S, S), jnp.float32)
    y = jax.random.randint(ky, (B, T), 0, n_action, dtype=jnp.int32)

    params = init_params(kp, input_dim=S, hidden_dim=hidden_dim,
                         n_action=n_action, embed_dim=embed_dim)

    step_embed = cnn_rnn_encoder_forward(params, x, y)
    step_embed = jax.block_until_ready(step_embed)

    assert step_embed.shape == (B, T, hidden_dim), step_embed.shape
    assert jnp.all(jnp.isfinite(step_embed))
    print("KERNEL_OK")
</pallas_src>

<mosaic_0001>
module attributes {stable_mosaic.version = 11 : i64} {
  func.func @matmul_bias_relu_kernel(%arg0: i32, %arg1: memref<6096x9xbf16, #tpu.memory_space<vmem>>, %arg2: memref<9x32xbf16, #tpu.memory_space<vmem>>, %arg3: memref<1x32xf32, #tpu.memory_space<vmem>>, %arg4: memref<6096x32xbf16, #tpu.memory_space<vmem>>) attributes {dimension_semantics = [#tpu.dimension_semantics<parallel>], iteration_bounds = array<i64: 2>, scalar_prefetch = 0 : i64, scratch_operands = 0 : i64, tpu.core_type = #tpu.core_type<tc>, window_params = [{transform_indices = @transform_0, window_bounds = array<i64: 6096, 9>}, {pipeline_mode = #tpu.pipeline_mode<synchronous>, transform_indices = @transform_1, window_bounds = array<i64: 9, 32>}, {pipeline_mode = #tpu.pipeline_mode<synchronous>, transform_indices = @transform_2, window_bounds = array<i64: 1, 32>}, {transform_indices = @transform_3, window_bounds = array<i64: 6096, 32>}]} {
    %c0 = arith.constant 0 : index
    %c0_0 = arith.constant 0 : index
    %0 = vector.load %arg1[%c0, %c0_0] : memref<6096x9xbf16, #tpu.memory_space<vmem>>, vector<6096x9xbf16>
    %c0_1 = arith.constant 0 : index
    %c0_2 = arith.constant 0 : index
    %1 = vector.load %arg2[%c0_1, %c0_2] : memref<9x32xbf16, #tpu.memory_space<vmem>>, vector<9x32xbf16>
    %cst = arith.constant dense<0.000000e+00> : vector<6096x32xf32>
    %2 = tpu.matmul %0, %1, %cst {dimension_numbers = #tpu.dot_dimension_numbers<[1], [0], [0], [1], [0, 0, 1, 1], [], []>} : vector<6096x9xbf16>, vector<9x32xbf16>, vector<6096x32xf32> -> vector<6096x32xf32>
    %c0_3 = arith.constant 0 : index
    %c0_4 = arith.constant 0 : index
    %3 = vector.load %arg3[%c0_3, %c0_4] : memref<1x32xf32, #tpu.memory_space<vmem>>, vector<1x32xf32>
    %4 = vector.broadcast %3 : vector<1x32xf32> to vector<6096x32xf32>
    %5 = arith.addf %2, %4 : vector<6096x32xf32>
    %cst_5 = arith.constant 0.000000e+00 : f32
    %6 = vector.broadcast %cst_5 : f32 to vector<6096x32xf32>
    %7 = arith.maximumf %5, %6 : vector<6096x32xf32>
    %8 = arith.truncf %7 : vector<6096x32xf32> to vector<6096x32xbf16>
    %c0_6 = arith.constant 0 : index
    %c0_7 = arith.constant 0 : index
    %9 = vector.load %arg4[%c0_6, %c0_7] : memref<6096x32xbf16, #tpu.memory_space<vmem>>, vector<6096x32xbf16>
    tpu.vector_store %arg4[%c0_6, %c0_7], %8 {strides = array<i32>} : memref<6096x32xbf16, #tpu.memory_space<vmem>>, vector<6096x32xbf16>,
    return
  }
  func.func @transform_0(%arg0: i32) -> (i32, i32) {
    %c0_i32 = arith.constant 0 : i32
    %c0_i32_0 = arith.constant 0 : i32
    return %arg0, %c0_i32 : i32, i32
  }
  func.func @transform_1(%arg0: i32) -> (i32, i32) {
    %c0_i32 = arith.constant 0 : i32
    %c0_i32_0 = arith.constant 0 : i32
    %c0_i32_1 = arith.constant 0 : i32
    return %c0_i32, %c0_i32_0 : i32, i32
  }
  func.func @transform_2(%arg0: i32) -> (i32, i32) {
    %c0_i32 = arith.constant 0 : i32
    %c0_i32_0 = arith.constant 0 : i32
    %c0_i32_1 = arith.constant 0 : i32
    return %c0_i32, %c0_i32_0 : i32, i32
  }
  func.func @transform_3(%arg0: i32) -> (i32, i32) {
    %c0_i32 = arith.constant 0 : i32
    %c0_i32_0 = arith.constant 0 : i32
    return %arg0, %c0_i32 : i32, i32
  }
}

</mosaic_0001>

<llo_original>
// kernel: tpu_custom_call.1
$region0: #{tpu_custom_call.1}
  #allocation0 [shape = 'u32[]', space=smem, size = 0x4, offset = 0x4, fixed_abs, tag = 'smem constant byte address 0x4 - core index']
  #allocation1 [shape = 'u32[144,128]{1,0:T(1,128)}', space=vmem, size = 0x12000, scoped, tag = 'internal scratch']
  %s0 = inlined_call_operand.vmem [shape: bf16[12192,9], index: 0, kind: input, shape index: {}]
  %s1 = inlined_call_operand.vmem [shape: bf16[9,32], index: 1, kind: input, shape index: {}]
  %s2 = inlined_call_operand.vmem [shape: f32[1,32], index: 2, kind: input, shape index: {}]
  %s3 = inlined_call_operand.vmem [shape: bf16[12192,32], index: 3, kind: output, shape index: {}]
  %s4 = sld [smem:[#allocation0]]
  $region45: #{tpu_custom_call.1} parent=0
    _
  %s6 = ssub.s32 1, %s4
  %s7 = scalar_select 0, %s6, %s4
  loop: start=0, step=1, limit=4
  $region2: #{tpu_custom_call.1} parent=0 // loop_pre_header
    _
  $region3: #{tpu_custom_call.1} parent=0 // loop_header
    %s9 = sphi 0, %s13
    %p10 = scmp.ge.s32.totalorder %s9, 4
    %s19 = sphi 0, %s21
    %s22 = sphi 0, %s19
    %s23 = sphi 0, %s22
    %s39 = sphi 0, %s23
    %s43 = sphi 0, %s43
    %s45 = sphi 0, %s43
    %s46 = sphi 0, %s45
    %s60 = sphi 0, %s46
    %s64 = sphi 0, %s64
    %s66 = sphi 0, %s64
    %s67 = sphi 0, %s66
    %s81 = sphi 0, %s67
    %s87 = sphi 0, %s89
    %s90 = sphi 0, %s87
    %s91 = sphi 0, %s90
    %s107 = sphi 0, %s91
  $region4: #{tpu_custom_call.1} parent=0 // loop_header_branch
    %12 = sbr.rel (%p10) target = $region8
  $region5: #{tpu_custom_call.1} parent=0 // loop_body
    %s14 = ssub.s32 %s9, 1
    %s15 = ssub.s32 %s9, 2
    %s16 = sadd.s32 %s9, 1
    %s17 = ssub.s32 %s9, %s16
    %p18 = scmp.eq.s32.totalorder %s17, 0
    %s20 = sadd.s32 %s19, 1
    %s21 = scalar_select %p18, %s19, %s20
    %p24 = pneg %p18
    %p25 = scmp.eq.s32.totalorder %s9, 1
    %p26 = por %p24, %p25
    %p27 = scmp.ne.s32.totalorder %s19, %s22
    %p28 = scmp.eq.s32.totalorder %s9, 0
    %p29 = por %p27, %p28
    %p30 = scmp.ne.s32.totalorder %s19, %s22
    %p31 = scmp.eq.s32.totalorder %s14, 1
    %p32 = por %p30, %p31
    %p33 = scmp.ne.s32.totalorder %s22, %s23
    %p34 = scmp.eq.s32.totalorder %s14, 0
    %p35 = por %p33, %p34
    %p36 = scmp.ne.s32.totalorder %s22, %s23
    %p37 = scmp.eq.s32.totalorder %s15, 1
    %p38 = por %p36, %p37
    %p40 = scmp.ne.s32.totalorder %s23, %s39
    %p41 = scmp.eq.s32.totalorder %s15, 0
    %p42 = por %p40, %p41
    %s44 = sadd.s32 %s43, 1
    %p47 = scmp.eq.s32.totalorder %s9, 1
    %p48 = scmp.ne.s32.totalorder %s43, %s45
    %p49 = scmp.eq.s32.totalorder %s9, 0
    %p50 = por %p48, %p49
    %p51 = scmp.ne.s32.totalorder %s43, %s45
    %p52 = scmp.eq.s32.totalorder %s14, 1
    %p53 = por %p51, %p52
    %p54 = scmp.ne.s32.totalorder %s45, %s46
    %p55 = scmp.eq.s32.totalorder %s14, 0
    %p56 = por %p54, %p55
    %p57 = scmp.ne.s32.totalorder %s45, %s46
    %p58 = scmp.eq.s32.totalorder %s15, 1
    %p59 = por %p57, %p58
    %p61 = scmp.ne.s32.totalorder %s46, %s60
    %p62 = scmp.eq.s32.totalorder %s15, 0
    %p63 = por %p61, %p62
    %s65 = sadd.s32 %s64, 1
    %p68 = scmp.eq.s32.totalorder %s9, 1
    %p69 = scmp.ne.s32.totalorder %s64, %s66
    %p70 = scmp.eq.s32.totalorder %s9, 0
    %p71 = por %p69, %p70
    %p72 = scmp.ne.s32.totalorder %s64, %s66
    %p73 = scmp.eq.s32.totalorder %s14, 1
    %p74 = por %p72, %p73
    %p75 = scmp.ne.s32.totalorder %s66, %s67
    %p76 = scmp.eq.s32.totalorder %s14, 0
    %p77 = por %p75, %p76
    %p78 = scmp.ne.s32.totalorder %s66, %s67
    %p79 = scmp.eq.s32.totalorder %s15, 1
    %p80 = por %p78, %p79
    %p82 = scmp.ne.s32.totalorder %s67, %s81
    %p83 = scmp.eq.s32.totalorder %s15, 0
    %p84 = por %p82, %p83
    %s85 = ssub.s32 %s9, %s16
    %p86 = scmp.eq.s32.totalorder %s85, 0
    %s88 = sadd.s32 %s87, 1
    %s89 = scalar_select %p86, %s87, %s88
    %p92 = pneg %p86
    %p93 = scmp.eq.s32.totalorder %s9, 1
    %p94 = por %p92, %p93
    %p95 = scmp.ne.s32.totalorder %s87, %s90
    %p96 = scmp.eq.s32.totalorder %s9, 0
    %p97 = por %p95, %p96
    %p98 = scmp.ne.s32.totalorder %s87, %s90
    %p99 = scmp.eq.s32.totalorder %s14, 1
    %p100 = por %p98, %p99
    %p101 = scmp.ne.s32.totalorder %s90, %s91
    %p102 = scmp.eq.s32.totalorder %s14, 0
    %p103 = por %p101, %p102
    %p104 = scmp.ne.s32.totalorder %s90, %s91
    %p105 = scmp.eq.s32.totalorder %s15, 1
    %p106 = por %p104, %p105
    %p108 = scmp.ne.s32.totalorder %s91, %s107
    %p109 = scmp.eq.s32.totalorder %s15, 0
    %p110 = por %p108, %p109
    %p111 = scmp.le.s32.totalorder 1, %s9
    %p112 = scmp.lt.s32.totalorder %s9, 3
    %p113 = pnand %p111, %p112
    %p114 = pneg %p113
    // Predicated region
    $region9: #{tpu_custom_call.1} parent=5 // pred_check
      _
    $region10: #{tpu_custom_call.1} parent=5 // pred_check_branch
      %116 = sbr.rel (%p113) target = $region12
    $region11: #{tpu_custom_call.1} parent=5 // pred_region
      %s117 = ssub.s32 %s9, 1
      // Predicated region
      $region13: #{tpu_custom_call.1} parent=11 // pred_check
        %p118 = pneg %p56
      $region14: #{tpu_custom_call.1} parent=11 // pred_check_branch
        %120 = sbr.rel (%p118) target = $region16
      $region15: #{tpu_custom_call.1} parent=11 // pred_region
        _
      $region16: #{tpu_custom_call.1} parent=11 // pred_fallthru
        _
      // Predicated region
      $region17: #{tpu_custom_call.1} parent=11 // pred_check
        %p121 = pneg %p77
      $region18: #{tpu_custom_call.1} parent=11 // pred_check_branch
        %123 = sbr.rel (%p121) target = $region20
      $region19: #{tpu_custom_call.1} parent=11 // pred_region
        _
      $region20: #{tpu_custom_call.1} parent=11 // pred_fallthru
        _
    $region12: #{tpu_custom_call.1} parent=5 // pred_fallthru
      _
    %p124 = scmp.lt.s32.totalorder %s9, 2
    // Predicated region
    $region21: #{tpu_custom_call.1} parent=5 // pred_check
      %p125 = pneg %p124
    $region22: #{tpu_custom_call.1} parent=5 // pred_check_branch
      %127 = sbr.rel (%p125) target = $region24
    $region23: #{tpu_custom_call.1} parent=5 // pred_region
      // Predicated region
      $region25: #{tpu_custom_call.1} parent=23 // pred_check
        %p128 = pneg %p29
      $region26: #{tpu_custom_call.1} parent=23 // pred_check_branch
        %130 = sbr.rel (%p128) target = $region28
      $region27: #{tpu_custom_call.1} parent=23 // pred_region
        %s131 = smul.u32 762, %s9
        %p132 = scmp.lt.s32.totalorder %s131, 1523
        %s133 = scalar_select %p132, %s131, 1523
        %s134 = smul.addr %s133, 4
        %s135 = scalar_lea.vmem %s0, %s134
        %s136 = smul.u32 762, %s9
      $region28: #{tpu_custom_call.1} parent=23 // pred_fallthru
        _
    $region24: #{tpu_custom_call.1} parent=5 // pred_fallthru
      _
    %p137 = scmp.le.s32.totalorder 1, %s9
    %p138 = scmp.lt.s32.totalorder %s9, 3
    %p139 = pnand %p137, %p138
    %p140 = pneg %p139
    // Predicated region
    $region29: #{tpu_custom_call.1} parent=5 // pred_check
      _
    $region30: #{tpu_custom_call.1} parent=5 // pred_check_branch
      %142 = sbr.rel (%p139) target = $region32
    $region31: #{tpu_custom_call.1} parent=5 // pred_region
      %s143 = ssub.s32 %s9, 1
      %s144 = smul.u32 762, %s14
      %p145 = scmp.lt.s32.totalorder %s144, 1523
      %s146 = scalar_select %p145, %s144, 1523
      %s147 = smul.addr %s146, 4
      %s148 = scalar_lea.vmem %s0, %s147
      %p149 = pneg %p35
      %p150 = pneg %p32
      %p151 = pneg %p56
      %p152 = pneg %p53
      %p153 = pneg %p77
      %p154 = pneg %p74
      %p155 = pneg %p103
      %p156 = pneg %p100
      %s157 = smul.u32 762, %s14
      %p158 = scmp.lt.s32.totalorder %s157, 1523
      %s159 = scalar_select %p158, %s157, 1523
      %s160 = smul.addr %s159, 4
      %s161 = scalar_lea.vmem %s3, %s160
      %s162 = smul.u32 762, %s14
      %p163 = scmp.lt.s32.totalorder %s162, 1523
      %s164 = scalar_select %p163, %s162, 1523
      %s165 = smul.addr %s164, 4
      %s166 = scalar_lea.vmem %s0, %s165
      %s167 = smul.u32 762, %s14
      %s168 = smul.u32 762, %s14
      %p169 = scmp.lt.s32.totalorder %s168, 1523
      %s170 = scalar_select %p169, %s168, 1523
      %s171 = smul.addr %s170, 4
      %s172 = scalar_lea.vmem %s3, %s171
      %s173 = smul.u32 762, %s14
      %v175 = vld [vmem:[%s166] sm:$0xf]
      %v176 = vld [vmem:[%s166 + $0x4] sm:$0xf]
      %v177 = vld [vmem:[%s166 + $0x8] sm:$0xf]
      %v178 = vld [vmem:[%s166 + $0xc] sm:$0xf]
      %v179 = vld [vmem:[%s166 + $0x10] sm:$0xf]
      %v180 = vld [vmem:[%s166 + $0x14] sm:$0xf]
      %v181 = vld [vmem:[%s166 + $0x18] sm:$0xf]
      %v182 = vld [vmem:[%s166 + $0x1c] sm:$0xf]
      %v183 = vld [vmem:[%s166 + $0x20] sm:$0xf]
      %v184 = vld [vmem:[%s166 + $0x24] sm:$0xf]
      %v185 = vld [vmem:[%s166 + $0x28] sm:$0xf]
      %v186 = vld [vmem:[%s166 + $0x2c] sm:$0xf]
      %v187 = vld [vmem:[%s166 + $0x30] sm:$0xf]
      %v188 = vld [vmem:[%s166 + $0x34] sm:$0xf]
      %v189 = vld [vmem:[%s166 + $0x38] sm:$0xf]
      %v190 = vld [vmem:[%s166 + $0x3c] sm:$0xf]
      %v191 = vld [vmem:[%s166 + $0x40] sm:$0xf]
      %v192 = vld [vmem:[%s166 + $0x44] sm:$0xf]
      %v193 = vld [vmem:[%s166 + $0x48] sm:$0xf]
      %v194 = vld [vmem:[%s166 + $0x4c] sm:$0xf]
      %v195 = vld [vmem:[%s166 + $0x50] sm:$0xf]
      %v196 = vld [vmem:[%s166 + $0x54] sm:$0xf]
      %v197 = vld [vmem:[%s166 + $0x58] sm:$0xf]
      %v198 = vld [vmem:[%s166 + $0x5c] sm:$0xf]
      %v199 = vld [vmem:[%s166 + $0x60] sm:$0xf]
      %v200 = vld [vmem:[%s166 + $0x64] sm:$0xf]
      %v201 = vld [vmem:[%s166 + $0x68] sm:$0xf]
      %v202 = vld [vmem:[%s166 + $0x6c] sm:$0xf]
      %v203 = vld [vmem:[%s166 + $0x70] sm:$0xf]
      %v204 = vld [vmem:[%s166 + $0x74] sm:$0xf]
      %v205 = vld [vmem:[%s166 + $0x78] sm:$0xf]
      %v206 = vld [vmem:[%s166 + $0x7c] sm:$0xf]
      %v207 = vld [vmem:[%s166 + $0x80] sm:$0xf]
      %v208 = vld [vmem:[%s166 + $0x84] sm:$0xf]
      %v209 = vld [vmem:[%s166 + $0x88] sm:$0xf]
      %v210 = vld [vmem:[%s166 + $0x8c] sm:$0xf]
      %v211 = vld [vmem:[%s166 + $0x90] sm:$0xf]
      %v212 = vld [vmem:[%s166 + $0x94] sm:$0xf]
      %v213 = vld [vmem:[%s166 + $0x98] sm:$0xf]
      %v214 = vld [vmem:[%s166 + $0x9c] sm:$0xf]
      %v215 = vld [vmem:[%s166 + $0xa0] sm:$0xf]
      %v216 = vld [vmem:[%s166 + $0xa4] sm:$0xf]
      %v217 = vld [vmem:[%s166 + $0xa8] sm:$0xf]
      %v218 = vld [vmem:[%s166 + $0xac] sm:$0xf]
      %v219 = vld [vmem:[%s166 + $0xb0] sm:$0xf]
      %v220 = vld [vmem:[%s166 + $0xb4] sm:$0xf]
      %v221 = vld [vmem:[%s166 + $0xb8] sm:$0xf]
      %v222 = vld [vmem:[%s166 + $0xbc] sm:$0xf]
      %v223 = vld [vmem:[%s166 + $0xc0] sm:$0xf]
      %v224 = vld [vmem:[%s166 + $0xc4] sm:$0xf]
      %v225 = vld [vmem:[%s166 + $0xc8] sm:$0xf]
      %v226 = vld [vmem:[%s166 + $0xcc] sm:$0xf]
      %v227 = vld [vmem:[%s166 + $0xd0] sm:$0xf]
      %v228 = vld [vmem:[%s166 + $0xd4] sm:$0xf]
      %v229 = vld [vmem:[%s166 + $0xd8] sm:$0xf]
      %v230 = vld [vmem:[%s166 + $0xdc] sm:$0xf]
      %v231 = vld [vmem:[%s166 + $0xe0] sm:$0xf]
      %v232 = vld [vmem:[%s166 + $0xe4] sm:$0xf]
      %v233 = vld [vmem:[%s166 + $0xe8] sm:$0xf]
      %v234 = vld [vmem:[%s166 + $0xec] sm:$0xf]
      %v235 = vld [vmem:[%s166 + $0xf0] sm:$0xf]
      %v236 = vld [vmem:[%s166 + $0xf4] sm:$0xf]
      %v237 = vld [vmem:[%s166 + $0xf8] sm:$0xf]
      %v238 = vld [vmem:[%s166 + $0xfc] sm:$0xf]
      %v239 = vld [vmem:[%s166 + $0x100] sm:$0xf]
      %v240 = vld [vmem:[%s166 + $0x104] sm:$0xf]
      %v241 = vld [vmem:[%s166 + $0x108] sm:$0xf]
      %v242 = vld [vmem:[%s166 + $0x10c] sm:$0xf]
      %v243 = vld [vmem:[%s166 + $0x110] sm:$0xf]
      %v244 = vld [vmem:[%s166 + $0x114] sm:$0xf]
      %v245 = vld [vmem:[%s166 + $0x118] sm:$0xf]
      %v246 = vld [vmem:[%s166 + $0x11c] sm:$0xf]
      %v247 = vld [vmem:[%s166 + $0x120] sm:$0xf]
      %v248 = vld [vmem:[%s166 + $0x124] sm:$0xf]
      %v249 = vld [vmem:[%s166 + $0x128] sm:$0xf]
      %v250 = vld [vmem:[%s166 + $0x12c] sm:$0xf]
      %v251 = vld [vmem:[%s166 + $0x130] sm:$0xf]
      %v252 = vld [vmem:[%s166 + $0x134] sm:$0xf]
      %v253 = vld [vmem:[%s166 + $0x138] sm:$0xf]
      %v254 = vld [vmem:[%s166 + $0x13c] sm:$0xf]
      %v255 = vld [vmem:[%s166 + $0x140] sm:$0xf]
      %v256 = vld [vmem:[%s166 + $0x144] sm:$0xf]
      %v257 = vld [vmem:[%s166 + $0x148] sm:$0xf]
      %v258 = vld [vmem:[%s166 + $0x14c] sm:$0xf]
      %v259 = vld [vmem:[%s166 + $0x150] sm:$0xf]
      %v260 = vld [vmem:[%s166 + $0x154] sm:$0xf]
      %v261 = vld [vmem:[%s166 + $0x158] sm:$0xf]
      %v262 = vld [vmem:[%s166 + $0x15c] sm:$0xf]
      %v263 = vld [vmem:[%s166 + $0x160] sm:$0xf]
      %v264 = vld [vmem:[%s166 + $0x164] sm:$0xf]
      %v265 = vld [vmem:[%s166 + $0x168] sm:$0xf]
      %v266 = vld [vmem:[%s166 + $0x16c] sm:$0xf]
      %v267 = vld [vmem:[%s166 + $0x170] sm:$0xf]
      %v268 = vld [vmem:[%s166 + $0x174] sm:$0xf]
      %v269 = vld [vmem:[%s166 + $0x178] sm:$0xf]
      %v270 = vld [vmem:[%s166 + $0x17c] sm:$0xf]
      %v271 = vld [vmem:[%s166 + $0x180] sm:$0xf]
      %v272 = vld [vmem:[%s166 + $0x184] sm:$0xf]
      %v273 = vld [vmem:[%s166 + $0x188] sm:$0xf]
      %v274 = vld [vmem:[%s166 + $0x18c] sm:$0xf]
      %v275 = vld [vmem:[%s166 + $0x190] sm:$0xf]
      %v276 = vld [vmem:[%s166 + $0x194] sm:$0xf]
      %v277 = vld [vmem:[%s166 + $0x198] sm:$0xf]
      %v278 = vld [vmem:[%s166 + $0x19c] sm:$0xf]
      %v279 = vld [vmem:[%s166 + $0x1a0] sm:$0xf]
      %v280 = vld [vmem:[%s166 + $0x1a4] sm:$0xf]
      %v281 = vld [vmem:[%s166 + $0x1a8] sm:$0xf]
      %v282 = vld [vmem:[%s166 + $0x1ac] sm:$0xf]
      %v283 = vld [vmem:[%s166 + $0x1b0] sm:$0xf]
      %v284 = vld [vmem:[%s166 + $0x1b4] sm:$0xf]
      %v285 = vld [vmem:[%s166 + $0x1b8] sm:$0xf]
      %v286 = vld [vmem:[%s166 + $0x1bc] sm:$0xf]
      %v287 = vld [vmem:[%s166 + $0x1c0] sm:$0xf]
      %v288 = vld [vmem:[%s166 + $0x1c4] sm:$0xf]
      %v289 = vld [vmem:[%s166 + $0x1c8] sm:$0xf]
      %v290 = vld [vmem:[%s166 + $0x1cc] sm:$0xf]
      %v291 = vld [vmem:[%s166 + $0x1d0] sm:$0xf]
      %v292 = vld [vmem:[%s166 + $0x1d4] sm:$0xf]
      %v293 = vld [vmem:[%s166 + $0x1d8] sm:$0xf]
      %v294 = vld [vmem:[%s166 + $0x1dc] sm:$0xf]
      %v295 = vld [vmem:[%s166 + $0x1e0] sm:$0xf]
      %v296 = vld [vmem:[%s166 + $0x1e4] sm:$0xf]
      %v297 = vld [vmem:[%s166 + $0x1e8] sm:$0xf]
      %v298 = vld [vmem:[%s166 + $0x1ec] sm:$0xf]
      %v299 = vld [vmem:[%s166 + $0x1f0] sm:$0xf]
      %v300 = vld [vmem:[%s166 + $0x1f4] sm:$0xf]
      %v301 = vld [vmem:[%s166 + $0x1f8] sm:$0xf]
      %v302 = vld [vmem:[%s166 + $0x1fc] sm:$0xf]
      %v303 = vld [vmem:[%s166 + $0x200] sm:$0xf]
      %v304 = vld [vmem:[%s166 + $0x204] sm:$0xf]
      %v305 = vld [vmem:[%s166 + $0x208] sm:$0xf]
      %v306 = vld [vmem:[%s166 + $0x20c] sm:$0xf]
      %v307 = vld [vmem:[%s166 + $0x210] sm:$0xf]
      %v308 = vld [vmem:[%s166 + $0x214] sm:$0xf]
      %v309 = vld [vmem:[%s166 + $0x218] sm:$0xf]
      %v310 = vld [vmem:[%s166 + $0x21c] sm:$0xf]
      %v311 = vld [vmem:[%s166 + $0x220] sm:$0xf]
      %v312 = vld [vmem:[%s166 + $0x224] sm:$0xf]
      %v313 = vld [vmem:[%s166 + $0x228] sm:$0xf]
      %v314 = vld [vmem:[%s166 + $0x22c] sm:$0xf]
      %v315 = vld [vmem:[%s166 + $0x230] sm:$0xf]
      %v316 = vld [vmem:[%s166 + $0x234] sm:$0xf]
      %v317 = vld [vmem:[%s166 + $0x238] sm:$0xf]
      %v318 = vld [vmem:[%s166 + $0x23c] sm:$0xf]
      %v319 = vld [vmem:[%s166 + $0x240] sm:$0xf]
      %v320 = vld [vmem:[%s166 + $0x244] sm:$0xf]
      %v321 = vld [vmem:[%s166 + $0x248] sm:$0xf]
      %v322 = vld [vmem:[%s166 + $0x24c] sm:$0xf]
      %v323 = vld [vmem:[%s166 + $0x250] sm:$0xf]
      %v324 = vld [vmem:[%s166 + $0x254] sm:$0xf]
      %v325 = vld [vmem:[%s166 + $0x258] sm:$0xf]
      %v326 = vld [vmem:[%s166 + $0x25c] sm:$0xf]
      %v327 = vld [vmem:[%s166 + $0x260] sm:$0xf]
      %v328 = vld [vmem:[%s166 + $0x264] sm:$0xf]
      %v329 = vld [vmem:[%s166 + $0x268] sm:$0xf]
      %v330 = vld [vmem:[%s166 + $0x26c] sm:$0xf]
      %v331 = vld [vmem:[%s166 + $0x270] sm:$0xf]
      %v332 = vld [vmem:[%s166 + $0x274] sm:$0xf]
      %v333 = vld [vmem:[%s166 + $0x278] sm:$0xf]
      %v334 = vld [vmem:[%s166 + $0x27c] sm:$0xf]
      %v335 = vld [vmem:[%s166 + $0x280] sm:$0xf]
      %v336 = vld [vmem:[%s166 + $0x284] sm:$0xf]
      %v337 = vld [vmem:[%s166 + $0x288] sm:$0xf]
      %v338 = vld [vmem:[%s166 + $0x28c] sm:$0xf]
      %v339 = vld [vmem:[%s166 + $0x290] sm:$0xf]
      %v340 = vld [vmem:[%s166 + $0x294] sm:$0xf]
      %v341 = vld [vmem:[%s166 + $0x298] sm:$0xf]
      %v342 = vld [vmem:[%s166 + $0x29c] sm:$0xf]
      %v343 = vld [vmem:[%s166 + $0x2a0] sm:$0xf]
      %v344 = vld [vmem:[%s166 + $0x2a4] sm:$0xf]
      %v345 = vld [vmem:[%s166 + $0x2a8] sm:$0xf]
      %v346 = vld [vmem:[%s166 + $0x2ac] sm:$0xf]
      %v347 = vld [vmem:[%s166 + $0x2b0] sm:$0xf]
      %v348 = vld [vmem:[%s166 + $0x2b4] sm:$0xf]
      %v349 = vld [vmem:[%s166 + $0x2b8] sm:$0xf]
      %v350 = vld [vmem:[%s166 + $0x2bc] sm:$0xf]
      %v351 = vld [vmem:[%s166 + $0x2c0] sm:$0xf]
      %v352 = vld [vmem:[%s166 + $0x2c4] sm:$0xf]
      %v353 = vld [vmem:[%s166 + $0x2c8] sm:$0xf]
      %v354 = vld [vmem:[%s166 + $0x2cc] sm:$0xf]
      %v355 = vld [vmem:[%s166 + $0x2d0] sm:$0xf]
      %v356 = vld [vmem:[%s166 + $0x2d4] sm:$0xf]
      %v357 = vld [vmem:[%s166 + $0x2d8] sm:$0xf]
      %v358 = vld [vmem:[%s166 + $0x2dc] sm:$0xf]
      %v359 = vld [vmem:[%s166 + $0x2e0] sm:$0xf]
      %v360 = vld [vmem:[%s166 + $0x2e4] sm:$0xf]
      %v361 = vld [vmem:[%s166 + $0x2e8] sm:$0xf]
      %v362 = vld [vmem:[%s166 + $0x2ec] sm:$0xf]
      %v363 = vld [vmem:[%s166 + $0x2f0] sm:$0xf]
      %v364 = vld [vmem:[%s166 + $0x2f4] sm:$0xf]
      %v365 = vld [vmem:[%s166 + $0x2f8] sm:$0xf]
      %v366 = vld [vmem:[%s166 + $0x2fc] sm:$0xf]
      %v367 = vld [vmem:[%s166 + $0x300] sm:$0xf]
      %v368 = vld [vmem:[%s166 + $0x304] sm:$0xf]
      %v369 = vld [vmem:[%s166 + $0x308] sm:$0xf]
      %v370 = vld [vmem:[%s166 + $0x30c] sm:$0xf]
      %v371 = vld [vmem:[%s166 + $0x310] sm:$0xf]
      %v372 = vld [vmem:[%s166 + $0x314] sm:$0xf]
      %v373 = vld [vmem:[%s166 + $0x318] sm:$0xf]
      %v374 = vld [vmem:[%s166 + $0x31c] sm:$0xf]
      %v375 = vld [vmem:[%s166 + $0x320] sm:$0xf]
      %v376 = vld [vmem:[%s166 + $0x324] sm:$0xf]
      %v377 = vld [vmem:[%s166 + $0x328] sm:$0xf]
      %v378 = vld [vmem:[%s166 + $0x32c] sm:$0xf]
      %v379 = vld [vmem:[%s166 + $0x330] sm:$0xf]
      %v380 = vld [vmem:[%s166 + $0x334] sm:$0xf]
      %v381 = vld [vmem:[%s166 + $0x338] sm:$0xf]
      %v382 = vld [vmem:[%s166 + $0x33c] sm:$0xf]
      %v383 = vld [vmem:[%s166 + $0x340] sm:$0xf]
      %v384 = vld [vmem:[%s166 + $0x344] sm:$0xf]
      %v385 = vld [vmem:[%s166 + $0x348] sm:$0xf]
      %v386 = vld [vmem:[%s166 + $0x34c] sm:$0xf]
      %v387 = vld [vmem:[%s166 + $0x350] sm:$0xf]
      %v388 = vld [vmem:[%s166 + $0x354] sm:$0xf]
      %v389 = vld [vmem:[%s166 + $0x358] sm:$0xf]
      %v390 = vld [vmem:[%s166 + $0x35c] sm:$0xf]
      %v391 = vld [vmem:[%s166 + $0x360] sm:$0xf]
      %v392 = vld [vmem:[%s166 + $0x364] sm:$0xf]
      %v393 = vld [vmem:[%s166 + $0x368] sm:$0xf]
      %v394 = vld [vmem:[%s166 + $0x36c] sm:$0xf]
      %v395 = vld [vmem:[%s166 + $0x370] sm:$0xf]
      %v396 = vld [vmem:[%s166 + $0x374] sm:$0xf]
      %v397 = vld [vmem:[%s166 + $0x378] sm:$0xf]
      %v398 = vld [vmem:[%s166 + $0x37c] sm:$0xf]
      %v399 = vld [vmem:[%s166 + $0x380] sm:$0xf]
      %v400 = vld [vmem:[%s166 + $0x384] sm:$0xf]
      %v401 = vld [vmem:[%s166 + $0x388] sm:$0xf]
      %v402 = vld [vmem:[%s166 + $0x38c] sm:$0xf]
      %v403 = vld [vmem:[%s166 + $0x390] sm:$0xf]
      %v404 = vld [vmem:[%s166 + $0x394] sm:$0xf]
      %v405 = vld [vmem:[%s166 + $0x398] sm:$0xf]
      %v406 = vld [vmem:[%s166 + $0x39c] sm:$0xf]
      %v407 = vld [vmem:[%s166 + $0x3a0] sm:$0xf]
      %v408 = vld [vmem:[%s166 + $0x3a4] sm:$0xf]
      %v409 = vld [vmem:[%s166 + $0x3a8] sm:$0xf]
      %v410 = vld [vmem:[%s166 + $0x3ac] sm:$0xf]
      %v411 = vld [vmem:[%s166 + $0x3b0] sm:$0xf]
      %v412 = vld [vmem:[%s166 + $0x3b4] sm:$0xf]
      %v413 = vld [vmem:[%s166 + $0x3b8] sm:$0xf]
      %v414 = vld [vmem:[%s166 + $0x3bc] sm:$0xf]
      %v415 = vld [vmem:[%s166 + $0x3c0] sm:$0xf]
      %v416 = vld [vmem:[%s166 + $0x3c4] sm:$0xf]
      %v417 = vld [vmem:[%s166 + $0x3c8] sm:$0xf]
      %v418 = vld [vmem:[%s166 + $0x3cc] sm:$0xf]
      %v419 = vld [vmem:[%s166 + $0x3d0] sm:$0xf]
      %v420 = vld [vmem:[%s166 + $0x3d4] sm:$0xf]
      %v421 = vld [vmem:[%s166 + $0x3d8] sm:$0xf]
      %v422 = vld [vmem:[%s166 + $0x3dc] sm:$0xf]
      %v423 = vld [vmem:[%s166 + $0x3e0] sm:$0xf]
      %v424 = vld [vmem:[%s166 + $0x3e4] sm:$0xf]
      %v425 = vld [vmem:[%s166 + $0x3e8] sm:$0xf]
      %v426 = vld [vmem:[%s166 + $0x3ec] sm:$0xf]
      %v427 = vld [vmem:[%s166 + $0x3f0] sm:$0xf]
      %v428 = vld [vmem:[%s166 + $0x3f4] sm:$0xf]
      %v429 = vld [vmem:[%s166 + $0x3f8] sm:$0xf]
      %v430 = vld [vmem:[%s166 + $0x3fc] sm:$0xf]
      %v431 = vld [vmem:[%s166 + $0x400] sm:$0xf]
      %v432 = vld [vmem:[%s166 + $0x404] sm:$0xf]
      %v433 = vld [vmem:[%s166 + $0x408] sm:$0xf]
      %v434 = vld [vmem:[%s166 + $0x40c] sm:$0xf]
      %v435 = vld [vmem:[%s166 + $0x410] sm:$0xf]
      %v436 = vld [vmem:[%s166 + $0x414] sm:$0xf]
      %v437 = vld [vmem:[%s166 + $0x418] sm:$0xf]
      %v438 = vld [vmem:[%s166 + $0x41c] sm:$0xf]
      %v439 = vld [vmem:[%s166 + $0x420] sm:$0xf]
      %v440 = vld [vmem:[%s166 + $0x424] sm:$0xf]
      %v441 = vld [vmem:[%s166 + $0x428] sm:$0xf]
      %v442 = vld [vmem:[%s166 + $0x42c] sm:$0xf]
      %v443 = vld [vmem:[%s166 + $0x430] sm:$0xf]
      %v444 = vld [vmem:[%s166 + $0x434] sm:$0xf]
      %v445 = vld [vmem:[%s166 + $0x438] sm:$0xf]
      %v446 = vld [vmem:[%s166 + $0x43c] sm:$0xf]
      %v447 = vld [vmem:[%s166 + $0x440] sm:$0xf]
      %v448 = vld [vmem:[%s166 + $0x444] sm:$0xf]
      %v449 = vld [vmem:[%s166 + $0x448] sm:$0xf]
      %v450 = vld [vmem:[%s166 + $0x44c] sm:$0xf]
      %v451 = vld [vmem:[%s166 + $0x450] sm:$0xf]
      %v452 = vld [vmem:[%s166 + $0x454] sm:$0xf]
      %v453 = vld [vmem:[%s166 + $0x458] sm:$0xf]
      %v454 = vld [vmem:[%s166 + $0x45c] sm:$0xf]
      %v455 = vld [vmem:[%s166 + $0x460] sm:$0xf]
      %v456 = vld [vmem:[%s166 + $0x464] sm:$0xf]
      %v457 = vld [vmem:[%s166 + $0x468] sm:$0xf]
      %v458 = vld [vmem:[%s166 + $0x46c] sm:$0xf]
      %v459 = vld [vmem:[%s166 + $0x470] sm:$0xf]
      %v460 = vld [vmem:[%s166 + $0x474] sm:$0xf]
      %v461 = vld [vmem:[%s166 + $0x478] sm:$0xf]
      %v462 = vld [vmem:[%s166 + $0x47c] sm:$0xf]
      %v463 = vld [vmem:[%s166 + $0x480] sm:$0xf]
      %v464 = vld [vmem:[%s166 + $0x484] sm:$0xf]
      %v465 = vld [vmem:[%s166 + $0x488] sm:$0xf]
      %v466 = vld [vmem:[%s166 + $0x48c] sm:$0xf]
      %v467 = vld [vmem:[%s166 + $0x490] sm:$0xf]
      %v468 = vld [vmem:[%s166 + $0x494] sm:$0xf]
      %v469 = vld [vmem:[%s166 + $0x498] sm:$0xf]
      %v470 = vld [vmem:[%s166 + $0x49c] sm:$0xf]
      %v471 = vld [vmem:[%s166 + $0x4a0] sm:$0xf]
      %v472 = vld [vmem:[%s166 + $0x4a4] sm:$0xf]
      %v473 = vld [vmem:[%s166 + $0x4a8] sm:$0xf]
      %v474 = vld [vmem:[%s166 + $0x4ac] sm:$0xf]
      %v475 = vld [vmem:[%s166 + $0x4b0] sm:$0xf]
      %v476 = vld [vmem:[%s166 + $0x4b4] sm:$0xf]
      %v477 = vld [vmem:[%s166 + $0x4b8] sm:$0xf]
      %v478 = vld [vmem:[%s166 + $0x4bc] sm:$0xf]
      %v479 = vld [vmem:[%s166 + $0x4c0] sm:$0xf]
      %v480 = vld [vmem:[%s166 + $0x4c4] sm:$0xf]
      %v481 = vld [vmem:[%s166 + $0x4c8] sm:$0xf]
      %v482 = vld [vmem:[%s166 + $0x4cc] sm:$0xf]
      %v483 = vld [vmem:[%s166 + $0x4d0] sm:$0xf]
      %v484 = vld [vmem:[%s166 + $0x4d4] sm:$0xf]
      %v485 = vld [vmem:[%s166 + $0x4d8] sm:$0xf]
      %v486 = vld [vmem:[%s166 + $0x4dc] sm:$0xf]
      %v487 = vld [vmem:[%s166 + $0x4e0] sm:$0xf]
      %v488 = vld [vmem:[%s166 + $0x4e4] sm:$0xf]
      %v489 = vld [vmem:[%s166 + $0x4e8] sm:$0xf]
      %v490 = vld [vmem:[%s166 + $0x4ec] sm:$0xf]
      %v491 = vld [vmem:[%s166 + $0x4f0] sm:$0xf]
      %v492 = vld [vmem:[%s166 + $0x4f4] sm:$0xf]
      %v493 = vld [vmem:[%s166 + $0x4f8] sm:$0xf]
      %v494 = vld [vmem:[%s166 + $0x4fc] sm:$0xf]
      %v495 = vld [vmem:[%s166 + $0x500] sm:$0xf]
      %v496 = vld [vmem:[%s166 + $0x504] sm:$0xf]
      %v497 = vld [vmem:[%s166 + $0x508] sm:$0xf]
      %v498 = vld [vmem:[%s166 + $0x50c] sm:$0xf]
      %v499 = vld [vmem:[%s166 + $0x510] sm:$0xf]
      %v500 = vld [vmem:[%s166 + $0x514] sm:$0xf]
      %v501 = vld [vmem:[%s166 + $0x518] sm:$0xf]
      %v502 = vld [vmem:[%s166 + $0x51c] sm:$0xf]
      %v503 = vld [vmem:[%s166 + $0x520] sm:$0xf]
      %v504 = vld [vmem:[%s166 + $0x524] sm:$0xf]
      %v505 = vld [vmem:[%s166 + $0x528] sm:$0xf]
      %v506 = vld [vmem:[%s166 + $0x52c] sm:$0xf]
      %v507 = vld [vmem:[%s166 + $0x530] sm:$0xf]
      %v508 = vld [vmem:[%s166 + $0x534] sm:$0xf]
      %v509 = vld [vmem:[%s166 + $0x538] sm:$0xf]
      %v510 = vld [vmem:[%s166 + $0x53c] sm:$0xf]
      %v511 = vld [vmem:[%s166 + $0x540] sm:$0xf]
      %v512 = vld [vmem:[%s166 + $0x544] sm:$0xf]
      %v513 = vld [vmem:[%s166 + $0x548] sm:$0xf]
      %v514 = vld [vmem:[%s166 + $0x54c] sm:$0xf]
      %v515 = vld [vmem:[%s166 + $0x550] sm:$0xf]
      %v516 = vld [vmem:[%s166 + $0x554] sm:$0xf]
      %v517 = vld [vmem:[%s166 + $0x558] sm:$0xf]
      %v518 = vld [vmem:[%s166 + $0x55c] sm:$0xf]
      %v519 = vld [vmem:[%s166 + $0x560] sm:$0xf]
      %v520 = vld [vmem:[%s166 + $0x564] sm:$0xf]
      %v521 = vld [vmem:[%s166 + $0x568] sm:$0xf]
      %v522 = vld [vmem:[%s166 + $0x56c] sm:$0xf]
      %v523 = vld [vmem:[%s166 + $0x570] sm:$0xf]
      %v524 = vld [vmem:[%s166 + $0x574] sm:$0xf]
      %v525 = vld [vmem:[%s166 + $0x578] sm:$0xf]
      %v526 = vld [vmem:[%s166 + $0x57c] sm:$0xf]
      %v527 = vld [vmem:[%s166 + $0x580] sm:$0xf]
      %v528 = vld [vmem:[%s166 + $0x584] sm:$0xf]
      %v529 = vld [vmem:[%s166 + $0x588] sm:$0xf]
      %v530 = vld [vmem:[%s166 + $0x58c] sm:$0xf]
      %v531 = vld [vmem:[%s166 + $0x590] sm:$0xf]
      %v532 = vld [vmem:[%s166 + $0x594] sm:$0xf]
      %v533 = vld [vmem:[%s166 + $0x598] sm:$0xf]
      %v534 = vld [vmem:[%s166 + $0x59c] sm:$0xf]
      %v535 = vld [vmem:[%s166 + $0x5a0] sm:$0xf]
      %v536 = vld [vmem:[%s166 + $0x5a4] sm:$0xf]
      %v537 = vld [vmem:[%s166 + $0x5a8] sm:$0xf]
      %v538 = vld [vmem:[%s166 + $0x5ac] sm:$0xf]
      %v539 = vld [vmem:[%s166 + $0x5b0] sm:$0xf]
      %v540 = vld [vmem:[%s166 + $0x5b4] sm:$0xf]
      %v541 = vld [vmem:[%s166 + $0x5b8] sm:$0xf]
      %v542 = vld [vmem:[%s166 + $0x5bc] sm:$0xf]
      %v543 = vld [vmem:[%s166 + $0x5c0] sm:$0xf]
      %v544 = vld [vmem:[%s166 + $0x5c4] sm:$0xf]
      %v545 = vld [vmem:[%s166 + $0x5c8] sm:$0xf]
      %v546 = vld [vmem:[%s166 + $0x5cc] sm:$0xf]
      %v547 = vld [vmem:[%s166 + $0x5d0] sm:$0xf]
      %v548 = vld [vmem:[%s166 + $0x5d4] sm:$0xf]
      %v549 = vld [vmem:[%s166 + $0x5d8] sm:$0xf]
      %v550 = vld [vmem:[%s166 + $0x5dc] sm:$0xf]
      %v551 = vld [vmem:[%s166 + $0x5e0] sm:$0xf]
      %v552 = vld [vmem:[%s166 + $0x5e4] sm:$0xf]
      %v553 = vld [vmem:[%s166 + $0x5e8] sm:$0xf]
      %v554 = vld [vmem:[%s166 + $0x5ec] sm:$0xf]
      %v555 = vld [vmem:[%s166 + $0x5f0] sm:$0xf]
      %v556 = vld [vmem:[%s166 + $0x5f4] sm:$0xf]
      %v557 = vld [vmem:[%s166 + $0x5f8] sm:$0xf]
      %v558 = vld [vmem:[%s166 + $0x5fc] sm:$0xf]
      %v559 = vld [vmem:[%s166 + $0x600] sm:$0xf]
      %v560 = vld [vmem:[%s166 + $0x604] sm:$0xf]
      %v561 = vld [vmem:[%s166 + $0x608] sm:$0xf]
      %v562 = vld [vmem:[%s166 + $0x60c] sm:$0xf]
      %v563 = vld [vmem:[%s166 + $0x610] sm:$0xf]
      %v564 = vld [vmem:[%s166 + $0x614] sm:$0xf]
      %v565 = vld [vmem:[%s166 + $0x618] sm:$0xf]
      %v566 = vld [vmem:[%s166 + $0x61c] sm:$0xf]
      %v567 = vld [vmem:[%s166 + $0x620] sm:$0xf]
      %v568 = vld [vmem:[%s166 + $0x624] sm:$0xf]
      %v569 = vld [vmem:[%s166 + $0x628] sm:$0xf]
      %v570 = vld [vmem:[%s166 + $0x62c] sm:$0xf]
      %v571 = vld [vmem:[%s166 + $0x630] sm:$0xf]
      %v572 = vld [vmem:[%s166 + $0x634] sm:$0xf]
      %v573 = vld [vmem:[%s166 + $0x638] sm:$0xf]
      %v574 = vld [vmem:[%s166 + $0x63c] sm:$0xf]
      %v575 = vld [vmem:[%s166 + $0x640] sm:$0xf]
      %v576 = vld [vmem:[%s166 + $0x644] sm:$0xf]
      %v577 = vld [vmem:[%s166 + $0x648] sm:$0xf]
      %v578 = vld [vmem:[%s166 + $0x64c] sm:$0xf]
      %v579 = vld [vmem:[%s166 + $0x650] sm:$0xf]
      %v580 = vld [vmem:[%s166 + $0x654] sm:$0xf]
      %v581 = vld [vmem:[%s166 + $0x658] sm:$0xf]
      %v582 = vld [vmem:[%s166 + $0x65c] sm:$0xf]
      %v583 = vld [vmem:[%s166 + $0x660] sm:$0xf]
      %v584 = vld [vmem:[%s166 + $0x664] sm:$0xf]
      %v585 = vld [vmem:[%s166 + $0x668] sm:$0xf]
      %v586 = vld [vmem:[%s166 + $0x66c] sm:$0xf]
      %v587 = vld [vmem:[%s166 + $0x670] sm:$0xf]
      %v588 = vld [vmem:[%s166 + $0x674] sm:$0xf]
      %v589 = vld [vmem:[%s166 + $0x678] sm:$0xf]
      %v590 = vld [vmem:[%s166 + $0x67c] sm:$0xf]
      %v591 = vld [vmem:[%s166 + $0x680] sm:$0xf]
      %v592 = vld [vmem:[%s166 + $0x684] sm:$0xf]
      %v593 = vld [vmem:[%s166 + $0x688] sm:$0xf]
      %v594 = vld [vmem:[%s166 + $0x68c] sm:$0xf]
      %v595 = vld [vmem:[%s166 + $0x690] sm:$0xf]
      %v596 = vld [vmem:[%s166 + $0x694] sm:$0xf]
      %v597 = vld [vmem:[%s166 + $0x698] sm:$0xf]
      %v598 = vld [vmem:[%s166 + $0x69c] sm:$0xf]
      %v599 = vld [vmem:[%s166 + $0x6a0] sm:$0xf]
      %v600 = vld [vmem:[%s166 + $0x6a4] sm:$0xf]
      %v601 = vld [vmem:[%s166 + $0x6a8] sm:$0xf]
      %v602 = vld [vmem:[%s166 + $0x6ac] sm:$0xf]
      %v603 = vld [vmem:[%s166 + $0x6b0] sm:$0xf]
      %v604 = vld [vmem:[%s166 + $0x6b4] sm:$0xf]
      %v605 = vld [vmem:[%s166 + $0x6b8] sm:$0xf]
      %v606 = vld [vmem:[%s166 + $0x6bc] sm:$0xf]
      %v607 = vld [vmem:[%s166 + $0x6c0] sm:$0xf]
      %v608 = vld [vmem:[%s166 + $0x6c4] sm:$0xf]
      %v609 = vld [vmem:[%s166 + $0x6c8] sm:$0xf]
      %v610 = vld [vmem:[%s166 + $0x6cc] sm:$0xf]
      %v611 = vld [vmem:[%s166 + $0x6d0] sm:$0xf]
      %v612 = vld [vmem:[%s166 + $0x6d4] sm:$0xf]
      %v613 = vld [vmem:[%s166 + $0x6d8] sm:$0xf]
      %v614 = vld [vmem:[%s166 + $0x6dc] sm:$0xf]
      %v615 = vld [vmem:[%s166 + $0x6e0] sm:$0xf]
      %v616 = vld [vmem:[%s166 + $0x6e4] sm:$0xf]
      %v617 = vld [vmem:[%s166 + $0x6e8] sm:$0xf]
      %v618 = vld [vmem:[%s166 + $0x6ec] sm:$0xf]
      %v619 = vld [vmem:[%s166 + $0x6f0] sm:$0xf]
      %v620 = vld [vmem:[%s166 + $0x6f4] sm:$0xf]
      %v621 = vld [vmem:[%s166 + $0x6f8] sm:$0xf]
      %v622 = vld [vmem:[%s166 + $0x6fc] sm:$0xf]
      %v623 = vld [vmem:[%s166 + $0x700] sm:$0xf]
      %v624 = vld [vmem:[%s166 + $0x704] sm:$0xf]
      %v625 = vld [vmem:[%s166 + $0x708] sm:$0xf]
      %v626 = vld [vmem:[%s166 + $0x70c] sm:$0xf]
      %v627 = vld [vmem:[%s166 + $0x710] sm:$0xf]
      %v628 = vld [vmem:[%s166 + $0x714] sm:$0xf]
      %v629 = vld [vmem:[%s166 + $0x718] sm:$0xf]
      %v630 = vld [vmem:[%s166 + $0x71c] sm:$0xf]
      %v631 = vld [vmem:[%s166 + $0x720] sm:$0xf]
      %v632 = vld [vmem:[%s166 + $0x724] sm:$0xf]
      %v633 = vld [vmem:[%s166 + $0x728] sm:$0xf]
      %v634 = vld [vmem:[%s166 + $0x72c] sm:$0xf]
      %v635 = vld [vmem:[%s166 + $0x730] sm:$0xf]
      %v636 = vld [vmem:[%s166 + $0x734] sm:$0xf]
      %v637 = vld [vmem:[%s166 + $0x738] sm:$0xf]
      %v638 = vld [vmem:[%s166 + $0x73c] sm:$0xf]
      %v639 = vld [vmem:[%s166 + $0x740] sm:$0xf]
      %v640 = vld [vmem:[%s166 + $0x744] sm:$0xf]
      %v641 = vld [vmem:[%s166 + $0x748] sm:$0xf]
      %v642 = vld [vmem:[%s166 + $0x74c] sm:$0xf]
      %v643 = vld [vmem:[%s166 + $0x750] sm:$0xf]
      %v644 = vld [vmem:[%s166 + $0x754] sm:$0xf]
      %v645 = vld [vmem:[%s166 + $0x758] sm:$0xf]
      %v646 = vld [vmem:[%s166 + $0x75c] sm:$0xf]
      %v647 = vld [vmem:[%s166 + $0x760] sm:$0xf]
      %v648 = vld [vmem:[%s166 + $0x764] sm:$0xf]
      %v649 = vld [vmem:[%s166 + $0x768] sm:$0xf]
      %v650 = vld [vmem:[%s166 + $0x76c] sm:$0xf]
      %v651 = vld [vmem:[%s166 + $0x770] sm:$0xf]
      %v652 = vld [vmem:[%s166 + $0x774] sm:$0xf]
      %v653 = vld [vmem:[%s166 + $0x778] sm:$0xf]
      %v654 = vld [vmem:[%s166 + $0x77c] sm:$0xf]
      %v655 = vld [vmem:[%s166 + $0x780] sm:$0xf]
      %v656 = vld [vmem:[%s166 + $0x784] sm:$0xf]
      %v657 = vld [vmem:[%s166 + $0x788] sm:$0xf]
      %v658 = vld [vmem:[%s166 + $0x78c] sm:$0xf]
      %v659 = vld [vmem:[%s166 + $0x790] sm:$0xf]
      %v660 = vld [vmem:[%s166 + $0x794] sm:$0xf]
      %v661 = vld [vmem:[%s166 + $0x798] sm:$0xf]
      %v662 = vld [vmem:[%s166 + $0x79c] sm:$0xf]
      %v663 = vld [vmem:[%s166 + $0x7a0] sm:$0xf]
      %v664 = vld [vmem:[%s166 + $0x7a4] sm:$0xf]
      %v665 = vld [vmem:[%s166 + $0x7a8] sm:$0xf]
      %v666 = vld [vmem:[%s166 + $0x7ac] sm:$0xf]
      %v667 = vld [vmem:[%s166 + $0x7b0] sm:$0xf]
      %v668 = vld [vmem:[%s166 + $0x7b4] sm:$0xf]
      %v669 = vld [vmem:[%s166 + $0x7b8] sm:$0xf]
      %v670 = vld [vmem:[%s166 + $0x7bc] sm:$0xf]
      %v671 = vld [vmem:[%s166 + $0x7c0] sm:$0xf]
      %v672 = vld [vmem:[%s166 + $0x7c4] sm:$0xf]
      %v673 = vld [vmem:[%s166 + $0x7c8] sm:$0xf]
      %v674 = vld [vmem:[%s166 + $0x7cc] sm:$0xf]
      %v675 = vld [vmem:[%s166 + $0x7d0] sm:$0xf]
      %v676 = vld [vmem:[%s166 + $0x7d4] sm:$0xf]
      %v677 = vld [vmem:[%s166 + $0x7d8] sm:$0xf]
      %v678 = vld [vmem:[%s166 + $0x7dc] sm:$0xf]
      %v679 = vld [vmem:[%s166 + $0x7e0] sm:$0xf]
      %v680 = vld [vmem:[%s166 + $0x7e4] sm:$0xf]
      %v681 = vld [vmem:[%s166 + $0x7e8] sm:$0xf]
      %v682 = vld [vmem:[%s166 + $0x7ec] sm:$0xf]
      %v683 = vld [vmem:[%s166 + $0x7f0] sm:$0xf]
      %v684 = vld [vmem:[%s166 + $0x7f4] sm:$0xf]
      %v685 = vld [vmem:[%s166 + $0x7f8] sm:$0xf]
      %v686 = vld [vmem:[%s166 + $0x7fc] sm:$0xf]
      %v687 = vld [vmem:[%s166 + $0x800] sm:$0xf]
      %v688 = vld [vmem:[%s166 + $0x804] sm:$0xf]
      %v689 = vld [vmem:[%s166 + $0x808] sm:$0xf]
      %v690 = vld [vmem:[%s166 + $0x80c] sm:$0xf]
      %v691 = vld [vmem:[%s166 + $0x810] sm:$0xf]
      %v692 = vld [vmem:[%s166 + $0x814] sm:$0xf]
      %v693 = vld [vmem:[%s166 + $0x818] sm:$0xf]
      %v694 = vld [vmem:[%s166 + $0x81c] sm:$0xf]
      %v695 = vld [vmem:[%s166 + $0x820] sm:$0xf]
      %v696 = vld [vmem:[%s166 + $0x824] sm:$0xf]
      %v697 = vld [vmem:[%s166 + $0x828] sm:$0xf]
      %v698 = vld [vmem:[%s166 + $0x82c] sm:$0xf]
      %v699 = vld [vmem:[%s166 + $0x830] sm:$0xf]
      %v700 = vld [vmem:[%s166 + $0x834] sm:$0xf]
      %v701 = vld [vmem:[%s166 + $0x838] sm:$0xf]
      %v702 = vld [vmem:[%s166 + $0x83c] sm:$0xf]
      %v703 = vld [vmem:[%s166 + $0x840] sm:$0xf]
      %v704 = vld [vmem:[%s166 + $0x844] sm:$0xf]
      %v705 = vld [vmem:[%s166 + $0x848] sm:$0xf]
      %v706 = vld [vmem:[%s166 + $0x84c] sm:$0xf]
      %v707 = vld [vmem:[%s166 + $0x850] sm:$0xf]
      %v708 = vld [vmem:[%s166 + $0x854] sm:$0xf]
      %v709 = vld [vmem:[%s166 + $0x858] sm:$0xf]
      %v710 = vld [vmem:[%s166 + $0x85c] sm:$0xf]
      %v711 = vld [vmem:[%s166 + $0x860] sm:$0xf]
      %v712 = vld [vmem:[%s166 + $0x864] sm:$0xf]
      %v713 = vld [vmem:[%s166 + $0x868] sm:$0xf]
      %v714 = vld [vmem:[%s166 + $0x86c] sm:$0xf]
      %v715 = vld [vmem:[%s166 + $0x870] sm:$0xf]
      %v716 = vld [vmem:[%s166 + $0x874] sm:$0xf]
      %v717 = vld [vmem:[%s166 + $0x878] sm:$0xf]
      %v718 = vld [vmem:[%s166 + $0x87c] sm:$0xf]
      %v719 = vld [vmem:[%s166 + $0x880] sm:$0xf]
      %v720 = vld [vmem:[%s166 + $0x884] sm:$0xf]
      %v721 = vld [vmem:[%s166 + $0x888] sm:$0xf]
      %v722 = vld [vmem:[%s166 + $0x88c] sm:$0xf]
      %v723 = vld [vmem:[%s166 + $0x890] sm:$0xf]
      %v724 = vld [vmem:[%s166 + $0x894] sm:$0xf]
      %v725 = vld [vmem:[%s166 + $0x898] sm:$0xf]
      %v726 = vld [vmem:[%s166 + $0x89c] sm:$0xf]
      %v727 = vld [vmem:[%s166 + $0x8a0] sm:$0xf]
      %v728 = vld [vmem:[%s166 + $0x8a4] sm:$0xf]
      %v729 = vld [vmem:[%s166 + $0x8a8] sm:$0xf]
      %v730 = vld [vmem:[%s166 + $0x8ac] sm:$0xf]
      %v731 = vld [vmem:[%s166 + $0x8b0] sm:$0xf]
      %v732 = vld [vmem:[%s166 + $0x8b4] sm:$0xf]
      %v733 = vld [vmem:[%s166 + $0x8b8] sm:$0xf]
      %v734 = vld [vmem:[%s166 + $0x8bc] sm:$0xf]
      %v735 = vld [vmem:[%s166 + $0x8c0] sm:$0xf]
      %v736 = vld [vmem:[%s166 + $0x8c4] sm:$0xf]
      %v737 = vld [vmem:[%s166 + $0x8c8] sm:$0xf]
      %v738 = vld [vmem:[%s166 + $0x8cc] sm:$0xf]
      %v739 = vld [vmem:[%s166 + $0x8d0] sm:$0xf]
      %v740 = vld [vmem:[%s166 + $0x8d4] sm:$0xf]
      %v741 = vld [vmem:[%s166 + $0x8d8] sm:$0xf]
      %v742 = vld [vmem:[%s166 + $0x8dc] sm:$0xf]
      %v743 = vld [vmem:[%s166 + $0x8e0] sm:$0xf]
      %v744 = vld [vmem:[%s166 + $0x8e4] sm:$0xf]
      %v745 = vld [vmem:[%s166 + $0x8e8] sm:$0xf]
      %v746 = vld [vmem:[%s166 + $0x8ec] sm:$0xf]
      %v747 = vld [vmem:[%s166 + $0x8f0] sm:$0xf]
      %v748 = vld [vmem:[%s166 + $0x8f4] sm:$0xf]
      %v749 = vld [vmem:[%s166 + $0x8f8] sm:$0xf]
      %v750 = vld [vmem:[%s166 + $0x8fc] sm:$0xf]
      %v751 = vld [vmem:[%s166 + $0x900] sm:$0xf]
      %v752 = vld [vmem:[%s166 + $0x904] sm:$0xf]
      %v753 = vld [vmem:[%s166 + $0x908] sm:$0xf]
      %v754 = vld [vmem:[%s166 + $0x90c] sm:$0xf]
      %v755 = vld [vmem:[%s166 + $0x910] sm:$0xf]
      %v756 = vld [vmem:[%s166 + $0x914] sm:$0xf]
      %v757 = vld [vmem:[%s166 + $0x918] sm:$0xf]
      %v758 = vld [vmem:[%s166 + $0x91c] sm:$0xf]
      %v759 = vld [vmem:[%s166 + $0x920] sm:$0xf]
      %v760 = vld [vmem:[%s166 + $0x924] sm:$0xf]
      %v761 = vld [vmem:[%s166 + $0x928] sm:$0xf]
      %v762 = vld [vmem:[%s166 + $0x92c] sm:$0xf]
      %v763 = vld [vmem:[%s166 + $0x930] sm:$0xf]
      %v764 = vld [vmem:[%s166 + $0x934] sm:$0xf]
      %v765 = vld [vmem:[%s166 + $0x938] sm:$0xf]
      %v766 = vld [vmem:[%s166 + $0x93c] sm:$0xf]
      %v767 = vld [vmem:[%s166 + $0x940] sm:$0xf]
      %v768 = vld [vmem:[%s166 + $0x944] sm:$0xf]
      %v769 = vld [vmem:[%s166 + $0x948] sm:$0xf]
      %v770 = vld [vmem:[%s166 + $0x94c] sm:$0xf]
      %v771 = vld [vmem:[%s166 + $0x950] sm:$0xf]
      %v772 = vld [vmem:[%s166 + $0x954] sm:$0xf]
      %v773 = vld [vmem:[%s166 + $0x958] sm:$0xf]
      %v774 = vld [vmem:[%s166 + $0x95c] sm:$0xf]
      %v775 = vld [vmem:[%s166 + $0x960] sm:$0xf]
      %v776 = vld [vmem:[%s166 + $0x964] sm:$0xf]
      %v777 = vld [vmem:[%s166 + $0x968] sm:$0xf]
      %v778 = vld [vmem:[%s166 + $0x96c] sm:$0xf]
      %v779 = vld [vmem:[%s166 + $0x970] sm:$0xf]
      %v780 = vld [vmem:[%s166 + $0x974] sm:$0xf]
      %v781 = vld [vmem:[%s166 + $0x978] sm:$0xf]
      %v782 = vld [vmem:[%s166 + $0x97c] sm:$0xf]
      %v783 = vld [vmem:[%s166 + $0x980] sm:$0xf]
      %v784 = vld [vmem:[%s166 + $0x984] sm:$0xf]
      %v785 = vld [vmem:[%s166 + $0x988] sm:$0xf]
      %v786 = vld [vmem:[%s166 + $0x98c] sm:$0xf]
      %v787 = vld [vmem:[%s166 + $0x990] sm:$0xf]
      %v788 = vld [vmem:[%s166 + $0x994] sm:$0xf]
      %v789 = vld [vmem:[%s166 + $0x998] sm:$0xf]
      %v790 = vld [vmem:[%s166 + $0x99c] sm:$0xf]
      %v791 = vld [vmem:[%s166 + $0x9a0] sm:$0xf]
      %v792 = vld [vmem:[%s166 + $0x9a4] sm:$0xf]
      %v793 = vld [vmem:[%s166 + $0x9a8] sm:$0xf]
      %v794 = vld [vmem:[%s166 + $0x9ac] sm:$0xf]
      %v795 = vld [vmem:[%s166 + $0x9b0] sm:$0xf]
      %v796 = vld [vmem:[%s166 + $0x9b4] sm:$0xf]
      %v797 = vld [vmem:[%s166 + $0x9b8] sm:$0xf]
      %v798 = vld [vmem:[%s166 + $0x9bc] sm:$0xf]
      %v799 = vld [vmem:[%s166 + $0x9c0] sm:$0xf]
      %v800 = vld [vmem:[%s166 + $0x9c4] sm:$0xf]
      %v801 = vld [vmem:[%s166 + $0x9c8] sm:$0xf]
      %v802 = vld [vmem:[%s166 + $0x9cc] sm:$0xf]
      %v803 = vld [vmem:[%s166 + $0x9d0] sm:$0xf]
      %v804 = vld [vmem:[%s166 + $0x9d4] sm:$0xf]
      %v805 = vld [vmem:[%s166 + $0x9d8] sm:$0xf]
      %v806 = vld [vmem:[%s166 + $0x9dc] sm:$0xf]
      %v807 = vld [vmem:[%s166 + $0x9e0] sm:$0xf]
      %v808 = vld [vmem:[%s166 + $0x9e4] sm:$0xf]
      %v809 = vld [vmem:[%s166 + $0x9e8] sm:$0xf]
      %v810 = vld [vmem:[%s166 + $0x9ec] sm:$0xf]
      %v811 = vld [vmem:[%s166 + $0x9f0] sm:$0xf]
      %v812 = vld [vmem:[%s166 + $0x9f4] sm:$0xf]
      %v813 = vld [vmem:[%s166 + $0x9f8] sm:$0xf]
      %v814 = vld [vmem:[%s166 + $0x9fc] sm:$0xf]
      %v815 = vld [vmem:[%s166 + $0xa00] sm:$0xf]
      %v816 = vld [vmem:[%s166 + $0xa04] sm:$0xf]
      %v817 = vld [vmem:[%s166 + $0xa08] sm:$0xf]
      %v818 = vld [vmem:[%s166 + $0xa0c] sm:$0xf]
      %v819 = vld [vmem:[%s166 + $0xa10] sm:$0xf]
      %v820 = vld [vmem:[%s166 + $0xa14] sm:$0xf]
      %v821 = vld [vmem:[%s166 + $0xa18] sm:$0xf]
      %v822 = vld [vmem:[%s166 + $0xa1c] sm:$0xf]
      %v823 = vld [vmem:[%s166 + $0xa20] sm:$0xf]
      %v824 = vld [vmem:[%s166 + $0xa24] sm:$0xf]
      %v825 = vld [vmem:[%s166 + $0xa28] sm:$0xf]
      %v826 = vld [vmem:[%s166 + $0xa2c] sm:$0xf]
      %v827 = vld [vmem:[%s166 + $0xa30] sm:$0xf]
      %v828 = vld [vmem:[%s166 + $0xa34] sm:$0xf]
      %v829 = vld [vmem:[%s166 + $0xa38] sm:$0xf]
      %v830 = vld [vmem:[%s166 + $0xa3c] sm:$0xf]
      %v831 = vld [vmem:[%s166 + $0xa40] sm:$0xf]
      %v832 = vld [vmem:[%s166 + $0xa44] sm:$0xf]
      %v833 = vld [vmem:[%s166 + $0xa48] sm:$0xf]
      %v834 = vld [vmem:[%s166 + $0xa4c] sm:$0xf]
      %v835 = vld [vmem:[%s166 + $0xa50] sm:$0xf]
      %v836 = vld [vmem:[%s166 + $0xa54] sm:$0xf]
      %v837 = vld [vmem:[%s166 + $0xa58] sm:$0xf]
      %v838 = vld [vmem:[%s166 + $0xa5c] sm:$0xf]
      %v839 = vld [vmem:[%s166 + $0xa60] sm:$0xf]
      %v840 = vld [vmem:[%s166 + $0xa64] sm:$0xf]
      %v841 = vld [vmem:[%s166 + $0xa68] sm:$0xf]
      %v842 = vld [vmem:[%s166 + $0xa6c] sm:$0xf]
      %v843 = vld [vmem:[%s166 + $0xa70] sm:$0xf]
      %v844 = vld [vmem:[%s166 + $0xa74] sm:$0xf]
      %v845 = vld [vmem:[%s166 + $0xa78] sm:$0xf]
      %v846 = vld [vmem:[%s166 + $0xa7c] sm:$0xf]
      %v847 = vld [vmem:[%s166 + $0xa80] sm:$0xf]
      %v848 = vld [vmem:[%s166 + $0xa84] sm:$0xf]
      %v849 = vld [vmem:[%s166 + $0xa88] sm:$0xf]
      %v850 = vld [vmem:[%s166 + $0xa8c] sm:$0xf]
      %v851 = vld [vmem:[%s166 + $0xa90] sm:$0xf]
      %v852 = vld [vmem:[%s166 + $0xa94] sm:$0xf]
      %v853 = vld [vmem:[%s166 + $0xa98] sm:$0xf]
      %v854 = vld [vmem:[%s166 + $0xa9c] sm:$0xf]
      %v855 = vld [vmem:[%s166 + $0xaa0] sm:$0xf]
      %v856 = vld [vmem:[%s166 + $0xaa4] sm:$0xf]
      %v857 = vld [vmem:[%s166 + $0xaa8] sm:$0xf]
      %v858 = vld [vmem:[%s166 + $0xaac] sm:$0xf]
      %v859 = vld [vmem:[%s166 + $0xab0] sm:$0xf]
      %v860 = vld [vmem:[%s166 + $0xab4] sm:$0xf]
      %v861 = vld [vmem:[%s166 + $0xab8] sm:$0xf]
      %v862 = vld [vmem:[%s166 + $0xabc] sm:$0xf]
      %v863 = vld [vmem:[%s166 + $0xac0] sm:$0xf]
      %v864 = vld [vmem:[%s166 + $0xac4] sm:$0xf]
      %v865 = vld [vmem:[%s166 + $0xac8] sm:$0xf]
      %v866 = vld [vmem:[%s166 + $0xacc] sm:$0xf]
      %v867 = vld [vmem:[%s166 + $0xad0] sm:$0xf]
      %v868 = vld [vmem:[%s166 + $0xad4] sm:$0xf]
      %v869 = vld [vmem:[%s166 + $0xad8] sm:$0xf]
      %v870 = vld [vmem:[%s166 + $0xadc] sm:$0xf]
      %v871 = vld [vmem:[%s166 + $0xae0] sm:$0xf]
      %v872 = vld [vmem:[%s166 + $0xae4] sm:$0xf]
      %v873 = vld [vmem:[%s166 + $0xae8] sm:$0xf]
      %v874 = vld [vmem:[%s166 + $0xaec] sm:$0xf]
      %v875 = vld [vmem:[%s166 + $0xaf0] sm:$0xf]
      %v876 = vld [vmem:[%s166 + $0xaf4] sm:$0xf]
      %v877 = vld [vmem:[%s166 + $0xaf8] sm:$0xf]
      %v878 = vld [vmem:[%s166 + $0xafc] sm:$0xf]
      %v879 = vld [vmem:[%s166 + $0xb00] sm:$0xf]
      %v880 = vld [vmem:[%s166 + $0xb04] sm:$0xf]
      %v881 = vld [vmem:[%s166 + $0xb08] sm:$0xf]
      %v882 = vld [vmem:[%s166 + $0xb0c] sm:$0xf]
      %v883 = vld [vmem:[%s166 + $0xb10] sm:$0xf]
      %v884 = vld [vmem:[%s166 + $0xb14] sm:$0xf]
      %v885 = vld [vmem:[%s166 + $0xb18] sm:$0xf]
      %v886 = vld [vmem:[%s166 + $0xb1c] sm:$0xf]
      %v887 = vld [vmem:[%s166 + $0xb20] sm:$0xf]
      %v888 = vld [vmem:[%s166 + $0xb24] sm:$0xf]
      %v889 = vld [vmem:[%s166 + $0xb28] sm:$0xf]
      %v890 = vld [vmem:[%s166 + $0xb2c] sm:$0xf]
      %v891 = vld [vmem:[%s166 + $0xb30] sm:$0xf]
      %v892 = vld [vmem:[%s166 + $0xb34] sm:$0xf]
      %v893 = vld [vmem:[%s166 + $0xb38] sm:$0xf]
      %v894 = vld [vmem:[%s166 + $0xb3c] sm:$0xf]
      %v895 = vld [vmem:[%s166 + $0xb40] sm:$0xf]
      %v896 = vld [vmem:[%s166 + $0xb44] sm:$0xf]
      %v897 = vld [vmem:[%s166 + $0xb48] sm:$0xf]
      %v898 = vld [vmem:[%s166 + $0xb4c] sm:$0xf]
      %v899 = vld [vmem:[%s166 + $0xb50] sm:$0xf]
      %v900 = vld [vmem:[%s166 + $0xb54] sm:$0xf]
      %v901 = vld [vmem:[%s166 + $0xb58] sm:$0xf]
      %v902 = vld [vmem:[%s166 + $0xb5c] sm:$0xf]
      %v903 = vld [vmem:[%s166 + $0xb60] sm:$0xf]
      %v904 = vld [vmem:[%s166 + $0xb64] sm:$0xf]
      %v905 = vld [vmem:[%s166 + $0xb68] sm:$0xf]
      %v906 = vld [vmem:[%s166 + $0xb6c] sm:$0xf]
      %v907 = vld [vmem:[%s166 + $0xb70] sm:$0xf]
      %v908 = vld [vmem:[%s166 + $0xb74] sm:$0xf]
      %v909 = vld [vmem:[%s166 + $0xb78] sm:$0xf]
      %v910 = vld [vmem:[%s166 + $0xb7c] sm:$0xf]
      %v911 = vld [vmem:[%s166 + $0xb80] sm:$0xf]
      %v912 = vld [vmem:[%s166 + $0xb84] sm:$0xf]
      %v913 = vld [vmem:[%s166 + $0xb88] sm:$0xf]
      %v914 = vld [vmem:[%s166 + $0xb8c] sm:$0xf]
      %v915 = vld [vmem:[%s166 + $0xb90] sm:$0xf]
      %v916 = vld [vmem:[%s166 + $0xb94] sm:$0xf]
      %v917 = vld [vmem:[%s166 + $0xb98] sm:$0xf]
      %v918 = vld [vmem:[%s166 + $0xb9c] sm:$0xf]
      %v919 = vld [vmem:[%s166 + $0xba0] sm:$0xf]
      %v920 = vld [vmem:[%s166 + $0xba4] sm:$0xf]
      %v921 = vld [vmem:[%s166 + $0xba8] sm:$0xf]
      %v922 = vld [vmem:[%s166 + $0xbac] sm:$0xf]
      %v923 = vld [vmem:[%s166 + $0xbb0] sm:$0xf]
      %v924 = vld [vmem:[%s166 + $0xbb4] sm:$0xf]
      %v925 = vld [vmem:[%s166 + $0xbb8] sm:$0xf]
      %v926 = vld [vmem:[%s166 + $0xbbc] sm:$0xf]
      %v927 = vld [vmem:[%s166 + $0xbc0] sm:$0xf]
      %v928 = vld [vmem:[%s166 + $0xbc4] sm:$0xf]
      %v929 = vld [vmem:[%s166 + $0xbc8] sm:$0xf]
      %v930 = vld [vmem:[%s166 + $0xbcc] sm:$0xf]
      %v931 = vld [vmem:[%s166 + $0xbd0] sm:$0xf]
      %v932 = vld [vmem:[%s166 + $0xbd4] sm:$0xf]
      %v933 = vld [vmem:[%s166 + $0xbd8] sm:$0xf]
      %v934 = vld [vmem:[%s166 + $0xbdc] sm:$0xf]
      %v935 = vld [vmem:[%s166 + $0xbe0] sm:$0xf]
      %v936 = vld [vmem:[%s166 + $0xbe4] sm:$0xf]
      %v937 = vld [vmem:[%s1] sm:$0xf]
      %v938 = vld [vmem:[%s1 + $0x4] sm:$0x1]
      %v939 = vld [vmem:[%s2] sm:$0x1]
      %v941 = vlaneseq
      %v942 = vshrl.u32 %v941, 7
      %v943 = vsub.s32 0, %v942
      %v944 = vrot.slane %v939, %v943
      %v1708 = vunpack.c.l.b16 %v175
      %v1709 = vunpack.c.l.b16 %v176
      %v1710 = vunpack.c.l.b16 %v177
      %v1711 = vunpack.c.l.b16 %v178
      %v1712 = vunpack.c.l.b16 %v179
      %v1713 = vunpack.c.l.b16 %v180
      %v1714 = vunpack.c.l.b16 %v181
      %v1715 = vunpack.c.l.b16 %v182
      %v1716 = vunpack.c.l.b16 %v183
      %v1717 = vunpack.c.l.b16 %v184
      %v1718 = vunpack.c.l.b16 %v185
      %v1719 = vunpack.c.l.b16 %v186
      %v1720 = vunpack.c.l.b16 %v187
      %v1721 = vunpack.c.l.b16 %v188
      %v1722 = vunpack.c.l.b16 %v189
      %v1723 = vunpack.c.l.b16 %v190
      %v1724 = vunpack.c.l.b16 %v191
      %v1725 = vunpack.c.l.b16 %v192
      %v1726 = vunpack.c.l.b16 %v193
      %v1727 = vunpack.c.l.b16 %v194
      %v1728 = vunpack.c.l.b16 %v195
      %v1729 = vunpack.c.l.b16 %v196
      %v1730 = vunpack.c.l.b16 %v197
      %v1731 = vunpack.c.l.b16 %v198
      %v1732 = vunpack.c.l.b16 %v199
      %v1733 = vunpack.c.l.b16 %v200
      %v1734 = vunpack.c.l.b16 %v201
      %v1735 = vunpack.c.l.b16 %v202
      %v1736 = vunpack.c.l.b16 %v203
      %v1737 = vunpack.c.l.b16 %v204
      %v1738 = vunpack.c.l.b16 %v205
      %v1739 = vunpack.c.l.b16 %v206
      %v1740 = vunpack.c.l.b16 %v207
      %v1741 = vunpack.c.l.b16 %v208
      %v1742 = vunpack.c.l.b16 %v209
      %v1743 = vunpack.c.l.b16 %v210
      %v1744 = vunpack.c.l.b16 %v211
      %v1745 = vunpack.c.l.b16 %v212
      %v1746 = vunpack.c.l.b16 %v213
      %v1747 = vunpack.c.l.b16 %v214
      %v1748 = vunpack.c.l.b16 %v215
      %v1749 = vunpack.c.l.b16 %v216
      %v1750 = vunpack.c.l.b16 %v217
      %v1751 = vunpack.c.l.b16 %v218
      %v1752 = vunpack.c.l.b16 %v219
      %v1753 = vunpack.c.l.b16 %v220
      %v1754 = vunpack.c.l.b16 %v221
      %v1755 = vunpack.c.l.b16 %v222
      %v1756 = vunpack.c.l.b16 %v223
      %v1757 = vunpack.c.l.b16 %v224
      %v1758 = vunpack.c.l.b16 %v225
      %v1759 = vunpack.c.l.b16 %v226
      %v1760 = vunpack.c.l.b16 %v227
      %v1761 = vunpack.c.l.b16 %v228
      %v1762 = vunpack.c.l.b16 %v229
      %v1763 = vunpack.c.l.b16 %v230
      %v1764 = vunpack.c.l.b16 %v231
      %v1765 = vunpack.c.l.b16 %v232
      %v1766 = vunpack.c.l.b16 %v233
      %v1767 = vunpack.c.l.b16 %v234
      %v1768 = vunpack.c.l.b16 %v235
      %v1769 = vunpack.c.l.b16 %v236
      %v1770 = vunpack.c.l.b16 %v237
      %v1771 = vunpack.c.l.b16 %v238
      %v1772 = vunpack.c.l.b16 %v239
      %v1773 = vunpack.c.l.b16 %v240
      %v1774 = vunpack.c.l.b16 %v241
      %v1775 = vunpack.c.l.b16 %v242
      %v1776 = vunpack.c.l.b16 %v243
      %v1777 = vunpack.c.l.b16 %v244
      %v1778 = vunpack.c.l.b16 %v245
      %v1779 = vunpack.c.l.b16 %v246
      %v1780 = vunpack.c.l.b16 %v247
      %v1781 = vunpack.c.l.b16 %v248
      %v1782 = vunpack.c.l.b16 %v249
      %v1783 = vunpack.c.l.b16 %v250
      %v1784 = vunpack.c.l.b16 %v251
      %v1785 = vunpack.c.l.b16 %v252
      %v1786 = vunpack.c.l.b16 %v253
      %v1787 = vunpack.c.l.b16 %v254
      %v1788 = vunpack.c.l.b16 %v255
      %v1789 = vunpack.c.l.b16 %v256
      %v1790 = vunpack.c.l.b16 %v257
      %v1791 = vunpack.c.l.b16 %v258
      %v1792 = vunpack.c.l.b16 %v259
      %v1793 = vunpack.c.l.b16 %v260
      %v1794 = vunpack.c.l.b16 %v261
      %v1795 = vunpack.c.l.b16 %v262
      %v1796 = vunpack.c.l.b16 %v263
      %v1797 = vunpack.c.l.b16 %v264
      %v1798 = vunpack.c.l.b16 %v265
      %v1799 = vunpack.c.l.b16 %v266
      %v1800 = vunpack.c.l.b16 %v267
      %v1801 = vunpack.c.l.b16 %v268
      %v1802 = vunpack.c.l.b16 %v269
      %v1803 = vunpack.c.l.b16 %v270
      %v1804 = vunpack.c.l.b16 %v271
      %v1805 = vunpack.c.l.b16 %v272
      %v1806 = vunpack.c.l.b16 %v273
      %v1807 = vunpack.c.l.b16 %v274
      %v1808 = vunpack.c.l.b16 %v275
      %v1809 = vunpack.c.l.b16 %v276
      %v1810 = vunpack.c.l.b16 %v277
      %v1811 = vunpack.c.l.b16 %v278
      %v1812 = vunpack.c.l.b16 %v279
      %v1813 = vunpack.c.l.b16 %v280
      %v1814 = vunpack.c.l.b16 %v281
      %v1815 = vunpack.c.l.b16 %v282
      %v1816 = vunpack.c.l.b16 %v283
      %v1817 = vunpack.c.l.b16 %v284
      %v1818 = vunpack.c.l.b16 %v285
      %v1819 = vunpack.c.l.b16 %v286
      %v1820 = vunpack.c.l.b16 %v287
      %v1821 = vunpack.c.l.b16 %v288
      %v1822 = vunpack.c.l.b16 %v289
      %v1823 = vunpack.c.l.b16 %v290
      %v1824 = vunpack.c.l.b16 %v291
      %v1825 = vunpack.c.l.b16 %v292
      %v1826 = vunpack.c.l.b16 %v293
      %v1827 = vunpack.c.l.b16 %v294
      %v1828 = vunpack.c.l.b16 %v295
      %v1829 = vunpack.c.l.b16 %v296
      %v1830 = vunpack.c.l.b16 %v297
      %v1831 = vunpack.c.l.b16 %v298
      %v1832 = vunpack.c.l.b16 %v299
      %v1833 = vunpack.c.l.b16 %v300
      %v1834 = vunpack.c.l.b16 %v301
      %v1835 = vunpack.c.l.b16 %v302
      %v1836 = vunpack.c.l.b16 %v303
      %v1837 = vunpack.c.l.b16 %v304
      %v1838 = vunpack.c.l.b16 %v305
      %v1839 = vunpack.c.l.b16 %v306
      %v1840 = vunpack.c.l.b16 %v307
      %v1841 = vunpack.c.l.b16 %v308
      %v1842 = vunpack.c.l.b16 %v309
      %v1843 = vunpack.c.l.b16 %v310
      %v1844 = vunpack.c.l.b16 %v311
      %v1845 = vunpack.c.l.b16 %v312
      %v1846 = vunpack.c.l.b16 %v313
      %v1847 = vunpack.c.l.b16 %v314
      %v1848 = vunpack.c.l.b16 %v315
      %v1849 = vunpack.c.l.b16 %v316
      %v1850 = vunpack.c.l.b16 %v317
      %v1851 = vunpack.c.l.b16 %v318
      %v1852 = vunpack.c.l.b16 %v319
      %v1853 = vunpack.c.l.b16 %v320
      %v1854 = vunpack.c.l.b16 %v321
      %v1855 = vunpack.c.l.b16 %v322
      %v1856 = vunpack.c.l.b16 %v323
      %v1857 = vunpack.c.l.b16 %v324
      %v1858 = vunpack.c.l.b16 %v325
      %v1859 = vunpack.c.l.b16 %v326
      %v1860 = vunpack.c.l.b16 %v327
      %v1861 = vunpack.c.l.b16 %v328
      %v1862 = vunpack.c.l.b16 %v329
      %v1863 = vunpack.c.l.b16 %v330
      %v1864 = vunpack.c.l.b16 %v331
      %v1865 = vunpack.c.l.b16 %v332
      %v1866 = vunpack.c.l.b16 %v333
      %v1867 = vunpack.c.l.b16 %v334
      %v1868 = vunpack.c.l.b16 %v335
      %v1869 = vunpack.c.l.b16 %v336
      %v1870 = vunpack.c.l.b16 %v337
      %v1871 = vunpack.c.l.b16 %v338
      %v1872 = vunpack.c.l.b16 %v339
      %v1873 = vunpack.c.l.b16 %v340
      %v1874 = vunpack.c.l.b16 %v341
      %v1875 = vunpack.c.l.b16 %v342
      %v1876 = vunpack.c.l.b16 %v343
      %v1877 = vunpack.c.l.b16 %v344
      %v1878 = vunpack.c.l.b16 %v345
      %v1879 = vunpack.c.l.b16 %v346
      %v1880 = vunpack.c.l.b16 %v347
      %v1881 = vunpack.c.l.b16 %v348
      %v1882 = vunpack.c.l.b16 %v349
      %v1883 = vunpack.c.l.b16 %v350
      %v1884 = vunpack.c.l.b16 %v351
      %v1885 = vunpack.c.l.b16 %v352
      %v1886 = vunpack.c.l.b16 %v353
      %v1887 = vunpack.c.l.b16 %v354
      %v1888 = vunpack.c.l.b16 %v355
      %v1889 = vunpack.c.l.b16 %v356
      %v1890 = vunpack.c.l.b16 %v357
      %v1891 = vunpack.c.l.b16 %v358
      %v1892 = vunpack.c.l.b16 %v359
      %v1893 = vunpack.c.l.b16 %v360
      %v1894 = vunpack.c.l.b16 %v361
      %v1895 = vunpack.c.l.b16 %v362
      %v1896 = vunpack.c.l.b16 %v363
      %v1897 = vunpack.c.l.b16 %v364
      %v1898 = vunpack.c.l.b16 %v365
      %v1899 = vunpack.c.l.b16 %v366
      %v1900 = vunpack.c.l.b16 %v367
      %v1901 = vunpack.c.l.b16 %v368
      %v1902 = vunpack.c.l.b16 %v369
      %v1903 = vunpack.c.l.b16 %v370
      %v1904 = vunpack.c.l.b16 %v371
      %v1905 = vunpack.c.l.b16 %v372
      %v1906 = vunpack.c.l.b16 %v373
      %v1907 = vunpack.c.l.b16 %v374
      %v1908 = vunpack.c.l.b16 %v375
      %v1909 = vunpack.c.l.b16 %v376
      %v1910 = vunpack.c.l.b16 %v377
      %v1911 = vunpack.c.l.b16 %v378
      %v1912 = vunpack.c.l.b16 %v379
      %v1913 = vunpack.c.l.b16 %v380
      %v1914 = vunpack.c.l.b16 %v381
      %v1915 = vunpack.c.l.b16 %v382
      %v1916 = vunpack.c.l.b16 %v383
      %v1917 = vunpack.c.l.b16 %v384
      %v1918 = vunpack.c.l.b16 %v385
      %v1919 = vunpack.c.l.b16 %v386
      %v1920 = vunpack.c.l.b16 %v387
      %v1921 = vunpack.c.l.b16 %v388
      %v1922 = vunpack.c.l.b16 %v389
      %v1923 = vunpack.c.l.b16 %v390
      %v1924 = vunpack.c.l.b16 %v391
      %v1925 = vunpack.c.l.b16 %v392
      %v1926 = vunpack.c.l.b16 %v393
      %v1927 = vunpack.c.l.b16 %v394
      %v1928 = vunpack.c.l.b16 %v395
      %v1929 = vunpack.c.l.b16 %v396
      %v1930 = vunpack.c.l.b16 %v397
      %v1931 = vunpack.c.l.b16 %v398
      %v1932 = vunpack.c.l.b16 %v399
      %v1933 = vunpack.c.l.b16 %v400
      %v1934 = vunpack.c.l.b16 %v401
      %v1935 = vunpack.c.l.b16 %v402
      %v1936 = vunpack.c.l.b16 %v403
      %v1937 = vunpack.c.l.b16 %v404
      %v1938 = vunpack.c.l.b16 %v405
      %v1939 = vunpack.c.l.b16 %v406
      %v1940 = vunpack.c.l.b16 %v407
      %v1941 = vunpack.c.l.b16 %v408
      %v1942 = vunpack.c.l.b16 %v409
      %v1943 = vunpack.c.l.b16 %v410
      %v1944 = vunpack.c.l.b16 %v411
      %v1945 = vunpack.c.l.b16 %v412
      %v1946 = vunpack.c.l.b16 %v413
      %v1947 = vunpack.c.l.b16 %v414
      %v1948 = vunpack.c.l.b16 %v415
      %v1949 = vunpack.c.l.b16 %v416
      %v1950 = vunpack.c.l.b16 %v417
      %v1951 = vunpack.c.l.b16 %v418
      %v1952 = vunpack.c.l.b16 %v419
      %v1953 = vunpack.c.l.b16 %v420
      %v1954 = vunpack.c.l.b16 %v421
      %v1955 = vunpack.c.l.b16 %v422
      %v1956 = vunpack.c.l.b16 %v423
      %v1957 = vunpack.c.l.b16 %v424
      %v1958 = vunpack.c.l.b16 %v425
      %v1959 = vunpack.c.l.b16 %v426
      %v1960 = vunpack.c.l.b16 %v427
      %v1961 = vunpack.c.l.b16 %v428
      %v1962 = vunpack.c.l.b16 %v429
      %v1963 = vunpack.c.l.b16 %v430
      %v1964 = vunpack.c.l.b16 %v431
      %v1965 = vunpack.c.l.b16 %v432
      %v1966 = vunpack.c.l.b16 %v433
      %v1967 = vunpack.c.l.b16 %v434
      %v1968 = vunpack.c.l.b16 %v435
      %v1969 = vunpack.c.l.b16 %v436
      %v1970 = vunpack.c.l.b16 %v437
      %v1971 = vunpack.c.l.b16 %v438
      %v1972 = vunpack.c.l.b16 %v439
      %v1973 = vunpack.c.l.b16 %v440
      %v1974 = vunpack.c.l.b16 %v441
      %v1975 = vunpack.c.l.b16 %v442
      %v1976 = vunpack.c.l.b16 %v443
      %v1977 = vunpack.c.l.b16 %v444
      %v1978 = vunpack.c.l.b16 %v445
      %v1979 = vunpack.c.l.b16 %v446
      %v1980 = vunpack.c.l.b16 %v447
      %v1981 = vunpack.c.l.b16 %v448
      %v1982 = vunpack.c.l.b16 %v449
      %v1983 = vunpack.c.l.b16 %v450
      %v1984 = vunpack.c.l.b16 %v451
      %v1985 = vunpack.c.l.b16 %v452
      %v1986 = vunpack.c.l.b16 %v453
      %v1987 = vunpack.c.l.b16 %v454
      %v1988 = vunpack.c.l.b16 %v455
      %v1989 = vunpack.c.l.b16 %v456
      %v1990 = vunpack.c.l.b16 %v457
      %v1991 = vunpack.c.l.b16 %v458
      %v1992 = vunpack.c.l.b16 %v459
      %v1993 = vunpack.c.l.b16 %v460
      %v1994 = vunpack.c.l.b16 %v461
      %v1995 = vunpack.c.l.b16 %v462
      %v1996 = vunpack.c.l.b16 %v463
      %v1997 = vunpack.c.l.b16 %v464
      %v1998 = vunpack.c.l.b16 %v465
      %v1999 = vunpack.c.l.b16 %v466
      %v2000 = vunpack.c.l.b16 %v467
      %v2001 = vunpack.c.l.b16 %v468
      %v2002 = vunpack.c.l.b16 %v469
      %v2003 = vunpack.c.l.b16 %v470
      %v2004 = vunpack.c.l.b16 %v471
      %v2005 = vunpack.c.l.b16 %v472
      %v2006 = vunpack.c.l.b16 %v473
      %v2007 = vunpack.c.l.b16 %v474
      %v2008 = vunpack.c.l.b16 %v475
      %v2009 = vunpack.c.l.b16 %v476
      %v2010 = vunpack.c.l.b16 %v477
      %v2011 = vunpack.c.l.b16 %v478
      %v2012 = vunpack.c.l.b16 %v479
      %v2013 = vunpack.c.l.b16 %v480
      %v2014 = vunpack.c.l.b16 %v481
      %v2015 = vunpack.c.l.b16 %v482
      %v2016 = vunpack.c.l.b16 %v483
      %v2017 = vunpack.c.l.b16 %v484
      %v2018 = vunpack.c.l.b16 %v485
      %v2019 = vunpack.c.l.b16 %v486
      %v2020 = vunpack.c.l.b16 %v487
      %v2021 = vunpack.c.l.b16 %v488
      %v2022 = vunpack.c.l.b16 %v489
      %v2023 = vunpack.c.l.b16 %v490
      %v2024 = vunpack.c.l.b16 %v491
      %v2025 = vunpack.c.l.b16 %v492
      %v2026 = vunpack.c.l.b16 %v493
      %v2027 = vunpack.c.l.b16 %v494
      %v2028 = vunpack.c.l.b16 %v495
      %v2029 = vunpack.c.l.b16 %v496
      %v2030 = vunpack.c.l.b16 %v497
      %v2031 = vunpack.c.l.b16 %v498
      %v2032 = vunpack.c.l.b16 %v499
      %v2033 = vunpack.c.l.b16 %v500
      %v2034 = vunpack.c.l.b16 %v501
      %v2035 = vunpack.c.l.b16 %v502
      %v2036 = vunpack.c.l.b16 %v503
      %v2037 = vunpack.c.l.b16 %v504
      %v2038 = vunpack.c.l.b16 %v505
      %v2039 = vunpack.c.l.b16 %v506
      %v2040 = vunpack.c.l.b16 %v507
      %v2041 = vunpack.c.l.b16 %v508
      %v2042 = vunpack.c.l.b16 %v509
      %v2043 = vunpack.c.l.b16 %v510
      %v2044 = vunpack.c.l.b16 %v511
      %v2045 = vunpack.c.l.b16 %v512
      %v2046 = vunpack.c.l.b16 %v513
      %v2047 = vunpack.c.l.b16 %v514
      %v2048 = vunpack.c.l.b16 %v515
      %v2049 = vunpack.c.l.b16 %v516
      %v2050 = vunpack.c.l.b16 %v517
      %v2051 = vunpack.c.l.b16 %v518
      %v2052 = vunpack.c.l.b16 %v519
      %v2053 = vunpack.c.l.b16 %v520
      %v2054 = vunpack.c.l.b16 %v521
      %v2055 = vunpack.c.l.b16 %v522
      %v2056 = vunpack.c.l.b16 %v523
      %v2057 = vunpack.c.l.b16 %v524
      %v2058 = vunpack.c.l.b16 %v525
      %v2059 = vunpack.c.l.b16 %v526
      %v2060 = vunpack.c.l.b16 %v527
      %v2061 = vunpack.c.l.b16 %v528
      %v2062 = vunpack.c.l.b16 %v529
      %v2063 = vunpack.c.l.b16 %v530
      %v2064 = vunpack.c.l.b16 %v531
      %v2065 = vunpack.c.l.b16 %v532
      %v2066 = vunpack.c.l.b16 %v533
      %v2067 = vunpack.c.l.b16 %v534
      %v2068 = vunpack.c.l.b16 %v535
      %v2069 = vunpack.c.l.b16 %v536
      %v2070 = vunpack.c.l.b16 %v537
      %v2071 = vunpack.c.l.b16 %v538
      %v2072 = vunpack.c.l.b16 %v539
      %v2073 = vunpack.c.l.b16 %v540
      %v2074 = vunpack.c.l.b16 %v541
      %v2075 = vunpack.c.l.b16 %v542
      %v2076 = vunpack.c.l.b16 %v543
      %v2077 = vunpack.c.l.b16 %v544
      %v2078 = vunpack.c.l.b16 %v545
      %v2079 = vunpack.c.l.b16 %v546
      %v2080 = vunpack.c.l.b16 %v547
      %v2081 = vunpack.c.l.b16 %v548
      %v2082 = vunpack.c.l.b16 %v549
      %v2083 = vunpack.c.l.b16 %v550
      %v2084 = vunpack.c.l.b16 %v551
      %v2085 = vunpack.c.l.b16 %v552
      %v2086 = vunpack.c.l.b16 %v553
      %v2087 = vunpack.c.l.b16 %v554
      %v2088 = vunpack.c.l.b16 %v555
      %v2089 = vunpack.c.l.b16 %v556
      %v2090 = vunpack.c.l.b16 %v557
      %v2091 = vunpack.c.l.b16 %v558
      %v2092 = vunpack.c.l.b16 %v559
      %v2093 = vunpack.c.l.b16 %v560
      %v2094 = vunpack.c.l.b16 %v561
      %v2095 = vunpack.c.l.b16 %v562
      %v2096 = vunpack.c.l.b16 %v563
      %v2097 = vunpack.c.l.b16 %v564
      %v2098 = vunpack.c.l.b16 %v565
      %v2099 = vunpack.c.l.b16 %v566
      %v2100 = vunpack.c.l.b16 %v567
      %v2101 = vunpack.c.l.b16 %v568
      %v2102 = vunpack.c.l.b16 %v569
      %v2103 = vunpack.c.l.b16 %v570
      %v2104 = vunpack.c.l.b16 %v571
      %v2105 = vunpack.c.l.b16 %v572
      %v2106 = vunpack.c.l.b16 %v573
      %v2107 = vunpack.c.l.b16 %v574
      %v2108 = vunpack.c.l.b16 %v575
      %v2109 = vunpack.c.l.b16 %v576
      %v2110 = vunpack.c.l.b16 %v577
      %v2111 = vunpack.c.l.b16 %v578
      %v2112 = vunpack.c.l.b16 %v579
      %v2113 = vunpack.c.l.b16 %v580
      %v2114 = vunpack.c.l.b16 %v581
      %v2115 = vunpack.c.l.b16 %v582
      %v2116 = vunpack.c.l.b16 %v583
      %v2117 = vunpack.c.l.b16 %v584
      %v2118 = vunpack.c.l.b16 %v585
      %v2119 = vunpack.c.l.b16 %v586
      %v2120 = vunpack.c.l.b16 %v587
      %v2121 = vunpack.c.l.b16 %v588
      %v2122 = vunpack.c.l.b16 %v589
      %v2123 = vunpack.c.l.b16 %v590
      %v2124 = vunpack.c.l.b16 %v591
      %v2125 = vunpack.c.l.b16 %v592
      %v2126 = vunpack.c.l.b16 %v593
      %v2127 = vunpack.c.l.b16 %v594
      %v2128 = vunpack.c.l.b16 %v595
      %v2129 = vunpack.c.l.b16 %v596
      %v2130 = vunpack.c.l.b16 %v597
      %v2131 = vunpack.c.l.b16 %v598
      %v2132 = vunpack.c.l.b16 %v599
      %v2133 = vunpack.c.l.b16 %v600
      %v2134 = vunpack.c.l.b16 %v601
      %v2135 = vunpack.c.l.b16 %v602
      %v2136 = vunpack.c.l.b16 %v603
      %v2137 = vunpack.c.l.b16 %v604
      %v2138 = vunpack.c.l.b16 %v605
      %v2139 = vunpack.c.l.b16 %v606
      %v2140 = vunpack.c.l.b16 %v607
      %v2141 = vunpack.c.l.b16 %v608
      %v2142 = vunpack.c.l.b16 %v609
      %v2143 = vunpack.c.l.b16 %v610
      %v2144 = vunpack.c.l.b16 %v611
      %v2145 = vunpack.c.l.b16 %v612
      %v2146 = vunpack.c.l.b16 %v613
      %v2147 = vunpack.c.l.b16 %v614
      %v2148 = vunpack.c.l.b16 %v615
      %v2149 = vunpack.c.l.b16 %v616
      %v2150 = vunpack.c.l.b16 %v617
      %v2151 = vunpack.c.l.b16 %v618
      %v2152 = vunpack.c.l.b16 %v619
      %v2153 = vunpack.c.l.b16 %v620
      %v2154 = vunpack.c.l.b16 %v621
      %v2155 = vunpack.c.l.b16 %v622
      %v2156 = vunpack.c.l.b16 %v623
      %v2157 = vunpack.c.l.b16 %v624
      %v2158 = vunpack.c.l.b16 %v625
      %v2159 = vunpack.c.l.b16 %v626
      %v2160 = vunpack.c.l.b16 %v627
      %v2161 = vunpack.c.l.b16 %v628
      %v2162 = vunpack.c.l.b16 %v629
      %v2163 = vunpack.c.l.b16 %v630
      %v2164 = vunpack.c.l.b16 %v631
      %v2165 = vunpack.c.l.b16 %v632
      %v2166 = vunpack.c.l.b16 %v633
      %v2167 = vunpack.c.l.b16 %v634
      %v2168 = vunpack.c.l.b16 %v635
      %v2169 = vunpack.c.l.b16 %v636
      %v2170 = vunpack.c.l.b16 %v637
      %v2171 = vunpack.c.l.b16 %v638
      %v2172 = vunpack.c.l.b16 %v639
      %v2173 = vunpack.c.l.b16 %v640
      %v2174 = vunpack.c.l.b16 %v641
      %v2175 = vunpack.c.l.b16 %v642
      %v2176 = vunpack.c.l.b16 %v643
      %v2177 = vunpack.c.l.b16 %v644
      %v2178 = vunpack.c.l.b16 %v645
      %v2179 = vunpack.c.l.b16 %v646
      %v2180 = vunpack.c.l.b16 %v647
      %v2181 = vunpack.c.l.b16 %v648
      %v2182 = vunpack.c.l.b16 %v649
      %v2183 = vunpack.c.l.b16 %v650
      %v2184 = vunpack.c.l.b16 %v651
      %v2185 = vunpack.c.l.b16 %v652
      %v2186 = vunpack.c.l.b16 %v653
      %v2187 = vunpack.c.l.b16 %v654
      %v2188 = vunpack.c.l.b16 %v655
      %v2189 = vunpack.c.l.b16 %v656
      %v2190 = vunpack.c.l.b16 %v657
      %v2191 = vunpack.c.l.b16 %v658
      %v2192 = vunpack.c.l.b16 %v659
      %v2193 = vunpack.c.l.b16 %v660
      %v2194 = vunpack.c.l.b16 %v661
      %v2195 = vunpack.c.l.b16 %v662
      %v2196 = vunpack.c.l.b16 %v663
      %v2197 = vunpack.c.l.b16 %v664
      %v2198 = vunpack.c.l.b16 %v665
      %v2199 = vunpack.c.l.b16 %v666
      %v2200 = vunpack.c.l.b16 %v667
      %v2201 = vunpack.c.l.b16 %v668
      %v2202 = vunpack.c.l.b16 %v669
      %v2203 = vunpack.c.l.b16 %v670
      %v2204 = vunpack.c.l.b16 %v671
      %v2205 = vunpack.c.l.b16 %v672
      %v2206 = vunpack.c.l.b16 %v673
      %v2207 = vunpack.c.l.b16 %v674
      %v2208 = vunpack.c.l.b16 %v675
      %v2209 = vunpack.c.l.b16 %v676
      %v2210 = vunpack.c.l.b16 %v677
      %v2211 = vunpack.c.l.b16 %v678
      %v2212 = vunpack.c.l.b16 %v679
      %v2213 = vunpack.c.l.b16 %v680
      %v2214 = vunpack.c.l.b16 %v681
      %v2215 = vunpack.c.l.b16 %v682
      %v2216 = vunpack.c.l.b16 %v683
      %v2217 = vunpack.c.l.b16 %v684
      %v2218 = vunpack.c.l.b16 %v685
      %v2219 = vunpack.c.l.b16 %v686
      %v2220 = vunpack.c.l.b16 %v687
      %v2221 = vunpack.c.l.b16 %v688
      %v2222 = vunpack.c.l.b16 %v689
      %v2223 = vunpack.c.l.b16 %v690
      %v2224 = vunpack.c.l.b16 %v691
      %v2225 = vunpack.c.l.b16 %v692
      %v2226 = vunpack.c.l.b16 %v693
      %v2227 = vunpack.c.l.b16 %v694
      %v2228 = vunpack.c.l.b16 %v695
      %v2229 = vunpack.c.l.b16 %v696
      %v2230 = vunpack.c.l.b16 %v697
      %v2231 = vunpack.c.l.b16 %v698
      %v2232 = vunpack.c.l.b16 %v699
      %v2233 = vunpack.c.l.b16 %v700
      %v2234 = vunpack.c.l.b16 %v701
      %v2235 = vunpack.c.l.b16 %v702
      %v2236 = vunpack.c.l.b16 %v703
      %v2237 = vunpack.c.l.b16 %v704
      %v2238 = vunpack.c.l.b16 %v705
      %v2239 = vunpack.c.l.b16 %v706
      %v2240 = vunpack.c.l.b16 %v707
      %v2241 = vunpack.c.l.b16 %v708
      %v2242 = vunpack.c.l.b16 %v709
      %v2243 = vunpack.c.l.b16 %v710
      %v2244 = vunpack.c.l.b16 %v711
      %v2245 = vunpack.c.l.b16 %v712
      %v2246 = vunpack.c.l.b16 %v713
      %v2247 = vunpack.c.l.b16 %v714
      %v2248 = vunpack.c.l.b16 %v715
      %v2249 = vunpack.c.l.b16 %v716
      %v2250 = vunpack.c.l.b16 %v717
      %v2251 = vunpack.c.l.b16 %v718
      %v2252 = vunpack.c.l.b16 %v719
      %v2253 = vunpack.c.l.b16 %v720
      %v2254 = vunpack.c.l.b16 %v721
      %v2255 = vunpack.c.l.b16 %v722
      %v2256 = vunpack.c.l.b16 %v723
      %v2257 = vunpack.c.l.b16 %v724
      %v2258 = vunpack.c.l.b16 %v725
      %v2259 = vunpack.c.l.b16 %v726
      %v2260 = vunpack.c.l.b16 %v727
      %v2261 = vunpack.c.l.b16 %v728
      %v2262 = vunpack.c.l.b16 %v729
      %v2263 = vunpack.c.l.b16 %v730
      %v2264 = vunpack.c.l.b16 %v731
      %v2265 = vunpack.c.l.b16 %v732
      %v2266 = vunpack.c.l.b16 %v733
      %v2267 = vunpack.c.l.b16 %v734
      %v2268 = vunpack.c.l.b16 %v735
      %v2269 = vunpack.c.l.b16 %v736
      %v2270 = vunpack.c.l.b16 %v737
      %v2271 = vunpack.c.l.b16 %v738
      %v2272 = vunpack.c.l.b16 %v739
      %v2273 = vunpack.c.l.b16 %v740
      %v2274 = vunpack.c.l.b16 %v741
      %v2275 = vunpack.c.l.b16 %v742
      %v2276 = vunpack.c.l.b16 %v743
      %v2277 = vunpack.c.l.b16 %v744
      %v2278 = vunpack.c.l.b16 %v745
      %v2279 = vunpack.c.l.b16 %v746
      %v2280 = vunpack.c.l.b16 %v747
      %v2281 = vunpack.c.l.b16 %v748
      %v2282 = vunpack.c.l.b16 %v749
      %v2283 = vunpack.c.l.b16 %v750
      %v2284 = vunpack.c.l.b16 %v751
      %v2285 = vunpack.c.l.b16 %v752
      %v2286 = vunpack.c.l.b16 %v753
      %v2287 = vunpack.c.l.b16 %v754
      %v2288 = vunpack.c.l.b16 %v755
      %v2289 = vunpack.c.l.b16 %v756
      %v2290 = vunpack.c.l.b16 %v757
      %v2291 = vunpack.c.l.b16 %v758
      %v2292 = vunpack.c.l.b16 %v759
      %v2293 = vunpack.c.l.b16 %v760
      %v2294 = vunpack.c.l.b16 %v761
      %v2295 = vunpack.c.l.b16 %v762
      %v2296 = vunpack.c.l.b16 %v763
      %v2297 = vunpack.c.l.b16 %v764
      %v2298 = vunpack.c.l.b16 %v765
      %v2299 = vunpack.c.l.b16 %v766
      %v2300 = vunpack.c.l.b16 %v767
      %v2301 = vunpack.c.l.b16 %v768
      %v2302 = vunpack.c.l.b16 %v769
      %v2303 = vunpack.c.l.b16 %v770
      %v2304 = vunpack.c.l.b16 %v771
      %v2305 = vunpack.c.l.b16 %v772
      %v2306 = vunpack.c.l.b16 %v773
      %v2307 = vunpack.c.l.b16 %v774
      %v2308 = vunpack.c.l.b16 %v775
      %v2309 = vunpack.c.l.b16 %v776
      %v2310 = vunpack.c.l.b16 %v777
      %v2311 = vunpack.c.l.b16 %v778
      %v2312 = vunpack.c.l.b16 %v779
      %v2313 = vunpack.c.l.b16 %v780
      %v2314 = vunpack.c.l.b16 %v781
      %v2315 = vunpack.c.l.b16 %v782
      %v2316 = vunpack.c.l.b16 %v783
      %v2317 = vunpack.c.l.b16 %v784
      %v2318 = vunpack.c.l.b16 %v785
      %v2319 = vunpack.c.l.b16 %v786
      %v2320 = vunpack.c.l.b16 %v787
      %v2321 = vunpack.c.l.b16 %v788
      %v2322 = vunpack.c.l.b16 %v789
      %v2323 = vunpack.c.l.b16 %v790
      %v2324 = vunpack.c.l.b16 %v791
      %v2325 = vunpack.c.l.b16 %v792
      %v2326 = vunpack.c.l.b16 %v793
      %v2327 = vunpack.c.l.b16 %v794
      %v2328 = vunpack.c.l.b16 %v795
      %v2329 = vunpack.c.l.b16 %v796
      %v2330 = vunpack.c.l.b16 %v797
      %v2331 = vunpack.c.l.b16 %v798
      %v2332 = vunpack.c.l.b16 %v799
      %v2333 = vunpack.c.l.b16 %v800
      %v2334 = vunpack.c.l.b16 %v801
      %v2335 = vunpack.c.l.b16 %v802
      %v2336 = vunpack.c.l.b16 %v803
      %v2337 = vunpack.c.l.b16 %v804
      %v2338 = vunpack.c.l.b16 %v805
      %v2339 = vunpack.c.l.b16 %v806
      %v2340 = vunpack.c.l.b16 %v807
      %v2341 = vunpack.c.l.b16 %v808
      %v2342 = vunpack.c.l.b16 %v809
      %v2343 = vunpack.c.l.b16 %v810
      %v2344 = vunpack.c.l.b16 %v811
      %v2345 = vunpack.c.l.b16 %v812
      %v2346 = vunpack.c.l.b16 %v813
      %v2347 = vunpack.c.l.b16 %v814
      %v2348 = vunpack.c.l.b16 %v815
      %v2349 = vunpack.c.l.b16 %v816
      %v2350 = vunpack.c.l.b16 %v817
      %v2351 = vunpack.c.l.b16 %v818
      %v2352 = vunpack.c.l.b16 %v819
      %v2353 = vunpack.c.l.b16 %v820
      %v2354 = vunpack.c.l.b16 %v821
      %v2355 = vunpack.c.l.b16 %v822
      %v2356 = vunpack.c.l.b16 %v823
      %v2357 = vunpack.c.l.b16 %v824
      %v2358 = vunpack.c.l.b16 %v825
      %v2359 = vunpack.c.l.b16 %v826
      %v2360 = vunpack.c.l.b16 %v827
      %v2361 = vunpack.c.l.b16 %v828
      %v2362 = vunpack.c.l.b16 %v829
      %v2363 = vunpack.c.l.b16 %v830
      %v2364 = vunpack.c.l.b16 %v831
      %v2365 = vunpack.c.l.b16 %v832
      %v2366 = vunpack.c.l.b16 %v833
      %v2367 = vunpack.c.l.b16 %v834
      %v2368 = vunpack.c.l.b16 %v835
      %v2369 = vunpack.c.l.b16 %v836
      %v2370 = vunpack.c.l.b16 %v837
      %v2371 = vunpack.c.l.b16 %v838
      %v2372 = vunpack.c.l.b16 %v839
      %v2373 = vunpack.c.l.b16 %v840
      %v2374 = vunpack.c.l.b16 %v841
      %v2375 = vunpack.c.l.b16 %v842
      %v2376 = vunpack.c.l.b16 %v843
      %v2377 = vunpack.c.l.b16 %v844
      %v2378 = vunpack.c.l.b16 %v845
      %v2379 = vunpack.c.l.b16 %v846
      %v2380 = vunpack.c.l.b16 %v847
      %v2381 = vunpack.c.l.b16 %v848
      %v2382 = vunpack.c.l.b16 %v849
      %v2383 = vunpack.c.l.b16 %v850
      %v2384 = vunpack.c.l.b16 %v851
      %v2385 = vunpack.c.l.b16 %v852
      %v2386 = vunpack.c.l.b16 %v853
      %v2387 = vunpack.c.l.b16 %v854
      %v2388 = vunpack.c.l.b16 %v855
      %v2389 = vunpack.c.l.b16 %v856
      %v2390 = vunpack.c.l.b16 %v857
      %v2391 = vunpack.c.l.b16 %v858
      %v2392 = vunpack.c.l.b16 %v859
      %v2393 = vunpack.c.l.b16 %v860
      %v2394 = vunpack.c.l.b16 %v861
      %v2395 = vunpack.c.l.b16 %v862
      %v2396 = vunpack.c.l.b16 %v863
      %v2397 = vunpack.c.l.b16 %v864
      %v2398 = vunpack.c.l.b16 %v865
      %v2399 = vunpack.c.l.b16 %v866
      %v2400 = vunpack.c.l.b16 %v867
      %v2401 = vunpack.c.l.b16 %v868
      %v2402 = vunpack.c.l.b16 %v869
      %v2403 = vunpack.c.l.b16 %v870
      %v2404 = vunpack.c.l.b16 %v871
      %v2405 = vunpack.c.l.b16 %v872
      %v2406 = vunpack.c.l.b16 %v873
      %v2407 = vunpack.c.l.b16 %v874
      %v2408 = vunpack.c.l.b16 %v875
      %v2409 = vunpack.c.l.b16 %v876
      %v2410 = vunpack.c.l.b16 %v877
      %v2411 = vunpack.c.l.b16 %v878
      %v2412 = vunpack.c.l.b16 %v879
      %v2413 = vunpack.c.l.b16 %v880
      %v2414 = vunpack.c.l.b16 %v881
      %v2415 = vunpack.c.l.b16 %v882
      %v2416 = vunpack.c.l.b16 %v883
      %v2417 = vunpack.c.l.b16 %v884
      %v2418 = vunpack.c.l.b16 %v885
      %v2419 = vunpack.c.l.b16 %v886
      %v2420 = vunpack.c.l.b16 %v887
      %v2421 = vunpack.c.l.b16 %v888
      %v2422 = vunpack.c.l.b16 %v889
      %v2423 = vunpack.c.l.b16 %v890
      %v2424 = vunpack.c.l.b16 %v891
      %v2425 = vunpack.c.l.b16 %v892
      %v2426 = vunpack.c.l.b16 %v893
      %v2427 = vunpack.c.l.b16 %v894
      %v2428 = vunpack.c.l.b16 %v895
      %v2429 = vunpack.c.l.b16 %v896
      %v2430 = vunpack.c.l.b16 %v897
      %v2431 = vunpack.c.l.b16 %v898
      %v2432 = vunpack.c.l.b16 %v899
      %v2433 = vunpack.c.l.b16 %v900
      %v2434 = vunpack.c.l.b16 %v901
      %v2435 = vunpack.c.l.b16 %v902
      %v2436 = vunpack.c.l.b16 %v903
      %v2437 = vunpack.c.l.b16 %v904
      %v2438 = vunpack.c.l.b16 %v905
      %v2439 = vunpack.c.l.b16 %v906
      %v2440 = vunpack.c.l.b16 %v907
      %v2441 = vunpack.c.l.b16 %v908
      %v2442 = vunpack.c.l.b16 %v909
      %v2443 = vunpack.c.l.b16 %v910
      %v2444 = vunpack.c.l.b16 %v911
      %v2445 = vunpack.c.l.b16 %v912
      %v2446 = vunpack.c.l.b16 %v913
      %v2447 = vunpack.c.l.b16 %v914
      %v2448 = vunpack.c.l.b16 %v915
      %v2449 = vunpack.c.l.b16 %v916
      %v2450 = vunpack.c.l.b16 %v917
      %v2451 = vunpack.c.l.b16 %v918
      %v2452 = vunpack.c.l.b16 %v919
      %v2453 = vunpack.c.l.b16 %v920
      %v2454 = vunpack.c.l.b16 %v921
      %v2455 = vunpack.c.l.b16 %v922
      %v2456 = vunpack.c.l.b16 %v923
      %v2457 = vunpack.c.l.b16 %v924
      %v2458 = vunpack.c.l.b16 %v925
      %v2459 = vunpack.c.l.b16 %v926
      %v2460 = vunpack.c.l.b16 %v927
      %v2461 = vunpack.c.l.b16 %v928
      %v2462 = vunpack.c.l.b16 %v929
      %v2463 = vunpack.c.l.b16 %v930
      %v2464 = vunpack.c.l.b16 %v931
      %v2465 = vunpack.c.l.b16 %v932
      %v2466 = vunpack.c.l.b16 %v933
      %v2467 = vunpack.c.l.b16 %v934
      %v2468 = vunpack.c.l.b16 %v935
      %v2469 = vunpack.c.l.b16 %v936
      %v2470 = vpack.c.b16 %v1709, %v1708
      %v2471 = vpack.c.b16 %v1711, %v1710
      %v2472 = vpack.c.b16 %v1713, %v1712
      %v2473 = vpack.c.b16 %v1715, %v1714
      %v2474 = vpack.c.b16 %v1717, %v1716
      %v2475 = vpack.c.b16 %v1719, %v1718
      %v2476 = vpack.c.b16 %v1721, %v1720
      %v2477 = vpack.c.b16 %v1723, %v1722
      %v2478 = vpack.c.b16 %v1725, %v1724
      %v2479 = vpack.c.b16 %v1727, %v1726
      %v2480 = vpack.c.b16 %v1729, %v1728
      %v2481 = vpack.c.b16 %v1731, %v1730
      %v2482 = vpack.c.b16 %v1733, %v1732
      %v2483 = vpack.c.b16 %v1735, %v1734
      %v2484 = vpack.c.b16 %v1737, %v1736
      %v2485 = vpack.c.b16 %v1739, %v1738
      %v2486 = vpack.c.b16 %v1741, %v1740
      %v2487 = vpack.c.b16 %v1743, %v1742
      %v2488 = vpack.c.b16 %v1745, %v1744
      %v2489 = vpack.c.b16 %v1747, %v1746
      %v2490 = vpack.c.b16 %v1749, %v1748
      %v2491 = vpack.c.b16 %v1751, %v1750
      %v2492 = vpack.c.b16 %v1753, %v1752
      %v2493 = vpack.c.b16 %v1755, %v1754
      %v2494 = vpack.c.b16 %v1757, %v1756
      %v2495 = vpack.c.b16 %v1759, %v1758
      %v2496 = vpack.c.b16 %v1761, %v1760
      %v2497 = vpack.c.b16 %v1763, %v1762
      %v2498 = vpack.c.b16 %v1765, %v1764
      %v2499 = vpack.c.b16 %v1767, %v1766
      %v2500 = vpack.c.b16 %v1769, %v1768
      %v2501 = vpack.c.b16 %v1771, %v1770
      %v2502 = vpack.c.b16 %v1773, %v1772
      %v2503 = vpack.c.b16 %v1775, %v1774
      %v2504 = vpack.c.b16 %v1777, %v1776
      %v2505 = vpack.c.b16 %v1779, %v1778
      %v2506 = vpack.c.b16 %v1781, %v1780
      %v2507 = vpack.c.b16 %v1783, %v1782
      %v2508 = vpack.c.b16 %v1785, %v1784
      %v2509 = vpack.c.b16 %v1787, %v1786
      %v2510 = vpack.c.b16 %v1789, %v1788
      %v2511 = vpack.c.b16 %v1791, %v1790
      %v2512 = vpack.c.b16 %v1793, %v1792
      %v2513 = vpack.c.b16 %v1795, %v1794
      %v2514 = vpack.c.b16 %v1797, %v1796
      %v2515 = vpack.c.b16 %v1799, %v1798
      %v2516 = vpack.c.b16 %v1801, %v1800
      %v2517 = vpack.c.b16 %v1803, %v1802
      %v2518 = vpack.c.b16 %v1805, %v1804
      %v2519 = vpack.c.b16 %v1807, %v1806
      %v2520 = vpack.c.b16 %v1809, %v1808
      %v2521 = vpack.c.b16 %v1811, %v1810
      %v2522 = vpack.c.b16 %v1813, %v1812
      %v2523 = vpack.c.b16 %v1815, %v1814
      %v2524 = vpack.c.b16 %v1817, %v1816
      %v2525 = vpack.c.b16 %v1819, %v1818
      %v2526 = vpack.c.b16 %v1821, %v1820
      %v2527 = vpack.c.b16 %v1823, %v1822
      %v2528 = vpack.c.b16 %v1825, %v1824
      %v2529 = vpack.c.b16 %v1827, %v1826
      %v2530 = vpack.c.b16 %v1829, %v1828
      %v2531 = vpack.c.b16 %v1831, %v1830
      %v2532 = vpack.c.b16 %v1833, %v1832
      %v2533 = vpack.c.b16 %v1835, %v1834
      %v2534 = vpack.c.b16 %v1837, %v1836
      %v2535 = vpack.c.b16 %v1839, %v1838
      %v2536 = vpack.c.b16 %v1841, %v1840
      %v2537 = vpack.c.b16 %v1843, %v1842
      %v2538 = vpack.c.b16 %v1845, %v1844
      %v2539 = vpack.c.b16 %v1847, %v1846
      %v2540 = vpack.c.b16 %v1849, %v1848
      %v2541 = vpack.c.b16 %v1851, %v1850
      %v2542 = vpack.c.b16 %v1853, %v1852
      %v2543 = vpack.c.b16 %v1855, %v1854
      %v2544 = vpack.c.b16 %v1857, %v1856
      %v2545 = vpack.c.b16 %v1859, %v1858
      %v2546 = vpack.c.b16 %v1861, %v1860
      %v2547 = vpack.c.b16 %v1863, %v1862
      %v2548 = vpack.c.b16 %v1865, %v1864
      %v2549 = vpack.c.b16 %v1867, %v1866
      %v2550 = vpack.c.b16 %v1869, %v1868
      %v2551 = vpack.c.b16 %v1871, %v1870
      %v2552 = vpack.c.b16 %v1873, %v1872
      %v2553 = vpack.c.b16 %v1875, %v1874
      %v2554 = vpack.c.b16 %v1877, %v1876
      %v2555 = vpack.c.b16 %v1879, %v1878
      %v2556 = vpack.c.b16 %v1881, %v1880
      %v2557 = vpack.c.b16 %v1883, %v1882
      %v2558 = vpack.c.b16 %v1885, %v1884
      %v2559 = vpack.c.b16 %v1887, %v1886
      %v2560 = vpack.c.b16 %v1889, %v1888
      %v2561 = vpack.c.b16 %v1891, %v1890
      %v2562 = vpack.c.b16 %v1893, %v1892
      %v2563 = vpack.c.b16 %v1895, %v1894
      %v2564 = vpack.c.b16 %v1897, %v1896
      %v2565 = vpack.c.b16 %v1899, %v1898
      %v2566 = vpack.c.b16 %v1901, %v1900
      %v2567 = vpack.c.b16 %v1903, %v1902
      %v2568 = vpack.c.b16 %v1905, %v1904
      %v2569 = vpack.c.b16 %v1907, %v1906
      %v2570 = vpack.c.b16 %v1909, %v1908
      %v2571 = vpack.c.b16 %v1911, %v1910
      %v2572 = vpack.c.b16 %v1913, %v1912
      %v2573 = vpack.c.b16 %v1915, %v1914
      %v2574 = vpack.c.b16 %v1917, %v1916
      %v2575 = vpack.c.b16 %v1919, %v1918
      %v2576 = vpack.c.b16 %v1921, %v1920
      %v2577 = vpack.c.b16 %v1923, %v1922
      %v2578 = vpack.c.b16 %v1925, %v1924
      %v2579 = vpack.c.b16 %v1927, %v1926
      %v2580 = vpack.c.b16 %v1929, %v1928
      %v2581 = vpack.c.b16 %v1931, %v1930
      %v2582 = vpack.c.b16 %v1933, %v1932
      %v2583 = vpack.c.b16 %v1935, %v1934
      %v2584 = vpack.c.b16 %v1937, %v1936
      %v2585 = vpack.c.b16 %v1939, %v1938
      %v2586 = vpack.c.b16 %v1941, %v1940
      %v2587 = vpack.c.b16 %v1943, %v1942
      %v2588 = vpack.c.b16 %v1945, %v1944
      %v2589 = vpack.c.b16 %v1947, %v1946
      %v2590 = vpack.c.b16 %v1949, %v1948
      %v2591 = vpack.c.b16 %v1951, %v1950
      %v2592 = vpack.c.b16 %v1953, %v1952
      %v2593 = vpack.c.b16 %v1955, %v1954
      %v2594 = vpack.c.b16 %v1957, %v1956
      %v2595 = vpack.c.b16 %v1959, %v1958
      %v2596 = vpack.c.b16 %v1961, %v1960
      %v2597 = vpack.c.b16 %v1963, %v1962
      %v2598 = vpack.c.b16 %v1965, %v1964
      %v2599 = vpack.c.b16 %v1967, %v1966
      %v2600 = vpack.c.b16 %v1969, %v1968
      %v2601 = vpack.c.b16 %v1971, %v1970
      %v2602 = vpack.c.b16 %v1973, %v1972
      %v2603 = vpack.c.b16 %v1975, %v1974
      %v2604 = vpack.c.b16 %v1977, %v1976
      %v2605 = vpack.c.b16 %v1979, %v1978
      %v2606 = vpack.c.b16 %v1981, %v1980
      %v2607 = vpack.c.b16 %v1983, %v1982
      %v2608 = vpack.c.b16 %v1985, %v1984
      %v2609 = vpack.c.b16 %v1987, %v1986
      %v2610 = vpack.c.b16 %v1989, %v1988
      %v2611 = vpack.c.b16 %v1991, %v1990
      %v2612 = vpack.c.b16 %v1993, %v1992
      %v2613 = vpack.c.b16 %v1995, %v1994
      %v2614 = vpack.c.b16 %v1997, %v1996
      %v2615 = vpack.c.b16 %v1999, %v1998
      %v2616 = vpack.c.b16 %v2001, %v2000
      %v2617 = vpack.c.b16 %v2003, %v2002
      %v2618 = vpack.c.b16 %v2005, %v2004
      %v2619 = vpack.c.b16 %v2007, %v2006
      %v2620 = vpack.c.b16 %v2009, %v2008
      %v2621 = vpack.c.b16 %v2011, %v2010
      %v2622 = vpack.c.b16 %v2013, %v2012
      %v2623 = vpack.c.b16 %v2015, %v2014
      %v2624 = vpack.c.b16 %v2017, %v2016
      %v2625 = vpack.c.b16 %v2019, %v2018
      %v2626 = vpack.c.b16 %v2021, %v2020
      %v2627 = vpack.c.b16 %v2023, %v2022
      %v2628 = vpack.c.b16 %v2025, %v2024
      %v2629 = vpack.c.b16 %v2027, %v2026
      %v2630 = vpack.c.b16 %v2029, %v2028
      %v2631 = vpack.c.b16 %v2031, %v2030
      %v2632 = vpack.c.b16 %v2033, %v2032
      %v2633 = vpack.c.b16 %v2035, %v2034
      %v2634 = vpack.c.b16 %v2037, %v2036
      %v2635 = vpack.c.b16 %v2039, %v2038
      %v2636 = vpack.c.b16 %v2041, %v2040
      %v2637 = vpack.c.b16 %v2043, %v2042
      %v2638 = vpack.c.b16 %v2045, %v2044
      %v2639 = vpack.c.b16 %v2047, %v2046
      %v2640 = vpack.c.b16 %v2049, %v2048
      %v2641 = vpack.c.b16 %v2051, %v2050
      %v2642 = vpack.c.b16 %v2053, %v2052
      %v2643 = vpack.c.b16 %v2055, %v2054
      %v2644 = vpack.c.b16 %v2057, %v2056
      %v2645 = vpack.c.b16 %v2059, %v2058
      %v2646 = vpack.c.b16 %v2061, %v2060
      %v2647 = vpack.c.b16 %v2063, %v2062
      %v2648 = vpack.c.b16 %v2065, %v2064
      %v2649 = vpack.c.b16 %v2067, %v2066
      %v2650 = vpack.c.b16 %v2069, %v2068
      %v2651 = vpack.c.b16 %v2071, %v2070
      %v2652 = vpack.c.b16 %v2073, %v2072
      %v2653 = vpack.c.b16 %v2075, %v2074
      %v2654 = vpack.c.b16 %v2077, %v2076
      %v2655 = vpack.c.b16 %v2079, %v2078
      %v2656 = vpack.c.b16 %v2081, %v2080
      %v2657 = vpack.c.b16 %v2083, %v2082
      %v2658 = vpack.c.b16 %v2085, %v2084
      %v2659 = vpack.c.b16 %v2087, %v2086
      %v2660 = vpack.c.b16 %v2089, %v2088
      %v2661 = vpack.c.b16 %v2091, %v2090
      %v2662 = vpack.c.b16 %v2093, %v2092
      %v2663 = vpack.c.b16 %v2095, %v2094
      %v2664 = vpack.c.b16 %v2097, %v2096
      %v2665 = vpack.c.b16 %v2099, %v2098
      %v2666 = vpack.c.b16 %v2101, %v2100
      %v2667 = vpack.c.b16 %v2103, %v2102
      %v2668 = vpack.c.b16 %v2105, %v2104
      %v2669 = vpack.c.b16 %v2107, %v2106
      %v2670 = vpack.c.b16 %v2109, %v2108
      %v2671 = vpack.c.b16 %v2111, %v2110
      %v2672 = vpack.c.b16 %v2113, %v2112
      %v2673 = vpack.c.b16 %v2115, %v2114
      %v2674 = vpack.c.b16 %v2117, %v2116
      %v2675 = vpack.c.b16 %v2119, %v2118
      %v2676 = vpack.c.b16 %v2121, %v2120
      %v2677 = vpack.c.b16 %v2123, %v2122
      %v2678 = vpack.c.b16 %v2125, %v2124
      %v2679 = vpack.c.b16 %v2127, %v2126
      %v2680 = vpack.c.b16 %v2129, %v2128
      %v2681 = vpack.c.b16 %v2131, %v2130
      %v2682 = vpack.c.b16 %v2133, %v2132
      %v2683 = vpack.c.b16 %v2135, %v2134
      %v2684 = vpack.c.b16 %v2137, %v2136
      %v2685 = vpack.c.b16 %v2139, %v2138
      %v2686 = vpack.c.b16 %v2141, %v2140
      %v2687 = vpack.c.b16 %v2143, %v2142
      %v2688 = vpack.c.b16 %v2145, %v2144
      %v2689 = vpack.c.b16 %v2147, %v2146
      %v2690 = vpack.c.b16 %v2149, %v2148
      %v2691 = vpack.c.b16 %v2151, %v2150
      %v2692 = vpack.c.b16 %v2153, %v2152
      %v2693 = vpack.c.b16 %v2155, %v2154
      %v2694 = vpack.c.b16 %v2157, %v2156
      %v2695 = vpack.c.b16 %v2159, %v2158
      %v2696 = vpack.c.b16 %v2161, %v2160
      %v2697 = vpack.c.b16 %v2163, %v2162
      %v2698 = vpack.c.b16 %v2165, %v2164
      %v2699 = vpack.c.b16 %v2167, %v2166
      %v2700 = vpack.c.b16 %v2169, %v2168
      %v2701 = vpack.c.b16 %v2171, %v2170
      %v2702 = vpack.c.b16 %v2173, %v2172
      %v2703 = vpack.c.b16 %v2175, %v2174
      %v2704 = vpack.c.b16 %v2177, %v2176
      %v2705 = vpack.c.b16 %v2179, %v2178
      %v2706 = vpack.c.b16 %v2181, %v2180
      %v2707 = vpack.c.b16 %v2183, %v2182
      %v2708 = vpack.c.b16 %v2185, %v2184
      %v2709 = vpack.c.b16 %v2187, %v2186
      %v2710 = vpack.c.b16 %v2189, %v2188
      %v2711 = vpack.c.b16 %v2191, %v2190
      %v2712 = vpack.c.b16 %v2193, %v2192
      %v2713 = vpack.c.b16 %v2195, %v2194
      %v2714 = vpack.c.b16 %v2197, %v2196
      %v2715 = vpack.c.b16 %v2199, %v2198
      %v2716 = vpack.c.b16 %v2201, %v2200
      %v2717 = vpack.c.b16 %v2203, %v2202
      %v2718 = vpack.c.b16 %v2205, %v2204
      %v2719 = vpack.c.b16 %v2207, %v2206
      %v2720 = vpack.c.b16 %v2209, %v2208
      %v2721 = vpack.c.b16 %v2211, %v2210
      %v2722 = vpack.c.b16 %v2213, %v2212
      %v2723 = vpack.c.b16 %v2215, %v2214
      %v2724 = vpack.c.b16 %v2217, %v2216
      %v2725 = vpack.c.b16 %v2219, %v2218
      %v2726 = vpack.c.b16 %v2221, %v2220
      %v2727 = vpack.c.b16 %v2223, %v2222
      %v2728 = vpack.c.b16 %v2225, %v2224
      %v2729 = vpack.c.b16 %v2227, %v2226
      %v2730 = vpack.c.b16 %v2229, %v2228
      %v2731 = vpack.c.b16 %v2231, %v2230
      %v2732 = vpack.c.b16 %v2233, %v2232
      %v2733 = vpack.c.b16 %v2235, %v2234
      %v2734 = vpack.c.b16 %v2237, %v2236
      %v2735 = vpack.c.b16 %v2239, %v2238
      %v2736 = vpack.c.b16 %v2241, %v2240
      %v2737 = vpack.c.b16 %v2243, %v2242
      %v2738 = vpack.c.b16 %v2245, %v2244
      %v2739 = vpack.c.b16 %v2247, %v2246
      %v2740 = vpack.c.b16 %v2249, %v2248
      %v2741 = vpack.c.b16 %v2251, %v2250
      %v2742 = vpack.c.b16 %v2253, %v2252
      %v2743 = vpack.c.b16 %v2255, %v2254
      %v2744 = vpack.c.b16 %v2257, %v2256
      %v2745 = vpack.c.b16 %v2259, %v2258
      %v2746 = vpack.c.b16 %v2261, %v2260
      %v2747 = vpack.c.b16 %v2263, %v2262
      %v2748 = vpack.c.b16 %v2265, %v2264
      %v2749 = vpack.c.b16 %v2267, %v2266
      %v2750 = vpack.c.b16 %v2269, %v2268
      %v2751 = vpack.c.b16 %v2271, %v2270
      %v2752 = vpack.c.b16 %v2273, %v2272
      %v2753 = vpack.c.b16 %v2275, %v2274
      %v2754 = vpack.c.b16 %v2277, %v2276
      %v2755 = vpack.c.b16 %v2279, %v2278
      %v2756 = vpack.c.b16 %v2281, %v2280
      %v2757 = vpack.c.b16 %v2283, %v2282
      %v2758 = vpack.c.b16 %v2285, %v2284
      %v2759 = vpack.c.b16 %v2287, %v2286
      %v2760 = vpack.c.b16 %v2289, %v2288
      %v2761 = vpack.c.b16 %v2291, %v2290
      %v2762 = vpack.c.b16 %v2293, %v2292
      %v2763 = vpack.c.b16 %v2295, %v2294
      %v2764 = vpack.c.b16 %v2297, %v2296
      %v2765 = vpack.c.b16 %v2299, %v2298
      %v2766 = vpack.c.b16 %v2301, %v2300
      %v2767 = vpack.c.b16 %v2303, %v2302
      %v2768 = vpack.c.b16 %v2305, %v2304
      %v2769 = vpack.c.b16 %v2307, %v2306
      %v2770 = vpack.c.b16 %v2309, %v2308
      %v2771 = vpack.c.b16 %v2311, %v2310
      %v2772 = vpack.c.b16 %v2313, %v2312
      %v2773 = vpack.c.b16 %v2315, %v2314
      %v2774 = vpack.c.b16 %v2317, %v2316
      %v2775 = vpack.c.b16 %v2319, %v2318
      %v2776 = vpack.c.b16 %v2321, %v2320
      %v2777 = vpack.c.b16 %v2323, %v2322
      %v2778 = vpack.c.b16 %v2325, %v2324
      %v2779 = vpack.c.b16 %v2327, %v2326
      %v2780 = vpack.c.b16 %v2329, %v2328
      %v2781 = vpack.c.b16 %v2331, %v2330
      %v2782 = vpack.c.b16 %v2333, %v2332
      %v2783 = vpack.c.b16 %v2335, %v2334
      %v2784 = vpack.c.b16 %v2337, %v2336
      %v2785 = vpack.c.b16 %v2339, %v2338
      %v2786 = vpack.c.b16 %v2341, %v2340
      %v2787 = vpack.c.b16 %v2343, %v2342
      %v2788 = vpack.c.b16 %v2345, %v2344
      %v2789 = vpack.c.b16 %v2347, %v2346
      %v2790 = vpack.c.b16 %v2349, %v2348
      %v2791 = vpack.c.b16 %v2351, %v2350
      %v2792 = vpack.c.b16 %v2353, %v2352
      %v2793 = vpack.c.b16 %v2355, %v2354
      %v2794 = vpack.c.b16 %v2357, %v2356
      %v2795 = vpack.c.b16 %v2359, %v2358
      %v2796 = vpack.c.b16 %v2361, %v2360
      %v2797 = vpack.c.b16 %v2363, %v2362
      %v2798 = vpack.c.b16 %v2365, %v2364
      %v2799 = vpack.c.b16 %v2367, %v2366
      %v2800 = vpack.c.b16 %v2369, %v2368
      %v2801 = vpack.c.b16 %v2371, %v2370
      %v2802 = vpack.c.b16 %v2373, %v2372
      %v2803 = vpack.c.b16 %v2375, %v2374
      %v2804 = vpack.c.b16 %v2377, %v2376
      %v2805 = vpack.c.b16 %v2379, %v2378
      %v2806 = vpack.c.b16 %v2381, %v2380
      %v2807 = vpack.c.b16 %v2383, %v2382
      %v2808 = vpack.c.b16 %v2385, %v2384
      %v2809 = vpack.c.b16 %v2387, %v2386
      %v2810 = vpack.c.b16 %v2389, %v2388
      %v2811 = vpack.c.b16 %v2391, %v2390
      %v2812 = vpack.c.b16 %v2393, %v2392
      %v2813 = vpack.c.b16 %v2395, %v2394
      %v2814 = vpack.c.b16 %v2397, %v2396
      %v2815 = vpack.c.b16 %v2399, %v2398
      %v2816 = vpack.c.b16 %v2401, %v2400
      %v2817 = vpack.c.b16 %v2403, %v2402
      %v2818 = vpack.c.b16 %v2405, %v2404
      %v2819 = vpack.c.b16 %v2407, %v2406
      %v2820 = vpack.c.b16 %v2409, %v2408
      %v2821 = vpack.c.b16 %v2411, %v2410
      %v2822 = vpack.c.b16 %v2413, %v2412
      %v2823 = vpack.c.b16 %v2415, %v2414
      %v2824 = vpack.c.b16 %v2417, %v2416
      %v2825 = vpack.c.b16 %v2419, %v2418
      %v2826 = vpack.c.b16 %v2421, %v2420
      %v2827 = vpack.c.b16 %v2423, %v2422
      %v2828 = vpack.c.b16 %v2425, %v2424
      %v2829 = vpack.c.b16 %v2427, %v2426
      %v2830 = vpack.c.b16 %v2429, %v2428
      %v2831 = vpack.c.b16 %v2431, %v2430
      %v2832 = vpack.c.b16 %v2433, %v2432
      %v2833 = vpack.c.b16 %v2435, %v2434
      %v2834 = vpack.c.b16 %v2437, %v2436
      %v2835 = vpack.c.b16 %v2439, %v2438
      %v2836 = vpack.c.b16 %v2441, %v2440
      %v2837 = vpack.c.b16 %v2443, %v2442
      %v2838 = vpack.c.b16 %v2445, %v2444
      %v2839 = vpack.c.b16 %v2447, %v2446
      %v2840 = vpack.c.b16 %v2449, %v2448
      %v2841 = vpack.c.b16 %v2451, %v2450
      %v2842 = vpack.c.b16 %v2453, %v2452
      %v2843 = vpack.c.b16 %v2455, %v2454
      %v2844 = vpack.c.b16 %v2457, %v2456
      %v2845 = vpack.c.b16 %v2459, %v2458
      %v2846 = vpack.c.b16 %v2461, %v2460
      %v2847 = vpack.c.b16 %v2463, %v2462
      %v2848 = vpack.c.b16 %v2465, %v2464
      %v2849 = vpack.c.b16 %v2467, %v2466
      %v2850 = vpack.c.b16 %v2469, %v2468
      %v2853 = vunpack.c.l.b16 %v937
      %v2854 = vunpack.c.l.b16 %v938
      %v2855 = vpack.c.b16 %v2854, %v2853
      %vm2856 = vcmask 72704
      %v2858 = vsel %vm2856, %v2470, 0
      %v2861 = vsel %vm2856, %v2471, 0
      %v2864 = vsel %vm2856, %v2472, 0
      %v2867 = vsel %vm2856, %v2473, 0
      %v2870 = vsel %vm2856, %v2474, 0
      %v2873 = vsel %vm2856, %v2475, 0
      %v2876 = vsel %vm2856, %v2476, 0
      %v2879 = vsel %vm2856, %v2477, 0
      %v2882 = vsel %vm2856, %v2478, 0
      %v2885 = vsel %vm2856, %v2479, 0
      %v2888 = vsel %vm2856, %v2480, 0
      %v2891 = vsel %vm2856, %v2481, 0
      %v2894 = vsel %vm2856, %v2482, 0
      %v2897 = vsel %vm2856, %v2483, 0
      %v2900 = vsel %vm2856, %v2484, 0
      %v2903 = vsel %vm2856, %v2485, 0
      %v2906 = vsel %vm2856, %v2486, 0
      %v2909 = vsel %vm2856, %v2487, 0
      %v2912 = vsel %vm2856, %v2488, 0
      %v2915 = vsel %vm2856, %v2489, 0
      %v2918 = vsel %vm2856, %v2490, 0
      %v2921 = vsel %vm2856, %v2491, 0
      %v2924 = vsel %vm2856, %v2492, 0
      %v2927 = vsel %vm2856, %v2493, 0
      %v2930 = vsel %vm2856, %v2494, 0
      %v2933 = vsel %vm2856, %v2495, 0
      %v2936 = vsel %vm2856, %v2496, 0
      %v2939 = vsel %vm2856, %v2497, 0
      %v2942 = vsel %vm2856, %v2498, 0
      %v2945 = vsel %vm2856, %v2499, 0
      %v2948 = vsel %vm2856, %v2500, 0
      %v2951 = vsel %vm2856, %v2501, 0
      %v2954 = vsel %vm2856, %v2502, 0
      %v2957 = vsel %vm2856, %v2503, 0
      %v2960 = vsel %vm2856, %v2504, 0
      %v2963 = vsel %vm2856, %v2505, 0
      %v2966 = vsel %vm2856, %v2506, 0
      %v2969 = vsel %vm2856, %v2507, 0
      %v2972 = vsel %vm2856, %v2508, 0
      %v2975 = vsel %vm2856, %v2509, 0
      %v2978 = vsel %vm2856, %v2510, 0
      %v2981 = vsel %vm2856, %v2511, 0
      %v2984 = vsel %vm2856, %v2512, 0
      %v2987 = vsel %vm2856, %v2513, 0
      %v2990 = vsel %vm2856, %v2514, 0
      %v2993 = vsel %vm2856, %v2515, 0
      %v2996 = vsel %vm2856, %v2516, 0
      %v2999 = vsel %vm2856, %v2517, 0
      %v3002 = vsel %vm2856, %v2518, 0
      %v3005 = vsel %vm2856, %v2519, 0
      %v3008 = vsel %vm2856, %v2520, 0
      %v3011 = vsel %vm2856, %v2521, 0
      %v3014 = vsel %vm2856, %v2522, 0
      %v3017 = vsel %vm2856, %v2523, 0
      %v3020 = vsel %vm2856, %v2524, 0
      %v3023 = vsel %vm2856, %v2525, 0
      %v3026 = vsel %vm2856, %v2526, 0
      %v3029 = vsel %vm2856, %v2527, 0
      %v3032 = vsel %vm2856, %v2528, 0
      %v3035 = vsel %vm2856, %v2529, 0
      %v3038 = vsel %vm2856, %v2530, 0
      %v3041 = vsel %vm2856, %v2531, 0
      %v3044 = vsel %vm2856, %v2532, 0
      %v3047 = vsel %vm2856, %v2533, 0
      %v3050 = vsel %vm2856, %v2534, 0
      %v3053 = vsel %vm2856, %v2535, 0
      %v3056 = vsel %vm2856, %v2536, 0
      %v3059 = vsel %vm2856, %v2537, 0
      %v3062 = vsel %vm2856, %v2538, 0
      %v3065 = vsel %vm2856, %v2539, 0
      %v3068 = vsel %vm2856, %v2540, 0
      %v3071 = vsel %vm2856, %v2541, 0
      %v3074 = vsel %vm2856, %v2542, 0
      %v3077 = vsel %vm2856, %v2543, 0
      %v3080 = vsel %vm2856, %v2544, 0
      %v3083 = vsel %vm2856, %v2545, 0
      %v3086 = vsel %vm2856, %v2546, 0
      %v3089 = vsel %vm2856, %v2547, 0
      %v3092 = vsel %vm2856, %v2548, 0
      %v3095 = vsel %vm2856, %v2549, 0
      %v3098 = vsel %vm2856, %v2550, 0
      %v3101 = vsel %vm2856, %v2551, 0
      %v3104 = vsel %vm2856, %v2552, 0
      %v3107 = vsel %vm2856, %v2553, 0
      %v3110 = vsel %vm2856, %v2554, 0
      %v3113 = vsel %vm2856, %v2555, 0
      %v3116 = vsel %vm2856, %v2556, 0
      %v3119 = vsel %vm2856, %v2557, 0
      %v3122 = vsel %vm2856, %v2558, 0
      %v3125 = vsel %vm2856, %v2559, 0
      %v3128 = vsel %vm2856, %v2560, 0
      %v3131 = vsel %vm2856, %v2561, 0
      %v3134 = vsel %vm2856, %v2562, 0
      %v3137 = vsel %vm2856, %v2563, 0
      %v3140 = vsel %vm2856, %v2564, 0
      %v3143 = vsel %vm2856, %v2565, 0
      %v3146 = vsel %vm2856, %v2566, 0
      %v3149 = vsel %vm2856, %v2567, 0
      %v3152 = vsel %vm2856, %v2568, 0
      %v3155 = vsel %vm2856, %v2569, 0
      %v3158 = vsel %vm2856, %v2570, 0
      %v3161 = vsel %vm2856, %v2571, 0
      %v3164 = vsel %vm2856, %v2572, 0
      %v3167 = vsel %vm2856, %v2573, 0
      %v3170 = vsel %vm2856, %v2574, 0
      %v3173 = vsel %vm2856, %v2575, 0
      %v3176 = vsel %vm2856, %v2576, 0
      %v3179 = vsel %vm2856, %v2577, 0
      %v3182 = vsel %vm2856, %v2578, 0
      %v3185 = vsel %vm2856, %v2579, 0
      %v3188 = vsel %vm2856, %v2580, 0
      %v3191 = vsel %vm2856, %v2581, 0
      %v3194 = vsel %vm2856, %v2582, 0
      %v3197 = vsel %vm2856, %v2583, 0
      %v3200 = vsel %vm2856, %v2584, 0
      %v3203 = vsel %vm2856, %v2585, 0
      %v3206 = vsel %vm2856, %v2586, 0
      %v3209 = vsel %vm2856, %v2587, 0
      %v3212 = vsel %vm2856, %v2588, 0
      %v3215 = vsel %vm2856, %v2589, 0
      %v3218 = vsel %vm2856, %v2590, 0
      %v3221 = vsel %vm2856, %v2591, 0
      %v3224 = vsel %vm2856, %v2592, 0
      %v3227 = vsel %vm2856, %v2593, 0
      %v3230 = vsel %vm2856, %v2594, 0
      %v3233 = vsel %vm2856, %v2595, 0
      %v3236 = vsel %vm2856, %v2596, 0
      %v3239 = vsel %vm2856, %v2597, 0
      %v3242 = vsel %vm2856, %v2598, 0
      %v3245 = vsel %vm2856, %v2599, 0
      %v3248 = vsel %vm2856, %v2600, 0
      %v3251 = vsel %vm2856, %v2601, 0
      %v3254 = vsel %vm2856, %v2602, 0
      %v3257 = vsel %vm2856, %v2603, 0
      %v3260 = vsel %vm2856, %v2604, 0
      %v3263 = vsel %vm2856, %v2605, 0
      %v3266 = vsel %vm2856, %v2606, 0
      %v3269 = vsel %vm2856, %v2607, 0
      %v3272 = vsel %vm2856, %v2608, 0
      %v3275 = vsel %vm2856, %v2609, 0
      %v3278 = vsel %vm2856, %v2610, 0
      %v3281 = vsel %vm2856, %v2611, 0
      %v3284 = vsel %vm2856, %v2612, 0
      %v3287 = vsel %vm2856, %v2613, 0
      %v3290 = vsel %vm2856, %v2614, 0
      %v3293 = vsel %vm2856, %v2615, 0
      %v3296 = vsel %vm2856, %v2616, 0
      %v3299 = vsel %vm2856, %v2617, 0
      %v3302 = vsel %vm2856, %v2618, 0
      %v3305 = vsel %vm2856, %v2619, 0
      %v3308 = vsel %vm2856, %v2620, 0
      %v3311 = vsel %vm2856, %v2621, 0
      %v3314 = vsel %vm2856, %v2622, 0
      %v3317 = vsel %vm2856, %v2623, 0
      %v3320 = vsel %vm2856, %v2624, 0
      %v3323 = vsel %vm2856, %v2625, 0
      %v3326 = vsel %vm2856, %v2626, 0
      %v3329 = vsel %vm2856, %v2627, 0
      %v3332 = vsel %vm2856, %v2628, 0
      %v3335 = vsel %vm2856, %v2629, 0
      %v3338 = vsel %vm2856, %v2630, 0
      %v3341 = vsel %vm2856, %v2631, 0
      %v3344 = vsel %vm2856, %v2632, 0
      %v3347 = vsel %vm2856, %v2633, 0
      %v3350 = vsel %vm2856, %v2634, 0
      %v3353 = vsel %vm2856, %v2635, 0
      %v3356 = vsel %vm2856, %v2636, 0
      %v3359 = vsel %vm2856, %v2637, 0
      %v3362 = vsel %vm2856, %v2638, 0
      %v3365 = vsel %vm2856, %v2639, 0
      %v3368 = vsel %vm2856, %v2640, 0
      %v3371 = vsel %vm2856, %v2641, 0
      %v3374 = vsel %vm2856, %v2642, 0
      %v3377 = vsel %vm2856, %v2643, 0
      %v3380 = vsel %vm2856, %v2644, 0
      %v3383 = vsel %vm2856, %v2645, 0
      %v3386 = vsel %vm2856, %v2646, 0
      %v3389 = vsel %vm2856, %v2647, 0
      %v3392 = vsel %vm2856, %v2648, 0
      %v3395 = vsel %vm2856, %v2649, 0
      %v3398 = vsel %vm2856, %v2650, 0
      %v3401 = vsel %vm2856, %v2651, 0
      %v3404 = vsel %vm2856, %v2652, 0
      %v3407 = vsel %vm2856, %v2653, 0
      %v3410 = vsel %vm2856, %v2654, 0
      %v3413 = vsel %vm2856, %v2655, 0
      %v3416 = vsel %vm2856, %v2656, 0
      %v3419 = vsel %vm2856, %v2657, 0
      %v3422 = vsel %vm2856, %v2658, 0
      %v3425 = vsel %vm2856, %v2659, 0
      %v3428 = vsel %vm2856, %v2660, 0
      %v3431 = vsel %vm2856, %v2661, 0
      %v3434 = vsel %vm2856, %v2662, 0
      %v3437 = vsel %vm2856, %v2663, 0
      %v3440 = vsel %vm2856, %v2664, 0
      %v3443 = vsel %vm2856, %v2665, 0
      %v3446 = vsel %vm2856, %v2666, 0
      %v3449 = vsel %vm2856, %v2667, 0
      %v3452 = vsel %vm2856, %v2668, 0
      %v3455 = vsel %vm2856, %v2669, 0
      %v3458 = vsel %vm2856, %v2670, 0
      %v3461 = vsel %vm2856, %v2671, 0
      %v3464 = vsel %vm2856, %v2672, 0
      %v3467 = vsel %vm2856, %v2673, 0
      %v3470 = vsel %vm2856, %v2674, 0
      %v3473 = vsel %vm2856, %v2675, 0
      %v3476 = vsel %vm2856, %v2676, 0
      %v3479 = vsel %vm2856, %v2677, 0
      %v3482 = vsel %vm2856, %v2678, 0
      %v3485 = vsel %vm2856, %v2679, 0
      %v3488 = vsel %vm2856, %v2680, 0
      %v3491 = vsel %vm2856, %v2681, 0
      %v3494 = vsel %vm2856, %v2682, 0
      %v3497 = vsel %vm2856, %v2683, 0
      %v3500 = vsel %vm2856, %v2684, 0
      %v3503 = vsel %vm2856, %v2685, 0
      %v3506 = vsel %vm2856, %v2686, 0
      %v3509 = vsel %vm2856, %v2687, 0
      %v3512 = vsel %vm2856, %v2688, 0
      %v3515 = vsel %vm2856, %v2689, 0
      %v3518 = vsel %vm2856, %v2690, 0
      %v3521 = vsel %vm2856, %v2691, 0
      %v3524 = vsel %vm2856, %v2692, 0
      %v3527 = vsel %vm2856, %v2693, 0
      %v3530 = vsel %vm2856, %v2694, 0
      %v3533 = vsel %vm2856, %v2695, 0
      %v3536 = vsel %vm2856, %v2696, 0
      %v3539 = vsel %vm2856, %v2697, 0
      %v3542 = vsel %vm2856, %v2698, 0
      %v3545 = vsel %vm2856, %v2699, 0
      %v3548 = vsel %vm2856, %v2700, 0
      %v3551 = vsel %vm2856, %v2701, 0
      %v3554 = vsel %vm2856, %v2702, 0
      %v3557 = vsel %vm2856, %v2703, 0
      %v3560 = vsel %vm2856, %v2704, 0
      %v3563 = vsel %vm2856, %v2705, 0
      %v3566 = vsel %vm2856, %v2706, 0
      %v3569 = vsel %vm2856, %v2707, 0
      %v3572 = vsel %vm2856, %v2708, 0
      %v3575 = vsel %vm2856, %v2709, 0
      %v3578 = vsel %vm2856, %v2710, 0
      %v3581 = vsel %vm2856, %v2711, 0
      %v3584 = vsel %vm2856, %v2712, 0
      %v3587 = vsel %vm2856, %v2713, 0
      %v3590 = vsel %vm2856, %v2714, 0
      %v3593 = vsel %vm2856, %v2715, 0
      %v3596 = vsel %vm2856, %v2716, 0
      %v3599 = vsel %vm2856, %v2717, 0
      %v3602 = vsel %vm2856, %v2718, 0
      %v3605 = vsel %vm2856, %v2719, 0
      %v3608 = vsel %vm2856, %v2720, 0
      %v3611 = vsel %vm2856, %v2721, 0
      %v3614 = vsel %vm2856, %v2722, 0
      %v3617 = vsel %vm2856, %v2723, 0
      %v3620 = vsel %vm2856, %v2724, 0
      %v3623 = vsel %vm2856, %v2725, 0
      %v3626 = vsel %vm2856, %v2726, 0
      %v3629 = vsel %vm2856, %v2727, 0
      %v3632 = vsel %vm2856, %v2728, 0
      %v3635 = vsel %vm2856, %v2729, 0
      %v3638 = vsel %vm2856, %v2730, 0
      %v3641 = vsel %vm2856, %v2731, 0
      %v3644 = vsel %vm2856, %v2732, 0
      %v3647 = vsel %vm2856, %v2733, 0
      %v3650 = vsel %vm2856, %v2734, 0
      %v3653 = vsel %vm2856, %v2735, 0
      %v3656 = vsel %vm2856, %v2736, 0
      %v3659 = vsel %vm2856, %v2737, 0
      %v3662 = vsel %vm2856, %v2738, 0
      %v3665 = vsel %vm2856, %v2739, 0
      %v3668 = vsel %vm2856, %v2740, 0
      %v3671 = vsel %vm2856, %v2741, 0
      %v3674 = vsel %vm2856, %v2742, 0
      %v3677 = vsel %vm2856, %v2743, 0
      %v3680 = vsel %vm2856, %v2744, 0
      %v3683 = vsel %vm2856, %v2745, 0
      %v3686 = vsel %vm2856, %v2746, 0
      %v3689 = vsel %vm2856, %v2747, 0
      %v3692 = vsel %vm2856, %v2748, 0
      %v3695 = vsel %vm2856, %v2749, 0
      %v3698 = vsel %vm2856, %v2750, 0
      %v3701 = vsel %vm2856, %v2751, 0
      %v3704 = vsel %vm2856, %v2752, 0
      %v3707 = vsel %vm2856, %v2753, 0
      %v3710 = vsel %vm2856, %v2754, 0
      %v3713 = vsel %vm2856, %v2755, 0
      %v3716 = vsel %vm2856, %v2756, 0
      %v3719 = vsel %vm2856, %v2757, 0
      %v3722 = vsel %vm2856, %v2758, 0
      %v3725 = vsel %vm2856, %v2759, 0
      %v3728 = vsel %vm2856, %v2760, 0
      %v3731 = vsel %vm2856, %v2761, 0
      %v3734 = vsel %vm2856, %v2762, 0
      %v3737 = vsel %vm2856, %v2763, 0
      %v3740 = vsel %vm2856, %v2764, 0
      %v3743 = vsel %vm2856, %v2765, 0
      %v3746 = vsel %vm2856, %v2766, 0
      %v3749 = vsel %vm2856, %v2767, 0
      %v3752 = vsel %vm2856, %v2768, 0
      %v3755 = vsel %vm2856, %v2769, 0
      %v3758 = vsel %vm2856, %v2770, 0
      %v3761 = vsel %vm2856, %v2771, 0
      %v3764 = vsel %vm2856, %v2772, 0
      %v3767 = vsel %vm2856, %v2773, 0
      %v3770 = vsel %vm2856, %v2774, 0
      %v3773 = vsel %vm2856, %v2775, 0
      %v3776 = vsel %vm2856, %v2776, 0
      %v3779 = vsel %vm2856, %v2777, 0
      %v3782 = vsel %vm2856, %v2778, 0
      %v3785 = vsel %vm2856, %v2779, 0
      %v3788 = vsel %vm2856, %v2780, 0
      %v3791 = vsel %vm2856, %v2781, 0
      %v3794 = vsel %vm2856, %v2782, 0
      %v3797 = vsel %vm2856, %v2783, 0
      %v3800 = vsel %vm2856, %v2784, 0
      %v3803 = vsel %vm2856, %v2785, 0
      %v3806 = vsel %vm2856, %v2786, 0
      %v3809 = vsel %vm2856, %v2787, 0
      %v3812 = vsel %vm2856, %v2788, 0
      %v3815 = vsel %vm2856, %v2789, 0
      %v3818 = vsel %vm2856, %v2790, 0
      %v3821 = vsel %vm2856, %v2791, 0
      %v3824 = vsel %vm2856, %v2792, 0
      %v3827 = vsel %vm2856, %v2793, 0
      %v3830 = vsel %vm2856, %v2794, 0
      %v3833 = vsel %vm2856, %v2795, 0
      %v3836 = vsel %vm2856, %v2796, 0
      %v3839 = vsel %vm2856, %v2797, 0
      %v3842 = vsel %vm2856, %v2798, 0
      %v3845 = vsel %vm2856, %v2799, 0
      %v3848 = vsel %vm2856, %v2800, 0
      %v3851 = vsel %vm2856, %v2801, 0
      %v3854 = vsel %vm2856, %v2802, 0
      %v3857 = vsel %vm2856, %v2803, 0
      %v3860 = vsel %vm2856, %v2804, 0
      %v3863 = vsel %vm2856, %v2805, 0
      %v3866 = vsel %vm2856, %v2806, 0
      %v3869 = vsel %vm2856, %v2807, 0
      %v3872 = vsel %vm2856, %v2808, 0
      %v3875 = vsel %vm2856, %v2809, 0
      %v3878 = vsel %vm2856, %v2810, 0
      %v3881 = vsel %vm2856, %v2811, 0
      %v3884 = vsel %vm2856, %v2812, 0
      %v3887 = vsel %vm2856, %v2813, 0
      %v3890 = vsel %vm2856, %v2814, 0
      %v3893 = vsel %vm2856, %v2815, 0
      %v3896 = vsel %vm2856, %v2816, 0
      %v3899 = vsel %vm2856, %v2817, 0
      %v3902 = vsel %vm2856, %v2818, 0
      %v3905 = vsel %vm2856, %v2819, 0
      %v3908 = vsel %vm2856, %v2820, 0
      %v3911 = vsel %vm2856, %v2821, 0
      %v3914 = vsel %vm2856, %v2822, 0
      %v3917 = vsel %vm2856, %v2823, 0
      %v3920 = vsel %vm2856, %v2824, 0
      %v3923 = vsel %vm2856, %v2825, 0
      %v3926 = vsel %vm2856, %v2826, 0
      %v3929 = vsel %vm2856, %v2827, 0
      %v3932 = vsel %vm2856, %v2828, 0
      %v3935 = vsel %vm2856, %v2829, 0
      %v3938 = vsel %vm2856, %v2830, 0
      %v3941 = vsel %vm2856, %v2831, 0
      %v3944 = vsel %vm2856, %v2832, 0
      %v3947 = vsel %vm2856, %v2833, 0
      %v3950 = vsel %vm2856, %v2834, 0
      %v3953 = vsel %vm2856, %v2835, 0
      %v3956 = vsel %vm2856, %v2836, 0
      %v3959 = vsel %vm2856, %v2837, 0
      %v3962 = vsel %vm2856, %v2838, 0
      %v3965 = vsel %vm2856, %v2839, 0
      %v3968 = vsel %vm2856, %v2840, 0
      %v3971 = vsel %vm2856, %v2841, 0
      %v3974 = vsel %vm2856, %v2842, 0
      %v3977 = vsel %vm2856, %v2843, 0
      %v3980 = vsel %vm2856, %v2844, 0
      %v3983 = vsel %vm2856, %v2845, 0
      %v3986 = vsel %vm2856, %v2846, 0
      %v3989 = vsel %vm2856, %v2847, 0
      %v3992 = vsel %vm2856, %v2848, 0
      %v3995 = vsel %vm2856, %v2849, 0
      %v3998 = vsel %vm2856, %v2850, 0
      %vm4000 = vcmask 1043456
      %vm4001 = vcmask 1044480
      %v4002 = vsel %vm4000, 4294967295, 65535
      %v4003 = vsel %vm4001, %v4002, 0
      %v4005 = vand.u32 %v2855, %v4003
      %4007 = vmatprep.subr.bf16.mxu0 0
      %4008 = vmatpush1.bf16.msra.mxu0 %v4005
      %4009 = vmatprep.subr.bf16.mxu0 0
      %4010 = vmatpush1.bf16.msra.mxu0 0
      %4011 = vmatprep.subr.bf16.mxu0 0
      %4012 = vmatpush1.bf16.msra.mxu0 0
      %4013 = vmatprep.subr.bf16.mxu0 0
      %4014 = vmatpush1.bf16.msra.mxu0 0
      %4015 = vmatprep.subr.bf16.mxu0 0
      %4016 = vmatpush1.bf16.msra.mxu0 0
      %4017 = vmatprep.subr.bf16.mxu0 0
      %4018 = vmatpush1.bf16.msra.mxu0 0
      %4019 = vmatprep.subr.bf16.mxu0 0
      %4020 = vmatpush1.bf16.msra.mxu0 0
      %4021 = vmatprep.subr.bf16.mxu0 0
      %4022 = vmatpush1.bf16.msra.mxu0 0
      %4023 = vmatprep.subr.bf16.mxu0 0
      %4024 = vmatpush1.bf16.msra.mxu0 0
      %4025 = vmatprep.subr.bf16.mxu0 0
      %4026 = vmatpush1.bf16.msra.mxu0 0
      %4027 = vmatprep.subr.bf16.mxu0 0
      %4028 = vmatpush1.bf16.msra.mxu0 0
      %4029 = vmatprep.subr.bf16.mxu0 0
      %4030 = vmatpush1.bf16.msra.mxu0 0
      %4031 = vmatprep.subr.bf16.mxu0 0
      %4032 = vmatpush1.bf16.msra.mxu0 0
      %4033 = vmatprep.subr.bf16.mxu0 0
      %4034 = vmatpush1.bf16.msra.mxu0 0
      %4035 = vmatprep.subr.bf16.mxu0 0
      %4036 = vmatpush1.bf16.msra.mxu0 0
      %4037 = vmatprep.subr.bf16.mxu0 0
      %4038 = vmatpush1.bf16.msra.mxu0 0
      %4039 = vmatprep.mubr.bf16.mxu0 0
      %4040 = vmatmul.mubr.bf16.gmra.mrb[0].mxu0 %v2858
      %v4041 = vpop.f32.mrb[0].mxu0
      %v4042 = vadd.f32 %v944, %v4041
      %v4043 = vpop.f32.mrb[0].mxu0
      %v4044 = vpop.f32.mrb[0].mxu0
      %v4045 = vadd.f32 %v944, %v4044
      %v4046 = vpop.f32.mrb[0].mxu0
      %4047 = vmatprep.mubr.bf16.mxu0 0
      %4048 = vmatmul.mubr.bf16.gmra.mrb[0].mxu0 %v2861
      %v4049 = vpop.f32.mrb[0].mxu0
      %v4050 = vadd.f32 %v944, %v4049
      %v4051 = vpop.f32.mrb[0].mxu0
      %v4052 = vpop.f32.mrb[0].mxu0
      %v4053 = vadd.f32 %v944, %v4052
      %v4054 = vpop.f32.mrb[0].mxu0
      %4055 = vmatprep.mubr.bf16.mxu0 0
      %4056 = vmatmul.mubr.bf16.gmra.mrb[0].mxu0 %v2864
      %v4057 = vpop.f32.mrb[0].mxu0
      %v4058 = vadd.f32 %v944, %v4057
      %v4059 = vpop.f32.mrb[0].mxu0
      %v4060 = vpop.f32.mrb[0].mxu0
      %v4061 = vadd.f32 %v944, %v4060
      %v4062 = vpop.f32.mrb[0].mxu0
      %4063 = vmatprep.mubr.bf16.mxu0 0
      %4064 = vmatmul.mubr.bf16.gmra.mrb[0].mxu0 %v2867
      %v4065 = vpop.f32.mrb[0].mxu0
      %v4066 = vadd.f32 %v944, %v4065
      %v4067 = vpop.f32.mrb[0].mxu0
      %v4068 = vpop.f32.mrb[0].mxu0
      %v4069 = vadd.f32 %v944, %v4068
      %v4070 = vpop.f32.mrb[0].mxu0
      %4071 = vmatprep.mubr.bf16.mxu0 0
      %4072 = vmatmul.mubr.bf16.gmra.mrb[0].mxu0 %v2870
      %v4073 = vpop.f32.mrb[0].mxu0
      %v4074 = vadd.f32 %v944, %v4073
      %v4075 = vpop.f32.mrb[0].mxu0
      %v4076 = vpop.f32.mrb[0].mxu0
      %v4077 = vadd.f32 %v944, %v4076
      %v4078 = vpop.f32.mrb[0].mxu0
      %4079 = vmatprep.mubr.bf16.mxu0 0
      %4080 = vmatmul.mubr.bf16.gmra.mrb[0].mxu0 %v2873
      %v4081 = vpop.f32.mrb[0].mxu0
      %v4082 = vadd.f32 %v944, %v4081
      %v4083 = vpop.f32.mrb[0].mxu0
      %v4084 = vpop.f32.mrb[0].mxu0
      %v4085 = vadd.f32 %v944, %v4084
      %v4086 = vpop.f32.mrb[0].mxu0
      %4087 = vmatprep.mubr.bf16.mxu0 0
      %4088 = vmatmul.mubr.bf16.gmra.mrb[0].mxu0 %v2876
      %v4089 = vpop.f32.mrb[0].mxu0
      %v4090 = vadd.f32 %v944, %v4089
      %v4091 = vpop.f32.mrb[0].mxu0
      %v4092 = vpop.f32.mrb[0].mxu0
      %v4093 = vadd.f32 %v944, %v4092
      %v4094 = vpop.f32.mrb[0].mxu0
      %4095 = vmatprep.mubr.bf16.mxu0 0
      %4096 = vmatmul.mubr.bf16.gmra.mrb[0].mxu0 %v2879
      %v4097 = vpop.f32.mrb[0].mxu0
      %v4098 = vadd.f32 %v944, %v4097
      %v4099 = vpop.f32.mrb[0].mxu0
      %v4100 = vpop.f32.mrb[0].mxu0
      %v4101 = vadd.f32 %v944, %v4100
      %v4102 = vpop.f32.mrb[0].mxu0
      %4103 = vmatprep.mubr.bf16.mxu0 0
      %4104 = vmatmul.mubr.bf16.gmra.mrb[0].mxu0 %v2882
      %v4105 = vpop.f32.mrb[0].mxu0
      %v4106 = vadd.f32 %v944, %v4105
      %v4107 = vpop.f32.mrb[0].mxu0
      %v4108 = vpop.f32.mrb[0].mxu0
      %v4109 = vadd.f32 %v944, %v4108
      %v4110 = vpop.f32.mrb[0].mxu0
      %4111 = vmatprep.mubr.bf16.mxu0 0
      %4112 = vmatmul.mubr.bf16.gmra.mrb[0].mxu0 %v2885
      %v4113 = vpop.f32.mrb[0].mxu0
      %v4114 = vadd.f32 %v944, %v4113
      %v4115 = vpop.f32.mrb[0].mxu0
      %v4116 = vpop.f32.mrb[0].mxu0
      %v4117 = vadd.f32 %v944, %v4116
      %v4118 = vpop.f32.mrb[0].mxu0
      %4119 = vmatprep.mubr.bf16.mxu0 0
      %4120 = vmatmul.mubr.bf16.gmra.mrb[0].mxu0 %v2888
      %v4121 = vpop.f32.mrb[0].mxu0
      %v4122 = vadd.f32 %v944, %v4121
      %v4123 = vpop.f32.mrb[0].mxu0
      %v4124 = vpop.f32.mrb[0].mxu0
      %v4125 = vadd.f32 %v944, %v4124
      %v4126 = vpop.f32.mrb[0].mxu0
      %4127 = vmatprep.mubr.bf16.mxu0 0
      %4128 = vmatmul.mubr.bf16.gmra.mrb[0].mxu0 %v2891
      %v4129 = vpop.f32.mrb[0].mxu0
      %v4130 = vadd.f32 %v944, %v4129
      %v4131 = vpop.f32.mrb[0].mxu0
      %v4132 = vpop.f32.mrb[0].mxu0
      %v4133 = vadd.f32 %v944, %v4132
      %v4134 = vpop.f32.mrb[0].mxu0
      %4135 = vmatprep.mubr.bf16.mxu0 0
      %4136 = vmatmul.mubr.bf16.gmra.mrb[0].mxu0 %v2894
      %v4137 = vpop.f32.mrb[0].mxu0
      %v4138 = vadd.f32 %v944, %v4137
      %v4139 = vpop.f32.mrb[0].mxu0
      %v4140 = vpop.f32.mrb[0].mxu0
      %v4141 = vadd.f32 %v944, %v4140
      %v4142 = vpop.f32.mrb[0].mxu0
      %4143 = vmatprep.mubr.bf16.mxu0 0
      %4144 = vmatmul.mubr.bf16.gmra.mrb[0].mxu0 %v2897
      %v4145 = vpop.f32.mrb[0].mxu0
      %v4146 = vadd.f32 %v944, %v4145
      %v4147 = vpop.f32.mrb[0].mxu0
      %v4148 = vpop.f32.mrb[0].mxu0
      %v4149 = vadd.f32 %v944, %v4148
      %v4150 = vpop.f32.mrb[0].mxu0
      %4151 = vmatprep.mubr.bf16.mxu0 0
      %4152 = vmatmul.mubr.bf16.gmra.mrb[0].mxu0 %v2900
      %v4153 = vpop.f32.mrb[0].mxu0
      %v4154 = vadd.f32 %v944, %v4153
      %v4155 = vpop.f32.mrb[0].mxu0
      %v4156 = vpop.f32.mrb[0].mxu0
      %v4157 = vadd.f32 %v944, %v4156
      %v4158 = vpop.f32.mrb[0].mxu0
      %4159 = vmatprep.mubr.bf16.mxu0 0
      %4160 = vmatmul.mubr.bf16.gmra.mrb[0].mxu0 %v2903
      %v4161 = vpop.f32.mrb[0].mxu0
      %v4162 = vadd.f32 %v944, %v4161
      %v4163 = vpop.f32.mrb[0].mxu0
      %v4164 = vpop.f32.mrb[0].mxu0
      %v4165 = vadd.f32 %v944, %v4164
      %v4166 = vpop.f32.mrb[0].mxu0
      %4167 = vmatprep.mubr.bf16.mxu0 0
      %4168 = vmatmul.mubr.bf16.gmra.mrb[0].mxu0 %v2906
      %v4169 = vpop.f32.mrb[0].mxu0
      %v4170 = vadd.f32 %v944, %v4169
      %v4171 = vpop.f32.mrb[0].mxu0
      %v4172 = vpop.f32.mrb[0].mxu0
      %v4173 = vadd.f32 %v944, %v4172
      %v4174 = vpop.f32.mrb[0].mxu0
      %4175 = vmatprep.mubr.bf16.mxu0 0
      %4176 = vmatmul.mubr.bf16.gmra.mrb[0].mxu0 %v2909
      %v4177 = vpop.f32.mrb[0].mxu0
      %v4178 = vadd.f32 %v944, %v4177
      %v4179 = vpop.f32.mrb[0].mxu0
      %v4180 = vpop.f32.mrb[0].mxu0
      %v4181 = vadd.f32 %v944, %v4180
      %v4182 = vpop.f32.mrb[0].mxu0
      %4183 = vmatprep.mubr.bf16.mxu0 0
      %4184 = vmatmul.mubr.bf16.gmra.mrb[0].mxu0 %v2912
      %v4185 = vpop.f32.mrb[0].mxu0
      %v4186 = vadd.f32 %v944, %v4185
      %v4187 = vpop.f32.mrb[0].mxu0
      %v4188 = vpop.f32.mrb[0].mxu0
      %v4189 = vadd.f32 %v944, %v4188
      %v4190 = vpop.f32.mrb[0].mxu0
      %4191 = vmatprep.mubr.bf16.mxu0 0
      %4192 = vmatmul.mubr.bf16.gmra.mrb[0].mxu0 %v2915
      %v4193 = vpop.f32.mrb[0].mxu0
      %v4194 = vadd.f32 %v944, %v4193
      %v4195 = vpop.f32.mrb[0].mxu0
      %v4196 = vpop.f32.mrb[0].mxu0
      %v4197 = vadd.f32 %v944, %v4196
      %v4198 = vpop.f32.mrb[0].mxu0
      %4199 = vmatprep.mubr.bf16.mxu0 0
      %4200 = vmatmul.mubr.bf16.gmra.mrb[0].mxu0 %v2918
      %v4201 = vpop.f32.mrb[0].mxu0
      %v4202 = vadd.f32 %v944, %v4201
      %v4203 = vpop.f32.mrb[0].mxu0
      %v4204 = vpop.f32.mrb[0].mxu0
      %v4205 = vadd.f32 %v944, %v4204
      %v4206 = vpop.f32.mrb[0].mxu0
      %4207 = vmatprep.mubr.bf16.mxu0 0
      %4208 = vmatmul.mubr.bf16.gmra.mrb[0].mxu0 %v2921
      %v4209 = vpop.f32.mrb[0].mxu0
      %v4210 = vadd.f32 %v944, %v4209
      %v4211 = vpop.f32.mrb[0].mxu0
      %v4212 = vpop.f32.mrb[0].mxu0
      %v4213 = vadd.f32 %v944, %v4212
      %v4214 = vpop.f32.mrb[0].mxu0
      %4215 = vmatprep.mubr.bf16.mxu0 0
      %4216 = vmatmul.mubr.bf16.gmra.mrb[0].mxu0 %v2924
      %v4217 = vpop.f32.mrb[0].mxu0
      %v4218 = vadd.f32 %v944, %v4217
      %v4219 = vpop.f32.mrb[0].mxu0
      %v4220 = vpop.f32.mrb[0].mxu0
      %v4221 = vadd.f32 %v944, %v4220
      %v4222 = vpop.f32.mrb[0].mxu0
      %4223 = vmatprep.mubr.bf16.mxu0 0
      %4224 = vmatmul.mubr.bf16.gmra.mrb[0].mxu0 %v2927
      %v4225 = vpop.f32.mrb[0].mxu0
      %v4226 = vadd.f32 %v944, %v4225
      %v4227 = vpop.f32.mrb[0].mxu0
      %v4228 = vpop.f32.mrb[0].mxu0
      %v4229 = vadd.f32 %v944, %v4228
      %v4230 = vpop.f32.mrb[0].mxu0
      %4231 = vmatprep.mubr.bf16.mxu0 0
      %4232 = vmatmul.mubr.bf16.gmra.mrb[0].mxu0 %v2930
      %v4233 = vpop.f32.mrb[0].mxu0
      %v4234 = vadd.f32 %v944, %v4233
      %v4235 = vpop.f32.mrb[0].mxu0
      %v4236 = vpop.f32.mrb[0].mxu0
      %v4237 = vadd.f32 %v944, %v4236
      %v4238 = vpop.f32.mrb[0].mxu0
      %4239 = vmatprep.mubr.bf16.mxu0 0
      %4240 = vmatmul.mubr.bf16.gmra.mrb[0].mxu0 %v2933
      %v4241 = vpop.f32.mrb[0].mxu0
      %v4242 = vadd.f32 %v944, %v4241
      %v4243 = vpop.f32.mrb[0].mxu0
      %v4244 = vpop.f32.mrb[0].mxu0
      %v4245 = vadd.f32 %v944, %v4244
      %v4246 = vpop.f32.mrb[0].mxu0
      %4247 = vmatprep.mubr.bf16.mxu0 0
      %4248 = vmatmul.mubr.bf16.gmra.mrb[0].mxu0 %v2936
      %v4249 = vpop.f32.mrb[0].mxu0
      %v4250 = vadd.f32 %v944, %v4249
      %v4251 = vpop.f32.mrb[0].mxu0
      %v4252 = vpop.f32.mrb[0].mxu0
      %v4253 = vadd.f32 %v944, %v4252
      %v4254 = vpop.f32.mrb[0].mxu0
      %4255 = vmatprep.mubr.bf16.mxu0 0
      %4256 = vmatmul.mubr.bf16.gmra.mrb[0].mxu0 %v2939
      %v4257 = vpop.f32.mrb[0].mxu0
      %v4258 = vadd.f32 %v944, %v4257
      %v4259 = vpop.f32.mrb[0].mxu0
      %v4260 = vpop.f32.mrb[0].mxu0
      %v4261 = vadd.f32 %v944, %v4260
      %v4262 = vpop.f32.mrb[0].mxu0
      %4263 = vmatprep.mubr.bf16.mxu0 0
      %4264 = vmatmul.mubr.bf16.gmra.mrb[0].mxu0 %v2942
      %v4265 = vpop.f32.mrb[0].mxu0
      %v4266 = vadd.f32 %v944, %v4265
      %v4267 = vpop.f32.mrb[0].mxu0
      %v4268 = vpop.f32.mrb[0].mxu0
      %v4269 = vadd.f32 %v944, %v4268
      %v4270 = vpop.f32.mrb[0].mxu0
      %4271 = vmatprep.mubr.bf16.mxu0 0
      %4272 = vmatmul.mubr.bf16.gmra.mrb[0].mxu0 %v2945
      %v4273 = vpop.f32.mrb[0].mxu0
      %v4274 = vadd.f32 %v944, %v4273
      %v4275 = vpop.f32.mrb[0].mxu0
      %v4276 = vpop.f32.mrb[0].mxu0
      %v4277 = vadd.f32 %v944, %v4276
      %v4278 = vpop.f32.mrb[0].mxu0
      %4279 = vmatprep.mubr.bf16.mxu0 0
      %4280 = vmatmul.mubr.bf16.gmra.mrb[0].mxu0 %v2948
      %v4281 = vpop.f32.mrb[0].mxu0
      %v4282 = vadd.f32 %v944, %v4281
      %v4283 = vpop.f32.mrb[0].mxu0
      %v4284 = vpop.f32.mrb[0].mxu0
      %v4285 = vadd.f32 %v944, %v4284
      %v4286 = vpop.f32.mrb[0].mxu0
      %4287 = vmatprep.mubr.bf16.mxu0 0
      %4288 = vmatmul.mubr.bf16.gmra.mrb[0].mxu0 %v2951
      %v4289 = vpop.f32.mrb[0].mxu0
      %v4290 = vadd.f32 %v944, %v4289
      %v4291 = vpop.f32.mrb[0].mxu0
      %v4292 = vpop.f32.mrb[0].mxu0
      %v4293 = vadd.f32 %v944, %v4292
      %v4294 = vpop.f32.mrb[0].mxu0
      %4295 = vmatprep.mubr.bf16.mxu0 0
      %4296 = vmatmul.mubr.bf16.gmra.mrb[0].mxu0 %v2954
      %v4297 = vpop.f32.mrb[0].mxu0
      %v4298 = vadd.f32 %v944, %v4297
      %v4299 = vpop.f32.mrb[0].mxu0
      %v4300 = vpop.f32.mrb[0].mxu0
      %v4301 = vadd.f32 %v944, %v4300
      %v4302 = vpop.f32.mrb[0].mxu0
      %4303 = vmatprep.mubr.bf16.mxu0 0
      %4304 = vmatmul.mubr.bf16.gmra.mrb[0].mxu0 %v2957
      %v4305 = vpop.f32.mrb[0].mxu0
      %v4306 = vadd.f32 %v944, %v4305
      %v4307 = vpop.f32.mrb[0].mxu0
      %v4308 = vpop.f32.mrb[0].mxu0
      %v4309 = vadd.f32 %v944, %v4308
      %v4310 = vpop.f32.mrb[0].mxu0
      %4311 = vmatprep.mubr.bf16.mxu0 0
      %4312 = vmatmul.mubr.bf16.gmra.mrb[0].mxu0 %v2960
      %v4313 = vpop.f32.mrb[0].mxu0
      %v4314 = vadd.f32 %v944, %v4313
      %v4315 = vpop.f32.mrb[0].mxu0
      %v4316 = vpop.f32.mrb[0].mxu0
      %v4317 = vadd.f32 %v944, %v4316
      %v4318 = vpop.f32.mrb[0].mxu0
      %4319 = vmatprep.mubr.bf16.mxu0 0
      %4320 = vmatmul.mubr.bf16.gmra.mrb[0].mxu0 %v2963
      %v4321 = vpop.f32.mrb[0].mxu0
      %v4322 = vadd.f32 %v944, %v4321
      %v4323 = vpop.f32.mrb[0].mxu0
      %v4324 = vpop.f32.mrb[0].mxu0
      %v4325 = vadd.f32 %v944, %v4324
      %v4326 = vpop.f32.mrb[0].mxu0
      %4327 = vmatprep.mubr.bf16.mxu0 0
      %4328 = vmatmul.mubr.bf16.gmra.mrb[0].mxu0 %v2966
      %v4329 = vpop.f32.mrb[0].mxu0
      %v4330 = vadd.f32 %v944, %v4329
      %v4331 = vpop.f32.mrb[0].mxu0
      %v4332 = vpop.f32.mrb[0].mxu0
      %v4333 = vadd.f32 %v944, %v4332
      %v4334 = vpop.f32.mrb[0].mxu0
      %4335 = vmatprep.mubr.bf16.mxu0 0
      %4336 = vmatmul.mubr.bf16.gmra.mrb[0].mxu0 %v2969
      %v4337 = vpop.f32.mrb[0].mxu0
      %v4338 = vadd.f32 %v944, %v4337
      %v4339 = vpop.f32.mrb[0].mxu0
      %v4340 = vpop.f32.mrb[0].mxu0
      %v4341 = vadd.f32 %v944, %v4340
      %v4342 = vpop.f32.mrb[0].mxu0
      %4343 = vmatprep.mubr.bf16.mxu0 0
      %4344 = vmatmul.mubr.bf16.gmra.mrb[0].mxu0 %v2972
      %v4345 = vpop.f32.mrb[0].mxu0
      %v4346 = vadd.f32 %v944, %v4345
      %v4347 = vpop.f32.mrb[0].mxu0
      %v4348 = vpop.f32.mrb[0].mxu0
      %v4349 = vadd.f32 %v944, %v4348
      %v4350 = vpop.f32.mrb[0].mxu0
      %4351 = vmatprep.mubr.bf16.mxu0 0
      %4352 = vmatmul.mubr.bf16.gmra.mrb[0].mxu0 %v2975
      %v4353 = vpop.f32.mrb[0].mxu0
      %v4354 = vadd.f32 %v944, %v4353
      %v4355 = vpop.f32.mrb[0].mxu0
      %v4356 = vpop.f32.mrb[0].mxu0
      %v4357 = vadd.f32 %v944, %v4356
      %v4358 = vpop.f32.mrb[0].mxu0
      %4359 = vmatprep.mubr.bf16.mxu0 0
      %4360 = vmatmul.mubr.bf16.gmra.mrb[0].mxu0 %v2978
      %v4361 = vpop.f32.mrb[0].mxu0
      %v4362 = vadd.f32 %v944, %v4361
      %v4363 = vpop.f32.mrb[0].mxu0
      %v4364 = vpop.f32.mrb[0].mxu0
      %v4365 = vadd.f32 %v944, %v4364
      %v4366 = vpop.f32.mrb[0].mxu0
      %4367 = vmatprep.mubr.bf16.mxu0 0
      %4368 = vmatmul.mubr.bf16.gmra.mrb[0].mxu0 %v2981
      %v4369 = vpop.f32.mrb[0].mxu0
      %v4370 = vadd.f32 %v944, %v4369
      %v4371 = vpop.f32.mrb[0].mxu0
      %v4372 = vpop.f32.mrb[0].mxu0
      %v4373 = vadd.f32 %v944, %v4372
      %v4374 = vpop.f32.mrb[0].mxu0
      %4375 = vmatprep.mubr.bf16.mxu0 0
      %4376 = vmatmul.mubr.bf16.gmra.mrb[0].mxu0 %v2984
      %v4377 = vpop.f32.mrb[0].mxu0
      %v4378 = vadd.f32 %v944, %v4377
      %v4379 = vpop.f32.mrb[0].mxu0
      %v4380 = vpop.f32.mrb[0].mxu0
      %v4381 = vadd.f32 %v944, %v4380
      %v4382 = vpop.f32.mrb[0].mxu0
      %4383 = vmatprep.mubr.bf16.mxu0 0
      %4384 = vmatmul.mubr.bf16.gmra.mrb[0].mxu0 %v2987
      %v4385 = vpop.f32.mrb[0].mxu0
      %v4386 = vadd.f32 %v944, %v4385
      %v4387 = vpop.f32.mrb[0].mxu0
      %v4388 = vpop.f32.mrb[0].mxu0
      %v4389 = vadd.f32 %v944, %v4388
      %v4390 = vpop.f32.mrb[0].mxu0
      %4391 = vmatprep.mubr.bf16.mxu0 0
      %4392 = vmatmul.mubr.bf16.gmra.mrb[0].mxu0 %v2990
      %v4393 = vpop.f32.mrb[0].mxu0
      %v4394 = vadd.f32 %v944, %v4393
      %v4395 = vpop.f32.mrb[0].mxu0
      %v4396 = vpop.f32.mrb[0].mxu0
      %v4397 = vadd.f32 %v944, %v4396
      %v4398 = vpop.f32.mrb[0].mxu0
      %4399 = vmatprep.mubr.bf16.mxu0 0
      %4400 = vmatmul.mubr.bf16.gmra.mrb[0].mxu0 %v2993
      %v4401 = vpop.f32.mrb[0].mxu0
      %v4402 = vadd.f32 %v944, %v4401
      %v4403 = vpop.f32.mrb[0].mxu0
      %v4404 = vpop.f32.mrb[0].mxu0
      %v4405 = vadd.f32 %v944, %v4404
      %v4406 = vpop.f32.mrb[0].mxu0
      %4407 = vmatprep.mubr.bf16.mxu0 0
      %4408 = vmatmul.mubr.bf16.gmra.mrb[0].mxu0 %v2996
      %v4409 = vpop.f32.mrb[0].mxu0
      %v4410 = vadd.f32 %v944, %v4409
      %v4411 = vpop.f32.mrb[0].mxu0
      %v4412 = vpop.f32.mrb[0].mxu0
      %v4413 = vadd.f32 %v944, %v4412
      %v4414 = vpop.f32.mrb[0].mxu0
      %4415 = vmatprep.mubr.bf16.mxu0 0
      %4416 = vmatmul.mubr.bf16.gmra.mrb[0].mxu0 %v2999
      %v4417 = vpop.f32.mrb[0].mxu0
      %v4418 = vadd.f32 %v944, %v4417
      %v4419 = vpop.f32.mrb[0].mxu0
      %v4420 = vpop.f32.mrb[0].mxu0
      %v4421 = vadd.f32 %v944, %v4420
      %v4422 = vpop.f32.mrb[0].mxu0
      %4423 = vmatprep.mubr.bf16.mxu0 0
      %4424 = vmatmul.mubr.bf16.gmra.mrb[0].mxu0 %v3002
      %v4425 = vpop.f32.mrb[0].mxu0
      %v4426 = vadd.f32 %v944, %v4425
      %v4427 = vpop.f32.mrb[0].mxu0
      %v4428 = vpop.f32.mrb[0].mxu0
      %v4429 = vadd.f32 %v944, %v4428
      %v4430 = vpop.f32.mrb[0].mxu0
      %4431 = vmatprep.mubr.bf16.mxu0 0
      %4432 = vmatmul.mubr.bf16.gmra.mrb[0].mxu0 %v3005
      %v4433 = vpop.f32.mrb[0].mxu0
      %v4434 = vadd.f32 %v944, %v4433
      %v4435 = vpop.f32.mrb[0].mxu0
      %v4436 = vpop.f32.mrb[0].mxu0
      %v4437 = vadd.f32 %v944, %v4436
      %v4438 = vpop.f32.mrb[0].mxu0
      %4439 = vmatprep.mubr.bf16.mxu0 0
      %4440 = vmatmul.mubr.bf16.gmra.mrb[0].mxu0 %v3008
      %v4441 = vpop.f32.mrb[0].mxu0
      %v4442 = vadd.f32 %v944, %v4441
      %v4443 = vpop.f32.mrb[0].mxu0
      %v4444 = vpop.f32.mrb[0].mxu0
      %v4445 = vadd.f32 %v944, %v4444
      %v4446 = vpop.f32.mrb[0].mxu0
      %4447 = vmatprep.mubr.bf16.mxu0 0
      %4448 = vmatmul.mubr.bf16.gmra.mrb[0].mxu0 %v3011
      %v4449 = vpop.f32.mrb[0].mxu0
      %v4450 = vadd.f32 %v944, %v4449
      %v4451 = vpop.f32.mrb[0].mxu0
      %v4452 = vpop.f32.mrb[0].mxu0
      %v4453 = vadd.f32 %v944, %v4452
      %v4454 = vpop.f32.mrb[0].mxu0
      %4455 = vmatprep.mubr.bf16.mxu0 0
      %4456 = vmatmul.mubr.bf16.gmra.mrb[0].mxu0 %v3014
      %v4457 = vpop.f32.mrb[0].mxu0
      %v4458 = vadd.f32 %v944, %v4457
      %v4459 = vpop.f32.mrb[0].mxu0
      %v4460 = vpop.f32.mrb[0].mxu0
      %v4461 = vadd.f32 %v944, %v4460
      %v4462 = vpop.f32.mrb[0].mxu0
      %4463 = vmatprep.mubr.bf16.mxu0 0
      %4464 = vmatmul.mubr.bf16.gmra.mrb[0].mxu0 %v3017
      %v4465 = vpop.f32.mrb[0].mxu0
      %v4466 = vadd.f32 %v944, %v4465
      %v4467 = vpop.f32.mrb[0].mxu0
      %v4468 = vpop.f32.mrb[0].mxu0
      %v4469 = vadd.f32 %v944, %v4468
      %v4470 = vpop.f32.mrb[0].mxu0
      %4471 = vmatprep.mubr.bf16.mxu0 0
      %4472 = vmatmul.mubr.bf16.gmra.mrb[0].mxu0 %v3020
      %v4473 = vpop.f32.mrb[0].mxu0
      %v4474 = vadd.f32 %v944, %v4473
      %v4475 = vpop.f32.mrb[0].mxu0
      %v4476 = vpop.f32.mrb[0].mxu0
      %v4477 = vadd.f32 %v944, %v4476
      %v4478 = vpop.f32.mrb[0].mxu0
      %4479 = vmatprep.mubr.bf16.mxu0 0
      %4480 = vmatmul.mubr.bf16.gmra.mrb[0].mxu0 %v3023
      %v4481 = vpop.f32.mrb[0].mxu0
      %v4482 = vadd.f32 %v944, %v4481
      %v4483 = vpop.f32.mrb[0].mxu0
      %v4484 = vpop.f32.mrb[0].mxu0
      %v4485 = vadd.f32 %v944, %v4484
      %v4486 = vpop.f32.mrb[0].mxu0
      %4487 = vmatprep.mubr.bf16.mxu0 0
      %4488 = vmatmul.mubr.bf16.gmra.mrb[0].mxu0 %v3026
      %v4489 = vpop.f32.mrb[0].mxu0
      %v4490 = vadd.f32 %v944, %v4489
      %v4491 = vpop.f32.mrb[0].mxu0
      %v4492 = vpop.f32.mrb[0].mxu0
      %v4493 = vadd.f32 %v944, %v4492
      %v4494 = vpop.f32.mrb[0].mxu0
      %4495 = vmatprep.mubr.bf16.mxu0 0
      %4496 = vmatmul.mubr.bf16.gmra.mrb[0].mxu0 %v3029
      %v4497 = vpop.f32.mrb[0].mxu0
      %v4498 = vadd.f32 %v944, %v4497
      %v4499 = vpop.f32.mrb[0].mxu0
      %v4500 = vpop.f32.mrb[0].mxu0
      %v4501 = vadd.f32 %v944, %v4500
      %v4502 = vpop.f32.mrb[0].mxu0
      %4503 = vmatprep.mubr.bf16.mxu0 0
      %4504 = vmatmul.mubr.bf16.gmra.mrb[0].mxu0 %v3032
      %v4505 = vpop.f32.mrb[0].mxu0
      %v4506 = vadd.f32 %v944, %v4505
      %v4507 = vpop.f32.mrb[0].mxu0
      %v4508 = vpop.f32.mrb[0].mxu0
      %v4509 = vadd.f32 %v944, %v4508
      %v4510 = vpop.f32.mrb[0].mxu0
      %4511 = vmatprep.mubr.bf16.mxu0 0
      %4512 = vmatmul.mubr.bf16.gmra.mrb[0].mxu0 %v3035
      %v4513 = vpop.f32.mrb[0].mxu0
      %v4514 = vadd.f32 %v944, %v4513
      %v4515 = vpop.f32.mrb[0].mxu0
      %v4516 = vpop.f32.mrb[0].mxu0
      %v4517 = vadd.f32 %v944, %v4516
      %v4518 = vpop.f32.mrb[0].mxu0
      %4519 = vmatprep.mubr.bf16.mxu0 0
      %4520 = vmatmul.mubr.bf16.gmra.mrb[0].mxu0 %v3038
      %v4521 = vpop.f32.mrb[0].mxu0
      %v4522 = vadd.f32 %v944, %v4521
      %v4523 = vpop.f32.mrb[0].mxu0
      %v4524 = vpop.f32.mrb[0].mxu0
      %v4525 = vadd.f32 %v944, %v4524
      %v4526 = vpop.f32.mrb[0].mxu0
      %4527 = vmatprep.mubr.bf16.mxu0 0
      %4528 = vmatmul.mubr.bf16.gmra.mrb[0].mxu0 %v3041
      %v4529 = vpop.f32.mrb[0].mxu0
      %v4530 = vadd.f32 %v944, %v4529
      %v4531 = vpop.f32.mrb[0].mxu0
      %v4532 = vpop.f32.mrb[0].mxu0
      %v4533 = vadd.f32 %v944, %v4532
      %v4534 = vpop.f32.mrb[0].mxu0
      %4535 = vmatprep.mubr.bf16.mxu0 0
      %4536 = vmatmul.mubr.bf16.gmra.mrb[0].mxu0 %v3044
      %v4537 = vpop.f32.mrb[0].mxu0
      %v4538 = vadd.f32 %v944, %v4537
      %v4539 = vpop.f32.mrb[0].mxu0
      %v4540 = vpop.f32.mrb[0].mxu0
      %v4541 = vadd.f32 %v944, %v4540
      %v4542 = vpop.f32.mrb[0].mxu0
      %4543 = vmatprep.mubr.bf16.mxu0 0
      %4544 = vmatmul.mubr.bf16.gmra.mrb[0].mxu0 %v3047
      %v4545 = vpop.f32.mrb[0].mxu0
      %v4546 = vadd.f32 %v944, %v4545
      %v4547 = vpop.f32.mrb[0].mxu0
      %v4548 = vpop.f32.mrb[0].mxu0
      %v4549 = vadd.f32 %v944, %v4548
      %v4550 = vpop.f32.mrb[0].mxu0
      %4551 = vmatprep.mubr.bf16.mxu0 0
      %4552 = vmatmul.mubr.bf16.gmra.mrb[0].mxu0 %v3050
      %v4553 = vpop.f32.mrb[0].mxu0
      %v4554 = vadd.f32 %v944, %v4553
      %v4555 = vpop.f32.mrb[0].mxu0
      %v4556 = vpop.f32.mrb[0].mxu0
      %v4557 = vadd.f32 %v944, %v4556
      %v4558 = vpop.f32.mrb[0].mxu0
      %4559 = vmatprep.mubr.bf16.mxu0 0
      %4560 = vmatmul.mubr.bf16.gmra.mrb[0].mxu0 %v3053
      %v4561 = vpop.f32.mrb[0].mxu0
      %v4562 = vadd.f32 %v944, %v4561
      %v4563 = vpop.f32.mrb[0].mxu0
      %v4564 = vpop.f32.mrb[0].mxu0
      %v4565 = vadd.f32 %v944, %v4564
      %v4566 = vpop.f32.mrb[0].mxu0
      %4567 = vmatprep.mubr.bf16.mxu0 0
      %4568 = vmatmul.mubr.bf16.gmra.mrb[0].mxu0 %v3056
      %v4569 = vpop.f32.mrb[0].mxu0
      %v4570 = vadd.f32 %v944, %v4569
      %v4571 = vpop.f32.mrb[0].mxu0
      %v4572 = vpop.f32.mrb[0].mxu0
      %v4573 = vadd.f32 %v944, %v4572
      %v4574 = vpop.f32.mrb[0].mxu0
      %4575 = vmatprep.mubr.bf16.mxu0 0
      %4576 = vmatmul.mubr.bf16.gmra.mrb[0].mxu0 %v3059
      %v4577 = vpop.f32.mrb[0].mxu0
      %v4578 = vadd.f32 %v944, %v4577
      %v4579 = vpop.f32.mrb[0].mxu0
      %v4580 = vpop.f32.mrb[0].mxu0
      %v4581 = vadd.f32 %v944, %v4580
      %v4582 = vpop.f32.mrb[0].mxu0
      %4583 = vmatprep.mubr.bf16.mxu0 0
      %4584 = vmatmul.mubr.bf16.gmra.mrb[0].mxu0 %v3062
      %v4585 = vpop.f32.mrb[0].mxu0
      %v4586 = vadd.f32 %v944, %v4585
      %v4587 = vpop.f32.mrb[0].mxu0
      %v4588 = vpop.f32.mrb[0].mxu0
      %v4589 = vadd.f32 %v944, %v4588
      %v4590 = vpop.f32.mrb[0].mxu0
      %4591 = vmatprep.mubr.bf16.mxu0 0
      %4592 = vmatmul.mubr.bf16.gmra.mrb[0].mxu0 %v3065
      %v4593 = vpop.f32.mrb[0].mxu0
      %v4594 = vadd.f32 %v944, %v4593
      %v4595 = vpop.f32.mrb[0].mxu0
      %v4596 = vpop.f32.mrb[0].mxu0
      %v4597 = vadd.f32 %v944, %v4596
      %v4598 = vpop.f32.mrb[0].mxu0
      %4599 = vmatprep.mubr.bf16.mxu0 0
      %4600 = vmatmul.mubr.bf16.gmra.mrb[0].mxu0 %v3068
      %v4601 = vpop.f32.mrb[0].mxu0
      %v4602 = vadd.f32 %v944, %v4601
      %v4603 = vpop.f32.mrb[0].mxu0
      %v4604 = vpop.f32.mrb[0].mxu0
      %v4605 = vadd.f32 %v944, %v4604
      %v4606 = vpop.f32.mrb[0].mxu0
      %4607 = vmatprep.mubr.bf16.mxu0 0
      %4608 = vmatmul.mubr.bf16.gmra.mrb[0].mxu0 %v3071
      %v4609 = vpop.f32.mrb[0].mxu0
      %v4610 = vadd.f32 %v944, %v4609
      %v4611 = vpop.f32.mrb[0].mxu0
      %v4612 = vpop.f32.mrb[0].mxu0
      %v4613 = vadd.f32 %v944, %v4612
      %v4614 = vpop.f32.mrb[0].mxu0
      %4615 = vmatprep.mubr.bf16.mxu0 0
      %4616 = vmatmul.mubr.bf16.gmra.mrb[0].mxu0 %v3074
      %v4617 = vpop.f32.mrb[0].mxu0
      %v4618 = vadd.f32 %v944, %v4617
      %v4619 = vpop.f32.mrb[0].mxu0
      %v4620 = vpop.f32.mrb[0].mxu0
      %v4621 = vadd.f32 %v944, %v4620
      %v4622 = vpop.f32.mrb[0].mxu0
      %4623 = vmatprep.mubr.bf16.mxu0 0
      %4624 = vmatmul.mubr.bf16.gmra.mrb[0].mxu0 %v3077
      %v4625 = vpop.f32.mrb[0].mxu0
      %v4626 = vadd.f32 %v944, %v4625
      %v4627 = vpop.f32.mrb[0].mxu0
      %v4628 = vpop.f32.mrb[0].mxu0
      %v4629 = vadd.f32 %v944, %v4628
      %v4630 = vpop.f32.mrb[0].mxu0
      %4631 = vmatprep.mubr.bf16.mxu0 0
      %4632 = vmatmul.mubr.bf16.gmra.mrb[0].mxu0 %v3080
      %v4633 = vpop.f32.mrb[0].mxu0
      %v4634 = vadd.f32 %v944, %v4633
      %v4635 = vpop.f32.mrb[0].mxu0
      %v4636 = vpop.f32.mrb[0].mxu0
      %v4637 = vadd.f32 %v944, %v4636
      %v4638 = vpop.f32.mrb[0].mxu0
      %4639 = vmatprep.mubr.bf16.mxu0 0
      %4640 = vmatmul.mubr.bf16.gmra.mrb[0].mxu0 %v3083
      %v4641 = vpop.f32.mrb[0].mxu0
      %v4642 = vadd.f32 %v944, %v4641
      %v4643 = vpop.f32.mrb[0].mxu0
      %v4644 = vpop.f32.mrb[0].mxu0
      %v4645 = vadd.f32 %v944, %v4644
      %v4646 = vpop.f32.mrb[0].mxu0
      %4647 = vmatprep.mubr.bf16.mxu0 0
      %4648 = vmatmul.mubr.bf16.gmra.mrb[0].mxu0 %v3086
      %v4649 = vpop.f32.mrb[0].mxu0
      %v4650 = vadd.f32 %v944, %v4649
      %v4651 = vpop.f32.mrb[0].mxu0
      %v4652 = vpop.f32.mrb[0].mxu0
      %v4653 = vadd.f32 %v944, %v4652
      %v4654 = vpop.f32.mrb[0].mxu0
      %4655 = vmatprep.mubr.bf16.mxu0 0
      %4656 = vmatmul.mubr.bf16.gmra.mrb[0].mxu0 %v3089
      %v4657 = vpop.f32.mrb[0].mxu0
      %v4658 = vadd.f32 %v944, %v4657
      %v4659 = vpop.f32.mrb[0].mxu0
      %v4660 = vpop.f32.mrb[0].mxu0
      %v4661 = vadd.f32 %v944, %v4660
      %v4662 = vpop.f32.mrb[0].mxu0
      %4663 = vmatprep.mubr.bf16.mxu0 0
      %4664 = vmatmul.mubr.bf16.gmra.mrb[0].mxu0 %v3092
      %v4665 = vpop.f32.mrb[0].mxu0
      %v4666 = vadd.f32 %v944, %v4665
      %v4667 = vpop.f32.mrb[0].mxu0
      %v4668 = vpop.f32.mrb[0].mxu0
      %v4669 = vadd.f32 %v944, %v4668
      %v4670 = vpop.f32.mrb[0].mxu0
      %4671 = vmatprep.mubr.bf16.mxu0 0
      %4672 = vmatmul.mubr.bf16.gmra.mrb[0].mxu0 %v3095
      %v4673 = vpop.f32.mrb[0].mxu0
      %v4674 = vadd.f32 %v944, %v4673
      %v4675 = vpop.f32.mrb[0].mxu0
      %v4676 = vpop.f32.mrb[0].mxu0
      %v4677 = vadd.f32 %v944, %v4676
      %v4678 = vpop.f32.mrb[0].mxu0
      %4679 = vmatprep.mubr.bf16.mxu0 0
      %4680 = vmatmul.mubr.bf16.gmra.mrb[0].mxu0 %v3098
      %v4681 = vpop.f32.mrb[0].mxu0
      %v4682 = vadd.f32 %v944, %v4681
      %v4683 = vpop.f32.mrb[0].mxu0
      %v4684 = vpop.f32.mrb[0].mxu0
      %v4685 = vadd.f32 %v944, %v4684
      %v4686 = vpop.f32.mrb[0].mxu0
      %4687 = vmatprep.mubr.bf16.mxu0 0
      %4688 = vmatmul.mubr.bf16.gmra.mrb[0].mxu0 %v3101
      %v4689 = vpop.f32.mrb[0].mxu0
      %v4690 = vadd.f32 %v944, %v4689
      %v4691 = vpop.f32.mrb[0].mxu0
      %v4692 = vpop.f32.mrb[0].mxu0
      %v4693 = vadd.f32 %v944, %v4692
      %v4694 = vpop.f32.mrb[0].mxu0
      %4695 = vmatprep.mubr.bf16.mxu0 0
      %4696 = vmatmul.mubr.bf16.gmra.mrb[0].mxu0 %v3104
      %v4697 = vpop.f32.mrb[0].mxu0
      %v4698 = vadd.f32 %v944, %v4697
      %v4699 = vpop.f32.mrb[0].mxu0
      %v4700 = vpop.f32.mrb[0].mxu0
      %v4701 = vadd.f32 %v944, %v4700
      %v4702 = vpop.f32.mrb[0].mxu0
      %4703 = vmatprep.mubr.bf16.mxu0 0
      %4704 = vmatmul.mubr.bf16.gmra.mrb[0].mxu0 %v3107
      %v4705 = vpop.f32.mrb[0].mxu0
      %v4706 = vadd.f32 %v944, %v4705
      %v4707 = vpop.f32.mrb[0].mxu0
      %v4708 = vpop.f32.mrb[0].mxu0
      %v4709 = vadd.f32 %v944, %v4708
      %v4710 = vpop.f32.mrb[0].mxu0
      %4711 = vmatprep.mubr.bf16.mxu0 0
      %4712 = vmatmul.mubr.bf16.gmra.mrb[0].mxu0 %v3110
      %v4713 = vpop.f32.mrb[0].mxu0
      %v4714 = vadd.f32 %v944, %v4713
      %v4715 = vpop.f32.mrb[0].mxu0
      %v4716 = vpop.f32.mrb[0].mxu0
      %v4717 = vadd.f32 %v944, %v4716
      %v4718 = vpop.f32.mrb[0].mxu0
      %4719 = vmatprep.mubr.bf16.mxu0 0
      %4720 = vmatmul.mubr.bf16.gmra.mrb[0].mxu0 %v3113
      %v4721 = vpop.f32.mrb[0].mxu0
      %v4722 = vadd.f32 %v944, %v4721
      %v4723 = vpop.f32.mrb[0].mxu0
      %v4724 = vpop.f32.mrb[0].mxu0
      %v4725 = vadd.f32 %v944, %v4724
      %v4726 = vpop.f32.mrb[0].mxu0
      %4727 = vmatprep.mubr.bf16.mxu0 0
      %4728 = vmatmul.mubr.bf16.gmra.mrb[0].mxu0 %v3116
      %v4729 = vpop.f32.mrb[0].mxu0
      %v4730 = vadd.f32 %v944, %v4729
      %v4731 = vpop.f32.mrb[0].mxu0
      %v4732 = vpop.f32.mrb[0].mxu0
      %v4733 = vadd.f32 %v944, %v4732
      %v4734 = vpop.f32.mrb[0].mxu0
      %4735 = vmatprep.mubr.bf16.mxu0 0
      %4736 = vmatmul.mubr.bf16.gmra.mrb[0].mxu0 %v3119
      %v4737 = vpop.f32.mrb[0].mxu0
      %v4738 = vadd.f32 %v944, %v4737
      %v4739 = vpop.f32.mrb[0].mxu0
      %v4740 = vpop.f32.mrb[0].mxu0
      %v4741 = vadd.f32 %v944, %v4740
      %v4742 = vpop.f32.mrb[0].mxu0
      %4743 = vmatprep.mubr.bf16.mxu0 0
      %4744 = vmatmul.mubr.bf16.gmra.mrb[0].mxu0 %v3122
      %v4745 = vpop.f32.mrb[0].mxu0
      %v4746 = vadd.f32 %v944, %v4745
      %v4747 = vpop.f32.mrb[0].mxu0
      %v4748 = vpop.f32.mrb[0].mxu0
      %v4749 = vadd.f32 %v944, %v4748
      %v4750 = vpop.f32.mrb[0].mxu0
      %4751 = vmatprep.mubr.bf16.mxu0 0
      %4752 = vmatmul.mubr.bf16.gmra.mrb[0].mxu0 %v3125
      %v4753 = vpop.f32.mrb[0].mxu0
      %v4754 = vadd.f32 %v944, %v4753
      %v4755 = vpop.f32.mrb[0].mxu0
      %v4756 = vpop.f32.mrb[0].mxu0
      %v4757 = vadd.f32 %v944, %v4756
      %v4758 = vpop.f32.mrb[0].mxu0
      %4759 = vmatprep.mubr.bf16.mxu0 0
      %4760 = vmatmul.mubr.bf16.gmra.mrb[0].mxu0 %v3128
      %v4761 = vpop.f32.mrb[0].mxu0
      %v4762 = vadd.f32 %v944, %v4761
      %v4763 = vpop.f32.mrb[0].mxu0
      %v4764 = vpop.f32.mrb[0].mxu0
      %v4765 = vadd.f32 %v944, %v4764
      %v4766 = vpop.f32.mrb[0].mxu0
      %4767 = vmatprep.mubr.bf16.mxu0 0
      %4768 = vmatmul.mubr.bf16.gmra.mrb[0].mxu0 %v3131
      %v4769 = vpop.f32.mrb[0].mxu0
      %v4770 = vadd.f32 %v944, %v4769
      %v4771 = vpop.f32.mrb[0].mxu0
      %v4772 = vpop.f32.mrb[0].mxu0
      %v4773 = vadd.f32 %v944, %v4772
      %v4774 = vpop.f32.mrb[0].mxu0
      %4775 = vmatprep.mubr.bf16.mxu0 0
      %4776 = vmatmul.mubr.bf16.gmra.mrb[0].mxu0 %v3134
      %v4777 = vpop.f32.mrb[0].mxu0
      %v4778 = vadd.f32 %v944, %v4777
      %v4779 = vpop.f32.mrb[0].mxu0
      %v4780 = vpop.f32.mrb[0].mxu0
      %v4781 = vadd.f32 %v944, %v4780
      %v4782 = vpop.f32.mrb[0].mxu0
      %4783 = vmatprep.mubr.bf16.mxu0 0
      %4784 = vmatmul.mubr.bf16.gmra.mrb[0].mxu0 %v3137
      %v4785 = vpop.f32.mrb[0].mxu0
      %v4786 = vadd.f32 %v944, %v4785
      %v4787 = vpop.f32.mrb[0].mxu0
      %v4788 = vpop.f32.mrb[0].mxu0
      %v4789 = vadd.f32 %v944, %v4788
      %v4790 = vpop.f32.mrb[0].mxu0
      %4791 = vmatprep.mubr.bf16.mxu0 0
      %4792 = vmatmul.mubr.bf16.gmra.mrb[0].mxu0 %v3140
      %v4793 = vpop.f32.mrb[0].mxu0
      %v4794 = vadd.f32 %v944, %v4793
      %v4795 = vpop.f32.mrb[0].mxu0
      %v4796 = vpop.f32.mrb[0].mxu0
      %v4797 = vadd.f32 %v944, %v4796
      %v4798 = vpop.f32.mrb[0].mxu0
      %4799 = vmatprep.mubr.bf16.mxu0 0
      %4800 = vmatmul.mubr.bf16.gmra.mrb[0].mxu0 %v3143
      %v4801 = vpop.f32.mrb[0].mxu0
      %v4802 = vadd.f32 %v944, %v4801
      %v4803 = vpop.f32.mrb[0].mxu0
      %v4804 = vpop.f32.mrb[0].mxu0
      %v4805 = vadd.f32 %v944, %v4804
      %v4806 = vpop.f32.mrb[0].mxu0
      %4807 = vmatprep.mubr.bf16.mxu0 0
      %4808 = vmatmul.mubr.bf16.gmra.mrb[0].mxu0 %v3146
      %v4809 = vpop.f32.mrb[0].mxu0
      %v4810 = vadd.f32 %v944, %v4809
      %v4811 = vpop.f32.mrb[0].mxu0
      %v4812 = vpop.f32.mrb[0].mxu0
      %v4813 = vadd.f32 %v944, %v4812
      %v4814 = vpop.f32.mrb[0].mxu0
      %4815 = vmatprep.mubr.bf16.mxu0 0
      %4816 = vmatmul.mubr.bf16.gmra.mrb[0].mxu0 %v3149
      %v4817 = vpop.f32.mrb[0].mxu0
      %v4818 = vadd.f32 %v944, %v4817
      %v4819 = vpop.f32.mrb[0].mxu0
      %v4820 = vpop.f32.mrb[0].mxu0
      %v4821 = vadd.f32 %v944, %v4820
      %v4822 = vpop.f32.mrb[0].mxu0
      %4823 = vmatprep.mubr.bf16.mxu0 0
      %4824 = vmatmul.mubr.bf16.gmra.mrb[0].mxu0 %v3152
      %v4825 = vpop.f32.mrb[0].mxu0
      %v4826 = vadd.f32 %v944, %v4825
      %v4827 = vpop.f32.mrb[0].mxu0
      %v4828 = vpop.f32.mrb[0].mxu0
      %v4829 = vadd.f32 %v944, %v4828
      %v4830 = vpop.f32.mrb[0].mxu0
      %4831 = vmatprep.mubr.bf16.mxu0 0
      %4832 = vmatmul.mubr.bf16.gmra.mrb[0].mxu0 %v3155
      %v4833 = vpop.f32.mrb[0].mxu0
      %v4834 = vadd.f32 %v944, %v4833
      %v4835 = vpop.f32.mrb[0].mxu0
      %v4836 = vpop.f32.mrb[0].mxu0
      %v4837 = vadd.f32 %v944, %v4836
      %v4838 = vpop.f32.mrb[0].mxu0
      %4839 = vmatprep.mubr.bf16.mxu0 0
      %4840 = vmatmul.mubr.bf16.gmra.mrb[0].mxu0 %v3158
      %v4841 = vpop.f32.mrb[0].mxu0
      %v4842 = vadd.f32 %v944, %v4841
      %v4843 = vpop.f32.mrb[0].mxu0
      %v4844 = vpop.f32.mrb[0].mxu0
      %v4845 = vadd.f32 %v944, %v4844
      %v4846 = vpop.f32.mrb[0].mxu0
      %4847 = vmatprep.mubr.bf16.mxu0 0
      %4848 = vmatmul.mubr.bf16.gmra.mrb[0].mxu0 %v3161
      %v4849 = vpop.f32.mrb[0].mxu0
      %v4850 = vadd.f32 %v944, %v4849
      %v4851 = vpop.f32.mrb[0].mxu0
      %v4852 = vpop.f32.mrb[0].mxu0
      %v4853 = vadd.f32 %v944, %v4852
      %v4854 = vpop.f32.mrb[0].mxu0
      %4855 = vmatprep.mubr.bf16.mxu0 0
      %4856 = vmatmul.mubr.bf16.gmra.mrb[0].mxu0 %v3164
      %v4857 = vpop.f32.mrb[0].mxu0
      %v4858 = vadd.f32 %v944, %v4857
      %v4859 = vpop.f32.mrb[0].mxu0
      %v4860 = vpop.f32.mrb[0].mxu0
      %v4861 = vadd.f32 %v944, %v4860
      %v4862 = vpop.f32.mrb[0].mxu0
      %4863 = vmatprep.mubr.bf16.mxu0 0
      %4864 = vmatmul.mubr.bf16.gmra.mrb[0].mxu0 %v3167
      %v4865 = vpop.f32.mrb[0].mxu0
      %v4866 = vadd.f32 %v944, %v4865
      %v4867 = vpop.f32.mrb[0].mxu0
      %v4868 = vpop.f32.mrb[0].mxu0
      %v4869 = vadd.f32 %v944, %v4868
      %v4870 = vpop.f32.mrb[0].mxu0
      %4871 = vmatprep.mubr.bf16.mxu0 0
      %4872 = vmatmul.mubr.bf16.gmra.mrb[0].mxu0 %v3170
      %v4873 = vpop.f32.mrb[0].mxu0
      %v4874 = vadd.f32 %v944, %v4873
      %v4875 = vpop.f32.mrb[0].mxu0
      %v4876 = vpop.f32.mrb[0].mxu0
      %v4877 = vadd.f32 %v944, %v4876
      %v4878 = vpop.f32.mrb[0].mxu0
      %4879 = vmatprep.mubr.bf16.mxu0 0
      %4880 = vmatmul.mubr.bf16.gmra.mrb[0].mxu0 %v3173
      %v4881 = vpop.f32.mrb[0].mxu0
      %v4882 = vadd.f32 %v944, %v4881
      %v4883 = vpop.f32.mrb[0].mxu0
      %v4884 = vpop.f32.mrb[0].mxu0
      %v4885 = vadd.f32 %v944, %v4884
      %v4886 = vpop.f32.mrb[0].mxu0
      %4887 = vmatprep.mubr.bf16.mxu0 0
      %4888 = vmatmul.mubr.bf16.gmra.mrb[0].mxu0 %v3176
      %v4889 = vpop.f32.mrb[0].mxu0
      %v4890 = vadd.f32 %v944, %v4889
      %v4891 = vpop.f32.mrb[0].mxu0
      %v4892 = vpop.f32.mrb[0].mxu0
      %v4893 = vadd.f32 %v944, %v4892
      %v4894 = vpop.f32.mrb[0].mxu0
      %4895 = vmatprep.mubr.bf16.mxu0 0
      %4896 = vmatmul.mubr.bf16.gmra.mrb[0].mxu0 %v3179
      %v4897 = vpop.f32.mrb[0].mxu0
      %v4898 = vadd.f32 %v944, %v4897
      %v4899 = vpop.f32.mrb[0].mxu0
      %v4900 = vpop.f32.mrb[0].mxu0
      %v4901 = vadd.f32 %v944, %v4900
      %v4902 = vpop.f32.mrb[0].mxu0
      %4903 = vmatprep.mubr.bf16.mxu0 0
      %4904 = vmatmul.mubr.bf16.gmra.mrb[0].mxu0 %v3182
      %v4905 = vpop.f32.mrb[0].mxu0
      %v4906 = vadd.f32 %v944, %v4905
      %v4907 = vpop.f32.mrb[0].mxu0
      %v4908 = vpop.f32.mrb[0].mxu0
      %v4909 = vadd.f32 %v944, %v4908
      %v4910 = vpop.f32.mrb[0].mxu0
      %4911 = vmatprep.mubr.bf16.mxu0 0
      %4912 = vmatmul.mubr.bf16.gmra.mrb[0].mxu0 %v3185
      %v4913 = vpop.f32.mrb[0].mxu0
      %v4914 = vadd.f32 %v944, %v4913
      %v4915 = vpop.f32.mrb[0].mxu0
      %v4916 = vpop.f32.mrb[0].mxu0
      %v4917 = vadd.f32 %v944, %v4916
      %v4918 = vpop.f32.mrb[0].mxu0
      %4919 = vmatprep.mubr.bf16.mxu0 0
      %4920 = vmatmul.mubr.bf16.gmra.mrb[0].mxu0 %v3188
      %v4921 = vpop.f32.mrb[0].mxu0
      %v4922 = vadd.f32 %v944, %v4921
      %v4923 = vpop.f32.mrb[0].mxu0
      %v4924 = vpop.f32.mrb[0].mxu0
      %v4925 = vadd.f32 %v944, %v4924
      %v4926 = vpop.f32.mrb[0].mxu0
      %4927 = vmatprep.mubr.bf16.mxu0 0
      %4928 = vmatmul.mubr.bf16.gmra.mrb[0].mxu0 %v3191
      %v4929 = vpop.f32.mrb[0].mxu0
      %v4930 = vadd.f32 %v944, %v4929
      %v4931 = vpop.f32.mrb[0].mxu0
      %v4932 = vpop.f32.mrb[0].mxu0
      %v4933 = vadd.f32 %v944, %v4932
      %v4934 = vpop.f32.mrb[0].mxu0
      %4935 = vmatprep.mubr.bf16.mxu0 0
      %4936 = vmatmul.mubr.bf16.gmra.mrb[0].mxu0 %v3194
      %v4937 = vpop.f32.mrb[0].mxu0
      %v4938 = vadd.f32 %v944, %v4937
      %v4939 = vpop.f32.mrb[0].mxu0
      %v4940 = vpop.f32.mrb[0].mxu0
      %v4941 = vadd.f32 %v944, %v4940
      %v4942 = vpop.f32.mrb[0].mxu0
      %4943 = vmatprep.mubr.bf16.mxu0 0
      %4944 = vmatmul.mubr.bf16.gmra.mrb[0].mxu0 %v3197
      %v4945 = vpop.f32.mrb[0].mxu0
      %v4946 = vadd.f32 %v944, %v4945
      %v4947 = vpop.f32.mrb[0].mxu0
      %v4948 = vpop.f32.mrb[0].mxu0
      %v4949 = vadd.f32 %v944, %v4948
      %v4950 = vpop.f32.mrb[0].mxu0
      %4951 = vmatprep.mubr.bf16.mxu0 0
      %4952 = vmatmul.mubr.bf16.gmra.mrb[0].mxu0 %v3200
      %v4953 = vpop.f32.mrb[0].mxu0
      %v4954 = vadd.f32 %v944, %v4953
      %v4955 = vpop.f32.mrb[0].mxu0
      %v4956 = vpop.f32.mrb[0].mxu0
      %v4957 = vadd.f32 %v944, %v4956
      %v4958 = vpop.f32.mrb[0].mxu0
      %4959 = vmatprep.mubr.bf16.mxu0 0
      %4960 = vmatmul.mubr.bf16.gmra.mrb[0].mxu0 %v3203
      %v4961 = vpop.f32.mrb[0].mxu0
      %v4962 = vadd.f32 %v944, %v4961
      %v4963 = vpop.f32.mrb[0].mxu0
      %v4964 = vpop.f32.mrb[0].mxu0
      %v4965 = vadd.f32 %v944, %v4964
      %v4966 = vpop.f32.mrb[0].mxu0
      %4967 = vmatprep.mubr.bf16.mxu0 0
      %4968 = vmatmul.mubr.bf16.gmra.mrb[0].mxu0 %v3206
      %v4969 = vpop.f32.mrb[0].mxu0
      %v4970 = vadd.f32 %v944, %v4969
      %v4971 = vpop.f32.mrb[0].mxu0
      %v4972 = vpop.f32.mrb[0].mxu0
      %v4973 = vadd.f32 %v944, %v4972
      %v4974 = vpop.f32.mrb[0].mxu0
      %4975 = vmatprep.mubr.bf16.mxu0 0
      %4976 = vmatmul.mubr.bf16.gmra.mrb[0].mxu0 %v3209
      %v4977 = vpop.f32.mrb[0].mxu0
      %v4978 = vadd.f32 %v944, %v4977
      %v4979 = vpop.f32.mrb[0].mxu0
      %v4980 = vpop.f32.mrb[0].mxu0
      %v4981 = vadd.f32 %v944, %v4980
      %v4982 = vpop.f32.mrb[0].mxu0
      %4983 = vmatprep.mubr.bf16.mxu0 0
      %4984 = vmatmul.mubr.bf16.gmra.mrb[0].mxu0 %v3212
      %v4985 = vpop.f32.mrb[0].mxu0
      %v4986 = vadd.f32 %v944, %v4985
      %v4987 = vpop.f32.mrb[0].mxu0
      %v4988 = vpop.f32.mrb[0].mxu0
      %v4989 = vadd.f32 %v944, %v4988
      %v4990 = vpop.f32.mrb[0].mxu0
      %4991 = vmatprep.mubr.bf16.mxu0 0
      %4992 = vmatmul.mubr.bf16.gmra.mrb[0].mxu0 %v3215
      %v4993 = vpop.f32.mrb[0].mxu0
      %v4994 = vadd.f32 %v944, %v4993
      %v4995 = vpop.f32.mrb[0].mxu0
      %v4996 = vpop.f32.mrb[0].mxu0
      %v4997 = vadd.f32 %v944, %v4996
      %v4998 = vpop.f32.mrb[0].mxu0
      %4999 = vmatprep.mubr.bf16.mxu0 0
      %5000 = vmatmul.mubr.bf16.gmra.mrb[0].mxu0 %v3218
      %v5001 = vpop.f32.mrb[0].mxu0
      %v5002 = vadd.f32 %v944, %v5001
      %v5003 = vpop.f32.mrb[0].mxu0
      %v5004 = vpop.f32.mrb[0].mxu0
      %v5005 = vadd.f32 %v944, %v5004
      %v5006 = vpop.f32.mrb[0].mxu0
      %5007 = vmatprep.mubr.bf16.mxu0 0
      %5008 = vmatmul.mubr.bf16.gmra.mrb[0].mxu0 %v3221
      %v5009 = vpop.f32.mrb[0].mxu0
      %v5010 = vadd.f32 %v944, %v5009
      %v5011 = vpop.f32.mrb[0].mxu0
      %v5012 = vpop.f32.mrb[0].mxu0
      %v5013 = vadd.f32 %v944, %v5012
      %v5014 = vpop.f32.mrb[0].mxu0
      %5015 = vmatprep.mubr.bf16.mxu0 0
      %5016 = vmatmul.mubr.bf16.gmra.mrb[0].mxu0 %v3224
      %v5017 = vpop.f32.mrb[0].mxu0
      %v5018 = vadd.f32 %v944, %v5017
      %v5019 = vpop.f32.mrb[0].mxu0
      %v5020 = vpop.f32.mrb[0].mxu0
      %v5021 = vadd.f32 %v944, %v5020
      %v5022 = vpop.f32.mrb[0].mxu0
      %5023 = vmatprep.mubr.bf16.mxu0 0
      %5024 = vmatmul.mubr.bf16.gmra.mrb[0].mxu0 %v3227
      %v5025 = vpop.f32.mrb[0].mxu0
      %v5026 = vadd.f32 %v944, %v5025
      %v5027 = vpop.f32.mrb[0].mxu0
      %v5028 = vpop.f32.mrb[0].mxu0
      %v5029 = vadd.f32 %v944, %v5028
      %v5030 = vpop.f32.mrb[0].mxu0
      %5031 = vmatprep.mubr.bf16.mxu0 0
      %5032 = vmatmul.mubr.bf16.gmra.mrb[0].mxu0 %v3230
      %v5033 = vpop.f32.mrb[0].mxu0
      %v5034 = vadd.f32 %v944, %v5033
      %v5035 = vpop.f32.mrb[0].mxu0
      %v5036 = vpop.f32.mrb[0].mxu0
      %v5037 = vadd.f32 %v944, %v5036
      %v5038 = vpop.f32.mrb[0].mxu0
      %5039 = vmatprep.mubr.bf16.mxu0 0
      %5040 = vmatmul.mubr.bf16.gmra.mrb[0].mxu0 %v3233
      %v5041 = vpop.f32.mrb[0].mxu0
      %v5042 = vadd.f32 %v944, %v5041
      %v5043 = vpop.f32.mrb[0].mxu0
      %v5044 = vpop.f32.mrb[0].mxu0
      %v5045 = vadd.f32 %v944, %v5044
      %v5046 = vpop.f32.mrb[0].mxu0
      %5047 = vmatprep.mubr.bf16.mxu0 0
      %5048 = vmatmul.mubr.bf16.gmra.mrb[0].mxu0 %v3236
      %v5049 = vpop.f32.mrb[0].mxu0
      %v5050 = vadd.f32 %v944, %v5049
      %v5051 = vpop.f32.mrb[0].mxu0
      %v5052 = vpop.f32.mrb[0].mxu0
      %v5053 = vadd.f32 %v944, %v5052
      %v5054 = vpop.f32.mrb[0].mxu0
      %5055 = vmatprep.mubr.bf16.mxu0 0
      %5056 = vmatmul.mubr.bf16.gmra.mrb[0].mxu0 %v3239
      %v5057 = vpop.f32.mrb[0].mxu0
      %v5058 = vadd.f32 %v944, %v5057
      %v5059 = vpop.f32.mrb[0].mxu0
      %v5060 = vpop.f32.mrb[0].mxu0
      %v5061 = vadd.f32 %v944, %v5060
      %v5062 = vpop.f32.mrb[0].mxu0
      %5063 = vmatprep.mubr.bf16.mxu0 0
      %5064 = vmatmul.mubr.bf16.gmra.mrb[0].mxu0 %v3242
      %v5065 = vpop.f32.mrb[0].mxu0
      %v5066 = vadd.f32 %v944, %v5065
      %v5067 = vpop.f32.mrb[0].mxu0
      %v5068 = vpop.f32.mrb[0].mxu0
      %v5069 = vadd.f32 %v944, %v5068
      %v5070 = vpop.f32.mrb[0].mxu0
      %5071 = vmatprep.mubr.bf16.mxu0 0
      %5072 = vmatmul.mubr.bf16.gmra.mrb[0].mxu0 %v3245
      %v5073 = vpop.f32.mrb[0].mxu0
      %v5074 = vadd.f32 %v944, %v5073
      %v5075 = vpop.f32.mrb[0].mxu0
      %v5076 = vpop.f32.mrb[0].mxu0
      %v5077 = vadd.f32 %v944, %v5076
      %v5078 = vpop.f32.mrb[0].mxu0
      %5079 = vmatprep.mubr.bf16.mxu0 0
      %5080 = vmatmul.mubr.bf16.gmra.mrb[0].mxu0 %v3248
      %v5081 = vpop.f32.mrb[0].mxu0
      %v5082 = vadd.f32 %v944, %v5081
      %v5083 = vpop.f32.mrb[0].mxu0
      %v5084 = vpop.f32.mrb[0].mxu0
      %v5085 = vadd.f32 %v944, %v5084
      %v5086 = vpop.f32.mrb[0].mxu0
      %5087 = vmatprep.mubr.bf16.mxu0 0
      %5088 = vmatmul.mubr.bf16.gmra.mrb[0].mxu0 %v3251
      %v5089 = vpop.f32.mrb[0].mxu0
      %v5090 = vadd.f32 %v944, %v5089
      %v5091 = vpop.f32.mrb[0].mxu0
      %v5092 = vpop.f32.mrb[0].mxu0
      %v5093 = vadd.f32 %v944, %v5092
      %v5094 = vpop.f32.mrb[0].mxu0
      %5095 = vmatprep.mubr.bf16.mxu0 0
      %5096 = vmatmul.mubr.bf16.gmra.mrb[0].mxu0 %v3254
      %v5097 = vpop.f32.mrb[0].mxu0
      %v5098 = vadd.f32 %v944, %v5097
      %v5099 = vpop.f32.mrb[0].mxu0
      %v5100 = vpop.f32.mrb[0].mxu0
      %v5101 = vadd.f32 %v944, %v5100
      %v5102 = vpop.f32.mrb[0].mxu0
      %5103 = vmatprep.mubr.bf16.mxu0 0
      %5104 = vmatmul.mubr.bf16.gmra.mrb[0].mxu0 %v3257
      %v5105 = vpop.f32.mrb[0].mxu0
      %v5106 = vadd.f32 %v944, %v5105
      %v5107 = vpop.f32.mrb[0].mxu0
      %v5108 = vpop.f32.mrb[0].mxu0
      %v5109 = vadd.f32 %v944, %v5108
      %v5110 = vpop.f32.mrb[0].mxu0
      %5111 = vmatprep.mubr.bf16.mxu0 0
      %5112 = vmatmul.mubr.bf16.gmra.mrb[0].mxu0 %v3260
      %v5113 = vpop.f32.mrb[0].mxu0
      %v5114 = vadd.f32 %v944, %v5113
      %v5115 = vpop.f32.mrb[0].mxu0
      %v5116 = vpop.f32.mrb[0].mxu0
      %v5117 = vadd.f32 %v944, %v5116
      %v5118 = vpop.f32.mrb[0].mxu0
      %5119 = vmatprep.mubr.bf16.mxu0 0
      %5120 = vmatmul.mubr.bf16.gmra.mrb[0].mxu0 %v3263
      %v5121 = vpop.f32.mrb[0].mxu0
      %v5122 = vadd.f32 %v944, %v5121
      %v5123 = vpop.f32.mrb[0].mxu0
      %v5124 = vpop.f32.mrb[0].mxu0
      %v5125 = vadd.f32 %v944, %v5124
      %v5126 = vpop.f32.mrb[0].mxu0
      %5127 = vmatprep.mubr.bf16.mxu0 0
      %5128 = vmatmul.mubr.bf16.gmra.mrb[0].mxu0 %v3266
      %v5129 = vpop.f32.mrb[0].mxu0
      %v5130 = vadd.f32 %v944, %v5129
      %v5131 = vpop.f32.mrb[0].mxu0
      %v5132 = vpop.f32.mrb[0].mxu0
      %v5133 = vadd.f32 %v944, %v5132
      %v5134 = vpop.f32.mrb[0].mxu0
      %5135 = vmatprep.mubr.bf16.mxu0 0
      %5136 = vmatmul.mubr.bf16.gmra.mrb[0].mxu0 %v3269
      %v5137 = vpop.f32.mrb[0].mxu0
      %v5138 = vadd.f32 %v944, %v5137
      %v5139 = vpop.f32.mrb[0].mxu0
      %v5140 = vpop.f32.mrb[0].mxu0
      %v5141 = vadd.f32 %v944, %v5140
      %v5142 = vpop.f32.mrb[0].mxu0
      %5143 = vmatprep.mubr.bf16.mxu0 0
      %5144 = vmatmul.mubr.bf16.gmra.mrb[0].mxu0 %v3272
      %v5145 = vpop.f32.mrb[0].mxu0
      %v5146 = vadd.f32 %v944, %v5145
      %v5147 = vpop.f32.mrb[0].mxu0
      %v5148 = vpop.f32.mrb[0].mxu0
      %v5149 = vadd.f32 %v944, %v5148
      %v5150 = vpop.f32.mrb[0].mxu0
      %5151 = vmatprep.mubr.bf16.mxu0 0
      %5152 = vmatmul.mubr.bf16.gmra.mrb[0].mxu0 %v3275
      %v5153 = vpop.f32.mrb[0].mxu0
      %v5154 = vadd.f32 %v944, %v5153
      %v5155 = vpop.f32.mrb[0].mxu0
      %v5156 = vpop.f32.mrb[0].mxu0
      %v5157 = vadd.f32 %v944, %v5156
      %v5158 = vpop.f32.mrb[0].mxu0
      %5159 = vmatprep.mubr.bf16.mxu0 0
      %5160 = vmatmul.mubr.bf16.gmra.mrb[0].mxu0 %v3278
      %v5161 = vpop.f32.mrb[0].mxu0
      %v5162 = vadd.f32 %v944, %v5161
      %v5163 = vpop.f32.mrb[0].mxu0
      %v5164 = vpop.f32.mrb[0].mxu0
      %v5165 = vadd.f32 %v944, %v5164
      %v5166 = vpop.f32.mrb[0].mxu0
      %5167 = vmatprep.mubr.bf16.mxu0 0
      %5168 = vmatmul.mubr.bf16.gmra.mrb[0].mxu0 %v3281
      %v5169 = vpop.f32.mrb[0].mxu0
      %v5170 = vadd.f32 %v944, %v5169
      %v5171 = vpop.f32.mrb[0].mxu0
      %v5172 = vpop.f32.mrb[0].mxu0
      %v5173 = vadd.f32 %v944, %v5172
      %v5174 = vpop.f32.mrb[0].mxu0
      %5175 = vmatprep.mubr.bf16.mxu0 0
      %5176 = vmatmul.mubr.bf16.gmra.mrb[0].mxu0 %v3284
      %v5177 = vpop.f32.mrb[0].mxu0
      %v5178 = vadd.f32 %v944, %v5177
      %v5179 = vpop.f32.mrb[0].mxu0
      %v5180 = vpop.f32.mrb[0].mxu0
      %v5181 = vadd.f32 %v944, %v5180
      %v5182 = vpop.f32.mrb[0].mxu0
      %5183 = vmatprep.mubr.bf16.mxu0 0
      %5184 = vmatmul.mubr.bf16.gmra.mrb[0].mxu0 %v3287
      %v5185 = vpop.f32.mrb[0].mxu0
      %v5186 = vadd.f32 %v944, %v5185
      %v5187 = vpop.f32.mrb[0].mxu0
      %v5188 = vpop.f32.mrb[0].mxu0
      %v5189 = vadd.f32 %v944, %v5188
      %v5190 = vpop.f32.mrb[0].mxu0
      %5191 = vmatprep.mubr.bf16.mxu0 0
      %5192 = vmatmul.mubr.bf16.gmra.mrb[0].mxu0 %v3290
      %v5193 = vpop.f32.mrb[0].mxu0
      %v5194 = vadd.f32 %v944, %v5193
      %v5195 = vpop.f32.mrb[0].mxu0
      %v5196 = vpop.f32.mrb[0].mxu0
      %v5197 = vadd.f32 %v944, %v5196
      %v5198 = vpop.f32.mrb[0].mxu0
      %5199 = vmatprep.mubr.bf16.mxu0 0
      %5200 = vmatmul.mubr.bf16.gmra.mrb[0].mxu0 %v3293
      %v5201 = vpop.f32.mrb[0].mxu0
      %v5202 = vadd.f32 %v944, %v5201
      %v5203 = vpop.f32.mrb[0].mxu0
      %v5204 = vpop.f32.mrb[0].mxu0
      %v5205 = vadd.f32 %v944, %v5204
      %v5206 = vpop.f32.mrb[0].mxu0
      %5207 = vmatprep.mubr.bf16.mxu0 0
      %5208 = vmatmul.mubr.bf16.gmra.mrb[0].mxu0 %v3296
      %v5209 = vpop.f32.mrb[0].mxu0
      %v5210 = vadd.f32 %v944, %v5209
      %v5211 = vpop.f32.mrb[0].mxu0
      %v5212 = vpop.f32.mrb[0].mxu0
      %v5213 = vadd.f32 %v944, %v5212
      %v5214 = vpop.f32.mrb[0].mxu0
      %5215 = vmatprep.mubr.bf16.mxu0 0
      %5216 = vmatmul.mubr.bf16.gmra.mrb[0].mxu0 %v3299
      %v5217 = vpop.f32.mrb[0].mxu0
      %v5218 = vadd.f32 %v944, %v5217
      %v5219 = vpop.f32.mrb[0].mxu0
      %v5220 = vpop.f32.mrb[0].mxu0
      %v5221 = vadd.f32 %v944, %v5220
      %v5222 = vpop.f32.mrb[0].mxu0
      %5223 = vmatprep.mubr.bf16.mxu0 0
      %5224 = vmatmul.mubr.bf16.gmra.mrb[0].mxu0 %v3302
      %v5225 = vpop.f32.mrb[0].mxu0
      %v5226 = vadd.f32 %v944, %v5225
      %v5227 = vpop.f32.mrb[0].mxu0
      %v5228 = vpop.f32.mrb[0].mxu0
      %v5229 = vadd.f32 %v944, %v5228
      %v5230 = vpop.f32.mrb[0].mxu0
      %5231 = vmatprep.mubr.bf16.mxu0 0
      %5232 = vmatmul.mubr.bf16.gmra.mrb[0].mxu0 %v3305
      %v5233 = vpop.f32.mrb[0].mxu0
      %v5234 = vadd.f32 %v944, %v5233
      %v5235 = vpop.f32.mrb[0].mxu0
      %v5236 = vpop.f32.mrb[0].mxu0
      %v5237 = vadd.f32 %v944, %v5236
      %v5238 = vpop.f32.mrb[0].mxu0
      %5239 = vmatprep.mubr.bf16.mxu0 0
      %5240 = vmatmul.mubr.bf16.gmra.mrb[0].mxu0 %v3308
      %v5241 = vpop.f32.mrb[0].mxu0
      %v5242 = vadd.f32 %v944, %v5241
      %v5243 = vpop.f32.mrb[0].mxu0
      %v5244 = vpop.f32.mrb[0].mxu0
      %v5245 = vadd.f32 %v944, %v5244
      %v5246 = vpop.f32.mrb[0].mxu0
      %5247 = vmatprep.mubr.bf16.mxu0 0
      %5248 = vmatmul.mubr.bf16.gmra.mrb[0].mxu0 %v3311
      %v5249 = vpop.f32.mrb[0].mxu0
      %v5250 = vadd.f32 %v944, %v5249
      %v5251 = vpop.f32.mrb[0].mxu0
      %v5252 = vpop.f32.mrb[0].mxu0
      %v5253 = vadd.f32 %v944, %v5252
      %v5254 = vpop.f32.mrb[0].mxu0
      %5255 = vmatprep.mubr.bf16.mxu0 0
      %5256 = vmatmul.mubr.bf16.gmra.mrb[0].mxu0 %v3314
      %v5257 = vpop.f32.mrb[0].mxu0
      %v5258 = vadd.f32 %v944, %v5257
      %v5259 = vpop.f32.mrb[0].mxu0
      %v5260 = vpop.f32.mrb[0].mxu0
      %v5261 = vadd.f32 %v944, %v5260
      %v5262 = vpop.f32.mrb[0].mxu0
      %5263 = vmatprep.mubr.bf16.mxu0 0
      %5264 = vmatmul.mubr.bf16.gmra.mrb[0].mxu0 %v3317
      %v5265 = vpop.f32.mrb[0].mxu0
      %v5266 = vadd.f32 %v944, %v5265
      %v5267 = vpop.f32.mrb[0].mxu0
      %v5268 = vpop.f32.mrb[0].mxu0
      %v5269 = vadd.f32 %v944, %v5268
      %v5270 = vpop.f32.mrb[0].mxu0
      %5271 = vmatprep.mubr.bf16.mxu0 0
      %5272 = vmatmul.mubr.bf16.gmra.mrb[0].mxu0 %v3320
      %v5273 = vpop.f32.mrb[0].mxu0
      %v5274 = vadd.f32 %v944, %v5273
      %v5275 = vpop.f32.mrb[0].mxu0
      %v5276 = vpop.f32.mrb[0].mxu0
      %v5277 = vadd.f32 %v944, %v5276
      %v5278 = vpop.f32.mrb[0].mxu0
      %5279 = vmatprep.mubr.bf16.mxu0 0
      %5280 = vmatmul.mubr.bf16.gmra.mrb[0].mxu0 %v3323
      %v5281 = vpop.f32.mrb[0].mxu0
      %v5282 = vadd.f32 %v944, %v5281
      %v5283 = vpop.f32.mrb[0].mxu0
      %v5284 = vpop.f32.mrb[0].mxu0
      %v5285 = vadd.f32 %v944, %v5284
      %v5286 = vpop.f32.mrb[0].mxu0
      %5287 = vmatprep.mubr.bf16.mxu0 0
      %5288 = vmatmul.mubr.bf16.gmra.mrb[0].mxu0 %v3326
      %v5289 = vpop.f32.mrb[0].mxu0
      %v5290 = vadd.f32 %v944, %v5289
      %v5291 = vpop.f32.mrb[0].mxu0
      %v5292 = vpop.f32.mrb[0].mxu0
      %v5293 = vadd.f32 %v944, %v5292
      %v5294 = vpop.f32.mrb[0].mxu0
      %5295 = vmatprep.mubr.bf16.mxu0 0
      %5296 = vmatmul.mubr.bf16.gmra.mrb[0].mxu0 %v3329
      %v5297 = vpop.f32.mrb[0].mxu0
      %v5298 = vadd.f32 %v944, %v5297
      %v5299 = vpop.f32.mrb[0].mxu0
      %v5300 = vpop.f32.mrb[0].mxu0
      %v5301 = vadd.f32 %v944, %v5300
      %v5302 = vpop.f32.mrb[0].mxu0
      %5303 = vmatprep.mubr.bf16.mxu0 0
      %5304 = vmatmul.mubr.bf16.gmra.mrb[0].mxu0 %v3332
      %v5305 = vpop.f32.mrb[0].mxu0
      %v5306 = vadd.f32 %v944, %v5305
      %v5307 = vpop.f32.mrb[0].mxu0
      %v5308 = vpop.f32.mrb[0].mxu0
      %v5309 = vadd.f32 %v944, %v5308
      %v5310 = vpop.f32.mrb[0].mxu0
      %5311 = vmatprep.mubr.bf16.mxu0 0
      %5312 = vmatmul.mubr.bf16.gmra.mrb[0].mxu0 %v3335
      %v5313 = vpop.f32.mrb[0].mxu0
      %v5314 = vadd.f32 %v944, %v5313
      %v5315 = vpop.f32.mrb[0].mxu0
      %v5316 = vpop.f32.mrb[0].mxu0
      %v5317 = vadd.f32 %v944, %v5316
      %v5318 = vpop.f32.mrb[0].mxu0
      %5319 = vmatprep.mubr.bf16.mxu0 0
      %5320 = vmatmul.mubr.bf16.gmra.mrb[0].mxu0 %v3338
      %v5321 = vpop.f32.mrb[0].mxu0
      %v5322 = vadd.f32 %v944, %v5321
      %v5323 = vpop.f32.mrb[0].mxu0
      %v5324 = vpop.f32.mrb[0].mxu0
      %v5325 = vadd.f32 %v944, %v5324
      %v5326 = vpop.f32.mrb[0].mxu0
      %5327 = vmatprep.mubr.bf16.mxu0 0
      %5328 = vmatmul.mubr.bf16.gmra.mrb[0].mxu0 %v3341
      %v5329 = vpop.f32.mrb[0].mxu0
      %v5330 = vadd.f32 %v944, %v5329
      %v5331 = vpop.f32.mrb[0].mxu0
      %v5332 = vpop.f32.mrb[0].mxu0
      %v5333 = vadd.f32 %v944, %v5332
      %v5334 = vpop.f32.mrb[0].mxu0
      %5335 = vmatprep.mubr.bf16.mxu0 0
      %5336 = vmatmul.mubr.bf16.gmra.mrb[0].mxu0 %v3344
      %v5337 = vpop.f32.mrb[0].mxu0
      %v5338 = vadd.f32 %v944, %v5337
      %v5339 = vpop.f32.mrb[0].mxu0
      %v5340 = vpop.f32.mrb[0].mxu0
      %v5341 = vadd.f32 %v944, %v5340
      %v5342 = vpop.f32.mrb[0].mxu0
      %5343 = vmatprep.mubr.bf16.mxu0 0
      %5344 = vmatmul.mubr.bf16.gmra.mrb[0].mxu0 %v3347
      %v5345 = vpop.f32.mrb[0].mxu0
      %v5346 = vadd.f32 %v944, %v5345
      %v5347 = vpop.f32.mrb[0].mxu0
      %v5348 = vpop.f32.mrb[0].mxu0
      %v5349 = vadd.f32 %v944, %v5348
      %v5350 = vpop.f32.mrb[0].mxu0
      %5351 = vmatprep.mubr.bf16.mxu0 0
      %5352 = vmatmul.mubr.bf16.gmra.mrb[0].mxu0 %v3350
      %v5353 = vpop.f32.mrb[0].mxu0
      %v5354 = vadd.f32 %v944, %v5353
      %v5355 = vpop.f32.mrb[0].mxu0
      %v5356 = vpop.f32.mrb[0].mxu0
      %v5357 = vadd.f32 %v944, %v5356
      %v5358 = vpop.f32.mrb[0].mxu0
      %5359 = vmatprep.mubr.bf16.mxu0 0
      %5360 = vmatmul.mubr.bf16.gmra.mrb[0].mxu0 %v3353
      %v5361 = vpop.f32.mrb[0].mxu0
      %v5362 = vadd.f32 %v944, %v5361
      %v5363 = vpop.f32.mrb[0].mxu0
      %v5364 = vpop.f32.mrb[0].mxu0
      %v5365 = vadd.f32 %v944, %v5364
      %v5366 = vpop.f32.mrb[0].mxu0
      %5367 = vmatprep.mubr.bf16.mxu0 0
      %5368 = vmatmul.mubr.bf16.gmra.mrb[0].mxu0 %v3356
      %v5369 = vpop.f32.mrb[0].mxu0
      %v5370 = vadd.f32 %v944, %v5369
      %v5371 = vpop.f32.mrb[0].mxu0
      %v5372 = vpop.f32.mrb[0].mxu0
      %v5373 = vadd.f32 %v944, %v5372
      %v5374 = vpop.f32.mrb[0].mxu0
      %5375 = vmatprep.mubr.bf16.mxu0 0
      %5376 = vmatmul.mubr.bf16.gmra.mrb[0].mxu0 %v3359
      %v5377 = vpop.f32.mrb[0].mxu0
      %v5378 = vadd.f32 %v944, %v5377
      %v5379 = vpop.f32.mrb[0].mxu0
      %v5380 = vpop.f32.mrb[0].mxu0
      %v5381 = vadd.f32 %v944, %v5380
      %v5382 = vpop.f32.mrb[0].mxu0
      %5383 = vmatprep.mubr.bf16.mxu0 0
      %5384 = vmatmul.mubr.bf16.gmra.mrb[0].mxu0 %v3362
      %v5385 = vpop.f32.mrb[0].mxu0
      %v5386 = vadd.f32 %v944, %v5385
      %v5387 = vpop.f32.mrb[0].mxu0
      %v5388 = vpop.f32.mrb[0].mxu0
      %v5389 = vadd.f32 %v944, %v5388
      %v5390 = vpop.f32.mrb[0].mxu0
      %5391 = vmatprep.mubr.bf16.mxu0 0
      %5392 = vmatmul.mubr.bf16.gmra.mrb[0].mxu0 %v3365
      %v5393 = vpop.f32.mrb[0].mxu0
      %v5394 = vadd.f32 %v944, %v5393
      %v5395 = vpop.f32.mrb[0].mxu0
      %v5396 = vpop.f32.mrb[0].mxu0
      %v5397 = vadd.f32 %v944, %v5396
      %v5398 = vpop.f32.mrb[0].mxu0
      %5399 = vmatprep.mubr.bf16.mxu0 0
      %5400 = vmatmul.mubr.bf16.gmra.mrb[0].mxu0 %v3368
      %v5401 = vpop.f32.mrb[0].mxu0
      %v5402 = vadd.f32 %v944, %v5401
      %v5403 = vpop.f32.mrb[0].mxu0
      %v5404 = vpop.f32.mrb[0].mxu0
      %v5405 = vadd.f32 %v944, %v5404
      %v5406 = vpop.f32.mrb[0].mxu0
      %5407 = vmatprep.mubr.bf16.mxu0 0
      %5408 = vmatmul.mubr.bf16.gmra.mrb[0].mxu0 %v3371
      %v5409 = vpop.f32.mrb[0].mxu0
      %v5410 = vadd.f32 %v944, %v5409
      %v5411 = vpop.f32.mrb[0].mxu0
      %v5412 = vpop.f32.mrb[0].mxu0
      %v5413 = vadd.f32 %v944, %v5412
      %v5414 = vpop.f32.mrb[0].mxu0
      %5415 = vmatprep.mubr.bf16.mxu0 0
      %5416 = vmatmul.mubr.bf16.gmra.mrb[0].mxu0 %v3374
      %v5417 = vpop.f32.mrb[0].mxu0
      %v5418 = vadd.f32 %v944, %v5417
      %v5419 = vpop.f32.mrb[0].mxu0
      %v5420 = vpop.f32.mrb[0].mxu0
      %v5421 = vadd.f32 %v944, %v5420
      %v5422 = vpop.f32.mrb[0].mxu0
      %5423 = vmatprep.mubr.bf16.mxu0 0
      %5424 = vmatmul.mubr.bf16.gmra.mrb[0].mxu0 %v3377
      %v5425 = vpop.f32.mrb[0].mxu0
      %v5426 = vadd.f32 %v944, %v5425
      %v5427 = vpop.f32.mrb[0].mxu0
      %v5428 = vpop.f32.mrb[0].mxu0
      %v5429 = vadd.f32 %v944, %v5428
      %v5430 = vpop.f32.mrb[0].mxu0
      %5431 = vmatprep.mubr.bf16.mxu0 0
      %5432 = vmatmul.mubr.bf16.gmra.mrb[0].mxu0 %v3380
      %v5433 = vpop.f32.mrb[0].mxu0
      %v5434 = vadd.f32 %v944, %v5433
      %v5435 = vpop.f32.mrb[0].mxu0
      %v5436 = vpop.f32.mrb[0].mxu0
      %v5437 = vadd.f32 %v944, %v5436
      %v5438 = vpop.f32.mrb[0].mxu0
      %5439 = vmatprep.mubr.bf16.mxu0 0
      %5440 = vmatmul.mubr.bf16.gmra.mrb[0].mxu0 %v3383
      %v5441 = vpop.f32.mrb[0].mxu0
      %v5442 = vadd.f32 %v944, %v5441
      %v5443 = vpop.f32.mrb[0].mxu0
      %v5444 = vpop.f32.mrb[0].mxu0
      %v5445 = vadd.f32 %v944, %v5444
      %v5446 = vpop.f32.mrb[0].mxu0
      %5447 = vmatprep.mubr.bf16.mxu0 0
      %5448 = vmatmul.mubr.bf16.gmra.mrb[0].mxu0 %v3386
      %v5449 = vpop.f32.mrb[0].mxu0
      %v5450 = vadd.f32 %v944, %v5449
      %v5451 = vpop.f32.mrb[0].mxu0
      %v5452 = vpop.f32.mrb[0].mxu0
      %v5453 = vadd.f32 %v944, %v5452
      %v5454 = vpop.f32.mrb[0].mxu0
      %5455 = vmatprep.mubr.bf16.mxu0 0
      %5456 = vmatmul.mubr.bf16.gmra.mrb[0].mxu0 %v3389
      %v5457 = vpop.f32.mrb[0].mxu0
      %v5458 = vadd.f32 %v944, %v5457
      %v5459 = vpop.f32.mrb[0].mxu0
      %v5460 = vpop.f32.mrb[0].mxu0
      %v5461 = vadd.f32 %v944, %v5460
      %v5462 = vpop.f32.mrb[0].mxu0
      %5463 = vmatprep.mubr.bf16.mxu0 0
      %5464 = vmatmul.mubr.bf16.gmra.mrb[0].mxu0 %v3392
      %v5465 = vpop.f32.mrb[0].mxu0
      %v5466 = vadd.f32 %v944, %v5465
      %v5467 = vpop.f32.mrb[0].mxu0
      %v5468 = vpop.f32.mrb[0].mxu0
      %v5469 = vadd.f32 %v944, %v5468
      %v5470 = vpop.f32.mrb[0].mxu0
      %5471 = vmatprep.mubr.bf16.mxu0 0
      %5472 = vmatmul.mubr.bf16.gmra.mrb[0].mxu0 %v3395
      %v5473 = vpop.f32.mrb[0].mxu0
      %v5474 = vadd.f32 %v944, %v5473
      %v5475 = vpop.f32.mrb[0].mxu0
      %v5476 = vpop.f32.mrb[0].mxu0
      %v5477 = vadd.f32 %v944, %v5476
      %v5478 = vpop.f32.mrb[0].mxu0
      %5479 = vmatprep.mubr.bf16.mxu0 0
      %5480 = vmatmul.mubr.bf16.gmra.mrb[0].mxu0 %v3398
      %v5481 = vpop.f32.mrb[0].mxu0
      %v5482 = vadd.f32 %v944, %v5481
      %v5483 = vpop.f32.mrb[0].mxu0
      %v5484 = vpop.f32.mrb[0].mxu0
      %v5485 = vadd.f32 %v944, %v5484
      %v5486 = vpop.f32.mrb[0].mxu0
      %5487 = vmatprep.mubr.bf16.mxu0 0
      %5488 = vmatmul.mubr.bf16.gmra.mrb[0].mxu0 %v3401
      %v5489 = vpop.f32.mrb[0].mxu0
      %v5490 = vadd.f32 %v944, %v5489
      %v5491 = vpop.f32.mrb[0].mxu0
      %v5492 = vpop.f32.mrb[0].mxu0
      %v5493 = vadd.f32 %v944, %v5492
      %v5494 = vpop.f32.mrb[0].mxu0
      %5495 = vmatprep.mubr.bf16.mxu0 0
      %5496 = vmatmul.mubr.bf16.gmra.mrb[0].mxu0 %v3404
      %v5497 = vpop.f32.mrb[0].mxu0
      %v5498 = vadd.f32 %v944, %v5497
      %v5499 = vpop.f32.mrb[0].mxu0
      %v5500 = vpop.f32.mrb[0].mxu0
      %v5501 = vadd.f32 %v944, %v5500
      %v5502 = vpop.f32.mrb[0].mxu0
      %5503 = vmatprep.mubr.bf16.mxu0 0
      %5504 = vmatmul.mubr.bf16.gmra.mrb[0].mxu0 %v3407
      %v5505 = vpop.f32.mrb[0].mxu0
      %v5506 = vadd.f32 %v944, %v5505
      %v5507 = vpop.f32.mrb[0].mxu0
      %v5508 = vpop.f32.mrb[0].mxu0
      %v5509 = vadd.f32 %v944, %v5508
      %v5510 = vpop.f32.mrb[0].mxu0
      %5511 = vmatprep.mubr.bf16.mxu0 0
      %5512 = vmatmul.mubr.bf16.gmra.mrb[0].mxu0 %v3410
      %v5513 = vpop.f32.mrb[0].mxu0
      %v5514 = vadd.f32 %v944, %v5513
      %v5515 = vpop.f32.mrb[0].mxu0
      %v5516 = vpop.f32.mrb[0].mxu0
      %v5517 = vadd.f32 %v944, %v5516
      %v5518 = vpop.f32.mrb[0].mxu0
      %5519 = vmatprep.mubr.bf16.mxu0 0
      %5520 = vmatmul.mubr.bf16.gmra.mrb[0].mxu0 %v3413
      %v5521 = vpop.f32.mrb[0].mxu0
      %v5522 = vadd.f32 %v944, %v5521
      %v5523 = vpop.f32.mrb[0].mxu0
      %v5524 = vpop.f32.mrb[0].mxu0
      %v5525 = vadd.f32 %v944, %v5524
      %v5526 = vpop.f32.mrb[0].mxu0
      %5527 = vmatprep.mubr.bf16.mxu0 0
      %5528 = vmatmul.mubr.bf16.gmra.mrb[0].mxu0 %v3416
      %v5529 = vpop.f32.mrb[0].mxu0
      %v5530 = vadd.f32 %v944, %v5529
      %v5531 = vpop.f32.mrb[0].mxu0
      %v5532 = vpop.f32.mrb[0].mxu0
      %v5533 = vadd.f32 %v944, %v5532
      %v5534 = vpop.f32.mrb[0].mxu0
      %5535 = vmatprep.mubr.bf16.mxu0 0
      %5536 = vmatmul.mubr.bf16.gmra.mrb[0].mxu0 %v3419
      %v5537 = vpop.f32.mrb[0].mxu0
      %v5538 = vadd.f32 %v944, %v5537
      %v5539 = vpop.f32.mrb[0].mxu0
      %v5540 = vpop.f32.mrb[0].mxu0
      %v5541 = vadd.f32 %v944, %v5540
      %v5542 = vpop.f32.mrb[0].mxu0
      %5543 = vmatprep.mubr.bf16.mxu0 0
      %5544 = vmatmul.mubr.bf16.gmra.mrb[0].mxu0 %v3422
      %v5545 = vpop.f32.mrb[0].mxu0
      %v5546 = vadd.f32 %v944, %v5545
      %v5547 = vpop.f32.mrb[0].mxu0
      %v5548 = vpop.f32.mrb[0].mxu0
      %v5549 = vadd.f32 %v944, %v5548
      %v5550 = vpop.f32.mrb[0].mxu0
      %5551 = vmatprep.mubr.bf16.mxu0 0
      %5552 = vmatmul.mubr.bf16.gmra.mrb[0].mxu0 %v3425
      %v5553 = vpop.f32.mrb[0].mxu0
      %v5554 = vadd.f32 %v944, %v5553
      %v5555 = vpop.f32.mrb[0].mxu0
      %v5556 = vpop.f32.mrb[0].mxu0
      %v5557 = vadd.f32 %v944, %v5556
      %v5558 = vpop.f32.mrb[0].mxu0
      %5559 = vmatprep.mubr.bf16.mxu0 0
      %5560 = vmatmul.mubr.bf16.gmra.mrb[0].mxu0 %v3428
      %v5561 = vpop.f32.mrb[0].mxu0
      %v5562 = vadd.f32 %v944, %v5561
      %v5563 = vpop.f32.mrb[0].mxu0
      %v5564 = vpop.f32.mrb[0].mxu0
      %v5565 = vadd.f32 %v944, %v5564
      %v5566 = vpop.f32.mrb[0].mxu0
      %5567 = vmatprep.mubr.bf16.mxu0 0
      %5568 = vmatmul.mubr.bf16.gmra.mrb[0].mxu0 %v3431
      %v5569 = vpop.f32.mrb[0].mxu0
      %v5570 = vadd.f32 %v944, %v5569
      %v5571 = vpop.f32.mrb[0].mxu0
      %v5572 = vpop.f32.mrb[0].mxu0
      %v5573 = vadd.f32 %v944, %v5572
      %v5574 = vpop.f32.mrb[0].mxu0
      %5575 = vmatprep.mubr.bf16.mxu0 0
      %5576 = vmatmul.mubr.bf16.gmra.mrb[0].mxu0 %v3434
      %v5577 = vpop.f32.mrb[0].mxu0
      %v5578 = vadd.f32 %v944, %v5577
      %v5579 = vpop.f32.mrb[0].mxu0
      %v5580 = vpop.f32.mrb[0].mxu0
      %v5581 = vadd.f32 %v944, %v5580
      %v5582 = vpop.f32.mrb[0].mxu0
      %5583 = vmatprep.mubr.bf16.mxu0 0
      %5584 = vmatmul.mubr.bf16.gmra.mrb[0].mxu0 %v3437
      %v5585 = vpop.f32.mrb[0].mxu0
      %v5586 = vadd.f32 %v944, %v5585
      %v5587 = vpop.f32.mrb[0].mxu0
      %v5588 = vpop.f32.mrb[0].mxu0
      %v5589 = vadd.f32 %v944, %v5588
      %v5590 = vpop.f32.mrb[0].mxu0
      %5591 = vmatprep.mubr.bf16.mxu0 0
      %5592 = vmatmul.mubr.bf16.gmra.mrb[0].mxu0 %v3440
      %v5593 = vpop.f32.mrb[0].mxu0
      %v5594 = vadd.f32 %v944, %v5593
      %v5595 = vpop.f32.mrb[0].mxu0
      %v5596 = vpop.f32.mrb[0].mxu0
      %v5597 = vadd.f32 %v944, %v5596
      %v5598 = vpop.f32.mrb[0].mxu0
      %5599 = vmatprep.mubr.bf16.mxu0 0
      %5600 = vmatmul.mubr.bf16.gmra.mrb[0].mxu0 %v3443
      %v5601 = vpop.f32.mrb[0].mxu0
      %v5602 = vadd.f32 %v944, %v5601
      %v5603 = vpop.f32.mrb[0].mxu0
      %v5604 = vpop.f32.mrb[0].mxu0
      %v5605 = vadd.f32 %v944, %v5604
      %v5606 = vpop.f32.mrb[0].mxu0
      %5607 = vmatprep.mubr.bf16.mxu0 0
      %5608 = vmatmul.mubr.bf16.gmra.mrb[0].mxu0 %v3446
      %v5609 = vpop.f32.mrb[0].mxu0
      %v5610 = vadd.f32 %v944, %v5609
      %v5611 = vpop.f32.mrb[0].mxu0
      %v5612 = vpop.f32.mrb[0].mxu0
      %v5613 = vadd.f32 %v944, %v5612
      %v5614 = vpop.f32.mrb[0].mxu0
      %5615 = vmatprep.mubr.bf16.mxu0 0
      %5616 = vmatmul.mubr.bf16.gmra.mrb[0].mxu0 %v3449
      %v5617 = vpop.f32.mrb[0].mxu0
      %v5618 = vadd.f32 %v944, %v5617
      %v5619 = vpop.f32.mrb[0].mxu0
      %v5620 = vpop.f32.mrb[0].mxu0
      %v5621 = vadd.f32 %v944, %v5620
      %v5622 = vpop.f32.mrb[0].mxu0
      %5623 = vmatprep.mubr.bf16.mxu0 0
      %5624 = vmatmul.mubr.bf16.gmra.mrb[0].mxu0 %v3452
      %v5625 = vpop.f32.mrb[0].mxu0
      %v5626 = vadd.f32 %v944, %v5625
      %v5627 = vpop.f32.mrb[0].mxu0
      %v5628 = vpop.f32.mrb[0].mxu0
      %v5629 = vadd.f32 %v944, %v5628
      %v5630 = vpop.f32.mrb[0].mxu0
      %5631 = vmatprep.mubr.bf16.mxu0 0
      %5632 = vmatmul.mubr.bf16.gmra.mrb[0].mxu0 %v3455
      %v5633 = vpop.f32.mrb[0].mxu0
      %v5634 = vadd.f32 %v944, %v5633
      %v5635 = vpop.f32.mrb[0].mxu0
      %v5636 = vpop.f32.mrb[0].mxu0
      %v5637 = vadd.f32 %v944, %v5636
      %v5638 = vpop.f32.mrb[0].mxu0
      %5639 = vmatprep.mubr.bf16.mxu0 0
      %5640 = vmatmul.mubr.bf16.gmra.mrb[0].mxu0 %v3458
      %v5641 = vpop.f32.mrb[0].mxu0
      %v5642 = vadd.f32 %v944, %v5641
      %v5643 = vpop.f32.mrb[0].mxu0
      %v5644 = vpop.f32.mrb[0].mxu0
      %v5645 = vadd.f32 %v944, %v5644
      %v5646 = vpop.f32.mrb[0].mxu0
      %5647 = vmatprep.mubr.bf16.mxu0 0
      %5648 = vmatmul.mubr.bf16.gmra.mrb[0].mxu0 %v3461
      %v5649 = vpop.f32.mrb[0].mxu0
      %v5650 = vadd.f32 %v944, %v5649
      %v5651 = vpop.f32.mrb[0].mxu0
      %v5652 = vpop.f32.mrb[0].mxu0
      %v5653 = vadd.f32 %v944, %v5652
      %v5654 = vpop.f32.mrb[0].mxu0
      %5655 = vmatprep.mubr.bf16.mxu0 0
      %5656 = vmatmul.mubr.bf16.gmra.mrb[0].mxu0 %v3464
      %v5657 = vpop.f32.mrb[0].mxu0
      %v5658 = vadd.f32 %v944, %v5657
      %v5659 = vpop.f32.mrb[0].mxu0
      %v5660 = vpop.f32.mrb[0].mxu0
      %v5661 = vadd.f32 %v944, %v5660
      %v5662 = vpop.f32.mrb[0].mxu0
      %5663 = vmatprep.mubr.bf16.mxu0 0
      %5664 = vmatmul.mubr.bf16.gmra.mrb[0].mxu0 %v3467
      %v5665 = vpop.f32.mrb[0].mxu0
      %v5666 = vadd.f32 %v944, %v5665
      %v5667 = vpop.f32.mrb[0].mxu0
      %v5668 = vpop.f32.mrb[0].mxu0
      %v5669 = vadd.f32 %v944, %v5668
      %v5670 = vpop.f32.mrb[0].mxu0
      %5671 = vmatprep.mubr.bf16.mxu0 0
      %5672 = vmatmul.mubr.bf16.gmra.mrb[0].mxu0 %v3470
      %v5673 = vpop.f32.mrb[0].mxu0
      %v5674 = vadd.f32 %v944, %v5673
      %v5675 = vpop.f32.mrb[0].mxu0
      %v5676 = vpop.f32.mrb[0].mxu0
      %v5677 = vadd.f32 %v944, %v5676
      %v5678 = vpop.f32.mrb[0].mxu0
      %5679 = vmatprep.mubr.bf16.mxu0 0
      %5680 = vmatmul.mubr.bf16.gmra.mrb[0].mxu0 %v3473
      %v5681 = vpop.f32.mrb[0].mxu0
      %v5682 = vadd.f32 %v944, %v5681
      %v5683 = vpop.f32.mrb[0].mxu0
      %v5684 = vpop.f32.mrb[0].mxu0
      %v5685 = vadd.f32 %v944, %v5684
      %v5686 = vpop.f32.mrb[0].mxu0
      %5687 = vmatprep.mubr.bf16.mxu0 0
      %5688 = vmatmul.mubr.bf16.gmra.mrb[0].mxu0 %v3476
      %v5689 = vpop.f32.mrb[0].mxu0
      %v5690 = vadd.f32 %v944, %v5689
      %v5691 = vpop.f32.mrb[0].mxu0
      %v5692 = vpop.f32.mrb[0].mxu0
      %v5693 = vadd.f32 %v944, %v5692
      %v5694 = vpop.f32.mrb[0].mxu0
      %5695 = vmatprep.mubr.bf16.mxu0 0
      %5696 = vmatmul.mubr.bf16.gmra.mrb[0].mxu0 %v3479
      %v5697 = vpop.f32.mrb[0].mxu0
      %v5698 = vadd.f32 %v944, %v5697
      %v5699 = vpop.f32.mrb[0].mxu0
      %v5700 = vpop.f32.mrb[0].mxu0
      %v5701 = vadd.f32 %v944, %v5700
      %v5702 = vpop.f32.mrb[0].mxu0
      %5703 = vmatprep.mubr.bf16.mxu0 0
      %5704 = vmatmul.mubr.bf16.gmra.mrb[0].mxu0 %v3482
      %v5705 = vpop.f32.mrb[0].mxu0
      %v5706 = vadd.f32 %v944, %v5705
      %v5707 = vpop.f32.mrb[0].mxu0
      %v5708 = vpop.f32.mrb[0].mxu0
      %v5709 = vadd.f32 %v944, %v5708
      %v5710 = vpop.f32.mrb[0].mxu0
      %5711 = vmatprep.mubr.bf16.mxu0 0
      %5712 = vmatmul.mubr.bf16.gmra.mrb[0].mxu0 %v3485
      %v5713 = vpop.f32.mrb[0].mxu0
      %v5714 = vadd.f32 %v944, %v5713
      %v5715 = vpop.f32.mrb[0].mxu0
      %v5716 = vpop.f32.mrb[0].mxu0
      %v5717 = vadd.f32 %v944, %v5716
      %v5718 = vpop.f32.mrb[0].mxu0
      %5719 = vmatprep.mubr.bf16.mxu0 0
      %5720 = vmatmul.mubr.bf16.gmra.mrb[0].mxu0 %v3488
      %v5721 = vpop.f32.mrb[0].mxu0
      %v5722 = vadd.f32 %v944, %v5721
      %v5723 = vpop.f32.mrb[0].mxu0
      %v5724 = vpop.f32.mrb[0].mxu0
      %v5725 = vadd.f32 %v944, %v5724
      %v5726 = vpop.f32.mrb[0].mxu0
      %5727 = vmatprep.mubr.bf16.mxu0 0
      %5728 = vmatmul.mubr.bf16.gmra.mrb[0].mxu0 %v3491
      %v5729 = vpop.f32.mrb[0].mxu0
      %v5730 = vadd.f32 %v944, %v5729
      %v5731 = vpop.f32.mrb[0].mxu0
      %v5732 = vpop.f32.mrb[0].mxu0
      %v5733 = vadd.f32 %v944, %v5732
      %v5734 = vpop.f32.mrb[0].mxu0
      %5735 = vmatprep.mubr.bf16.mxu0 0
      %5736 = vmatmul.mubr.bf16.gmra.mrb[0].mxu0 %v3494
      %v5737 = vpop.f32.mrb[0].mxu0
      %v5738 = vadd.f32 %v944, %v5737
      %v5739 = vpop.f32.mrb[0].mxu0
      %v5740 = vpop.f32.mrb[0].mxu0
      %v5741 = vadd.f32 %v944, %v5740
      %v5742 = vpop.f32.mrb[0].mxu0
      %5743 = vmatprep.mubr.bf16.mxu0 0
      %5744 = vmatmul.mubr.bf16.gmra.mrb[0].mxu0 %v3497
      %v5745 = vpop.f32.mrb[0].mxu0
      %v5746 = vadd.f32 %v944, %v5745
      %v5747 = vpop.f32.mrb[0].mxu0
      %v5748 = vpop.f32.mrb[0].mxu0
      %v5749 = vadd.f32 %v944, %v5748
      %v5750 = vpop.f32.mrb[0].mxu0
      %5751 = vmatprep.mubr.bf16.mxu0 0
      %5752 = vmatmul.mubr.bf16.gmra.mrb[0].mxu0 %v3500
      %v5753 = vpop.f32.mrb[0].mxu0
      %v5754 = vadd.f32 %v944, %v5753
      %v5755 = vpop.f32.mrb[0].mxu0
      %v5756 = vpop.f32.mrb[0].mxu0
      %v5757 = vadd.f32 %v944, %v5756
      %v5758 = vpop.f32.mrb[0].mxu0
      %5759 = vmatprep.mubr.bf16.mxu0 0
      %5760 = vmatmul.mubr.bf16.gmra.mrb[0].mxu0 %v3503
      %v5761 = vpop.f32.mrb[0].mxu0
      %v5762 = vadd.f32 %v944, %v5761
      %v5763 = vpop.f32.mrb[0].mxu0
      %v5764 = vpop.f32.mrb[0].mxu0
      %v5765 = vadd.f32 %v944, %v5764
      %v5766 = vpop.f32.mrb[0].mxu0
      %5767 = vmatprep.mubr.bf16.mxu0 0
      %5768 = vmatmul.mubr.bf16.gmra.mrb[0].mxu0 %v3506
      %v5769 = vpop.f32.mrb[0].mxu0
      %v5770 = vadd.f32 %v944, %v5769
      %v5771 = vpop.f32.mrb[0].mxu0
      %v5772 = vpop.f32.mrb[0].mxu0
      %v5773 = vadd.f32 %v944, %v5772
      %v5774 = vpop.f32.mrb[0].mxu0
      %5775 = vmatprep.mubr.bf16.mxu0 0
      %5776 = vmatmul.mubr.bf16.gmra.mrb[0].mxu0 %v3509
      %v5777 = vpop.f32.mrb[0].mxu0
      %v5778 = vadd.f32 %v944, %v5777
      %v5779 = vpop.f32.mrb[0].mxu0
      %v5780 = vpop.f32.mrb[0].mxu0
      %v5781 = vadd.f32 %v944, %v5780
      %v5782 = vpop.f32.mrb[0].mxu0
      %5783 = vmatprep.mubr.bf16.mxu0 0
      %5784 = vmatmul.mubr.bf16.gmra.mrb[0].mxu0 %v3512
      %v5785 = vpop.f32.mrb[0].mxu0
      %v5786 = vadd.f32 %v944, %v5785
      %v5787 = vpop.f32.mrb[0].mxu0
      %v5788 = vpop.f32.mrb[0].mxu0
      %v5789 = vadd.f32 %v944, %v5788
      %v5790 = vpop.f32.mrb[0].mxu0
      %5791 = vmatprep.mubr.bf16.mxu0 0
      %5792 = vmatmul.mubr.bf16.gmra.mrb[0].mxu0 %v3515
      %v5793 = vpop.f32.mrb[0].mxu0
      %v5794 = vadd.f32 %v944, %v5793
      %v5795 = vpop.f32.mrb[0].mxu0
      %v5796 = vpop.f32.mrb[0].mxu0
      %v5797 = vadd.f32 %v944, %v5796
      %v5798 = vpop.f32.mrb[0].mxu0
      %5799 = vmatprep.mubr.bf16.mxu0 0
      %5800 = vmatmul.mubr.bf16.gmra.mrb[0].mxu0 %v3518
      %v5801 = vpop.f32.mrb[0].mxu0
      %v5802 = vadd.f32 %v944, %v5801
      %v5803 = vpop.f32.mrb[0].mxu0
      %v5804 = vpop.f32.mrb[0].mxu0
      %v5805 = vadd.f32 %v944, %v5804
      %v5806 = vpop.f32.mrb[0].mxu0
      %5807 = vmatprep.mubr.bf16.mxu0 0
      %5808 = vmatmul.mubr.bf16.gmra.mrb[0].mxu0 %v3521
      %v5809 = vpop.f32.mrb[0].mxu0
      %v5810 = vadd.f32 %v944, %v5809
      %v5811 = vpop.f32.mrb[0].mxu0
      %v5812 = vpop.f32.mrb[0].mxu0
      %v5813 = vadd.f32 %v944, %v5812
      %v5814 = vpop.f32.mrb[0].mxu0
      %5815 = vmatprep.mubr.bf16.mxu0 0
      %5816 = vmatmul.mubr.bf16.gmra.mrb[0].mxu0 %v3524
      %v5817 = vpop.f32.mrb[0].mxu0
      %v5818 = vadd.f32 %v944, %v5817
      %v5819 = vpop.f32.mrb[0].mxu0
      %v5820 = vpop.f32.mrb[0].mxu0
      %v5821 = vadd.f32 %v944, %v5820
      %v5822 = vpop.f32.mrb[0].mxu0
      %5823 = vmatprep.mubr.bf16.mxu0 0
      %5824 = vmatmul.mubr.bf16.gmra.mrb[0].mxu0 %v3527
      %v5825 = vpop.f32.mrb[0].mxu0
      %v5826 = vadd.f32 %v944, %v5825
      %v5827 = vpop.f32.mrb[0].mxu0
      %v5828 = vpop.f32.mrb[0].mxu0
      %v5829 = vadd.f32 %v944, %v5828
      %v5830 = vpop.f32.mrb[0].mxu0
      %5831 = vmatprep.mubr.bf16.mxu0 0
      %5832 = vmatmul.mubr.bf16.gmra.mrb[0].mxu0 %v3530
      %v5833 = vpop.f32.mrb[0].mxu0
      %v5834 = vadd.f32 %v944, %v5833
      %v5835 = vpop.f32.mrb[0].mxu0
      %v5836 = vpop.f32.mrb[0].mxu0
      %v5837 = vadd.f32 %v944, %v5836
      %v5838 = vpop.f32.mrb[0].mxu0
      %5839 = vmatprep.mubr.bf16.mxu0 0
      %5840 = vmatmul.mubr.bf16.gmra.mrb[0].mxu0 %v3533
      %v5841 = vpop.f32.mrb[0].mxu0
      %v5842 = vadd.f32 %v944, %v5841
      %v5843 = vpop.f32.mrb[0].mxu0
      %v5844 = vpop.f32.mrb[0].mxu0
      %v5845 = vadd.f32 %v944, %v5844
      %v5846 = vpop.f32.mrb[0].mxu0
      %5847 = vmatprep.mubr.bf16.mxu0 0
      %5848 = vmatmul.mubr.bf16.gmra.mrb[0].mxu0 %v3536
      %v5849 = vpop.f32.mrb[0].mxu0
      %v5850 = vadd.f32 %v944, %v5849
      %v5851 = vpop.f32.mrb[0].mxu0
      %v5852 = vpop.f32.mrb[0].mxu0
      %v5853 = vadd.f32 %v944, %v5852
      %v5854 = vpop.f32.mrb[0].mxu0
      %5855 = vmatprep.mubr.bf16.mxu0 0
      %5856 = vmatmul.mubr.bf16.gmra.mrb[0].mxu0 %v3539
      %v5857 = vpop.f32.mrb[0].mxu0
      %v5858 = vadd.f32 %v944, %v5857
      %v5859 = vpop.f32.mrb[0].mxu0
      %v5860 = vpop.f32.mrb[0].mxu0
      %v5861 = vadd.f32 %v944, %v5860
      %v5862 = vpop.f32.mrb[0].mxu0
      %5863 = vmatprep.mubr.bf16.mxu0 0
      %5864 = vmatmul.mubr.bf16.gmra.mrb[0].mxu0 %v3542
      %v5865 = vpop.f32.mrb[0].mxu0
      %v5866 = vadd.f32 %v944, %v5865
      %v5867 = vpop.f32.mrb[0].mxu0
      %v5868 = vpop.f32.mrb[0].mxu0
      %v5869 = vadd.f32 %v944, %v5868
      %v5870 = vpop.f32.mrb[0].mxu0
      %5871 = vmatprep.mubr.bf16.mxu0 0
      %5872 = vmatmul.mubr.bf16.gmra.mrb[0].mxu0 %v3545
      %v5873 = vpop.f32.mrb[0].mxu0
      %v5874 = vadd.f32 %v944, %v5873
      %v5875 = vpop.f32.mrb[0].mxu0
      %v5876 = vpop.f32.mrb[0].mxu0
      %v5877 = vadd.f32 %v944, %v5876
      %v5878 = vpop.f32.mrb[0].mxu0
      %5879 = vmatprep.mubr.bf16.mxu0 0
      %5880 = vmatmul.mubr.bf16.gmra.mrb[0].mxu0 %v3548
      %v5881 = vpop.f32.mrb[0].mxu0
      %v5882 = vadd.f32 %v944, %v5881
      %v5883 = vpop.f32.mrb[0].mxu0
      %v5884 = vpop.f32.mrb[0].mxu0
      %v5885 = vadd.f32 %v944, %v5884
      %v5886 = vpop.f32.mrb[0].mxu0
      %5887 = vmatprep.mubr.bf16.mxu0 0
      %5888 = vmatmul.mubr.bf16.gmra.mrb[0].mxu0 %v3551
      %v5889 = vpop.f32.mrb[0].mxu0
      %v5890 = vadd.f32 %v944, %v5889
      %v5891 = vpop.f32.mrb[0].mxu0
      %v5892 = vpop.f32.mrb[0].mxu0
      %v5893 = vadd.f32 %v944, %v5892
      %v5894 = vpop.f32.mrb[0].mxu0
      %5895 = vmatprep.mubr.bf16.mxu0 0
      %5896 = vmatmul.mubr.bf16.gmra.mrb[0].mxu0 %v3554
      %v5897 = vpop.f32.mrb[0].mxu0
      %v5898 = vadd.f32 %v944, %v5897
      %v5899 = vpop.f32.mrb[0].mxu0
      %v5900 = vpop.f32.mrb[0].mxu0
      %v5901 = vadd.f32 %v944, %v5900
      %v5902 = vpop.f32.mrb[0].mxu0
      %5903 = vmatprep.mubr.bf16.mxu0 0
      %5904 = vmatmul.mubr.bf16.gmra.mrb[0].mxu0 %v3557
      %v5905 = vpop.f32.mrb[0].mxu0
      %v5906 = vadd.f32 %v944, %v5905
      %v5907 = vpop.f32.mrb[0].mxu0
      %v5908 = vpop.f32.mrb[0].mxu0
      %v5909 = vadd.f32 %v944, %v5908
      %v5910 = vpop.f32.mrb[0].mxu0
      %5911 = vmatprep.mubr.bf16.mxu0 0
      %5912 = vmatmul.mubr.bf16.gmra.mrb[0].mxu0 %v3560
      %v5913 = vpop.f32.mrb[0].mxu0
      %v5914 = vadd.f32 %v944, %v5913
      %v5915 = vpop.f32.mrb[0].mxu0
      %v5916 = vpop.f32.mrb[0].mxu0
      %v5917 = vadd.f32 %v944, %v5916
      %v5918 = vpop.f32.mrb[0].mxu0
      %5919 = vmatprep.mubr.bf16.mxu0 0
      %5920 = vmatmul.mubr.bf16.gmra.mrb[0].mxu0 %v3563
      %v5921 = vpop.f32.mrb[0].mxu0
      %v5922 = vadd.f32 %v944, %v5921
      %v5923 = vpop.f32.mrb[0].mxu0
      %v5924 = vpop.f32.mrb[0].mxu0
      %v5925 = vadd.f32 %v944, %v5924
      %v5926 = vpop.f32.mrb[0].mxu0
      %5927 = vmatprep.mubr.bf16.mxu0 0
      %5928 = vmatmul.mubr.bf16.gmra.mrb[0].mxu0 %v3566
      %v5929 = vpop.f32.mrb[0].mxu0
      %v5930 = vadd.f32 %v944, %v5929
      %v5931 = vpop.f32.mrb[0].mxu0
      %v5932 = vpop.f32.mrb[0].mxu0
      %v5933 = vadd.f32 %v944, %v5932
      %v5934 = vpop.f32.mrb[0].mxu0
      %5935 = vmatprep.mubr.bf16.mxu0 0
      %5936 = vmatmul.mubr.bf16.gmra.mrb[0].mxu0 %v3569
      %v5937 = vpop.f32.mrb[0].mxu0
      %v5938 = vadd.f32 %v944, %v5937
      %v5939 = vpop.f32.mrb[0].mxu0
      %v5940 = vpop.f32.mrb[0].mxu0
      %v5941 = vadd.f32 %v944, %v5940
      %v5942 = vpop.f32.mrb[0].mxu0
      %5943 = vmatprep.mubr.bf16.mxu0 0
      %5944 = vmatmul.mubr.bf16.gmra.mrb[0].mxu0 %v3572
      %v5945 = vpop.f32.mrb[0].mxu0
      %v5946 = vadd.f32 %v944, %v5945
      %v5947 = vpop.f32.mrb[0].mxu0
      %v5948 = vpop.f32.mrb[0].mxu0
      %v5949 = vadd.f32 %v944, %v5948
      %v5950 = vpop.f32.mrb[0].mxu0
      %5951 = vmatprep.mubr.bf16.mxu0 0
      %5952 = vmatmul.mubr.bf16.gmra.mrb[0].mxu0 %v3575
      %v5953 = vpop.f32.mrb[0].mxu0
      %v5954 = vadd.f32 %v944, %v5953
      %v5955 = vpop.f32.mrb[0].mxu0
      %v5956 = vpop.f32.mrb[0].mxu0
      %v5957 = vadd.f32 %v944, %v5956
      %v5958 = vpop.f32.mrb[0].mxu0
      %5959 = vmatprep.mubr.bf16.mxu0 0
      %5960 = vmatmul.mubr.bf16.gmra.mrb[0].mxu0 %v3578
      %v5961 = vpop.f32.mrb[0].mxu0
      %v5962 = vadd.f32 %v944, %v5961
      %v5963 = vpop.f32.mrb[0].mxu0
      %v5964 = vpop.f32.mrb[0].mxu0
      %v5965 = vadd.f32 %v944, %v5964
      %v5966 = vpop.f32.mrb[0].mxu0
      %5967 = vmatprep.mubr.bf16.mxu0 0
      %5968 = vmatmul.mubr.bf16.gmra.mrb[0].mxu0 %v3581
      %v5969 = vpop.f32.mrb[0].mxu0
      %v5970 = vadd.f32 %v944, %v5969
      %v5971 = vpop.f32.mrb[0].mxu0
      %v5972 = vpop.f32.mrb[0].mxu0
      %v5973 = vadd.f32 %v944, %v5972
      %v5974 = vpop.f32.mrb[0].mxu0
      %5975 = vmatprep.mubr.bf16.mxu0 0
      %5976 = vmatmul.mubr.bf16.gmra.mrb[0].mxu0 %v3584
      %v5977 = vpop.f32.mrb[0].mxu0
      %v5978 = vadd.f32 %v944, %v5977
      %v5979 = vpop.f32.mrb[0].mxu0
      %v5980 = vpop.f32.mrb[0].mxu0
      %v5981 = vadd.f32 %v944, %v5980
      %v5982 = vpop.f32.mrb[0].mxu0
      %5983 = vmatprep.mubr.bf16.mxu0 0
      %5984 = vmatmul.mubr.bf16.gmra.mrb[0].mxu0 %v3587
      %v5985 = vpop.f32.mrb[0].mxu0
      %v5986 = vadd.f32 %v944, %v5985
      %v5987 = vpop.f32.mrb[0].mxu0
      %v5988 = vpop.f32.mrb[0].mxu0
      %v5989 = vadd.f32 %v944, %v5988
      %v5990 = vpop.f32.mrb[0].mxu0
      %5991 = vmatprep.mubr.bf16.mxu0 0
      %5992 = vmatmul.mubr.bf16.gmra.mrb[0].mxu0 %v3590
      %v5993 = vpop.f32.mrb[0].mxu0
      %v5994 = vadd.f32 %v944, %v5993
      %v5995 = vpop.f32.mrb[0].mxu0
      %v5996 = vpop.f32.mrb[0].mxu0
      %v5997 = vadd.f32 %v944, %v5996
      %v5998 = vpop.f32.mrb[0].mxu0
      %5999 = vmatprep.mubr.bf16.mxu0 0
      %6000 = vmatmul.mubr.bf16.gmra.mrb[0].mxu0 %v3593
      %v6001 = vpop.f32.mrb[0].mxu0
      %v6002 = vadd.f32 %v944, %v6001
      %v6003 = vpop.f32.mrb[0].mxu0
      %v6004 = vpop.f32.mrb[0].mxu0
      %v6005 = vadd.f32 %v944, %v6004
      %v6006 = vpop.f32.mrb[0].mxu0
      %6007 = vmatprep.mubr.bf16.mxu0 0
      %6008 = vmatmul.mubr.bf16.gmra.mrb[0].mxu0 %v3596
      %v6009 = vpop.f32.mrb[0].mxu0
      %v6010 = vadd.f32 %v944, %v6009
      %v6011 = vpop.f32.mrb[0].mxu0
      %v6012 = vpop.f32.mrb[0].mxu0
      %v6013 = vadd.f32 %v944, %v6012
      %v6014 = vpop.f32.mrb[0].mxu0
      %6015 = vmatprep.mubr.bf16.mxu0 0
      %6016 = vmatmul.mubr.bf16.gmra.mrb[0].mxu0 %v3599
      %v6017 = vpop.f32.mrb[0].mxu0
      %v6018 = vadd.f32 %v944, %v6017
      %v6019 = vpop.f32.mrb[0].mxu0
      %v6020 = vpop.f32.mrb[0].mxu0
      %v6021 = vadd.f32 %v944, %v6020
      %v6022 = vpop.f32.mrb[0].mxu0
      %6023 = vmatprep.mubr.bf16.mxu0 0
      %6024 = vmatmul.mubr.bf16.gmra.mrb[0].mxu0 %v3602
      %v6025 = vpop.f32.mrb[0].mxu0
      %v6026 = vadd.f32 %v944, %v6025
      %v6027 = vpop.f32.mrb[0].mxu0
      %v6028 = vpop.f32.mrb[0].mxu0
      %v6029 = vadd.f32 %v944, %v6028
      %v6030 = vpop.f32.mrb[0].mxu0
      %6031 = vmatprep.mubr.bf16.mxu0 0
      %6032 = vmatmul.mubr.bf16.gmra.mrb[0].mxu0 %v3605
      %v6033 = vpop.f32.mrb[0].mxu0
      %v6034 = vadd.f32 %v944, %v6033
      %v6035 = vpop.f32.mrb[0].mxu0
      %v6036 = vpop.f32.mrb[0].mxu0
      %v6037 = vadd.f32 %v944, %v6036
      %v6038 = vpop.f32.mrb[0].mxu0
      %6039 = vmatprep.mubr.bf16.mxu0 0
      %6040 = vmatmul.mubr.bf16.gmra.mrb[0].mxu0 %v3608
      %v6041 = vpop.f32.mrb[0].mxu0
      %v6042 = vadd.f32 %v944, %v6041
      %v6043 = vpop.f32.mrb[0].mxu0
      %v6044 = vpop.f32.mrb[0].mxu0
      %v6045 = vadd.f32 %v944, %v6044
      %v6046 = vpop.f32.mrb[0].mxu0
      %6047 = vmatprep.mubr.bf16.mxu0 0
      %6048 = vmatmul.mubr.bf16.gmra.mrb[0].mxu0 %v3611
      %v6049 = vpop.f32.mrb[0].mxu0
      %v6050 = vadd.f32 %v944, %v6049
      %v6051 = vpop.f32.mrb[0].mxu0
      %v6052 = vpop.f32.mrb[0].mxu0
      %v6053 = vadd.f32 %v944, %v6052
      %v6054 = vpop.f32.mrb[0].mxu0
      %6055 = vmatprep.mubr.bf16.mxu0 0
      %6056 = vmatmul.mubr.bf16.gmra.mrb[0].mxu0 %v3614
      %v6057 = vpop.f32.mrb[0].mxu0
      %v6058 = vadd.f32 %v944, %v6057
      %v6059 = vpop.f32.mrb[0].mxu0
      %v6060 = vpop.f32.mrb[0].mxu0
      %v6061 = vadd.f32 %v944, %v6060
      %v6062 = vpop.f32.mrb[0].mxu0
      %6063 = vmatprep.mubr.bf16.mxu0 0
      %6064 = vmatmul.mubr.bf16.gmra.mrb[0].mxu0 %v3617
      %v6065 = vpop.f32.mrb[0].mxu0
      %v6066 = vadd.f32 %v944, %v6065
      %v6067 = vpop.f32.mrb[0].mxu0
      %v6068 = vpop.f32.mrb[0].mxu0
      %v6069 = vadd.f32 %v944, %v6068
      %v6070 = vpop.f32.mrb[0].mxu0
      %6071 = vmatprep.mubr.bf16.mxu0 0
      %6072 = vmatmul.mubr.bf16.gmra.mrb[0].mxu0 %v3620
      %v6073 = vpop.f32.mrb[0].mxu0
      %v6074 = vadd.f32 %v944, %v6073
      %v6075 = vpop.f32.mrb[0].mxu0
      %v6076 = vpop.f32.mrb[0].mxu0
      %v6077 = vadd.f32 %v944, %v6076
      %v6078 = vpop.f32.mrb[0].mxu0
      %6079 = vmatprep.mubr.bf16.mxu0 0
      %6080 = vmatmul.mubr.bf16.gmra.mrb[0].mxu0 %v3623
      %v6081 = vpop.f32.mrb[0].mxu0
      %v6082 = vadd.f32 %v944, %v6081
      %v6083 = vpop.f32.mrb[0].mxu0
      %v6084 = vpop.f32.mrb[0].mxu0
      %v6085 = vadd.f32 %v944, %v6084
      %v6086 = vpop.f32.mrb[0].mxu0
      %6087 = vmatprep.mubr.bf16.mxu0 0
      %6088 = vmatmul.mubr.bf16.gmra.mrb[0].mxu0 %v3626
      %v6089 = vpop.f32.mrb[0].mxu0
      %v6090 = vadd.f32 %v944, %v6089
      %v6091 = vpop.f32.mrb[0].mxu0
      %v6092 = vpop.f32.mrb[0].mxu0
      %v6093 = vadd.f32 %v944, %v6092
      %v6094 = vpop.f32.mrb[0].mxu0
      %6095 = vmatprep.mubr.bf16.mxu0 0
      %6096 = vmatmul.mubr.bf16.gmra.mrb[0].mxu0 %v3629
      %v6097 = vpop.f32.mrb[0].mxu0
      %v6098 = vadd.f32 %v944, %v6097
      %v6099 = vpop.f32.mrb[0].mxu0
      %v6100 = vpop.f32.mrb[0].mxu0
      %v6101 = vadd.f32 %v944, %v6100
      %v6102 = vpop.f32.mrb[0].mxu0
      %6103 = vmatprep.mubr.bf16.mxu0 0
      %6104 = vmatmul.mubr.bf16.gmra.mrb[0].mxu0 %v3632
      %v6105 = vpop.f32.mrb[0].mxu0
      %v6106 = vadd.f32 %v944, %v6105
      %v6107 = vpop.f32.mrb[0].mxu0
      %v6108 = vpop.f32.mrb[0].mxu0
      %v6109 = vadd.f32 %v944, %v6108
      %v6110 = vpop.f32.mrb[0].mxu0
      %6111 = vmatprep.mubr.bf16.mxu0 0
      %6112 = vmatmul.mubr.bf16.gmra.mrb[0].mxu0 %v3635
      %v6113 = vpop.f32.mrb[0].mxu0
      %v6114 = vadd.f32 %v944, %v6113
      %v6115 = vpop.f32.mrb[0].mxu0
      %v6116 = vpop.f32.mrb[0].mxu0
      %v6117 = vadd.f32 %v944, %v6116
      %v6118 = vpop.f32.mrb[0].mxu0
      %6119 = vmatprep.mubr.bf16.mxu0 0
      %6120 = vmatmul.mubr.bf16.gmra.mrb[0].mxu0 %v3638
      %v6121 = vpop.f32.mrb[0].mxu0
      %v6122 = vadd.f32 %v944, %v6121
      %v6123 = vpop.f32.mrb[0].mxu0
      %v6124 = vpop.f32.mrb[0].mxu0
      %v6125 = vadd.f32 %v944, %v6124
      %v6126 = vpop.f32.mrb[0].mxu0
      %6127 = vmatprep.mubr.bf16.mxu0 0
      %6128 = vmatmul.mubr.bf16.gmra.mrb[0].mxu0 %v3641
      %v6129 = vpop.f32.mrb[0].mxu0
      %v6130 = vadd.f32 %v944, %v6129
      %v6131 = vpop.f32.mrb[0].mxu0
      %v6132 = vpop.f32.mrb[0].mxu0
      %v6133 = vadd.f32 %v944, %v6132
      %v6134 = vpop.f32.mrb[0].mxu0
      %6135 = vmatprep.mubr.bf16.mxu0 0
      %6136 = vmatmul.mubr.bf16.gmra.mrb[0].mxu0 %v3644
      %v6137 = vpop.f32.mrb[0].mxu0
      %v6138 = vadd.f32 %v944, %v6137
      %v6139 = vpop.f32.mrb[0].mxu0
      %v6140 = vpop.f32.mrb[0].mxu0
      %v6141 = vadd.f32 %v944, %v6140
      %v6142 = vpop.f32.mrb[0].mxu0
      %6143 = vmatprep.mubr.bf16.mxu0 0
      %6144 = vmatmul.mubr.bf16.gmra.mrb[0].mxu0 %v3647
      %v6145 = vpop.f32.mrb[0].mxu0
      %v6146 = vadd.f32 %v944, %v6145
      %v6147 = vpop.f32.mrb[0].mxu0
      %v6148 = vpop.f32.mrb[0].mxu0
      %v6149 = vadd.f32 %v944, %v6148
      %v6150 = vpop.f32.mrb[0].mxu0
      %6151 = vmatprep.mubr.bf16.mxu0 0
      %6152 = vmatmul.mubr.bf16.gmra.mrb[0].mxu0 %v3650
      %v6153 = vpop.f32.mrb[0].mxu0
      %v6154 = vadd.f32 %v944, %v6153
      %v6155 = vpop.f32.mrb[0].mxu0
      %v6156 = vpop.f32.mrb[0].mxu0
      %v6157 = vadd.f32 %v944, %v6156
      %v6158 = vpop.f32.mrb[0].mxu0
      %6159 = vmatprep.mubr.bf16.mxu0 0
      %6160 = vmatmul.mubr.bf16.gmra.mrb[0].mxu0 %v3653
      %v6161 = vpop.f32.mrb[0].mxu0
      %v6162 = vadd.f32 %v944, %v6161
      %v6163 = vpop.f32.mrb[0].mxu0
      %v6164 = vpop.f32.mrb[0].mxu0
      %v6165 = vadd.f32 %v944, %v6164
      %v6166 = vpop.f32.mrb[0].mxu0
      %6167 = vmatprep.mubr.bf16.mxu0 0
      %6168 = vmatmul.mubr.bf16.gmra.mrb[0].mxu0 %v3656
      %v6169 = vpop.f32.mrb[0].mxu0
      %v6170 = vadd.f32 %v944, %v6169
      %v6171 = vpop.f32.mrb[0].mxu0
      %v6172 = vpop.f32.mrb[0].mxu0
      %v6173 = vadd.f32 %v944, %v6172
      %v6174 = vpop.f32.mrb[0].mxu0
      %6175 = vmatprep.mubr.bf16.mxu0 0
      %6176 = vmatmul.mubr.bf16.gmra.mrb[0].mxu0 %v3659
      %v6177 = vpop.f32.mrb[0].mxu0
      %v6178 = vadd.f32 %v944, %v6177
      %v6179 = vpop.f32.mrb[0].mxu0
      %v6180 = vpop.f32.mrb[0].mxu0
      %v6181 = vadd.f32 %v944, %v6180
      %v6182 = vpop.f32.mrb[0].mxu0
      %6183 = vmatprep.mubr.bf16.mxu0 0
      %6184 = vmatmul.mubr.bf16.gmra.mrb[0].mxu0 %v3662
      %v6185 = vpop.f32.mrb[0].mxu0
      %v6186 = vadd.f32 %v944, %v6185
      %v6187 = vpop.f32.mrb[0].mxu0
      %v6188 = vpop.f32.mrb[0].mxu0
      %v6189 = vadd.f32 %v944, %v6188
      %v6190 = vpop.f32.mrb[0].mxu0
      %6191 = vmatprep.mubr.bf16.mxu0 0
      %6192 = vmatmul.mubr.bf16.gmra.mrb[0].mxu0 %v3665
      %v6193 = vpop.f32.mrb[0].mxu0
      %v6194 = vadd.f32 %v944, %v6193
      %v6195 = vpop.f32.mrb[0].mxu0
      %v6196 = vpop.f32.mrb[0].mxu0
      %v6197 = vadd.f32 %v944, %v6196
      %v6198 = vpop.f32.mrb[0].mxu0
      %6199 = vmatprep.mubr.bf16.mxu0 0
      %6200 = vmatmul.mubr.bf16.gmra.mrb[0].mxu0 %v3668
      %v6201 = vpop.f32.mrb[0].mxu0
      %v6202 = vadd.f32 %v944, %v6201
      %v6203 = vpop.f32.mrb[0].mxu0
      %v6204 = vpop.f32.mrb[0].mxu0
      %v6205 = vadd.f32 %v944, %v6204
      %v6206 = vpop.f32.mrb[0].mxu0
      %6207 = vmatprep.mubr.bf16.mxu0 0
      %6208 = vmatmul.mubr.bf16.gmra.mrb[0].mxu0 %v3671
      %v6209 = vpop.f32.mrb[0].mxu0
      %v6210 = vadd.f32 %v944, %v6209
      %v6211 = vpop.f32.mrb[0].mxu0
      %v6212 = vpop.f32.mrb[0].mxu0
      %v6213 = vadd.f32 %v944, %v6212
      %v6214 = vpop.f32.mrb[0].mxu0
      %6215 = vmatprep.mubr.bf16.mxu0 0
      %6216 = vmatmul.mubr.bf16.gmra.mrb[0].mxu0 %v3674
      %v6217 = vpop.f32.mrb[0].mxu0
      %v6218 = vadd.f32 %v944, %v6217
      %v6219 = vpop.f32.mrb[0].mxu0
      %v6220 = vpop.f32.mrb[0].mxu0
      %v6221 = vadd.f32 %v944, %v6220
      %v6222 = vpop.f32.mrb[0].mxu0
      %6223 = vmatprep.mubr.bf16.mxu0 0
      %6224 = vmatmul.mubr.bf16.gmra.mrb[0].mxu0 %v3677
      %v6225 = vpop.f32.mrb[0].mxu0
      %v6226 = vadd.f32 %v944, %v6225
      %v6227 = vpop.f32.mrb[0].mxu0
      %v6228 = vpop.f32.mrb[0].mxu0
      %v6229 = vadd.f32 %v944, %v6228
      %v6230 = vpop.f32.mrb[0].mxu0
      %6231 = vmatprep.mubr.bf16.mxu0 0
      %6232 = vmatmul.mubr.bf16.gmra.mrb[0].mxu0 %v3680
      %v6233 = vpop.f32.mrb[0].mxu0
      %v6234 = vadd.f32 %v944, %v6233
      %v6235 = vpop.f32.mrb[0].mxu0
      %v6236 = vpop.f32.mrb[0].mxu0
      %v6237 = vadd.f32 %v944, %v6236
      %v6238 = vpop.f32.mrb[0].mxu0
      %6239 = vmatprep.mubr.bf16.mxu0 0
      %6240 = vmatmul.mubr.bf16.gmra.mrb[0].mxu0 %v3683
      %v6241 = vpop.f32.mrb[0].mxu0
      %v6242 = vadd.f32 %v944, %v6241
      %v6243 = vpop.f32.mrb[0].mxu0
      %v6244 = vpop.f32.mrb[0].mxu0
      %v6245 = vadd.f32 %v944, %v6244
      %v6246 = vpop.f32.mrb[0].mxu0
      %6247 = vmatprep.mubr.bf16.mxu0 0
      %6248 = vmatmul.mubr.bf16.gmra.mrb[0].mxu0 %v3686
      %v6249 = vpop.f32.mrb[0].mxu0
      %v6250 = vadd.f32 %v944, %v6249
      %v6251 = vpop.f32.mrb[0].mxu0
      %v6252 = vpop.f32.mrb[0].mxu0
      %v6253 = vadd.f32 %v944, %v6252
      %v6254 = vpop.f32.mrb[0].mxu0
      %6255 = vmatprep.mubr.bf16.mxu0 0
      %6256 = vmatmul.mubr.bf16.gmra.mrb[0].mxu0 %v3689
      %v6257 = vpop.f32.mrb[0].mxu0
      %v6258 = vadd.f32 %v944, %v6257
      %v6259 = vpop.f32.mrb[0].mxu0
      %v6260 = vpop.f32.mrb[0].mxu0
      %v6261 = vadd.f32 %v944, %v6260
      %v6262 = vpop.f32.mrb[0].mxu0
      %6263 = vmatprep.mubr.bf16.mxu0 0
      %6264 = vmatmul.mubr.bf16.gmra.mrb[0].mxu0 %v3692
      %v6265 = vpop.f32.mrb[0].mxu0
      %v6266 = vadd.f32 %v944, %v6265
      %v6267 = vpop.f32.mrb[0].mxu0
      %v6268 = vpop.f32.mrb[0].mxu0
      %v6269 = vadd.f32 %v944, %v6268
      %v6270 = vpop.f32.mrb[0].mxu0
      %6271 = vmatprep.mubr.bf16.mxu0 0
      %6272 = vmatmul.mubr.bf16.gmra.mrb[0].mxu0 %v3695
      %v6273 = vpop.f32.mrb[0].mxu0
      %v6274 = vadd.f32 %v944, %v6273
      %v6275 = vpop.f32.mrb[0].mxu0
      %v6276 = vpop.f32.mrb[0].mxu0
      %v6277 = vadd.f32 %v944, %v6276
      %v6278 = vpop.f32.mrb[0].mxu0
      %6279 = vmatprep.mubr.bf16.mxu0 0
      %6280 = vmatmul.mubr.bf16.gmra.mrb[0].mxu0 %v3698
      %v6281 = vpop.f32.mrb[0].mxu0
      %v6282 = vadd.f32 %v944, %v6281
      %v6283 = vpop.f32.mrb[0].mxu0
      %v6284 = vpop.f32.mrb[0].mxu0
      %v6285 = vadd.f32 %v944, %v6284
      %v6286 = vpop.f32.mrb[0].mxu0
      %6287 = vmatprep.mubr.bf16.mxu0 0
      %6288 = vmatmul.mubr.bf16.gmra.mrb[0].mxu0 %v3701
      %v6289 = vpop.f32.mrb[0].mxu0
      %v6290 = vadd.f32 %v944, %v6289
      %v6291 = vpop.f32.mrb[0].mxu0
      %v6292 = vpop.f32.mrb[0].mxu0
      %v6293 = vadd.f32 %v944, %v6292
      %v6294 = vpop.f32.mrb[0].mxu0
      %6295 = vmatprep.mubr.bf16.mxu0 0
      %6296 = vmatmul.mubr.bf16.gmra.mrb[0].mxu0 %v3704
      %v6297 = vpop.f32.mrb[0].mxu0
      %v6298 = vadd.f32 %v944, %v6297
      %v6299 = vpop.f32.mrb[0].mxu0
      %v6300 = vpop.f32.mrb[0].mxu0
      %v6301 = vadd.f32 %v944, %v6300
      %v6302 = vpop.f32.mrb[0].mxu0
      %6303 = vmatprep.mubr.bf16.mxu0 0
      %6304 = vmatmul.mubr.bf16.gmra.mrb[0].mxu0 %v3707
      %v6305 = vpop.f32.mrb[0].mxu0
      %v6306 = vadd.f32 %v944, %v6305
      %v6307 = vpop.f32.mrb[0].mxu0
      %v6308 = vpop.f32.mrb[0].mxu0
      %v6309 = vadd.f32 %v944, %v6308
      %v6310 = vpop.f32.mrb[0].mxu0
      %6311 = vmatprep.mubr.bf16.mxu0 0
      %6312 = vmatmul.mubr.bf16.gmra.mrb[0].mxu0 %v3710
      %v6313 = vpop.f32.mrb[0].mxu0
      %v6314 = vadd.f32 %v944, %v6313
      %v6315 = vpop.f32.mrb[0].mxu0
      %v6316 = vpop.f32.mrb[0].mxu0
      %v6317 = vadd.f32 %v944, %v6316
      %v6318 = vpop.f32.mrb[0].mxu0
      %6319 = vmatprep.mubr.bf16.mxu0 0
      %6320 = vmatmul.mubr.bf16.gmra.mrb[0].mxu0 %v3713
      %v6321 = vpop.f32.mrb[0].mxu0
      %v6322 = vadd.f32 %v944, %v6321
      %v6323 = vpop.f32.mrb[0].mxu0
      %v6324 = vpop.f32.mrb[0].mxu0
      %v6325 = vadd.f32 %v944, %v6324
      %v6326 = vpop.f32.mrb[0].mxu0
      %6327 = vmatprep.mubr.bf16.mxu0 0
      %6328 = vmatmul.mubr.bf16.gmra.mrb[0].mxu0 %v3716
      %v6329 = vpop.f32.mrb[0].mxu0
      %v6330 = vadd.f32 %v944, %v6329
      %v6331 = vpop.f32.mrb[0].mxu0
      %v6332 = vpop.f32.mrb[0].mxu0
      %v6333 = vadd.f32 %v944, %v6332
      %v6334 = vpop.f32.mrb[0].mxu0
      %6335 = vmatprep.mubr.bf16.mxu0 0
      %6336 = vmatmul.mubr.bf16.gmra.mrb[0].mxu0 %v3719
      %v6337 = vpop.f32.mrb[0].mxu0
      %v6338 = vadd.f32 %v944, %v6337
      %v6339 = vpop.f32.mrb[0].mxu0
      %v6340 = vpop.f32.mrb[0].mxu0
      %v6341 = vadd.f32 %v944, %v6340
      %v6342 = vpop.f32.mrb[0].mxu0
      %6343 = vmatprep.mubr.bf16.mxu0 0
      %6344 = vmatmul.mubr.bf16.gmra.mrb[0].mxu0 %v3722
      %v6345 = vpop.f32.mrb[0].mxu0
      %v6346 = vadd.f32 %v944, %v6345
      %v6347 = vpop.f32.mrb[0].mxu0
      %v6348 = vpop.f32.mrb[0].mxu0
      %v6349 = vadd.f32 %v944, %v6348
      %v6350 = vpop.f32.mrb[0].mxu0
      %6351 = vmatprep.mubr.bf16.mxu0 0
      %6352 = vmatmul.mubr.bf16.gmra.mrb[0].mxu0 %v3725
      %v6353 = vpop.f32.mrb[0].mxu0
      %v6354 = vadd.f32 %v944, %v6353
      %v6355 = vpop.f32.mrb[0].mxu0
      %v6356 = vpop.f32.mrb[0].mxu0
      %v6357 = vadd.f32 %v944, %v6356
      %v6358 = vpop.f32.mrb[0].mxu0
      %6359 = vmatprep.mubr.bf16.mxu0 0
      %6360 = vmatmul.mubr.bf16.gmra.mrb[0].mxu0 %v3728
      %v6361 = vpop.f32.mrb[0].mxu0
      %v6362 = vadd.f32 %v944, %v6361
      %v6363 = vpop.f32.mrb[0].mxu0
      %v6364 = vpop.f32.mrb[0].mxu0
      %v6365 = vadd.f32 %v944, %v6364
      %v6366 = vpop.f32.mrb[0].mxu0
      %6367 = vmatprep.mubr.bf16.mxu0 0
      %6368 = vmatmul.mubr.bf16.gmra.mrb[0].mxu0 %v3731
      %v6369 = vpop.f32.mrb[0].mxu0
      %v6370 = vadd.f32 %v944, %v6369
      %v6371 = vpop.f32.mrb[0].mxu0
      %v6372 = vpop.f32.mrb[0].mxu0
      %v6373 = vadd.f32 %v944, %v6372
      %v6374 = vpop.f32.mrb[0].mxu0
      %6375 = vmatprep.mubr.bf16.mxu0 0
      %6376 = vmatmul.mubr.bf16.gmra.mrb[0].mxu0 %v3734
      %v6377 = vpop.f32.mrb[0].mxu0
      %v6378 = vadd.f32 %v944, %v6377
      %v6379 = vpop.f32.mrb[0].mxu0
      %v6380 = vpop.f32.mrb[0].mxu0
      %v6381 = vadd.f32 %v944, %v6380
      %v6382 = vpop.f32.mrb[0].mxu0
      %6383 = vmatprep.mubr.bf16.mxu0 0
      %6384 = vmatmul.mubr.bf16.gmra.mrb[0].mxu0 %v3737
      %v6385 = vpop.f32.mrb[0].mxu0
      %v6386 = vadd.f32 %v944, %v6385
      %v6387 = vpop.f32.mrb[0].mxu0
      %v6388 = vpop.f32.mrb[0].mxu0
      %v6389 = vadd.f32 %v944, %v6388
      %v6390 = vpop.f32.mrb[0].mxu0
      %6391 = vmatprep.mubr.bf16.mxu0 0
      %6392 = vmatmul.mubr.bf16.gmra.mrb[0].mxu0 %v3740
      %v6393 = vpop.f32.mrb[0].mxu0
      %v6394 = vadd.f32 %v944, %v6393
      %v6395 = vpop.f32.mrb[0].mxu0
      %v6396 = vpop.f32.mrb[0].mxu0
      %v6397 = vadd.f32 %v944, %v6396
      %v6398 = vpop.f32.mrb[0].mxu0
      %6399 = vmatprep.mubr.bf16.mxu0 0
      %6400 = vmatmul.mubr.bf16.gmra.mrb[0].mxu0 %v3743
      %v6401 = vpop.f32.mrb[0].mxu0
      %v6402 = vadd.f32 %v944, %v6401
      %v6403 = vpop.f32.mrb[0].mxu0
      %v6404 = vpop.f32.mrb[0].mxu0
      %v6405 = vadd.f32 %v944, %v6404
      %v6406 = vpop.f32.mrb[0].mxu0
      %6407 = vmatprep.mubr.bf16.mxu0 0
      %6408 = vmatmul.mubr.bf16.gmra.mrb[0].mxu0 %v3746
      %v6409 = vpop.f32.mrb[0].mxu0
      %v6410 = vadd.f32 %v944, %v6409
      %v6411 = vpop.f32.mrb[0].mxu0
      %v6412 = vpop.f32.mrb[0].mxu0
      %v6413 = vadd.f32 %v944, %v6412
      %v6414 = vpop.f32.mrb[0].mxu0
      %6415 = vmatprep.mubr.bf16.mxu0 0
      %6416 = vmatmul.mubr.bf16.gmra.mrb[0].mxu0 %v3749
      %v6417 = vpop.f32.mrb[0].mxu0
      %v6418 = vadd.f32 %v944, %v6417
      %v6419 = vpop.f32.mrb[0].mxu0
      %v6420 = vpop.f32.mrb[0].mxu0
      %v6421 = vadd.f32 %v944, %v6420
      %v6422 = vpop.f32.mrb[0].mxu0
      %6423 = vmatprep.mubr.bf16.mxu0 0
      %6424 = vmatmul.mubr.bf16.gmra.mrb[0].mxu0 %v3752
      %v6425 = vpop.f32.mrb[0].mxu0
      %v6426 = vadd.f32 %v944, %v6425
      %v6427 = vpop.f32.mrb[0].mxu0
      %v6428 = vpop.f32.mrb[0].mxu0
      %v6429 = vadd.f32 %v944, %v6428
      %v6430 = vpop.f32.mrb[0].mxu0
      %6431 = vmatprep.mubr.bf16.mxu0 0
      %6432 = vmatmul.mubr.bf16.gmra.mrb[0].mxu0 %v3755
      %v6433 = vpop.f32.mrb[0].mxu0
      %v6434 = vadd.f32 %v944, %v6433
      %v6435 = vpop.f32.mrb[0].mxu0
      %v6436 = vpop.f32.mrb[0].mxu0
      %v6437 = vadd.f32 %v944, %v6436
      %v6438 = vpop.f32.mrb[0].mxu0
      %6439 = vmatprep.mubr.bf16.mxu0 0
      %6440 = vmatmul.mubr.bf16.gmra.mrb[0].mxu0 %v3758
      %v6441 = vpop.f32.mrb[0].mxu0
      %v6442 = vadd.f32 %v944, %v6441
      %v6443 = vpop.f32.mrb[0].mxu0
      %v6444 = vpop.f32.mrb[0].mxu0
      %v6445 = vadd.f32 %v944, %v6444
      %v6446 = vpop.f32.mrb[0].mxu0
      %6447 = vmatprep.mubr.bf16.mxu0 0
      %6448 = vmatmul.mubr.bf16.gmra.mrb[0].mxu0 %v3761
      %v6449 = vpop.f32.mrb[0].mxu0
      %v6450 = vadd.f32 %v944, %v6449
      %v6451 = vpop.f32.mrb[0].mxu0
      %v6452 = vpop.f32.mrb[0].mxu0
      %v6453 = vadd.f32 %v944, %v6452
      %v6454 = vpop.f32.mrb[0].mxu0
      %6455 = vmatprep.mubr.bf16.mxu0 0
      %6456 = vmatmul.mubr.bf16.gmra.mrb[0].mxu0 %v3764
      %v6457 = vpop.f32.mrb[0].mxu0
      %v6458 = vadd.f32 %v944, %v6457
      %v6459 = vpop.f32.mrb[0].mxu0
      %v6460 = vpop.f32.mrb[0].mxu0
      %v6461 = vadd.f32 %v944, %v6460
      %v6462 = vpop.f32.mrb[0].mxu0
      %6463 = vmatprep.mubr.bf16.mxu0 0
      %6464 = vmatmul.mubr.bf16.gmra.mrb[0].mxu0 %v3767
      %v6465 = vpop.f32.mrb[0].mxu0
      %v6466 = vadd.f32 %v944, %v6465
      %v6467 = vpop.f32.mrb[0].mxu0
      %v6468 = vpop.f32.mrb[0].mxu0
      %v6469 = vadd.f32 %v944, %v6468
      %v6470 = vpop.f32.mrb[0].mxu0
      %6471 = vmatprep.mubr.bf16.mxu0 0
      %6472 = vmatmul.mubr.bf16.gmra.mrb[0].mxu0 %v3770
      %v6473 = vpop.f32.mrb[0].mxu0
      %v6474 = vadd.f32 %v944, %v6473
      %v6475 = vpop.f32.mrb[0].mxu0
      %v6476 = vpop.f32.mrb[0].mxu0
      %v6477 = vadd.f32 %v944, %v6476
      %v6478 = vpop.f32.mrb[0].mxu0
      %6479 = vmatprep.mubr.bf16.mxu0 0
      %6480 = vmatmul.mubr.bf16.gmra.mrb[0].mxu0 %v3773
      %v6481 = vpop.f32.mrb[0].mxu0
      %v6482 = vadd.f32 %v944, %v6481
      %v6483 = vpop.f32.mrb[0].mxu0
      %v6484 = vpop.f32.mrb[0].mxu0
      %v6485 = vadd.f32 %v944, %v6484
      %v6486 = vpop.f32.mrb[0].mxu0
      %6487 = vmatprep.mubr.bf16.mxu0 0
      %6488 = vmatmul.mubr.bf16.gmra.mrb[0].mxu0 %v3776
      %v6489 = vpop.f32.mrb[0].mxu0
      %v6490 = vadd.f32 %v944, %v6489
      %v6491 = vpop.f32.mrb[0].mxu0
      %v6492 = vpop.f32.mrb[0].mxu0
      %v6493 = vadd.f32 %v944, %v6492
      %v6494 = vpop.f32.mrb[0].mxu0
      %6495 = vmatprep.mubr.bf16.mxu0 0
      %6496 = vmatmul.mubr.bf16.gmra.mrb[0].mxu0 %v3779
      %v6497 = vpop.f32.mrb[0].mxu0
      %v6498 = vadd.f32 %v944, %v6497
      %v6499 = vpop.f32.mrb[0].mxu0
      %v6500 = vpop.f32.mrb[0].mxu0
      %v6501 = vadd.f32 %v944, %v6500
      %v6502 = vpop.f32.mrb[0].mxu0
      %6503 = vmatprep.mubr.bf16.mxu0 0
      %6504 = vmatmul.mubr.bf16.gmra.mrb[0].mxu0 %v3782
      %v6505 = vpop.f32.mrb[0].mxu0
      %v6506 = vadd.f32 %v944, %v6505
      %v6507 = vpop.f32.mrb[0].mxu0
      %v6508 = vpop.f32.mrb[0].mxu0
      %v6509 = vadd.f32 %v944, %v6508
      %v6510 = vpop.f32.mrb[0].mxu0
      %6511 = vmatprep.mubr.bf16.mxu0 0
      %6512 = vmatmul.mubr.bf16.gmra.mrb[0].mxu0 %v3785
      %v6513 = vpop.f32.mrb[0].mxu0
      %v6514 = vadd.f32 %v944, %v6513
      %v6515 = vpop.f32.mrb[0].mxu0
      %v6516 = vpop.f32.mrb[0].mxu0
      %v6517 = vadd.f32 %v944, %v6516
      %v6518 = vpop.f32.mrb[0].mxu0
      %6519 = vmatprep.mubr.bf16.mxu0 0
      %6520 = vmatmul.mubr.bf16.gmra.mrb[0].mxu0 %v3788
      %v6521 = vpop.f32.mrb[0].mxu0
      %v6522 = vadd.f32 %v944, %v6521
      %v6523 = vpop.f32.mrb[0].mxu0
      %v6524 = vpop.f32.mrb[0].mxu0
      %v6525 = vadd.f32 %v944, %v6524
      %v6526 = vpop.f32.mrb[0].mxu0
      %6527 = vmatprep.mubr.bf16.mxu0 0
      %6528 = vmatmul.mubr.bf16.gmra.mrb[0].mxu0 %v3791
      %v6529 = vpop.f32.mrb[0].mxu0
      %v6530 = vadd.f32 %v944, %v6529
      %v6531 = vpop.f32.mrb[0].mxu0
      %v6532 = vpop.f32.mrb[0].mxu0
      %v6533 = vadd.f32 %v944, %v6532
      %v6534 = vpop.f32.mrb[0].mxu0
      %6535 = vmatprep.mubr.bf16.mxu0 0
      %6536 = vmatmul.mubr.bf16.gmra.mrb[0].mxu0 %v3794
      %v6537 = vpop.f32.mrb[0].mxu0
      %v6538 = vadd.f32 %v944, %v6537
      %v6539 = vpop.f32.mrb[0].mxu0
      %v6540 = vpop.f32.mrb[0].mxu0
      %v6541 = vadd.f32 %v944, %v6540
      %v6542 = vpop.f32.mrb[0].mxu0
      %6543 = vmatprep.mubr.bf16.mxu0 0
      %6544 = vmatmul.mubr.bf16.gmra.mrb[0].mxu0 %v3797
      %v6545 = vpop.f32.mrb[0].mxu0
      %v6546 = vadd.f32 %v944, %v6545
      %v6547 = vpop.f32.mrb[0].mxu0
      %v6548 = vpop.f32.mrb[0].mxu0
      %v6549 = vadd.f32 %v944, %v6548
      %v6550 = vpop.f32.mrb[0].mxu0
      %6551 = vmatprep.mubr.bf16.mxu0 0
      %6552 = vmatmul.mubr.bf16.gmra.mrb[0].mxu0 %v3800
      %v6553 = vpop.f32.mrb[0].mxu0
      %v6554 = vadd.f32 %v944, %v6553
      %v6555 = vpop.f32.mrb[0].mxu0
      %v6556 = vpop.f32.mrb[0].mxu0
      %v6557 = vadd.f32 %v944, %v6556
      %v6558 = vpop.f32.mrb[0].mxu0
      %6559 = vmatprep.mubr.bf16.mxu0 0
      %6560 = vmatmul.mubr.bf16.gmra.mrb[0].mxu0 %v3803
      %v6561 = vpop.f32.mrb[0].mxu0
      %v6562 = vadd.f32 %v944, %v6561
      %v6563 = vpop.f32.mrb[0].mxu0
      %v6564 = vpop.f32.mrb[0].mxu0
      %v6565 = vadd.f32 %v944, %v6564
      %v6566 = vpop.f32.mrb[0].mxu0
      %6567 = vmatprep.mubr.bf16.mxu0 0
      %6568 = vmatmul.mubr.bf16.gmra.mrb[0].mxu0 %v3806
      %v6569 = vpop.f32.mrb[0].mxu0
      %v6570 = vadd.f32 %v944, %v6569
      %v6571 = vpop.f32.mrb[0].mxu0
      %v6572 = vpop.f32.mrb[0].mxu0
      %v6573 = vadd.f32 %v944, %v6572
      %v6574 = vpop.f32.mrb[0].mxu0
      %6575 = vmatprep.mubr.bf16.mxu0 0
      %6576 = vmatmul.mubr.bf16.gmra.mrb[0].mxu0 %v3809
      %v6577 = vpop.f32.mrb[0].mxu0
      %v6578 = vadd.f32 %v944, %v6577
      %v6579 = vpop.f32.mrb[0].mxu0
      %v6580 = vpop.f32.mrb[0].mxu0
      %v6581 = vadd.f32 %v944, %v6580
      %v6582 = vpop.f32.mrb[0].mxu0
      %6583 = vmatprep.mubr.bf16.mxu0 0
      %6584 = vmatmul.mubr.bf16.gmra.mrb[0].mxu0 %v3812
      %v6585 = vpop.f32.mrb[0].mxu0
      %v6586 = vadd.f32 %v944, %v6585
      %v6587 = vpop.f32.mrb[0].mxu0
      %v6588 = vpop.f32.mrb[0].mxu0
      %v6589 = vadd.f32 %v944, %v6588
      %v6590 = vpop.f32.mrb[0].mxu0
      %6591 = vmatprep.mubr.bf16.mxu0 0
      %6592 = vmatmul.mubr.bf16.gmra.mrb[0].mxu0 %v3815
      %v6593 = vpop.f32.mrb[0].mxu0
      %v6594 = vadd.f32 %v944, %v6593
      %v6595 = vpop.f32.mrb[0].mxu0
      %v6596 = vpop.f32.mrb[0].mxu0
      %v6597 = vadd.f32 %v944, %v6596
      %v6598 = vpop.f32.mrb[0].mxu0
      %6599 = vmatprep.mubr.bf16.mxu0 0
      %6600 = vmatmul.mubr.bf16.gmra.mrb[0].mxu0 %v3818
      %v6601 = vpop.f32.mrb[0].mxu0
      %v6602 = vadd.f32 %v944, %v6601
      %v6603 = vpop.f32.mrb[0].mxu0
      %v6604 = vpop.f32.mrb[0].mxu0
      %v6605 = vadd.f32 %v944, %v6604
      %v6606 = vpop.f32.mrb[0].mxu0
      %6607 = vmatprep.mubr.bf16.mxu0 0
      %6608 = vmatmul.mubr.bf16.gmra.mrb[0].mxu0 %v3821
      %v6609 = vpop.f32.mrb[0].mxu0
      %v6610 = vadd.f32 %v944, %v6609
      %v6611 = vpop.f32.mrb[0].mxu0
      %v6612 = vpop.f32.mrb[0].mxu0
      %v6613 = vadd.f32 %v944, %v6612
      %v6614 = vpop.f32.mrb[0].mxu0
      %6615 = vmatprep.mubr.bf16.mxu0 0
      %6616 = vmatmul.mubr.bf16.gmra.mrb[0].mxu0 %v3824
      %v6617 = vpop.f32.mrb[0].mxu0
      %v6618 = vadd.f32 %v944, %v6617
      %v6619 = vpop.f32.mrb[0].mxu0
      %v6620 = vpop.f32.mrb[0].mxu0
      %v6621 = vadd.f32 %v944, %v6620
      %v6622 = vpop.f32.mrb[0].mxu0
      %6623 = vmatprep.mubr.bf16.mxu0 0
      %6624 = vmatmul.mubr.bf16.gmra.mrb[0].mxu0 %v3827
      %v6625 = vpop.f32.mrb[0].mxu0
      %v6626 = vadd.f32 %v944, %v6625
      %v6627 = vpop.f32.mrb[0].mxu0
      %v6628 = vpop.f32.mrb[0].mxu0
      %v6629 = vadd.f32 %v944, %v6628
      %v6630 = vpop.f32.mrb[0].mxu0
      %6631 = vmatprep.mubr.bf16.mxu0 0
      %6632 = vmatmul.mubr.bf16.gmra.mrb[0].mxu0 %v3830
      %v6633 = vpop.f32.mrb[0].mxu0
      %v6634 = vadd.f32 %v944, %v6633
      %v6635 = vpop.f32.mrb[0].mxu0
      %v6636 = vpop.f32.mrb[0].mxu0
      %v6637 = vadd.f32 %v944, %v6636
      %v6638 = vpop.f32.mrb[0].mxu0
      %6639 = vmatprep.mubr.bf16.mxu0 0
      %6640 = vmatmul.mubr.bf16.gmra.mrb[0].mxu0 %v3833
      %v6641 = vpop.f32.mrb[0].mxu0
      %v6642 = vadd.f32 %v944, %v6641
      %v6643 = vpop.f32.mrb[0].mxu0
      %v6644 = vpop.f32.mrb[0].mxu0
      %v6645 = vadd.f32 %v944, %v6644
      %v6646 = vpop.f32.mrb[0].mxu0
      %6647 = vmatprep.mubr.bf16.mxu0 0
      %6648 = vmatmul.mubr.bf16.gmra.mrb[0].mxu0 %v3836
      %v6649 = vpop.f32.mrb[0].mxu0
      %v6650 = vadd.f32 %v944, %v6649
      %v6651 = vpop.f32.mrb[0].mxu0
      %v6652 = vpop.f32.mrb[0].mxu0
      %v6653 = vadd.f32 %v944, %v6652
      %v6654 = vpop.f32.mrb[0].mxu0
      %6655 = vmatprep.mubr.bf16.mxu0 0
      %6656 = vmatmul.mubr.bf16.gmra.mrb[0].mxu0 %v3839
      %v6657 = vpop.f32.mrb[0].mxu0
      %v6658 = vadd.f32 %v944, %v6657
      %v6659 = vpop.f32.mrb[0].mxu0
      %v6660 = vpop.f32.mrb[0].mxu0
      %v6661 = vadd.f32 %v944, %v6660
      %v6662 = vpop.f32.mrb[0].mxu0
      %6663 = vmatprep.mubr.bf16.mxu0 0
      %6664 = vmatmul.mubr.bf16.gmra.mrb[0].mxu0 %v3842
      %v6665 = vpop.f32.mrb[0].mxu0
      %v6666 = vadd.f32 %v944, %v6665
      %v6667 = vpop.f32.mrb[0].mxu0
      %v6668 = vpop.f32.mrb[0].mxu0
      %v6669 = vadd.f32 %v944, %v6668
      %v6670 = vpop.f32.mrb[0].mxu0
      %6671 = vmatprep.mubr.bf16.mxu0 0
      %6672 = vmatmul.mubr.bf16.gmra.mrb[0].mxu0 %v3845
      %v6673 = vpop.f32.mrb[0].mxu0
      %v6674 = vadd.f32 %v944, %v6673
      %v6675 = vpop.f32.mrb[0].mxu0
      %v6676 = vpop.f32.mrb[0].mxu0
      %v6677 = vadd.f32 %v944, %v6676
      %v6678 = vpop.f32.mrb[0].mxu0
      %6679 = vmatprep.mubr.bf16.mxu0 0
      %6680 = vmatmul.mubr.bf16.gmra.mrb[0].mxu0 %v3848
      %v6681 = vpop.f32.mrb[0].mxu0
      %v6682 = vadd.f32 %v944, %v6681
      %v6683 = vpop.f32.mrb[0].mxu0
      %v6684 = vpop.f32.mrb[0].mxu0
      %v6685 = vadd.f32 %v944, %v6684
      %v6686 = vpop.f32.mrb[0].mxu0
      %6687 = vmatprep.mubr.bf16.mxu0 0
      %6688 = vmatmul.mubr.bf16.gmra.mrb[0].mxu0 %v3851
      %v6689 = vpop.f32.mrb[0].mxu0
      %v6690 = vadd.f32 %v944, %v6689
      %v6691 = vpop.f32.mrb[0].mxu0
      %v6692 = vpop.f32.mrb[0].mxu0
      %v6693 = vadd.f32 %v944, %v6692
      %v6694 = vpop.f32.mrb[0].mxu0
      %6695 = vmatprep.mubr.bf16.mxu0 0
      %6696 = vmatmul.mubr.bf16.gmra.mrb[0].mxu0 %v3854
      %v6697 = vpop.f32.mrb[0].mxu0
      %v6698 = vadd.f32 %v944, %v6697
      %v6699 = vpop.f32.mrb[0].mxu0
      %v6700 = vpop.f32.mrb[0].mxu0
      %v6701 = vadd.f32 %v944, %v6700
      %v6702 = vpop.f32.mrb[0].mxu0
      %6703 = vmatprep.mubr.bf16.mxu0 0
      %6704 = vmatmul.mubr.bf16.gmra.mrb[0].mxu0 %v3857
      %v6705 = vpop.f32.mrb[0].mxu0
      %v6706 = vadd.f32 %v944, %v6705
      %v6707 = vpop.f32.mrb[0].mxu0
      %v6708 = vpop.f32.mrb[0].mxu0
      %v6709 = vadd.f32 %v944, %v6708
      %v6710 = vpop.f32.mrb[0].mxu0
      %6711 = vmatprep.mubr.bf16.mxu0 0
      %6712 = vmatmul.mubr.bf16.gmra.mrb[0].mxu0 %v3860
      %v6713 = vpop.f32.mrb[0].mxu0
      %v6714 = vadd.f32 %v944, %v6713
      %v6715 = vpop.f32.mrb[0].mxu0
      %v6716 = vpop.f32.mrb[0].mxu0
      %v6717 = vadd.f32 %v944, %v6716
      %v6718 = vpop.f32.mrb[0].mxu0
      %6719 = vmatprep.mubr.bf16.mxu0 0
      %6720 = vmatmul.mubr.bf16.gmra.mrb[0].mxu0 %v3863
      %v6721 = vpop.f32.mrb[0].mxu0
      %v6722 = vadd.f32 %v944, %v6721
      %v6723 = vpop.f32.mrb[0].mxu0
      %v6724 = vpop.f32.mrb[0].mxu0
      %v6725 = vadd.f32 %v944, %v6724
      %v6726 = vpop.f32.mrb[0].mxu0
      %6727 = vmatprep.mubr.bf16.mxu0 0
      %6728 = vmatmul.mubr.bf16.gmra.mrb[0].mxu0 %v3866
      %v6729 = vpop.f32.mrb[0].mxu0
      %v6730 = vadd.f32 %v944, %v6729
      %v6731 = vpop.f32.mrb[0].mxu0
      %v6732 = vpop.f32.mrb[0].mxu0
      %v6733 = vadd.f32 %v944, %v6732
      %v6734 = vpop.f32.mrb[0].mxu0
      %6735 = vmatprep.mubr.bf16.mxu0 0
      %6736 = vmatmul.mubr.bf16.gmra.mrb[0].mxu0 %v3869
      %v6737 = vpop.f32.mrb[0].mxu0
      %v6738 = vadd.f32 %v944, %v6737
      %v6739 = vpop.f32.mrb[0].mxu0
      %v6740 = vpop.f32.mrb[0].mxu0
      %v6741 = vadd.f32 %v944, %v6740
      %v6742 = vpop.f32.mrb[0].mxu0
      %6743 = vmatprep.mubr.bf16.mxu0 0
      %6744 = vmatmul.mubr.bf16.gmra.mrb[0].mxu0 %v3872
      %v6745 = vpop.f32.mrb[0].mxu0
      %v6746 = vadd.f32 %v944, %v6745
      %v6747 = vpop.f32.mrb[0].mxu0
      %v6748 = vpop.f32.mrb[0].mxu0
      %v6749 = vadd.f32 %v944, %v6748
      %v6750 = vpop.f32.mrb[0].mxu0
      %6751 = vmatprep.mubr.bf16.mxu0 0
      %6752 = vmatmul.mubr.bf16.gmra.mrb[0].mxu0 %v3875
      %v6753 = vpop.f32.mrb[0].mxu0
      %v6754 = vadd.f32 %v944, %v6753
      %v6755 = vpop.f32.mrb[0].mxu0
      %v6756 = vpop.f32.mrb[0].mxu0
      %v6757 = vadd.f32 %v944, %v6756
      %v6758 = vpop.f32.mrb[0].mxu0
      %6759 = vmatprep.mubr.bf16.mxu0 0
      %6760 = vmatmul.mubr.bf16.gmra.mrb[0].mxu0 %v3878
      %v6761 = vpop.f32.mrb[0].mxu0
      %v6762 = vadd.f32 %v944, %v6761
      %v6763 = vpop.f32.mrb[0].mxu0
      %v6764 = vpop.f32.mrb[0].mxu0
      %v6765 = vadd.f32 %v944, %v6764
      %v6766 = vpop.f32.mrb[0].mxu0
      %6767 = vmatprep.mubr.bf16.mxu0 0
      %6768 = vmatmul.mubr.bf16.gmra.mrb[0].mxu0 %v3881
      %v6769 = vpop.f32.mrb[0].mxu0
      %v6770 = vadd.f32 %v944, %v6769
      %v6771 = vpop.f32.mrb[0].mxu0
      %v6772 = vpop.f32.mrb[0].mxu0
      %v6773 = vadd.f32 %v944, %v6772
      %v6774 = vpop.f32.mrb[0].mxu0
      %6775 = vmatprep.mubr.bf16.mxu0 0
      %6776 = vmatmul.mubr.bf16.gmra.mrb[0].mxu0 %v3884
      %v6777 = vpop.f32.mrb[0].mxu0
      %v6778 = vadd.f32 %v944, %v6777
      %v6779 = vpop.f32.mrb[0].mxu0
      %v6780 = vpop.f32.mrb[0].mxu0
      %v6781 = vadd.f32 %v944, %v6780
      %v6782 = vpop.f32.mrb[0].mxu0
      %6783 = vmatprep.mubr.bf16.mxu0 0
      %6784 = vmatmul.mubr.bf16.gmra.mrb[0].mxu0 %v3887
      %v6785 = vpop.f32.mrb[0].mxu0
      %v6786 = vadd.f32 %v944, %v6785
      %v6787 = vpop.f32.mrb[0].mxu0
      %v6788 = vpop.f32.mrb[0].mxu0
      %v6789 = vadd.f32 %v944, %v6788
      %v6790 = vpop.f32.mrb[0].mxu0
      %6791 = vmatprep.mubr.bf16.mxu0 0
      %6792 = vmatmul.mubr.bf16.gmra.mrb[0].mxu0 %v3890
      %v6793 = vpop.f32.mrb[0].mxu0
      %v6794 = vadd.f32 %v944, %v6793
      %v6795 = vpop.f32.mrb[0].mxu0
      %v6796 = vpop.f32.mrb[0].mxu0
      %v6797 = vadd.f32 %v944, %v6796
      %v6798 = vpop.f32.mrb[0].mxu0
      %6799 = vmatprep.mubr.bf16.mxu0 0
      %6800 = vmatmul.mubr.bf16.gmra.mrb[0].mxu0 %v3893
      %v6801 = vpop.f32.mrb[0].mxu0
      %v6802 = vadd.f32 %v944, %v6801
      %v6803 = vpop.f32.mrb[0].mxu0
      %v6804 = vpop.f32.mrb[0].mxu0
      %v6805 = vadd.f32 %v944, %v6804
      %v6806 = vpop.f32.mrb[0].mxu0
      %6807 = vmatprep.mubr.bf16.mxu0 0
      %6808 = vmatmul.mubr.bf16.gmra.mrb[0].mxu0 %v3896
      %v6809 = vpop.f32.mrb[0].mxu0
      %v6810 = vadd.f32 %v944, %v6809
      %v6811 = vpop.f32.mrb[0].mxu0
      %v6812 = vpop.f32.mrb[0].mxu0
      %v6813 = vadd.f32 %v944, %v6812
      %v6814 = vpop.f32.mrb[0].mxu0
      %6815 = vmatprep.mubr.bf16.mxu0 0
      %6816 = vmatmul.mubr.bf16.gmra.mrb[0].mxu0 %v3899
      %v6817 = vpop.f32.mrb[0].mxu0
      %v6818 = vadd.f32 %v944, %v6817
      %v6819 = vpop.f32.mrb[0].mxu0
      %v6820 = vpop.f32.mrb[0].mxu0
      %v6821 = vadd.f32 %v944, %v6820
      %v6822 = vpop.f32.mrb[0].mxu0
      %6823 = vmatprep.mubr.bf16.mxu0 0
      %6824 = vmatmul.mubr.bf16.gmra.mrb[0].mxu0 %v3902
      %v6825 = vpop.f32.mrb[0].mxu0
      %v6826 = vadd.f32 %v944, %v6825
      %v6827 = vpop.f32.mrb[0].mxu0
      %v6828 = vpop.f32.mrb[0].mxu0
      %v6829 = vadd.f32 %v944, %v6828
      %v6830 = vpop.f32.mrb[0].mxu0
      %6831 = vmatprep.mubr.bf16.mxu0 0
      %6832 = vmatmul.mubr.bf16.gmra.mrb[0].mxu0 %v3905
      %v6833 = vpop.f32.mrb[0].mxu0
      %v6834 = vadd.f32 %v944, %v6833
      %v6835 = vpop.f32.mrb[0].mxu0
      %v6836 = vpop.f32.mrb[0].mxu0
      %v6837 = vadd.f32 %v944, %v6836
      %v6838 = vpop.f32.mrb[0].mxu0
      %6839 = vmatprep.mubr.bf16.mxu0 0
      %6840 = vmatmul.mubr.bf16.gmra.mrb[0].mxu0 %v3908
      %v6841 = vpop.f32.mrb[0].mxu0
      %v6842 = vadd.f32 %v944, %v6841
      %v6843 = vpop.f32.mrb[0].mxu0
      %v6844 = vpop.f32.mrb[0].mxu0
      %v6845 = vadd.f32 %v944, %v6844
      %v6846 = vpop.f32.mrb[0].mxu0
      %6847 = vmatprep.mubr.bf16.mxu0 0
      %6848 = vmatmul.mubr.bf16.gmra.mrb[0].mxu0 %v3911
      %v6849 = vpop.f32.mrb[0].mxu0
      %v6850 = vadd.f32 %v944, %v6849
      %v6851 = vpop.f32.mrb[0].mxu0
      %v6852 = vpop.f32.mrb[0].mxu0
      %v6853 = vadd.f32 %v944, %v6852
      %v6854 = vpop.f32.mrb[0].mxu0
      %6855 = vmatprep.mubr.bf16.mxu0 0
      %6856 = vmatmul.mubr.bf16.gmra.mrb[0].mxu0 %v3914
      %v6857 = vpop.f32.mrb[0].mxu0
      %v6858 = vadd.f32 %v944, %v6857
      %v6859 = vpop.f32.mrb[0].mxu0
      %v6860 = vpop.f32.mrb[0].mxu0
      %v6861 = vadd.f32 %v944, %v6860
      %v6862 = vpop.f32.mrb[0].mxu0
      %6863 = vmatprep.mubr.bf16.mxu0 0
      %6864 = vmatmul.mubr.bf16.gmra.mrb[0].mxu0 %v3917
      %v6865 = vpop.f32.mrb[0].mxu0
      %v6866 = vadd.f32 %v944, %v6865
      %v6867 = vpop.f32.mrb[0].mxu0
      %v6868 = vpop.f32.mrb[0].mxu0
      %v6869 = vadd.f32 %v944, %v6868
      %v6870 = vpop.f32.mrb[0].mxu0
      %6871 = vmatprep.mubr.bf16.mxu0 0
      %6872 = vmatmul.mubr.bf16.gmra.mrb[0].mxu0 %v3920
      %v6873 = vpop.f32.mrb[0].mxu0
      %v6874 = vadd.f32 %v944, %v6873
      %v6875 = vpop.f32.mrb[0].mxu0
      %v6876 = vpop.f32.mrb[0].mxu0
      %v6877 = vadd.f32 %v944, %v6876
      %v6878 = vpop.f32.mrb[0].mxu0
      %6879 = vmatprep.mubr.bf16.mxu0 0
      %6880 = vmatmul.mubr.bf16.gmra.mrb[0].mxu0 %v3923
      %v6881 = vpop.f32.mrb[0].mxu0
      %v6882 = vadd.f32 %v944, %v6881
      %v6883 = vpop.f32.mrb[0].mxu0
      %v6884 = vpop.f32.mrb[0].mxu0
      %v6885 = vadd.f32 %v944, %v6884
      %v6886 = vpop.f32.mrb[0].mxu0
      %6887 = vmatprep.mubr.bf16.mxu0 0
      %6888 = vmatmul.mubr.bf16.gmra.mrb[0].mxu0 %v3926
      %v6889 = vpop.f32.mrb[0].mxu0
      %v6890 = vadd.f32 %v944, %v6889
      %v6891 = vpop.f32.mrb[0].mxu0
      %v6892 = vpop.f32.mrb[0].mxu0
      %v6893 = vadd.f32 %v944, %v6892
      %v6894 = vpop.f32.mrb[0].mxu0
      %6895 = vmatprep.mubr.bf16.mxu0 0
      %6896 = vmatmul.mubr.bf16.gmra.mrb[0].mxu0 %v3929
      %v6897 = vpop.f32.mrb[0].mxu0
      %v6898 = vadd.f32 %v944, %v6897
      %v6899 = vpop.f32.mrb[0].mxu0
      %v6900 = vpop.f32.mrb[0].mxu0
      %v6901 = vadd.f32 %v944, %v6900
      %v6902 = vpop.f32.mrb[0].mxu0
      %6903 = vmatprep.mubr.bf16.mxu0 0
      %6904 = vmatmul.mubr.bf16.gmra.mrb[0].mxu0 %v3932
      %v6905 = vpop.f32.mrb[0].mxu0
      %v6906 = vadd.f32 %v944, %v6905
      %v6907 = vpop.f32.mrb[0].mxu0
      %v6908 = vpop.f32.mrb[0].mxu0
      %v6909 = vadd.f32 %v944, %v6908
      %v6910 = vpop.f32.mrb[0].mxu0
      %6911 = vmatprep.mubr.bf16.mxu0 0
      %6912 = vmatmul.mubr.bf16.gmra.mrb[0].mxu0 %v3935
      %v6913 = vpop.f32.mrb[0].mxu0
      %v6914 = vadd.f32 %v944, %v6913
      %v6915 = vpop.f32.mrb[0].mxu0
      %v6916 = vpop.f32.mrb[0].mxu0
      %v6917 = vadd.f32 %v944, %v6916
      %v6918 = vpop.f32.mrb[0].mxu0
      %6919 = vmatprep.mubr.bf16.mxu0 0
      %6920 = vmatmul.mubr.bf16.gmra.mrb[0].mxu0 %v3938
      %v6921 = vpop.f32.mrb[0].mxu0
      %v6922 = vadd.f32 %v944, %v6921
      %v6923 = vpop.f32.mrb[0].mxu0
      %v6924 = vpop.f32.mrb[0].mxu0
      %v6925 = vadd.f32 %v944, %v6924
      %v6926 = vpop.f32.mrb[0].mxu0
      %6927 = vmatprep.mubr.bf16.mxu0 0
      %6928 = vmatmul.mubr.bf16.gmra.mrb[0].mxu0 %v3941
      %v6929 = vpop.f32.mrb[0].mxu0
      %v6930 = vadd.f32 %v944, %v6929
      %v6931 = vpop.f32.mrb[0].mxu0
      %v6932 = vpop.f32.mrb[0].mxu0
      %v6933 = vadd.f32 %v944, %v6932
      %v6934 = vpop.f32.mrb[0].mxu0
      %6935 = vmatprep.mubr.bf16.mxu0 0
      %6936 = vmatmul.mubr.bf16.gmra.mrb[0].mxu0 %v3944
      %v6937 = vpop.f32.mrb[0].mxu0
      %v6938 = vadd.f32 %v944, %v6937
      %v6939 = vpop.f32.mrb[0].mxu0
      %v6940 = vpop.f32.mrb[0].mxu0
      %v6941 = vadd.f32 %v944, %v6940
      %v6942 = vpop.f32.mrb[0].mxu0
      %6943 = vmatprep.mubr.bf16.mxu0 0
      %6944 = vmatmul.mubr.bf16.gmra.mrb[0].mxu0 %v3947
      %v6945 = vpop.f32.mrb[0].mxu0
      %v6946 = vadd.f32 %v944, %v6945
      %v6947 = vpop.f32.mrb[0].mxu0
      %v6948 = vpop.f32.mrb[0].mxu0
      %v6949 = vadd.f32 %v944, %v6948
      %v6950 = vpop.f32.mrb[0].mxu0
      %6951 = vmatprep.mubr.bf16.mxu0 0
      %6952 = vmatmul.mubr.bf16.gmra.mrb[0].mxu0 %v3950
      %v6953 = vpop.f32.mrb[0].mxu0
      %v6954 = vadd.f32 %v944, %v6953
      %v6955 = vpop.f32.mrb[0].mxu0
      %v6956 = vpop.f32.mrb[0].mxu0
      %v6957 = vadd.f32 %v944, %v6956
      %v6958 = vpop.f32.mrb[0].mxu0
      %6959 = vmatprep.mubr.bf16.mxu0 0
      %6960 = vmatmul.mubr.bf16.gmra.mrb[0].mxu0 %v3953
      %v6961 = vpop.f32.mrb[0].mxu0
      %v6962 = vadd.f32 %v944, %v6961
      %v6963 = vpop.f32.mrb[0].mxu0
      %v6964 = vpop.f32.mrb[0].mxu0
      %v6965 = vadd.f32 %v944, %v6964
      %v6966 = vpop.f32.mrb[0].mxu0
      %6967 = vmatprep.mubr.bf16.mxu0 0
      %6968 = vmatmul.mubr.bf16.gmra.mrb[0].mxu0 %v3956
      %v6969 = vpop.f32.mrb[0].mxu0
      %v6970 = vadd.f32 %v944, %v6969
      %v6971 = vpop.f32.mrb[0].mxu0
      %v6972 = vpop.f32.mrb[0].mxu0
      %v6973 = vadd.f32 %v944, %v6972
      %v6974 = vpop.f32.mrb[0].mxu0
      %6975 = vmatprep.mubr.bf16.mxu0 0
      %6976 = vmatmul.mubr.bf16.gmra.mrb[0].mxu0 %v3959
      %v6977 = vpop.f32.mrb[0].mxu0
      %v6978 = vadd.f32 %v944, %v6977
      %v6979 = vpop.f32.mrb[0].mxu0
      %v6980 = vpop.f32.mrb[0].mxu0
      %v6981 = vadd.f32 %v944, %v6980
      %v6982 = vpop.f32.mrb[0].mxu0
      %6983 = vmatprep.mubr.bf16.mxu0 0
      %6984 = vmatmul.mubr.bf16.gmra.mrb[0].mxu0 %v3962
      %v6985 = vpop.f32.mrb[0].mxu0
      %v6986 = vadd.f32 %v944, %v6985
      %v6987 = vpop.f32.mrb[0].mxu0
      %v6988 = vpop.f32.mrb[0].mxu0
      %v6989 = vadd.f32 %v944, %v6988
      %v6990 = vpop.f32.mrb[0].mxu0
      %6991 = vmatprep.mubr.bf16.mxu0 0
      %6992 = vmatmul.mubr.bf16.gmra.mrb[0].mxu0 %v3965
      %v6993 = vpop.f32.mrb[0].mxu0
      %v6994 = vadd.f32 %v944, %v6993
      %v6995 = vpop.f32.mrb[0].mxu0
      %v6996 = vpop.f32.mrb[0].mxu0
      %v6997 = vadd.f32 %v944, %v6996
      %v6998 = vpop.f32.mrb[0].mxu0
      %6999 = vmatprep.mubr.bf16.mxu0 0
      %7000 = vmatmul.mubr.bf16.gmra.mrb[0].mxu0 %v3968
      %v7001 = vpop.f32.mrb[0].mxu0
      %v7002 = vadd.f32 %v944, %v7001
      %v7003 = vpop.f32.mrb[0].mxu0
      %v7004 = vpop.f32.mrb[0].mxu0
      %v7005 = vadd.f32 %v944, %v7004
      %v7006 = vpop.f32.mrb[0].mxu0
      %7007 = vmatprep.mubr.bf16.mxu0 0
      %7008 = vmatmul.mubr.bf16.gmra.mrb[0].mxu0 %v3971
      %v7009 = vpop.f32.mrb[0].mxu0
      %v7010 = vadd.f32 %v944, %v7009
      %v7011 = vpop.f32.mrb[0].mxu0
      %v7012 = vpop.f32.mrb[0].mxu0
      %v7013 = vadd.f32 %v944, %v7012
      %v7014 = vpop.f32.mrb[0].mxu0
      %7015 = vmatprep.mubr.bf16.mxu0 0
      %7016 = vmatmul.mubr.bf16.gmra.mrb[0].mxu0 %v3974
      %v7017 = vpop.f32.mrb[0].mxu0
      %v7018 = vadd.f32 %v944, %v7017
      %v7019 = vpop.f32.mrb[0].mxu0
      %v7020 = vpop.f32.mrb[0].mxu0
      %v7021 = vadd.f32 %v944, %v7020
      %v7022 = vpop.f32.mrb[0].mxu0
      %7023 = vmatprep.mubr.bf16.mxu0 0
      %7024 = vmatmul.mubr.bf16.gmra.mrb[0].mxu0 %v3977
      %v7025 = vpop.f32.mrb[0].mxu0
      %v7026 = vadd.f32 %v944, %v7025
      %v7027 = vpop.f32.mrb[0].mxu0
      %v7028 = vpop.f32.mrb[0].mxu0
      %v7029 = vadd.f32 %v944, %v7028
      %v7030 = vpop.f32.mrb[0].mxu0
      %7031 = vmatprep.mubr.bf16.mxu0 0
      %7032 = vmatmul.mubr.bf16.gmra.mrb[0].mxu0 %v3980
      %v7033 = vpop.f32.mrb[0].mxu0
      %v7034 = vadd.f32 %v944, %v7033
      %v7035 = vpop.f32.mrb[0].mxu0
      %v7036 = vpop.f32.mrb[0].mxu0
      %v7037 = vadd.f32 %v944, %v7036
      %v7038 = vpop.f32.mrb[0].mxu0
      %7039 = vmatprep.mubr.bf16.mxu0 0
      %7040 = vmatmul.mubr.bf16.gmra.mrb[0].mxu0 %v3983
      %v7041 = vpop.f32.mrb[0].mxu0
      %v7042 = vadd.f32 %v944, %v7041
      %v7043 = vpop.f32.mrb[0].mxu0
      %v7044 = vpop.f32.mrb[0].mxu0
      %v7045 = vadd.f32 %v944, %v7044
      %v7046 = vpop.f32.mrb[0].mxu0
      %7047 = vmatprep.mubr.bf16.mxu0 0
      %7048 = vmatmul.mubr.bf16.gmra.mrb[0].mxu0 %v3986
      %v7049 = vpop.f32.mrb[0].mxu0
      %v7050 = vadd.f32 %v944, %v7049
      %v7051 = vpop.f32.mrb[0].mxu0
      %v7052 = vpop.f32.mrb[0].mxu0
      %v7053 = vadd.f32 %v944, %v7052
      %v7054 = vpop.f32.mrb[0].mxu0
      %7055 = vmatprep.mubr.bf16.mxu0 0
      %7056 = vmatmul.mubr.bf16.gmra.mrb[0].mxu0 %v3989
      %v7057 = vpop.f32.mrb[0].mxu0
      %v7058 = vadd.f32 %v944, %v7057
      %v7059 = vpop.f32.mrb[0].mxu0
      %v7060 = vpop.f32.mrb[0].mxu0
      %v7061 = vadd.f32 %v944, %v7060
      %v7062 = vpop.f32.mrb[0].mxu0
      %7063 = vmatprep.mubr.bf16.mxu0 0
      %7064 = vmatmul.mubr.bf16.gmra.mrb[0].mxu0 %v3992
      %v7065 = vpop.f32.mrb[0].mxu0
      %v7066 = vadd.f32 %v944, %v7065
      %v7067 = vpop.f32.mrb[0].mxu0
      %v7068 = vpop.f32.mrb[0].mxu0
      %v7069 = vadd.f32 %v944, %v7068
      %v7070 = vpop.f32.mrb[0].mxu0
      %7071 = vmatprep.mubr.bf16.mxu0 0
      %7072 = vmatmul.mubr.bf16.gmra.mrb[0].mxu0 %v3995
      %v7073 = vpop.f32.mrb[0].mxu0
      %v7074 = vadd.f32 %v944, %v7073
      %v7075 = vpop.f32.mrb[0].mxu0
      %v7076 = vpop.f32.mrb[0].mxu0
      %v7077 = vadd.f32 %v944, %v7076
      %v7078 = vpop.f32.mrb[0].mxu0
      %7079 = vmatprep.mubr.bf16.mxu0 0
      %7080 = vmatmul.mubr.bf16.gmra.mrb[0].mxu0 %v3998
      %v7081 = vpop.f32.mrb[0].mxu0
      %v7082 = vadd.f32 %v944, %v7081
      %v7083 = vpop.f32.mrb[0].mxu0
      %v7084 = vpop.f32.mrb[0].mxu0
      %v7085 = vadd.f32 %v944, %v7084
      %v7086 = vpop.f32.mrb[0].mxu0
      %7087 = vdwg.mxu0
      %v7088 = vmax.f32 %v4042, 0.0
      %v7089 = vmax.f32 %v4045, 0.0
      %v7090 = vmax.f32 %v4050, 0.0
      %v7091 = vmax.f32 %v4053, 0.0
      %v7092 = vmax.f32 %v4058, 0.0
      %v7093 = vmax.f32 %v4061, 0.0
      %v7094 = vmax.f32 %v4066, 0.0
      %v7095 = vmax.f32 %v4069, 0.0
      %v7096 = vmax.f32 %v4074, 0.0
      %v7097 = vmax.f32 %v4077, 0.0
      %v7098 = vmax.f32 %v4082, 0.0
      %v7099 = vmax.f32 %v4085, 0.0
      %v7100 = vmax.f32 %v4090, 0.0
      %v7101 = vmax.f32 %v4093, 0.0
      %v7102 = vmax.f32 %v4098, 0.0
      %v7103 = vmax.f32 %v4101, 0.0
      %v7104 = vmax.f32 %v4106, 0.0
      %v7105 = vmax.f32 %v4109, 0.0
      %v7106 = vmax.f32 %v4114, 0.0
      %v7107 = vmax.f32 %v4117, 0.0
      %v7108 = vmax.f32 %v4122, 0.0
      %v7109 = vmax.f32 %v4125, 0.0
      %v7110 = vmax.f32 %v4130, 0.0
      %v7111 = vmax.f32 %v4133, 0.0
      %v7112 = vmax.f32 %v4138, 0.0
      %v7113 = vmax.f32 %v4141, 0.0
      %v7114 = vmax.f32 %v4146, 0.0
      %v7115 = vmax.f32 %v4149, 0.0
      %v7116 = vmax.f32 %v4154, 0.0
      %v7117 = vmax.f32 %v4157, 0.0
      %v7118 = vmax.f32 %v4162, 0.0
      %v7119 = vmax.f32 %v4165, 0.0
      %v7120 = vmax.f32 %v4170, 0.0
      %v7121 = vmax.f32 %v4173, 0.0
      %v7122 = vmax.f32 %v4178, 0.0
      %v7123 = vmax.f32 %v4181, 0.0
      %v7124 = vmax.f32 %v4186, 0.0
      %v7125 = vmax.f32 %v4189, 0.0
      %v7126 = vmax.f32 %v4194, 0.0
      %v7127 = vmax.f32 %v4197, 0.0
      %v7128 = vmax.f32 %v4202, 0.0
      %v7129 = vmax.f32 %v4205, 0.0
      %v7130 = vmax.f32 %v4210, 0.0
      %v7131 = vmax.f32 %v4213, 0.0
      %v7132 = vmax.f32 %v4218, 0.0
      %v7133 = vmax.f32 %v4221, 0.0
      %v7134 = vmax.f32 %v4226, 0.0
      %v7135 = vmax.f32 %v4229, 0.0
      %v7136 = vmax.f32 %v4234, 0.0
      %v7137 = vmax.f32 %v4237, 0.0
      %v7138 = vmax.f32 %v4242, 0.0
      %v7139 = vmax.f32 %v4245, 0.0
      %v7140 = vmax.f32 %v4250, 0.0
      %v7141 = vmax.f32 %v4253, 0.0
      %v7142 = vmax.f32 %v4258, 0.0
      %v7143 = vmax.f32 %v4261, 0.0
      %v7144 = vmax.f32 %v4266, 0.0
      %v7145 = vmax.f32 %v4269, 0.0
      %v7146 = vmax.f32 %v4274, 0.0
      %v7147 = vmax.f32 %v4277, 0.0
      %v7148 = vmax.f32 %v4282, 0.0
      %v7149 = vmax.f32 %v4285, 0.0
      %v7150 = vmax.f32 %v4290, 0.0
      %v7151 = vmax.f32 %v4293, 0.0
      %v7152 = vmax.f32 %v4298, 0.0
      %v7153 = vmax.f32 %v4301, 0.0
      %v7154 = vmax.f32 %v4306, 0.0
      %v7155 = vmax.f32 %v4309, 0.0
      %v7156 = vmax.f32 %v4314, 0.0
      %v7157 = vmax.f32 %v4317, 0.0
      %v7158 = vmax.f32 %v4322, 0.0
      %v7159 = vmax.f32 %v4325, 0.0
      %v7160 = vmax.f32 %v4330, 0.0
      %v7161 = vmax.f32 %v4333, 0.0
      %v7162 = vmax.f32 %v4338, 0.0
      %v7163 = vmax.f32 %v4341, 0.0
      %v7164 = vmax.f32 %v4346, 0.0
      %v7165 = vmax.f32 %v4349, 0.0
      %v7166 = vmax.f32 %v4354, 0.0
      %v7167 = vmax.f32 %v4357, 0.0
      %v7168 = vmax.f32 %v4362, 0.0
      %v7169 = vmax.f32 %v4365, 0.0
      %v7170 = vmax.f32 %v4370, 0.0
      %v7171 = vmax.f32 %v4373, 0.0
      %v7172 = vmax.f32 %v4378, 0.0
      %v7173 = vmax.f32 %v4381, 0.0
      %v7174 = vmax.f32 %v4386, 0.0
      %v7175 = vmax.f32 %v4389, 0.0
      %v7176 = vmax.f32 %v4394, 0.0
      %v7177 = vmax.f32 %v4397, 0.0
      %v7178 = vmax.f32 %v4402, 0.0
      %v7179 = vmax.f32 %v4405, 0.0
      %v7180 = vmax.f32 %v4410, 0.0
      %v7181 = vmax.f32 %v4413, 0.0
      %v7182 = vmax.f32 %v4418, 0.0
      %v7183 = vmax.f32 %v4421, 0.0
      %v7184 = vmax.f32 %v4426, 0.0
      %v7185 = vmax.f32 %v4429, 0.0
      %v7186 = vmax.f32 %v4434, 0.0
      %v7187 = vmax.f32 %v4437, 0.0
      %v7188 = vmax.f32 %v4442, 0.0
      %v7189 = vmax.f32 %v4445, 0.0
      %v7190 = vmax.f32 %v4450, 0.0
      %v7191 = vmax.f32 %v4453, 0.0
      %v7192 = vmax.f32 %v4458, 0.0
      %v7193 = vmax.f32 %v4461, 0.0
      %v7194 = vmax.f32 %v4466, 0.0
      %v7195 = vmax.f32 %v4469, 0.0
      %v7196 = vmax.f32 %v4474, 0.0
      %v7197 = vmax.f32 %v4477, 0.0
      %v7198 = vmax.f32 %v4482, 0.0
      %v7199 = vmax.f32 %v4485, 0.0
      %v7200 = vmax.f32 %v4490, 0.0
      %v7201 = vmax.f32 %v4493, 0.0
      %v7202 = vmax.f32 %v4498, 0.0
      %v7203 = vmax.f32 %v4501, 0.0
      %v7204 = vmax.f32 %v4506, 0.0
      %v7205 = vmax.f32 %v4509, 0.0
      %v7206 = vmax.f32 %v4514, 0.0
      %v7207 = vmax.f32 %v4517, 0.0
      %v7208 = vmax.f32 %v4522, 0.0
      %v7209 = vmax.f32 %v4525, 0.0
      %v7210 = vmax.f32 %v4530, 0.0
      %v7211 = vmax.f32 %v4533, 0.0
      %v7212 = vmax.f32 %v4538, 0.0
      %v7213 = vmax.f32 %v4541, 0.0
      %v7214 = vmax.f32 %v4546, 0.0
      %v7215 = vmax.f32 %v4549, 0.0
      %v7216 = vmax.f32 %v4554, 0.0
      %v7217 = vmax.f32 %v4557, 0.0
      %v7218 = vmax.f32 %v4562, 0.0
      %v7219 = vmax.f32 %v4565, 0.0
      %v7220 = vmax.f32 %v4570, 0.0
      %v7221 = vmax.f32 %v4573, 0.0
      %v7222 = vmax.f32 %v4578, 0.0
      %v7223 = vmax.f32 %v4581, 0.0
      %v7224 = vmax.f32 %v4586, 0.0
      %v7225 = vmax.f32 %v4589, 0.0
      %v7226 = vmax.f32 %v4594, 0.0
      %v7227 = vmax.f32 %v4597, 0.0
      %v7228 = vmax.f32 %v4602, 0.0
      %v7229 = vmax.f32 %v4605, 0.0
      %v7230 = vmax.f32 %v4610, 0.0
      %v7231 = vmax.f32 %v4613, 0.0
      %v7232 = vmax.f32 %v4618, 0.0
      %v7233 = vmax.f32 %v4621, 0.0
      %v7234 = vmax.f32 %v4626, 0.0
      %v7235 = vmax.f32 %v4629, 0.0
      %v7236 = vmax.f32 %v4634, 0.0
      %v7237 = vmax.f32 %v4637, 0.0
      %v7238 = vmax.f32 %v4642, 0.0
      %v7239 = vmax.f32 %v4645, 0.0
      %v7240 = vmax.f32 %v4650, 0.0
      %v7241 = vmax.f32 %v4653, 0.0
      %v7242 = vmax.f32 %v4658, 0.0
      %v7243 = vmax.f32 %v4661, 0.0
      %v7244 = vmax.f32 %v4666, 0.0
      %v7245 = vmax.f32 %v4669, 0.0
      %v7246 = vmax.f32 %v4674, 0.0
      %v7247 = vmax.f32 %v4677, 0.0
      %v7248 = vmax.f32 %v4682, 0.0
      %v7249 = vmax.f32 %v4685, 0.0
      %v7250 = vmax.f32 %v4690, 0.0
      %v7251 = vmax.f32 %v4693, 0.0
      %v7252 = vmax.f32 %v4698, 0.0
      %v7253 = vmax.f32 %v4701, 0.0
      %v7254 = vmax.f32 %v4706, 0.0
      %v7255 = vmax.f32 %v4709, 0.0
      %v7256 = vmax.f32 %v4714, 0.0
      %v7257 = vmax.f32 %v4717, 0.0
      %v7258 = vmax.f32 %v4722, 0.0
      %v7259 = vmax.f32 %v4725, 0.0
      %v7260 = vmax.f32 %v4730, 0.0
      %v7261 = vmax.f32 %v4733, 0.0
      %v7262 = vmax.f32 %v4738, 0.0
      %v7263 = vmax.f32 %v4741, 0.0
      %v7264 = vmax.f32 %v4746, 0.0
      %v7265 = vmax.f32 %v4749, 0.0
      %v7266 = vmax.f32 %v4754, 0.0
      %v7267 = vmax.f32 %v4757, 0.0
      %v7268 = vmax.f32 %v4762, 0.0
      %v7269 = vmax.f32 %v4765, 0.0
      %v7270 = vmax.f32 %v4770, 0.0
      %v7271 = vmax.f32 %v4773, 0.0
      %v7272 = vmax.f32 %v4778, 0.0
      %v7273 = vmax.f32 %v4781, 0.0
      %v7274 = vmax.f32 %v4786, 0.0
      %v7275 = vmax.f32 %v4789, 0.0
      %v7276 = vmax.f32 %v4794, 0.0
      %v7277 = vmax.f32 %v4797, 0.0
      %v7278 = vmax.f32 %v4802, 0.0
      %v7279 = vmax.f32 %v4805, 0.0
      %v7280 = vmax.f32 %v4810, 0.0
      %v7281 = vmax.f32 %v4813, 0.0
      %v7282 = vmax.f32 %v4818, 0.0
      %v7283 = vmax.f32 %v4821, 0.0
      %v7284 = vmax.f32 %v4826, 0.0
      %v7285 = vmax.f32 %v4829, 0.0
      %v7286 = vmax.f32 %v4834, 0.0
      %v7287 = vmax.f32 %v4837, 0.0
      %v7288 = vmax.f32 %v4842, 0.0
      %v7289 = vmax.f32 %v4845, 0.0
      %v7290 = vmax.f32 %v4850, 0.0
      %v7291 = vmax.f32 %v4853, 0.0
      %v7292 = vmax.f32 %v4858, 0.0
      %v7293 = vmax.f32 %v4861, 0.0
      %v7294 = vmax.f32 %v4866, 0.0
      %v7295 = vmax.f32 %v4869, 0.0
      %v7296 = vmax.f32 %v4874, 0.0
      %v7297 = vmax.f32 %v4877, 0.0
      %v7298 = vmax.f32 %v4882, 0.0
      %v7299 = vmax.f32 %v4885, 0.0
      %v7300 = vmax.f32 %v4890, 0.0
      %v7301 = vmax.f32 %v4893, 0.0
      %v7302 = vmax.f32 %v4898, 0.0
      %v7303 = vmax.f32 %v4901, 0.0
      %v7304 = vmax.f32 %v4906, 0.0
      %v7305 = vmax.f32 %v4909, 0.0
      %v7306 = vmax.f32 %v4914, 0.0
      %v7307 = vmax.f32 %v4917, 0.0
      %v7308 = vmax.f32 %v4922, 0.0
      %v7309 = vmax.f32 %v4925, 0.0
      %v7310 = vmax.f32 %v4930, 0.0
      %v7311 = vmax.f32 %v4933, 0.0
      %v7312 = vmax.f32 %v4938, 0.0
      %v7313 = vmax.f32 %v4941, 0.0
      %v7314 = vmax.f32 %v4946, 0.0
      %v7315 = vmax.f32 %v4949, 0.0
      %v7316 = vmax.f32 %v4954, 0.0
      %v7317 = vmax.f32 %v4957, 0.0
      %v7318 = vmax.f32 %v4962, 0.0
      %v7319 = vmax.f32 %v4965, 0.0
      %v7320 = vmax.f32 %v4970, 0.0
      %v7321 = vmax.f32 %v4973, 0.0
      %v7322 = vmax.f32 %v4978, 0.0
      %v7323 = vmax.f32 %v4981, 0.0
      %v7324 = vmax.f32 %v4986, 0.0
      %v7325 = vmax.f32 %v4989, 0.0
      %v7326 = vmax.f32 %v4994, 0.0
      %v7327 = vmax.f32 %v4997, 0.0
      %v7328 = vmax.f32 %v5002, 0.0
      %v7329 = vmax.f32 %v5005, 0.0
      %v7330 = vmax.f32 %v5010, 0.0
      %v7331 = vmax.f32 %v5013, 0.0
      %v7332 = vmax.f32 %v5018, 0.0
      %v7333 = vmax.f32 %v5021, 0.0
      %v7334 = vmax.f32 %v5026, 0.0
      %v7335 = vmax.f32 %v5029, 0.0
      %v7336 = vmax.f32 %v5034, 0.0
      %v7337 = vmax.f32 %v5037, 0.0
      %v7338 = vmax.f32 %v5042, 0.0
      %v7339 = vmax.f32 %v5045, 0.0
      %v7340 = vmax.f32 %v5050, 0.0
      %v7341 = vmax.f32 %v5053, 0.0
      %v7342 = vmax.f32 %v5058, 0.0
      %v7343 = vmax.f32 %v5061, 0.0
      %v7344 = vmax.f32 %v5066, 0.0
      %v7345 = vmax.f32 %v5069, 0.0
      %v7346 = vmax.f32 %v5074, 0.0
      %v7347 = vmax.f32 %v5077, 0.0
      %v7348 = vmax.f32 %v5082, 0.0
      %v7349 = vmax.f32 %v5085, 0.0
      %v7350 = vmax.f32 %v5090, 0.0
      %v7351 = vmax.f32 %v5093, 0.0
      %v7352 = vmax.f32 %v5098, 0.0
      %v7353 = vmax.f32 %v5101, 0.0
      %v7354 = vmax.f32 %v5106, 0.0
      %v7355 = vmax.f32 %v5109, 0.0
      %v7356 = vmax.f32 %v5114, 0.0
      %v7357 = vmax.f32 %v5117, 0.0
      %v7358 = vmax.f32 %v5122, 0.0
      %v7359 = vmax.f32 %v5125, 0.0
      %v7360 = vmax.f32 %v5130, 0.0
      %v7361 = vmax.f32 %v5133, 0.0
      %v7362 = vmax.f32 %v5138, 0.0
      %v7363 = vmax.f32 %v5141, 0.0
      %v7364 = vmax.f32 %v5146, 0.0
      %v7365 = vmax.f32 %v5149, 0.0
      %v7366 = vmax.f32 %v5154, 0.0
      %v7367 = vmax.f32 %v5157, 0.0
      %v7368 = vmax.f32 %v5162, 0.0
      %v7369 = vmax.f32 %v5165, 0.0
      %v7370 = vmax.f32 %v5170, 0.0
      %v7371 = vmax.f32 %v5173, 0.0
      %v7372 = vmax.f32 %v5178, 0.0
      %v7373 = vmax.f32 %v5181, 0.0
      %v7374 = vmax.f32 %v5186, 0.0
      %v7375 = vmax.f32 %v5189, 0.0
      %v7376 = vmax.f32 %v5194, 0.0
      %v7377 = vmax.f32 %v5197, 0.0
      %v7378 = vmax.f32 %v5202, 0.0
      %v7379 = vmax.f32 %v5205, 0.0
      %v7380 = vmax.f32 %v5210, 0.0
      %v7381 = vmax.f32 %v5213, 0.0
      %v7382 = vmax.f32 %v5218, 0.0
      %v7383 = vmax.f32 %v5221, 0.0
      %v7384 = vmax.f32 %v5226, 0.0
      %v7385 = vmax.f32 %v5229, 0.0
      %v7386 = vmax.f32 %v5234, 0.0
      %v7387 = vmax.f32 %v5237, 0.0
      %v7388 = vmax.f32 %v5242, 0.0
      %v7389 = vmax.f32 %v5245, 0.0
      %v7390 = vmax.f32 %v5250, 0.0
      %v7391 = vmax.f32 %v5253, 0.0
      %v7392 = vmax.f32 %v5258, 0.0
      %v7393 = vmax.f32 %v5261, 0.0
      %v7394 = vmax.f32 %v5266, 0.0
      %v7395 = vmax.f32 %v5269, 0.0
      %v7396 = vmax.f32 %v5274, 0.0
      %v7397 = vmax.f32 %v5277, 0.0
      %v7398 = vmax.f32 %v5282, 0.0
      %v7399 = vmax.f32 %v5285, 0.0
      %v7400 = vmax.f32 %v5290, 0.0
      %v7401 = vmax.f32 %v5293, 0.0
      %v7402 = vmax.f32 %v5298, 0.0
      %v7403 = vmax.f32 %v5301, 0.0
      %v7404 = vmax.f32 %v5306, 0.0
      %v7405 = vmax.f32 %v5309, 0.0
      %v7406 = vmax.f32 %v5314, 0.0
      %v7407 = vmax.f32 %v5317, 0.0
      %v7408 = vmax.f32 %v5322, 0.0
      %v7409 = vmax.f32 %v5325, 0.0
      %v7410 = vmax.f32 %v5330, 0.0
      %v7411 = vmax.f32 %v5333, 0.0
      %v7412 = vmax.f32 %v5338, 0.0
      %v7413 = vmax.f32 %v5341, 0.0
      %v7414 = vmax.f32 %v5346, 0.0
      %v7415 = vmax.f32 %v5349, 0.0
      %v7416 = vmax.f32 %v5354, 0.0
      %v7417 = vmax.f32 %v5357, 0.0
      %v7418 = vmax.f32 %v5362, 0.0
      %v7419 = vmax.f32 %v5365, 0.0
      %v7420 = vmax.f32 %v5370, 0.0
      %v7421 = vmax.f32 %v5373, 0.0
      %v7422 = vmax.f32 %v5378, 0.0
      %v7423 = vmax.f32 %v5381, 0.0
      %v7424 = vmax.f32 %v5386, 0.0
      %v7425 = vmax.f32 %v5389, 0.0
      %v7426 = vmax.f32 %v5394, 0.0
      %v7427 = vmax.f32 %v5397, 0.0
      %v7428 = vmax.f32 %v5402, 0.0
      %v7429 = vmax.f32 %v5405, 0.0
      %v7430 = vmax.f32 %v5410, 0.0
      %v7431 = vmax.f32 %v5413, 0.0
      %v7432 = vmax.f32 %v5418, 0.0
      %v7433 = vmax.f32 %v5421, 0.0
      %v7434 = vmax.f32 %v5426, 0.0
      %v7435 = vmax.f32 %v5429, 0.0
      %v7436 = vmax.f32 %v5434, 0.0
      %v7437 = vmax.f32 %v5437, 0.0
      %v7438 = vmax.f32 %v5442, 0.0
      %v7439 = vmax.f32 %v5445, 0.0
      %v7440 = vmax.f32 %v5450, 0.0
      %v7441 = vmax.f32 %v5453, 0.0
      %v7442 = vmax.f32 %v5458, 0.0
      %v7443 = vmax.f32 %v5461, 0.0
      %v7444 = vmax.f32 %v5466, 0.0
      %v7445 = vmax.f32 %v5469, 0.0
      %v7446 = vmax.f32 %v5474, 0.0
      %v7447 = vmax.f32 %v5477, 0.0
      %v7448 = vmax.f32 %v5482, 0.0
      %v7449 = vmax.f32 %v5485, 0.0
      %v7450 = vmax.f32 %v5490, 0.0
      %v7451 = vmax.f32 %v5493, 0.0
      %v7452 = vmax.f32 %v5498, 0.0
      %v7453 = vmax.f32 %v5501, 0.0
      %v7454 = vmax.f32 %v5506, 0.0
      %v7455 = vmax.f32 %v5509, 0.0
      %v7456 = vmax.f32 %v5514, 0.0
      %v7457 = vmax.f32 %v5517, 0.0
      %v7458 = vmax.f32 %v5522, 0.0
      %v7459 = vmax.f32 %v5525, 0.0
      %v7460 = vmax.f32 %v5530, 0.0
      %v7461 = vmax.f32 %v5533, 0.0
      %v7462 = vmax.f32 %v5538, 0.0
      %v7463 = vmax.f32 %v5541, 0.0
      %v7464 = vmax.f32 %v5546, 0.0
      %v7465 = vmax.f32 %v5549, 0.0
      %v7466 = vmax.f32 %v5554, 0.0
      %v7467 = vmax.f32 %v5557, 0.0
      %v7468 = vmax.f32 %v5562, 0.0
      %v7469 = vmax.f32 %v5565, 0.0
      %v7470 = vmax.f32 %v5570, 0.0
      %v7471 = vmax.f32 %v5573, 0.0
      %v7472 = vmax.f32 %v5578, 0.0
      %v7473 = vmax.f32 %v5581, 0.0
      %v7474 = vmax.f32 %v5586, 0.0
      %v7475 = vmax.f32 %v5589, 0.0
      %v7476 = vmax.f32 %v5594, 0.0
      %v7477 = vmax.f32 %v5597, 0.0
      %v7478 = vmax.f32 %v5602, 0.0
      %v7479 = vmax.f32 %v5605, 0.0
      %v7480 = vmax.f32 %v5610, 0.0
      %v7481 = vmax.f32 %v5613, 0.0
      %v7482 = vmax.f32 %v5618, 0.0
      %v7483 = vmax.f32 %v5621, 0.0
      %v7484 = vmax.f32 %v5626, 0.0
      %v7485 = vmax.f32 %v5629, 0.0
      %v7486 = vmax.f32 %v5634, 0.0
      %v7487 = vmax.f32 %v5637, 0.0
      %v7488 = vmax.f32 %v5642, 0.0
      %v7489 = vmax.f32 %v5645, 0.0
      %v7490 = vmax.f32 %v5650, 0.0
      %v7491 = vmax.f32 %v5653, 0.0
      %v7492 = vmax.f32 %v5658, 0.0
      %v7493 = vmax.f32 %v5661, 0.0
      %v7494 = vmax.f32 %v5666, 0.0
      %v7495 = vmax.f32 %v5669, 0.0
      %v7496 = vmax.f32 %v5674, 0.0
      %v7497 = vmax.f32 %v5677, 0.0
      %v7498 = vmax.f32 %v5682, 0.0
      %v7499 = vmax.f32 %v5685, 0.0
      %v7500 = vmax.f32 %v5690, 0.0
      %v7501 = vmax.f32 %v5693, 0.0
      %v7502 = vmax.f32 %v5698, 0.0
      %v7503 = vmax.f32 %v5701, 0.0
      %v7504 = vmax.f32 %v5706, 0.0
      %v7505 = vmax.f32 %v5709, 0.0
      %v7506 = vmax.f32 %v5714, 0.0
      %v7507 = vmax.f32 %v5717, 0.0
      %v7508 = vmax.f32 %v5722, 0.0
      %v7509 = vmax.f32 %v5725, 0.0
      %v7510 = vmax.f32 %v5730, 0.0
      %v7511 = vmax.f32 %v5733, 0.0
      %v7512 = vmax.f32 %v5738, 0.0
      %v7513 = vmax.f32 %v5741, 0.0
      %v7514 = vmax.f32 %v5746, 0.0
      %v7515 = vmax.f32 %v5749, 0.0
      %v7516 = vmax.f32 %v5754, 0.0
      %v7517 = vmax.f32 %v5757, 0.0
      %v7518 = vmax.f32 %v5762, 0.0
      %v7519 = vmax.f32 %v5765, 0.0
      %v7520 = vmax.f32 %v5770, 0.0
      %v7521 = vmax.f32 %v5773, 0.0
      %v7522 = vmax.f32 %v5778, 0.0
      %v7523 = vmax.f32 %v5781, 0.0
      %v7524 = vmax.f32 %v5786, 0.0
      %v7525 = vmax.f32 %v5789, 0.0
      %v7526 = vmax.f32 %v5794, 0.0
      %v7527 = vmax.f32 %v5797, 0.0
      %v7528 = vmax.f32 %v5802, 0.0
      %v7529 = vmax.f32 %v5805, 0.0
      %v7530 = vmax.f32 %v5810, 0.0
      %v7531 = vmax.f32 %v5813, 0.0
      %v7532 = vmax.f32 %v5818, 0.0
      %v7533 = vmax.f32 %v5821, 0.0
      %v7534 = vmax.f32 %v5826, 0.0
      %v7535 = vmax.f32 %v5829, 0.0
      %v7536 = vmax.f32 %v5834, 0.0
      %v7537 = vmax.f32 %v5837, 0.0
      %v7538 = vmax.f32 %v5842, 0.0
      %v7539 = vmax.f32 %v5845, 0.0
      %v7540 = vmax.f32 %v5850, 0.0
      %v7541 = vmax.f32 %v5853, 0.0
      %v7542 = vmax.f32 %v5858, 0.0
      %v7543 = vmax.f32 %v5861, 0.0
      %v7544 = vmax.f32 %v5866, 0.0
      %v7545 = vmax.f32 %v5869, 0.0
      %v7546 = vmax.f32 %v5874, 0.0
      %v7547 = vmax.f32 %v5877, 0.0
      %v7548 = vmax.f32 %v5882, 0.0
      %v7549 = vmax.f32 %v5885, 0.0
      %v7550 = vmax.f32 %v5890, 0.0
      %v7551 = vmax.f32 %v5893, 0.0
      %v7552 = vmax.f32 %v5898, 0.0
      %v7553 = vmax.f32 %v5901, 0.0
      %v7554 = vmax.f32 %v5906, 0.0
      %v7555 = vmax.f32 %v5909, 0.0
      %v7556 = vmax.f32 %v5914, 0.0
      %v7557 = vmax.f32 %v5917, 0.0
      %v7558 = vmax.f32 %v5922, 0.0
      %v7559 = vmax.f32 %v5925, 0.0
      %v7560 = vmax.f32 %v5930, 0.0
      %v7561 = vmax.f32 %v5933, 0.0
      %v7562 = vmax.f32 %v5938, 0.0
      %v7563 = vmax.f32 %v5941, 0.0
      %v7564 = vmax.f32 %v5946, 0.0
      %v7565 = vmax.f32 %v5949, 0.0
      %v7566 = vmax.f32 %v5954, 0.0
      %v7567 = vmax.f32 %v5957, 0.0
      %v7568 = vmax.f32 %v5962, 0.0
      %v7569 = vmax.f32 %v5965, 0.0
      %v7570 = vmax.f32 %v5970, 0.0
      %v7571 = vmax.f32 %v5973, 0.0
      %v7572 = vmax.f32 %v5978, 0.0
      %v7573 = vmax.f32 %v5981, 0.0
      %v7574 = vmax.f32 %v5986, 0.0
      %v7575 = vmax.f32 %v5989, 0.0
      %v7576 = vmax.f32 %v5994, 0.0
      %v7577 = vmax.f32 %v5997, 0.0
      %v7578 = vmax.f32 %v6002, 0.0
      %v7579 = vmax.f32 %v6005, 0.0
      %v7580 = vmax.f32 %v6010, 0.0
      %v7581 = vmax.f32 %v6013, 0.0
      %v7582 = vmax.f32 %v6018, 0.0
      %v7583 = vmax.f32 %v6021, 0.0
      %v7584 = vmax.f32 %v6026, 0.0
      %v7585 = vmax.f32 %v6029, 0.0
      %v7586 = vmax.f32 %v6034, 0.0
      %v7587 = vmax.f32 %v6037, 0.0
      %v7588 = vmax.f32 %v6042, 0.0
      %v7589 = vmax.f32 %v6045, 0.0
      %v7590 = vmax.f32 %v6050, 0.0
      %v7591 = vmax.f32 %v6053, 0.0
      %v7592 = vmax.f32 %v6058, 0.0
      %v7593 = vmax.f32 %v6061, 0.0
      %v7594 = vmax.f32 %v6066, 0.0
      %v7595 = vmax.f32 %v6069, 0.0
      %v7596 = vmax.f32 %v6074, 0.0
      %v7597 = vmax.f32 %v6077, 0.0
      %v7598 = vmax.f32 %v6082, 0.0
      %v7599 = vmax.f32 %v6085, 0.0
      %v7600 = vmax.f32 %v6090, 0.0
      %v7601 = vmax.f32 %v6093, 0.0
      %v7602 = vmax.f32 %v6098, 0.0
      %v7603 = vmax.f32 %v6101, 0.0
      %v7604 = vmax.f32 %v6106, 0.0
      %v7605 = vmax.f32 %v6109, 0.0
      %v7606 = vmax.f32 %v6114, 0.0
      %v7607 = vmax.f32 %v6117, 0.0
      %v7608 = vmax.f32 %v6122, 0.0
      %v7609 = vmax.f32 %v6125, 0.0
      %v7610 = vmax.f32 %v6130, 0.0
      %v7611 = vmax.f32 %v6133, 0.0
      %v7612 = vmax.f32 %v6138, 0.0
      %v7613 = vmax.f32 %v6141, 0.0
      %v7614 = vmax.f32 %v6146, 0.0
      %v7615 = vmax.f32 %v6149, 0.0
      %v7616 = vmax.f32 %v6154, 0.0
      %v7617 = vmax.f32 %v6157, 0.0
      %v7618 = vmax.f32 %v6162, 0.0
      %v7619 = vmax.f32 %v6165, 0.0
      %v7620 = vmax.f32 %v6170, 0.0
      %v7621 = vmax.f32 %v6173, 0.0
      %v7622 = vmax.f32 %v6178, 0.0
      %v7623 = vmax.f32 %v6181, 0.0
      %v7624 = vmax.f32 %v6186, 0.0
      %v7625 = vmax.f32 %v6189, 0.0
      %v7626 = vmax.f32 %v6194, 0.0
      %v7627 = vmax.f32 %v6197, 0.0
      %v7628 = vmax.f32 %v6202, 0.0
      %v7629 = vmax.f32 %v6205, 0.0
      %v7630 = vmax.f32 %v6210, 0.0
      %v7631 = vmax.f32 %v6213, 0.0
      %v7632 = vmax.f32 %v6218, 0.0
      %v7633 = vmax.f32 %v6221, 0.0
      %v7634 = vmax.f32 %v6226, 0.0
      %v7635 = vmax.f32 %v6229, 0.0
      %v7636 = vmax.f32 %v6234, 0.0
      %v7637 = vmax.f32 %v6237, 0.0
      %v7638 = vmax.f32 %v6242, 0.0
      %v7639 = vmax.f32 %v6245, 0.0
      %v7640 = vmax.f32 %v6250, 0.0
      %v7641 = vmax.f32 %v6253, 0.0
      %v7642 = vmax.f32 %v6258, 0.0
      %v7643 = vmax.f32 %v6261, 0.0
      %v7644 = vmax.f32 %v6266, 0.0
      %v7645 = vmax.f32 %v6269, 0.0
      %v7646 = vmax.f32 %v6274, 0.0
      %v7647 = vmax.f32 %v6277, 0.0
      %v7648 = vmax.f32 %v6282, 0.0
      %v7649 = vmax.f32 %v6285, 0.0
      %v7650 = vmax.f32 %v6290, 0.0
      %v7651 = vmax.f32 %v6293, 0.0
      %v7652 = vmax.f32 %v6298, 0.0
      %v7653 = vmax.f32 %v6301, 0.0
      %v7654 = vmax.f32 %v6306, 0.0
      %v7655 = vmax.f32 %v6309, 0.0
      %v7656 = vmax.f32 %v6314, 0.0
      %v7657 = vmax.f32 %v6317, 0.0
      %v7658 = vmax.f32 %v6322, 0.0
      %v7659 = vmax.f32 %v6325, 0.0
      %v7660 = vmax.f32 %v6330, 0.0
      %v7661 = vmax.f32 %v6333, 0.0
      %v7662 = vmax.f32 %v6338, 0.0
      %v7663 = vmax.f32 %v6341, 0.0
      %v7664 = vmax.f32 %v6346, 0.0
      %v7665 = vmax.f32 %v6349, 0.0
      %v7666 = vmax.f32 %v6354, 0.0
      %v7667 = vmax.f32 %v6357, 0.0
      %v7668 = vmax.f32 %v6362, 0.0
      %v7669 = vmax.f32 %v6365, 0.0
      %v7670 = vmax.f32 %v6370, 0.0
      %v7671 = vmax.f32 %v6373, 0.0
      %v7672 = vmax.f32 %v6378, 0.0
      %v7673 = vmax.f32 %v6381, 0.0
      %v7674 = vmax.f32 %v6386, 0.0
      %v7675 = vmax.f32 %v6389, 0.0
      %v7676 = vmax.f32 %v6394, 0.0
      %v7677 = vmax.f32 %v6397, 0.0
      %v7678 = vmax.f32 %v6402, 0.0
      %v7679 = vmax.f32 %v6405, 0.0
      %v7680 = vmax.f32 %v6410, 0.0
      %v7681 = vmax.f32 %v6413, 0.0
      %v7682 = vmax.f32 %v6418, 0.0
      %v7683 = vmax.f32 %v6421, 0.0
      %v7684 = vmax.f32 %v6426, 0.0
      %v7685 = vmax.f32 %v6429, 0.0
      %v7686 = vmax.f32 %v6434, 0.0
      %v7687 = vmax.f32 %v6437, 0.0
      %v7688 = vmax.f32 %v6442, 0.0
      %v7689 = vmax.f32 %v6445, 0.0
      %v7690 = vmax.f32 %v6450, 0.0
      %v7691 = vmax.f32 %v6453, 0.0
      %v7692 = vmax.f32 %v6458, 0.0
      %v7693 = vmax.f32 %v6461, 0.0
      %v7694 = vmax.f32 %v6466, 0.0
      %v7695 = vmax.f32 %v6469, 0.0
      %v7696 = vmax.f32 %v6474, 0.0
      %v7697 = vmax.f32 %v6477, 0.0
      %v7698 = vmax.f32 %v6482, 0.0
      %v7699 = vmax.f32 %v6485, 0.0
      %v7700 = vmax.f32 %v6490, 0.0
      %v7701 = vmax.f32 %v6493, 0.0
      %v7702 = vmax.f32 %v6498, 0.0
      %v7703 = vmax.f32 %v6501, 0.0
      %v7704 = vmax.f32 %v6506, 0.0
      %v7705 = vmax.f32 %v6509, 0.0
      %v7706 = vmax.f32 %v6514, 0.0
      %v7707 = vmax.f32 %v6517, 0.0
      %v7708 = vmax.f32 %v6522, 0.0
      %v7709 = vmax.f32 %v6525, 0.0
      %v7710 = vmax.f32 %v6530, 0.0
      %v7711 = vmax.f32 %v6533, 0.0
      %v7712 = vmax.f32 %v6538, 0.0
      %v7713 = vmax.f32 %v6541, 0.0
      %v7714 = vmax.f32 %v6546, 0.0
      %v7715 = vmax.f32 %v6549, 0.0
      %v7716 = vmax.f32 %v6554, 0.0
      %v7717 = vmax.f32 %v6557, 0.0
      %v7718 = vmax.f32 %v6562, 0.0
      %v7719 = vmax.f32 %v6565, 0.0
      %v7720 = vmax.f32 %v6570, 0.0
      %v7721 = vmax.f32 %v6573, 0.0
      %v7722 = vmax.f32 %v6578, 0.0
      %v7723 = vmax.f32 %v6581, 0.0
      %v7724 = vmax.f32 %v6586, 0.0
      %v7725 = vmax.f32 %v6589, 0.0
      %v7726 = vmax.f32 %v6594, 0.0
      %v7727 = vmax.f32 %v6597, 0.0
      %v7728 = vmax.f32 %v6602, 0.0
      %v7729 = vmax.f32 %v6605, 0.0
      %v7730 = vmax.f32 %v6610, 0.0
      %v7731 = vmax.f32 %v6613, 0.0
      %v7732 = vmax.f32 %v6618, 0.0
      %v7733 = vmax.f32 %v6621, 0.0
      %v7734 = vmax.f32 %v6626, 0.0
      %v7735 = vmax.f32 %v6629, 0.0
      %v7736 = vmax.f32 %v6634, 0.0
      %v7737 = vmax.f32 %v6637, 0.0
      %v7738 = vmax.f32 %v6642, 0.0
      %v7739 = vmax.f32 %v6645, 0.0
      %v7740 = vmax.f32 %v6650, 0.0
      %v7741 = vmax.f32 %v6653, 0.0
      %v7742 = vmax.f32 %v6658, 0.0
      %v7743 = vmax.f32 %v6661, 0.0
      %v7744 = vmax.f32 %v6666, 0.0
      %v7745 = vmax.f32 %v6669, 0.0
      %v7746 = vmax.f32 %v6674, 0.0
      %v7747 = vmax.f32 %v6677, 0.0
      %v7748 = vmax.f32 %v6682, 0.0
      %v7749 = vmax.f32 %v6685, 0.0
      %v7750 = vmax.f32 %v6690, 0.0
      %v7751 = vmax.f32 %v6693, 0.0
      %v7752 = vmax.f32 %v6698, 0.0
      %v7753 = vmax.f32 %v6701, 0.0
      %v7754 = vmax.f32 %v6706, 0.0
      %v7755 = vmax.f32 %v6709, 0.0
      %v7756 = vmax.f32 %v6714, 0.0
      %v7757 = vmax.f32 %v6717, 0.0
      %v7758 = vmax.f32 %v6722, 0.0
      %v7759 = vmax.f32 %v6725, 0.0
      %v7760 = vmax.f32 %v6730, 0.0
      %v7761 = vmax.f32 %v6733, 0.0
      %v7762 = vmax.f32 %v6738, 0.0
      %v7763 = vmax.f32 %v6741, 0.0
      %v7764 = vmax.f32 %v6746, 0.0
      %v7765 = vmax.f32 %v6749, 0.0
      %v7766 = vmax.f32 %v6754, 0.0
      %v7767 = vmax.f32 %v6757, 0.0
      %v7768 = vmax.f32 %v6762, 0.0
      %v7769 = vmax.f32 %v6765, 0.0
      %v7770 = vmax.f32 %v6770, 0.0
      %v7771 = vmax.f32 %v6773, 0.0
      %v7772 = vmax.f32 %v6778, 0.0
      %v7773 = vmax.f32 %v6781, 0.0
      %v7774 = vmax.f32 %v6786, 0.0
      %v7775 = vmax.f32 %v6789, 0.0
      %v7776 = vmax.f32 %v6794, 0.0
      %v7777 = vmax.f32 %v6797, 0.0
      %v7778 = vmax.f32 %v6802, 0.0
      %v7779 = vmax.f32 %v6805, 0.0
      %v7780 = vmax.f32 %v6810, 0.0
      %v7781 = vmax.f32 %v6813, 0.0
      %v7782 = vmax.f32 %v6818, 0.0
      %v7783 = vmax.f32 %v6821, 0.0
      %v7784 = vmax.f32 %v6826, 0.0
      %v7785 = vmax.f32 %v6829, 0.0
      %v7786 = vmax.f32 %v6834, 0.0
      %v7787 = vmax.f32 %v6837, 0.0
      %v7788 = vmax.f32 %v6842, 0.0
      %v7789 = vmax.f32 %v6845, 0.0
      %v7790 = vmax.f32 %v6850, 0.0
      %v7791 = vmax.f32 %v6853, 0.0
      %v7792 = vmax.f32 %v6858, 0.0
      %v7793 = vmax.f32 %v6861, 0.0
      %v7794 = vmax.f32 %v6866, 0.0
      %v7795 = vmax.f32 %v6869, 0.0
      %v7796 = vmax.f32 %v6874, 0.0
      %v7797 = vmax.f32 %v6877, 0.0
      %v7798 = vmax.f32 %v6882, 0.0
      %v7799 = vmax.f32 %v6885, 0.0
      %v7800 = vmax.f32 %v6890, 0.0
      %v7801 = vmax.f32 %v6893, 0.0
      %v7802 = vmax.f32 %v6898, 0.0
      %v7803 = vmax.f32 %v6901, 0.0
      %v7804 = vmax.f32 %v6906, 0.0
      %v7805 = vmax.f32 %v6909, 0.0
      %v7806 = vmax.f32 %v6914, 0.0
      %v7807 = vmax.f32 %v6917, 0.0
      %v7808 = vmax.f32 %v6922, 0.0
      %v7809 = vmax.f32 %v6925, 0.0
      %v7810 = vmax.f32 %v6930, 0.0
      %v7811 = vmax.f32 %v6933, 0.0
      %v7812 = vmax.f32 %v6938, 0.0
      %v7813 = vmax.f32 %v6941, 0.0
      %v7814 = vmax.f32 %v6946, 0.0
      %v7815 = vmax.f32 %v6949, 0.0
      %v7816 = vmax.f32 %v6954, 0.0
      %v7817 = vmax.f32 %v6957, 0.0
      %v7818 = vmax.f32 %v6962, 0.0
      %v7819 = vmax.f32 %v6965, 0.0
      %v7820 = vmax.f32 %v6970, 0.0
      %v7821 = vmax.f32 %v6973, 0.0
      %v7822 = vmax.f32 %v6978, 0.0
      %v7823 = vmax.f32 %v6981, 0.0
      %v7824 = vmax.f32 %v6986, 0.0
      %v7825 = vmax.f32 %v6989, 0.0
      %v7826 = vmax.f32 %v6994, 0.0
      %v7827 = vmax.f32 %v6997, 0.0
      %v7828 = vmax.f32 %v7002, 0.0
      %v7829 = vmax.f32 %v7005, 0.0
      %v7830 = vmax.f32 %v7010, 0.0
      %v7831 = vmax.f32 %v7013, 0.0
      %v7832 = vmax.f32 %v7018, 0.0
      %v7833 = vmax.f32 %v7021, 0.0
      %v7834 = vmax.f32 %v7026, 0.0
      %v7835 = vmax.f32 %v7029, 0.0
      %v7836 = vmax.f32 %v7034, 0.0
      %v7837 = vmax.f32 %v7037, 0.0
      %v7838 = vmax.f32 %v7042, 0.0
      %v7839 = vmax.f32 %v7045, 0.0
      %v7840 = vmax.f32 %v7050, 0.0
      %v7841 = vmax.f32 %v7053, 0.0
      %v7842 = vmax.f32 %v7058, 0.0
      %v7843 = vmax.f32 %v7061, 0.0
      %v7844 = vmax.f32 %v7066, 0.0
      %v7845 = vmax.f32 %v7069, 0.0
      %v7846 = vmax.f32 %v7074, 0.0
      %v7847 = vmax.f32 %v7077, 0.0
      %v7848 = vmax.f32 %v7082, 0.0
      %v7849 = vmax.f32 %v7085, 0.0
      %v7850 = vpack.c.bf16 %v7089, %v7088
      %v7851 = vpack.c.bf16 %v7091, %v7090
      %v7852 = vpack.c.bf16 %v7093, %v7092
      %v7853 = vpack.c.bf16 %v7095, %v7094
      %v7854 = vpack.c.bf16 %v7097, %v7096
      %v7855 = vpack.c.bf16 %v7099, %v7098
      %v7856 = vpack.c.bf16 %v7101, %v7100
      %v7857 = vpack.c.bf16 %v7103, %v7102
      %v7858 = vpack.c.bf16 %v7105, %v7104
      %v7859 = vpack.c.bf16 %v7107, %v7106
      %v7860 = vpack.c.bf16 %v7109, %v7108
      %v7861 = vpack.c.bf16 %v7111, %v7110
      %v7862 = vpack.c.bf16 %v7113, %v7112
      %v7863 = vpack.c.bf16 %v7115, %v7114
      %v7864 = vpack.c.bf16 %v7117, %v7116
      %v7865 = vpack.c.bf16 %v7119, %v7118
      %v7866 = vpack.c.bf16 %v7121, %v7120
      %v7867 = vpack.c.bf16 %v7123, %v7122
      %v7868 = vpack.c.bf16 %v7125, %v7124
      %v7869 = vpack.c.bf16 %v7127, %v7126
      %v7870 = vpack.c.bf16 %v7129, %v7128
      %v7871 = vpack.c.bf16 %v7131, %v7130
      %v7872 = vpack.c.bf16 %v7133, %v7132
      %v7873 = vpack.c.bf16 %v7135, %v7134
      %v7874 = vpack.c.bf16 %v7137, %v7136
      %v7875 = vpack.c.bf16 %v7139, %v7138
      %v7876 = vpack.c.bf16 %v7141, %v7140
      %v7877 = vpack.c.bf16 %v7143, %v7142
      %v7878 = vpack.c.bf16 %v7145, %v7144
      %v7879 = vpack.c.bf16 %v7147, %v7146
      %v7880 = vpack.c.bf16 %v7149, %v7148
      %v7881 = vpack.c.bf16 %v7151, %v7150
      %v7882 = vpack.c.bf16 %v7153, %v7152
      %v7883 = vpack.c.bf16 %v7155, %v7154
      %v7884 = vpack.c.bf16 %v7157, %v7156
      %v7885 = vpack.c.bf16 %v7159, %v7158
      %v7886 = vpack.c.bf16 %v7161, %v7160
      %v7887 = vpack.c.bf16 %v7163, %v7162
      %v7888 = vpack.c.bf16 %v7165, %v7164
      %v7889 = vpack.c.bf16 %v7167, %v7166
      %v7890 = vpack.c.bf16 %v7169, %v7168
      %v7891 = vpack.c.bf16 %v7171, %v7170
      %v7892 = vpack.c.bf16 %v7173, %v7172
      %v7893 = vpack.c.bf16 %v7175, %v7174
      %v7894 = vpack.c.bf16 %v7177, %v7176
      %v7895 = vpack.c.bf16 %v7179, %v7178
      %v7896 = vpack.c.bf16 %v7181, %v7180
      %v7897 = vpack.c.bf16 %v7183, %v7182
      %v7898 = vpack.c.bf16 %v7185, %v7184
      %v7899 = vpack.c.bf16 %v7187, %v7186
      %v7900 = vpack.c.bf16 %v7189, %v7188
      %v7901 = vpack.c.bf16 %v7191, %v7190
      %v7902 = vpack.c.bf16 %v7193, %v7192
      %v7903 = vpack.c.bf16 %v7195, %v7194
      %v7904 = vpack.c.bf16 %v7197, %v7196
      %v7905 = vpack.c.bf16 %v7199, %v7198
      %v7906 = vpack.c.bf16 %v7201, %v7200
      %v7907 = vpack.c.bf16 %v7203, %v7202
      %v7908 = vpack.c.bf16 %v7205, %v7204
      %v7909 = vpack.c.bf16 %v7207, %v7206
      %v7910 = vpack.c.bf16 %v7209, %v7208
      %v7911 = vpack.c.bf16 %v7211, %v7210
      %v7912 = vpack.c.bf16 %v7213, %v7212
      %v7913 = vpack.c.bf16 %v7215, %v7214
      %v7914 = vpack.c.bf16 %v7217, %v7216
      %v7915 = vpack.c.bf16 %v7219, %v7218
      %v7916 = vpack.c.bf16 %v7221, %v7220
      %v7917 = vpack.c.bf16 %v7223, %v7222
      %v7918 = vpack.c.bf16 %v7225, %v7224
      %v7919 = vpack.c.bf16 %v7227, %v7226
      %v7920 = vpack.c.bf16 %v7229, %v7228
      %v7921 = vpack.c.bf16 %v7231, %v7230
      %v7922 = vpack.c.bf16 %v7233, %v7232
      %v7923 = vpack.c.bf16 %v7235, %v7234
      %v7924 = vpack.c.bf16 %v7237, %v7236
      %v7925 = vpack.c.bf16 %v7239, %v7238
      %v7926 = vpack.c.bf16 %v7241, %v7240
      %v7927 = vpack.c.bf16 %v7243, %v7242
      %v7928 = vpack.c.bf16 %v7245, %v7244
      %v7929 = vpack.c.bf16 %v7247, %v7246
      %v7930 = vpack.c.bf16 %v7249, %v7248
      %v7931 = vpack.c.bf16 %v7251, %v7250
      %v7932 = vpack.c.bf16 %v7253, %v7252
      %v7933 = vpack.c.bf16 %v7255, %v7254
      %v7934 = vpack.c.bf16 %v7257, %v7256
      %v7935 = vpack.c.bf16 %v7259, %v7258
      %v7936 = vpack.c.bf16 %v7261, %v7260
      %v7937 = vpack.c.bf16 %v7263, %v7262
      %v7938 = vpack.c.bf16 %v7265, %v7264
      %v7939 = vpack.c.bf16 %v7267, %v7266
      %v7940 = vpack.c.bf16 %v7269, %v7268
      %v7941 = vpack.c.bf16 %v7271, %v7270
      %v7942 = vpack.c.bf16 %v7273, %v7272
      %v7943 = vpack.c.bf16 %v7275, %v7274
      %v7944 = vpack.c.bf16 %v7277, %v7276
      %v7945 = vpack.c.bf16 %v7279, %v7278
      %v7946 = vpack.c.bf16 %v7281, %v7280
      %v7947 = vpack.c.bf16 %v7283, %v7282
      %v7948 = vpack.c.bf16 %v7285, %v7284
      %v7949 = vpack.c.bf16 %v7287, %v7286
      %v7950 = vpack.c.bf16 %v7289, %v7288
      %v7951 = vpack.c.bf16 %v7291, %v7290
      %v7952 = vpack.c.bf16 %v7293, %v7292
      %v7953 = vpack.c.bf16 %v7295, %v7294
      %v7954 = vpack.c.bf16 %v7297, %v7296
      %v7955 = vpack.c.bf16 %v7299, %v7298
      %v7956 = vpack.c.bf16 %v7301, %v7300
      %v7957 = vpack.c.bf16 %v7303, %v7302
      %v7958 = vpack.c.bf16 %v7305, %v7304
      %v7959 = vpack.c.bf16 %v7307, %v7306
      %v7960 = vpack.c.bf16 %v7309, %v7308
      %v7961 = vpack.c.bf16 %v7311, %v7310
      %v7962 = vpack.c.bf16 %v7313, %v7312
      %v7963 = vpack.c.bf16 %v7315, %v7314
      %v7964 = vpack.c.bf16 %v7317, %v7316
      %v7965 = vpack.c.bf16 %v7319, %v7318
      %v7966 = vpack.c.bf16 %v7321, %v7320
      %v7967 = vpack.c.bf16 %v7323, %v7322
      %v7968 = vpack.c.bf16 %v7325, %v7324
      %v7969 = vpack.c.bf16 %v7327, %v7326
      %v7970 = vpack.c.bf16 %v7329, %v7328
      %v7971 = vpack.c.bf16 %v7331, %v7330
      %v7972 = vpack.c.bf16 %v7333, %v7332
      %v7973 = vpack.c.bf16 %v7335, %v7334
      %v7974 = vpack.c.bf16 %v7337, %v7336
      %v7975 = vpack.c.bf16 %v7339, %v7338
      %v7976 = vpack.c.bf16 %v7341, %v7340
      %v7977 = vpack.c.bf16 %v7343, %v7342
      %v7978 = vpack.c.bf16 %v7345, %v7344
      %v7979 = vpack.c.bf16 %v7347, %v7346
      %v7980 = vpack.c.bf16 %v7349, %v7348
      %v7981 = vpack.c.bf16 %v7351, %v7350
      %v7982 = vpack.c.bf16 %v7353, %v7352
      %v7983 = vpack.c.bf16 %v7355, %v7354
      %v7984 = vpack.c.bf16 %v7357, %v7356
      %v7985 = vpack.c.bf16 %v7359, %v7358
      %v7986 = vpack.c.bf16 %v7361, %v7360
      %v7987 = vpack.c.bf16 %v7363, %v7362
      %v7988 = vpack.c.bf16 %v7365, %v7364
      %v7989 = vpack.c.bf16 %v7367, %v7366
      %v7990 = vpack.c.bf16 %v7369, %v7368
      %v7991 = vpack.c.bf16 %v7371, %v7370
      %v7992 = vpack.c.bf16 %v7373, %v7372
      %v7993 = vpack.c.bf16 %v7375, %v7374
      %v7994 = vpack.c.bf16 %v7377, %v7376
      %v7995 = vpack.c.bf16 %v7379, %v7378
      %v7996 = vpack.c.bf16 %v7381, %v7380
      %v7997 = vpack.c.bf16 %v7383, %v7382
      %v7998 = vpack.c.bf16 %v7385, %v7384
      %v7999 = vpack.c.bf16 %v7387, %v7386
      %v8000 = vpack.c.bf16 %v7389, %v7388
      %v8001 = vpack.c.bf16 %v7391, %v7390
      %v8002 = vpack.c.bf16 %v7393, %v7392
      %v8003 = vpack.c.bf16 %v7395, %v7394
      %v8004 = vpack.c.bf16 %v7397, %v7396
      %v8005 = vpack.c.bf16 %v7399, %v7398
      %v8006 = vpack.c.bf16 %v7401, %v7400
      %v8007 = vpack.c.bf16 %v7403, %v7402
      %v8008 = vpack.c.bf16 %v7405, %v7404
      %v8009 = vpack.c.bf16 %v7407, %v7406
      %v8010 = vpack.c.bf16 %v7409, %v7408
      %v8011 = vpack.c.bf16 %v7411, %v7410
      %v8012 = vpack.c.bf16 %v7413, %v7412
      %v8013 = vpack.c.bf16 %v7415, %v7414
      %v8014 = vpack.c.bf16 %v7417, %v7416
      %v8015 = vpack.c.bf16 %v7419, %v7418
      %v8016 = vpack.c.bf16 %v7421, %v7420
      %v8017 = vpack.c.bf16 %v7423, %v7422
      %v8018 = vpack.c.bf16 %v7425, %v7424
      %v8019 = vpack.c.bf16 %v7427, %v7426
      %v8020 = vpack.c.bf16 %v7429, %v7428
      %v8021 = vpack.c.bf16 %v7431, %v7430
      %v8022 = vpack.c.bf16 %v7433, %v7432
      %v8023 = vpack.c.bf16 %v7435, %v7434
      %v8024 = vpack.c.bf16 %v7437, %v7436
      %v8025 = vpack.c.bf16 %v7439, %v7438
      %v8026 = vpack.c.bf16 %v7441, %v7440
      %v8027 = vpack.c.bf16 %v7443, %v7442
      %v8028 = vpack.c.bf16 %v7445, %v7444
      %v8029 = vpack.c.bf16 %v7447, %v7446
      %v8030 = vpack.c.bf16 %v7449, %v7448
      %v8031 = vpack.c.bf16 %v7451, %v7450
      %v8032 = vpack.c.bf16 %v7453, %v7452
      %v8033 = vpack.c.bf16 %v7455, %v7454
      %v8034 = vpack.c.bf16 %v7457, %v7456
      %v8035 = vpack.c.bf16 %v7459, %v7458
      %v8036 = vpack.c.bf16 %v7461, %v7460
      %v8037 = vpack.c.bf16 %v7463, %v7462
      %v8038 = vpack.c.bf16 %v7465, %v7464
      %v8039 = vpack.c.bf16 %v7467, %v7466
      %v8040 = vpack.c.bf16 %v7469, %v7468
      %v8041 = vpack.c.bf16 %v7471, %v7470
      %v8042 = vpack.c.bf16 %v7473, %v7472
      %v8043 = vpack.c.bf16 %v7475, %v7474
      %v8044 = vpack.c.bf16 %v7477, %v7476
      %v8045 = vpack.c.bf16 %v7479, %v7478
      %v8046 = vpack.c.bf16 %v7481, %v7480
      %v8047 = vpack.c.bf16 %v7483, %v7482
      %v8048 = vpack.c.bf16 %v7485, %v7484
      %v8049 = vpack.c.bf16 %v7487, %v7486
      %v8050 = vpack.c.bf16 %v7489, %v7488
      %v8051 = vpack.c.bf16 %v7491, %v7490
      %v8052 = vpack.c.bf16 %v7493, %v7492
      %v8053 = vpack.c.bf16 %v7495, %v7494
      %v8054 = vpack.c.bf16 %v7497, %v7496
      %v8055 = vpack.c.bf16 %v7499, %v7498
      %v8056 = vpack.c.bf16 %v7501, %v7500
      %v8057 = vpack.c.bf16 %v7503, %v7502
      %v8058 = vpack.c.bf16 %v7505, %v7504
      %v8059 = vpack.c.bf16 %v7507, %v7506
      %v8060 = vpack.c.bf16 %v7509, %v7508
      %v8061 = vpack.c.bf16 %v7511, %v7510
      %v8062 = vpack.c.bf16 %v7513, %v7512
      %v8063 = vpack.c.bf16 %v7515, %v7514
      %v8064 = vpack.c.bf16 %v7517, %v7516
      %v8065 = vpack.c.bf16 %v7519, %v7518
      %v8066 = vpack.c.bf16 %v7521, %v7520
      %v8067 = vpack.c.bf16 %v7523, %v7522
      %v8068 = vpack.c.bf16 %v7525, %v7524
      %v8069 = vpack.c.bf16 %v7527, %v7526
      %v8070 = vpack.c.bf16 %v7529, %v7528
      %v8071 = vpack.c.bf16 %v7531, %v7530
      %v8072 = vpack.c.bf16 %v7533, %v7532
      %v8073 = vpack.c.bf16 %v7535, %v7534
      %v8074 = vpack.c.bf16 %v7537, %v7536
      %v8075 = vpack.c.bf16 %v7539, %v7538
      %v8076 = vpack.c.bf16 %v7541, %v7540
      %v8077 = vpack.c.bf16 %v7543, %v7542
      %v8078 = vpack.c.bf16 %v7545, %v7544
      %v8079 = vpack.c.bf16 %v7547, %v7546
      %v8080 = vpack.c.bf16 %v7549, %v7548
      %v8081 = vpack.c.bf16 %v7551, %v7550
      %v8082 = vpack.c.bf16 %v7553, %v7552
      %v8083 = vpack.c.bf16 %v7555, %v7554
      %v8084 = vpack.c.bf16 %v7557, %v7556
      %v8085 = vpack.c.bf16 %v7559, %v7558
      %v8086 = vpack.c.bf16 %v7561, %v7560
      %v8087 = vpack.c.bf16 %v7563, %v7562
      %v8088 = vpack.c.bf16 %v7565, %v7564
      %v8089 = vpack.c.bf16 %v7567, %v7566
      %v8090 = vpack.c.bf16 %v7569, %v7568
      %v8091 = vpack.c.bf16 %v7571, %v7570
      %v8092 = vpack.c.bf16 %v7573, %v7572
      %v8093 = vpack.c.bf16 %v7575, %v7574
      %v8094 = vpack.c.bf16 %v7577, %v7576
      %v8095 = vpack.c.bf16 %v7579, %v7578
      %v8096 = vpack.c.bf16 %v7581, %v7580
      %v8097 = vpack.c.bf16 %v7583, %v7582
      %v8098 = vpack.c.bf16 %v7585, %v7584
      %v8099 = vpack.c.bf16 %v7587, %v7586
      %v8100 = vpack.c.bf16 %v7589, %v7588
      %v8101 = vpack.c.bf16 %v7591, %v7590
      %v8102 = vpack.c.bf16 %v7593, %v7592
      %v8103 = vpack.c.bf16 %v7595, %v7594
      %v8104 = vpack.c.bf16 %v7597, %v7596
      %v8105 = vpack.c.bf16 %v7599, %v7598
      %v8106 = vpack.c.bf16 %v7601, %v7600
      %v8107 = vpack.c.bf16 %v7603, %v7602
      %v8108 = vpack.c.bf16 %v7605, %v7604
      %v8109 = vpack.c.bf16 %v7607, %v7606
      %v8110 = vpack.c.bf16 %v7609, %v7608
      %v8111 = vpack.c.bf16 %v7611, %v7610
      %v8112 = vpack.c.bf16 %v7613, %v7612
      %v8113 = vpack.c.bf16 %v7615, %v7614
      %v8114 = vpack.c.bf16 %v7617, %v7616
      %v8115 = vpack.c.bf16 %v7619, %v7618
      %v8116 = vpack.c.bf16 %v7621, %v7620
      %v8117 = vpack.c.bf16 %v7623, %v7622
      %v8118 = vpack.c.bf16 %v7625, %v7624
      %v8119 = vpack.c.bf16 %v7627, %v7626
      %v8120 = vpack.c.bf16 %v7629, %v7628
      %v8121 = vpack.c.bf16 %v7631, %v7630
      %v8122 = vpack.c.bf16 %v7633, %v7632
      %v8123 = vpack.c.bf16 %v7635, %v7634
      %v8124 = vpack.c.bf16 %v7637, %v7636
      %v8125 = vpack.c.bf16 %v7639, %v7638
      %v8126 = vpack.c.bf16 %v7641, %v7640
      %v8127 = vpack.c.bf16 %v7643, %v7642
      %v8128 = vpack.c.bf16 %v7645, %v7644
      %v8129 = vpack.c.bf16 %v7647, %v7646
      %v8130 = vpack.c.bf16 %v7649, %v7648
      %v8131 = vpack.c.bf16 %v7651, %v7650
      %v8132 = vpack.c.bf16 %v7653, %v7652
      %v8133 = vpack.c.bf16 %v7655, %v7654
      %v8134 = vpack.c.bf16 %v7657, %v7656
      %v8135 = vpack.c.bf16 %v7659, %v7658
      %v8136 = vpack.c.bf16 %v7661, %v7660
      %v8137 = vpack.c.bf16 %v7663, %v7662
      %v8138 = vpack.c.bf16 %v7665, %v7664
      %v8139 = vpack.c.bf16 %v7667, %v7666
      %v8140 = vpack.c.bf16 %v7669, %v7668
      %v8141 = vpack.c.bf16 %v7671, %v7670
      %v8142 = vpack.c.bf16 %v7673, %v7672
      %v8143 = vpack.c.bf16 %v7675, %v7674
      %v8144 = vpack.c.bf16 %v7677, %v7676
      %v8145 = vpack.c.bf16 %v7679, %v7678
      %v8146 = vpack.c.bf16 %v7681, %v7680
      %v8147 = vpack.c.bf16 %v7683, %v7682
      %v8148 = vpack.c.bf16 %v7685, %v7684
      %v8149 = vpack.c.bf16 %v7687, %v7686
      %v8150 = vpack.c.bf16 %v7689, %v7688
      %v8151 = vpack.c.bf16 %v7691, %v7690
      %v8152 = vpack.c.bf16 %v7693, %v7692
      %v8153 = vpack.c.bf16 %v7695, %v7694
      %v8154 = vpack.c.bf16 %v7697, %v7696
      %v8155 = vpack.c.bf16 %v7699, %v7698
      %v8156 = vpack.c.bf16 %v7701, %v7700
      %v8157 = vpack.c.bf16 %v7703, %v7702
      %v8158 = vpack.c.bf16 %v7705, %v7704
      %v8159 = vpack.c.bf16 %v7707, %v7706
      %v8160 = vpack.c.bf16 %v7709, %v7708
      %v8161 = vpack.c.bf16 %v7711, %v7710
      %v8162 = vpack.c.bf16 %v7713, %v7712
      %v8163 = vpack.c.bf16 %v7715, %v7714
      %v8164 = vpack.c.bf16 %v7717, %v7716
      %v8165 = vpack.c.bf16 %v7719, %v7718
      %v8166 = vpack.c.bf16 %v7721, %v7720
      %v8167 = vpack.c.bf16 %v7723, %v7722
      %v8168 = vpack.c.bf16 %v7725, %v7724
      %v8169 = vpack.c.bf16 %v7727, %v7726
      %v8170 = vpack.c.bf16 %v7729, %v7728
      %v8171 = vpack.c.bf16 %v7731, %v7730
      %v8172 = vpack.c.bf16 %v7733, %v7732
      %v8173 = vpack.c.bf16 %v7735, %v7734
      %v8174 = vpack.c.bf16 %v7737, %v7736
      %v8175 = vpack.c.bf16 %v7739, %v7738
      %v8176 = vpack.c.bf16 %v7741, %v7740
      %v8177 = vpack.c.bf16 %v7743, %v7742
      %v8178 = vpack.c.bf16 %v7745, %v7744
      %v8179 = vpack.c.bf16 %v7747, %v7746
      %v8180 = vpack.c.bf16 %v7749, %v7748
      %v8181 = vpack.c.bf16 %v7751, %v7750
      %v8182 = vpack.c.bf16 %v7753, %v7752
      %v8183 = vpack.c.bf16 %v7755, %v7754
      %v8184 = vpack.c.bf16 %v7757, %v7756
      %v8185 = vpack.c.bf16 %v7759, %v7758
      %v8186 = vpack.c.bf16 %v7761, %v7760
      %v8187 = vpack.c.bf16 %v7763, %v7762
      %v8188 = vpack.c.bf16 %v7765, %v7764
      %v8189 = vpack.c.bf16 %v7767, %v7766
      %v8190 = vpack.c.bf16 %v7769, %v7768
      %v8191 = vpack.c.bf16 %v7771, %v7770
      %v8192 = vpack.c.bf16 %v7773, %v7772
      %v8193 = vpack.c.bf16 %v7775, %v7774
      %v8194 = vpack.c.bf16 %v7777, %v7776
      %v8195 = vpack.c.bf16 %v7779, %v7778
      %v8196 = vpack.c.bf16 %v7781, %v7780
      %v8197 = vpack.c.bf16 %v7783, %v7782
      %v8198 = vpack.c.bf16 %v7785, %v7784
      %v8199 = vpack.c.bf16 %v7787, %v7786
      %v8200 = vpack.c.bf16 %v7789, %v7788
      %v8201 = vpack.c.bf16 %v7791, %v7790
      %v8202 = vpack.c.bf16 %v7793, %v7792
      %v8203 = vpack.c.bf16 %v7795, %v7794
      %v8204 = vpack.c.bf16 %v7797, %v7796
      %v8205 = vpack.c.bf16 %v7799, %v7798
      %v8206 = vpack.c.bf16 %v7801, %v7800
      %v8207 = vpack.c.bf16 %v7803, %v7802
      %v8208 = vpack.c.bf16 %v7805, %v7804
      %v8209 = vpack.c.bf16 %v7807, %v7806
      %v8210 = vpack.c.bf16 %v7809, %v7808
      %v8211 = vpack.c.bf16 %v7811, %v7810
      %v8212 = vpack.c.bf16 %v7813, %v7812
      %v8213 = vpack.c.bf16 %v7815, %v7814
      %v8214 = vpack.c.bf16 %v7817, %v7816
      %v8215 = vpack.c.bf16 %v7819, %v7818
      %v8216 = vpack.c.bf16 %v7821, %v7820
      %v8217 = vpack.c.bf16 %v7823, %v7822
      %v8218 = vpack.c.bf16 %v7825, %v7824
      %v8219 = vpack.c.bf16 %v7827, %v7826
      %v8220 = vpack.c.bf16 %v7829, %v7828
      %v8221 = vpack.c.bf16 %v7831, %v7830
      %v8222 = vpack.c.bf16 %v7833, %v7832
      %v8223 = vpack.c.bf16 %v7835, %v7834
      %v8224 = vpack.c.bf16 %v7837, %v7836
      %v8225 = vpack.c.bf16 %v7839, %v7838
      %v8226 = vpack.c.bf16 %v7841, %v7840
      %v8227 = vpack.c.bf16 %v7843, %v7842
      %v8228 = vpack.c.bf16 %v7845, %v7844
      %v8229 = vpack.c.bf16 %v7847, %v7846
      %v8230 = vpack.c.bf16 %v7849, %v7848
      %v8612 = vunpack.c.l.b16 %v7850
      %v8613 = vunpack.c.h.b16 %v7850
      %v8614 = vunpack.c.l.b16 %v7851
      %v8615 = vunpack.c.h.b16 %v7851
      %v8616 = vunpack.c.l.b16 %v7852
      %v8617 = vunpack.c.h.b16 %v7852
      %v8618 = vunpack.c.l.b16 %v7853
      %v8619 = vunpack.c.h.b16 %v7853
      %v8620 = vunpack.c.l.b16 %v7854
      %v8621 = vunpack.c.h.b16 %v7854
      %v8622 = vunpack.c.l.b16 %v7855
      %v8623 = vunpack.c.h.b16 %v7855
      %v8624 = vunpack.c.l.b16 %v7856
      %v8625 = vunpack.c.h.b16 %v7856
      %v8626 = vunpack.c.l.b16 %v7857
      %v8627 = vunpack.c.h.b16 %v7857
      %v8628 = vunpack.c.l.b16 %v7858
      %v8629 = vunpack.c.h.b16 %v7858
      %v8630 = vunpack.c.l.b16 %v7859
      %v8631 = vunpack.c.h.b16 %v7859
      %v8632 = vunpack.c.l.b16 %v7860
      %v8633 = vunpack.c.h.b16 %v7860
      %v8634 = vunpack.c.l.b16 %v7861
      %v8635 = vunpack.c.h.b16 %v7861
      %v8636 = vunpack.c.l.b16 %v7862
      %v8637 = vunpack.c.h.b16 %v7862
      %v8638 = vunpack.c.l.b16 %v7863
      %v8639 = vunpack.c.h.b16 %v7863
      %v8640 = vunpack.c.l.b16 %v7864
      %v8641 = vunpack.c.h.b16 %v7864
      %v8642 = vunpack.c.l.b16 %v7865
      %v8643 = vunpack.c.h.b16 %v7865
      %v8644 = vunpack.c.l.b16 %v7866
      %v8645 = vunpack.c.h.b16 %v7866
      %v8646 = vunpack.c.l.b16 %v7867
      %v8647 = vunpack.c.h.b16 %v7867
      %v8648 = vunpack.c.l.b16 %v7868
      %v8649 = vunpack.c.h.b16 %v7868
      %v8650 = vunpack.c.l.b16 %v7869
      %v8651 = vunpack.c.h.b16 %v7869
      %v8652 = vunpack.c.l.b16 %v7870
      %v8653 = vunpack.c.h.b16 %v7870
      %v8654 = vunpack.c.l.b16 %v7871
      %v8655 = vunpack.c.h.b16 %v7871
      %v8656 = vunpack.c.l.b16 %v7872
      %v8657 = vunpack.c.h.b16 %v7872
      %v8658 = vunpack.c.l.b16 %v7873
      %v8659 = vunpack.c.h.b16 %v7873
      %v8660 = vunpack.c.l.b16 %v7874
      %v8661 = vunpack.c.h.b16 %v7874
      %v8662 = vunpack.c.l.b16 %v7875
      %v8663 = vunpack.c.h.b16 %v7875
      %v8664 = vunpack.c.l.b16 %v7876
      %v8665 = vunpack.c.h.b16 %v7876
      %v8666 = vunpack.c.l.b16 %v7877
      %v8667 = vunpack.c.h.b16 %v7877
      %v8668 = vunpack.c.l.b16 %v7878
      %v8669 = vunpack.c.h.b16 %v7878
      %v8670 = vunpack.c.l.b16 %v7879
      %v8671 = vunpack.c.h.b16 %v7879
      %v8672 = vunpack.c.l.b16 %v7880
      %v8673 = vunpack.c.h.b16 %v7880
      %v8674 = vunpack.c.l.b16 %v7881
      %v8675 = vunpack.c.h.b16 %v7881
      %v8676 = vunpack.c.l.b16 %v7882
      %v8677 = vunpack.c.h.b16 %v7882
      %v8678 = vunpack.c.l.b16 %v7883
      %v8679 = vunpack.c.h.b16 %v7883
      %v8680 = vunpack.c.l.b16 %v7884
      %v8681 = vunpack.c.h.b16 %v7884
      %v8682 = vunpack.c.l.b16 %v7885
      %v8683 = vunpack.c.h.b16 %v7885
      %v8684 = vunpack.c.l.b16 %v7886
      %v8685 = vunpack.c.h.b16 %v7886
      %v8686 = vunpack.c.l.b16 %v7887
      %v8687 = vunpack.c.h.b16 %v7887
      %v8688 = vunpack.c.l.b16 %v7888
      %v8689 = vunpack.c.h.b16 %v7888
      %v8690 = vunpack.c.l.b16 %v7889
      %v8691 = vunpack.c.h.b16 %v7889
      %v8692 = vunpack.c.l.b16 %v7890
      %v8693 = vunpack.c.h.b16 %v7890
      %v8694 = vunpack.c.l.b16 %v7891
      %v8695 = vunpack.c.h.b16 %v7891
      %v8696 = vunpack.c.l.b16 %v7892
      %v8697 = vunpack.c.h.b16 %v7892
      %v8698 = vunpack.c.l.b16 %v7893
      %v8699 = vunpack.c.h.b16 %v7893
      %v8700 = vunpack.c.l.b16 %v7894
      %v8701 = vunpack.c.h.b16 %v7894
      %v8702 = vunpack.c.l.b16 %v7895
      %v8703 = vunpack.c.h.b16 %v7895
      %v8704 = vunpack.c.l.b16 %v7896
      %v8705 = vunpack.c.h.b16 %v7896
      %v8706 = vunpack.c.l.b16 %v7897
      %v8707 = vunpack.c.h.b16 %v7897
      %v8708 = vunpack.c.l.b16 %v7898
      %v8709 = vunpack.c.h.b16 %v7898
      %v8710 = vunpack.c.l.b16 %v7899
      %v8711 = vunpack.c.h.b16 %v7899
      %v8712 = vunpack.c.l.b16 %v7900
      %v8713 = vunpack.c.h.b16 %v7900
      %v8714 = vunpack.c.l.b16 %v7901
      %v8715 = vunpack.c.h.b16 %v7901
      %v8716 = vunpack.c.l.b16 %v7902
      %v8717 = vunpack.c.h.b16 %v7902
      %v8718 = vunpack.c.l.b16 %v7903
      %v8719 = vunpack.c.h.b16 %v7903
      %v8720 = vunpack.c.l.b16 %v7904
      %v8721 = vunpack.c.h.b16 %v7904
      %v8722 = vunpack.c.l.b16 %v7905
      %v8723 = vunpack.c.h.b16 %v7905
      %v8724 = vunpack.c.l.b16 %v7906
      %v8725 = vunpack.c.h.b16 %v7906
      %v8726 = vunpack.c.l.b16 %v7907
      %v8727 = vunpack.c.h.b16 %v7907
      %v8728 = vunpack.c.l.b16 %v7908
      %v8729 = vunpack.c.h.b16 %v7908
      %v8730 = vunpack.c.l.b16 %v7909
      %v8731 = vunpack.c.h.b16 %v7909
      %v8732 = vunpack.c.l.b16 %v7910
      %v8733 = vunpack.c.h.b16 %v7910
      %v8734 = vunpack.c.l.b16 %v7911
      %v8735 = vunpack.c.h.b16 %v7911
      %v8736 = vunpack.c.l.b16 %v7912
      %v8737 = vunpack.c.h.b16 %v7912
      %v8738 = vunpack.c.l.b16 %v7913
      %v8739 = vunpack.c.h.b16 %v7913
      %v8740 = vunpack.c.l.b16 %v7914
      %v8741 = vunpack.c.h.b16 %v7914
      %v8742 = vunpack.c.l.b16 %v7915
      %v8743 = vunpack.c.h.b16 %v7915
      %v8744 = vunpack.c.l.b16 %v7916
      %v8745 = vunpack.c.h.b16 %v7916
      %v8746 = vunpack.c.l.b16 %v7917
      %v8747 = vunpack.c.h.b16 %v7917
      %v8748 = vunpack.c.l.b16 %v7918
      %v8749 = vunpack.c.h.b16 %v7918
      %v8750 = vunpack.c.l.b16 %v7919
      %v8751 = vunpack.c.h.b16 %v7919
      %v8752 = vunpack.c.l.b16 %v7920
      %v8753 = vunpack.c.h.b16 %v7920
      %v8754 = vunpack.c.l.b16 %v7921
      %v8755 = vunpack.c.h.b16 %v7921
      %v8756 = vunpack.c.l.b16 %v7922
      %v8757 = vunpack.c.h.b16 %v7922
      %v8758 = vunpack.c.l.b16 %v7923
      %v8759 = vunpack.c.h.b16 %v7923
      %v8760 = vunpack.c.l.b16 %v7924
      %v8761 = vunpack.c.h.b16 %v7924
      %v8762 = vunpack.c.l.b16 %v7925
      %v8763 = vunpack.c.h.b16 %v7925
      %v8764 = vunpack.c.l.b16 %v7926
      %v8765 = vunpack.c.h.b16 %v7926
      %v8766 = vunpack.c.l.b16 %v7927
      %v8767 = vunpack.c.h.b16 %v7927
      %v8768 = vunpack.c.l.b16 %v7928
      %v8769 = vunpack.c.h.b16 %v7928
      %v8770 = vunpack.c.l.b16 %v7929
      %v8771 = vunpack.c.h.b16 %v7929
      %v8772 = vunpack.c.l.b16 %v7930
      %v8773 = vunpack.c.h.b16 %v7930
      %v8774 = vunpack.c.l.b16 %v7931
      %v8775 = vunpack.c.h.b16 %v7931
      %v8776 = vunpack.c.l.b16 %v7932
      %v8777 = vunpack.c.h.b16 %v7932
      %v8778 = vunpack.c.l.b16 %v7933
      %v8779 = vunpack.c.h.b16 %v7933
      %v8780 = vunpack.c.l.b16 %v7934
      %v8781 = vunpack.c.h.b16 %v7934
      %v8782 = vunpack.c.l.b16 %v7935
      %v8783 = vunpack.c.h.b16 %v7935
      %v8784 = vunpack.c.l.b16 %v7936
      %v8785 = vunpack.c.h.b16 %v7936
      %v8786 = vunpack.c.l.b16 %v7937
      %v8787 = vunpack.c.h.b16 %v7937
      %v8788 = vunpack.c.l.b16 %v7938
      %v8789 = vunpack.c.h.b16 %v7938
      %v8790 = vunpack.c.l.b16 %v7939
      %v8791 = vunpack.c.h.b16 %v7939
      %v8792 = vunpack.c.l.b16 %v7940
      %v8793 = vunpack.c.h.b16 %v7940
      %v8794 = vunpack.c.l.b16 %v7941
      %v8795 = vunpack.c.h.b16 %v7941
      %v8796 = vunpack.c.l.b16 %v7942
      %v8797 = vunpack.c.h.b16 %v7942
      %v8798 = vunpack.c.l.b16 %v7943
      %v8799 = vunpack.c.h.b16 %v7943
      %v8800 = vunpack.c.l.b16 %v7944
      %v8801 = vunpack.c.h.b16 %v7944
      %v8802 = vunpack.c.l.b16 %v7945
      %v8803 = vunpack.c.h.b16 %v7945
      %v8804 = vunpack.c.l.b16 %v7946
      %v8805 = vunpack.c.h.b16 %v7946
      %v8806 = vunpack.c.l.b16 %v7947
      %v8807 = vunpack.c.h.b16 %v7947
      %v8808 = vunpack.c.l.b16 %v7948
      %v8809 = vunpack.c.h.b16 %v7948
      %v8810 = vunpack.c.l.b16 %v7949
      %v8811 = vunpack.c.h.b16 %v7949
      %v8812 = vunpack.c.l.b16 %v7950
      %v8813 = vunpack.c.h.b16 %v7950
      %v8814 = vunpack.c.l.b16 %v7951
      %v8815 = vunpack.c.h.b16 %v7951
      %v8816 = vunpack.c.l.b16 %v7952
      %v8817 = vunpack.c.h.b16 %v7952
      %v8818 = vunpack.c.l.b16 %v7953
      %v8819 = vunpack.c.h.b16 %v7953
      %v8820 = vunpack.c.l.b16 %v7954
      %v8821 = vunpack.c.h.b16 %v7954
      %v8822 = vunpack.c.l.b16 %v7955
      %v8823 = vunpack.c.h.b16 %v7955
      %v8824 = vunpack.c.l.b16 %v7956
      %v8825 = vunpack.c.h.b16 %v7956
      %v8826 = vunpack.c.l.b16 %v7957
      %v8827 = vunpack.c.h.b16 %v7957
      %v8828 = vunpack.c.l.b16 %v7958
      %v8829 = vunpack.c.h.b16 %v7958
      %v8830 = vunpack.c.l.b16 %v7959
      %v8831 = vunpack.c.h.b16 %v7959
      %v8832 = vunpack.c.l.b16 %v7960
      %v8833 = vunpack.c.h.b16 %v7960
      %v8834 = vunpack.c.l.b16 %v7961
      %v8835 = vunpack.c.h.b16 %v7961
      %v8836 = vunpack.c.l.b16 %v7962
      %v8837 = vunpack.c.h.b16 %v7962
      %v8838 = vunpack.c.l.b16 %v7963
      %v8839 = vunpack.c.h.b16 %v7963
      %v8840 = vunpack.c.l.b16 %v7964
      %v8841 = vunpack.c.h.b16 %v7964
      %v8842 = vunpack.c.l.b16 %v7965
      %v8843 = vunpack.c.h.b16 %v7965
      %v8844 = vunpack.c.l.b16 %v7966
      %v8845 = vunpack.c.h.b16 %v7966
      %v8846 = vunpack.c.l.b16 %v7967
      %v8847 = vunpack.c.h.b16 %v7967
      %v8848 = vunpack.c.l.b16 %v7968
      %v8849 = vunpack.c.h.b16 %v7968
      %v8850 = vunpack.c.l.b16 %v7969
      %v8851 = vunpack.c.h.b16 %v7969
      %v8852 = vunpack.c.l.b16 %v7970
      %v8853 = vunpack.c.h.b16 %v7970
      %v8854 = vunpack.c.l.b16 %v7971
      %v8855 = vunpack.c.h.b16 %v7971
      %v8856 = vunpack.c.l.b16 %v7972
      %v8857 = vunpack.c.h.b16 %v7972
      %v8858 = vunpack.c.l.b16 %v7973
      %v8859 = vunpack.c.h.b16 %v7973
      %v8860 = vunpack.c.l.b16 %v7974
      %v8861 = vunpack.c.h.b16 %v7974
      %v8862 = vunpack.c.l.b16 %v7975
      %v8863 = vunpack.c.h.b16 %v7975
      %v8864 = vunpack.c.l.b16 %v7976
      %v8865 = vunpack.c.h.b16 %v7976
      %v8866 = vunpack.c.l.b16 %v7977
      %v8867 = vunpack.c.h.b16 %v7977
      %v8868 = vunpack.c.l.b16 %v7978
      %v8869 = vunpack.c.h.b16 %v7978
      %v8870 = vunpack.c.l.b16 %v7979
      %v8871 = vunpack.c.h.b16 %v7979
      %v8872 = vunpack.c.l.b16 %v7980
      %v8873 = vunpack.c.h.b16 %v7980
      %v8874 = vunpack.c.l.b16 %v7981
      %v8875 = vunpack.c.h.b16 %v7981
      %v8876 = vunpack.c.l.b16 %v7982
      %v8877 = vunpack.c.h.b16 %v7982
      %v8878 = vunpack.c.l.b16 %v7983
      %v8879 = vunpack.c.h.b16 %v7983
      %v8880 = vunpack.c.l.b16 %v7984
      %v8881 = vunpack.c.h.b16 %v7984
      %v8882 = vunpack.c.l.b16 %v7985
      %v8883 = vunpack.c.h.b16 %v7985
      %v8884 = vunpack.c.l.b16 %v7986
      %v8885 = vunpack.c.h.b16 %v7986
      %v8886 = vunpack.c.l.b16 %v7987
      %v8887 = vunpack.c.h.b16 %v7987
      %v8888 = vunpack.c.l.b16 %v7988
      %v8889 = vunpack.c.h.b16 %v7988
      %v8890 = vunpack.c.l.b16 %v7989
      %v8891 = vunpack.c.h.b16 %v7989
      %v8892 = vunpack.c.l.b16 %v7990
      %v8893 = vunpack.c.h.b16 %v7990
      %v8894 = vunpack.c.l.b16 %v7991
      %v8895 = vunpack.c.h.b16 %v7991
      %v8896 = vunpack.c.l.b16 %v7992
      %v8897 = vunpack.c.h.b16 %v7992
      %v8898 = vunpack.c.l.b16 %v7993
      %v8899 = vunpack.c.h.b16 %v7993
      %v8900 = vunpack.c.l.b16 %v7994
      %v8901 = vunpack.c.h.b16 %v7994
      %v8902 = vunpack.c.l.b16 %v7995
      %v8903 = vunpack.c.h.b16 %v7995
      %v8904 = vunpack.c.l.b16 %v7996
      %v8905 = vunpack.c.h.b16 %v7996
      %v8906 = vunpack.c.l.b16 %v7997
      %v8907 = vunpack.c.h.b16 %v7997
      %v8908 = vunpack.c.l.b16 %v7998
      %v8909 = vunpack.c.h.b16 %v7998
      %v8910 = vunpack.c.l.b16 %v7999
      %v8911 = vunpack.c.h.b16 %v7999
      %v8912 = vunpack.c.l.b16 %v8000
      %v8913 = vunpack.c.h.b16 %v8000
      %v8914 = vunpack.c.l.b16 %v8001
      %v8915 = vunpack.c.h.b16 %v8001
      %v8916 = vunpack.c.l.b16 %v8002
      %v8917 = vunpack.c.h.b16 %v8002
      %v8918 = vunpack.c.l.b16 %v8003
      %v8919 = vunpack.c.h.b16 %v8003
      %v8920 = vunpack.c.l.b16 %v8004
      %v8921 = vunpack.c.h.b16 %v8004
      %v8922 = vunpack.c.l.b16 %v8005
      %v8923 = vunpack.c.h.b16 %v8005
      %v8924 = vunpack.c.l.b16 %v8006
      %v8925 = vunpack.c.h.b16 %v8006
      %v8926 = vunpack.c.l.b16 %v8007
      %v8927 = vunpack.c.h.b16 %v8007
      %v8928 = vunpack.c.l.b16 %v8008
      %v8929 = vunpack.c.h.b16 %v8008
      %v8930 = vunpack.c.l.b16 %v8009
      %v8931 = vunpack.c.h.b16 %v8009
      %v8932 = vunpack.c.l.b16 %v8010
      %v8933 = vunpack.c.h.b16 %v8010
      %v8934 = vunpack.c.l.b16 %v8011
      %v8935 = vunpack.c.h.b16 %v8011
      %v8936 = vunpack.c.l.b16 %v8012
      %v8937 = vunpack.c.h.b16 %v8012
      %v8938 = vunpack.c.l.b16 %v8013
      %v8939 = vunpack.c.h.b16 %v8013
      %v8940 = vunpack.c.l.b16 %v8014
      %v8941 = vunpack.c.h.b16 %v8014
      %v8942 = vunpack.c.l.b16 %v8015
      %v8943 = vunpack.c.h.b16 %v8015
      %v8944 = vunpack.c.l.b16 %v8016
      %v8945 = vunpack.c.h.b16 %v8016
      %v8946 = vunpack.c.l.b16 %v8017
      %v8947 = vunpack.c.h.b16 %v8017
      %v8948 = vunpack.c.l.b16 %v8018
      %v8949 = vunpack.c.h.b16 %v8018
      %v8950 = vunpack.c.l.b16 %v8019
      %v8951 = vunpack.c.h.b16 %v8019
      %v8952 = vunpack.c.l.b16 %v8020
      %v8953 = vunpack.c.h.b16 %v8020
      %v8954 = vunpack.c.l.b16 %v8021
      %v8955 = vunpack.c.h.b16 %v8021
      %v8956 = vunpack.c.l.b16 %v8022
      %v8957 = vunpack.c.h.b16 %v8022
      %v8958 = vunpack.c.l.b16 %v8023
      %v8959 = vunpack.c.h.b16 %v8023
      %v8960 = vunpack.c.l.b16 %v8024
      %v8961 = vunpack.c.h.b16 %v8024
      %v8962 = vunpack.c.l.b16 %v8025
      %v8963 = vunpack.c.h.b16 %v8025
      %v8964 = vunpack.c.l.b16 %v8026
      %v8965 = vunpack.c.h.b16 %v8026
      %v8966 = vunpack.c.l.b16 %v8027
      %v8967 = vunpack.c.h.b16 %v8027
      %v8968 = vunpack.c.l.b16 %v8028
      %v8969 = vunpack.c.h.b16 %v8028
      %v8970 = vunpack.c.l.b16 %v8029
      %v8971 = vunpack.c.h.b16 %v8029
      %v8972 = vunpack.c.l.b16 %v8030
      %v8973 = vunpack.c.h.b16 %v8030
      %v8974 = vunpack.c.l.b16 %v8031
      %v8975 = vunpack.c.h.b16 %v8031
      %v8976 = vunpack.c.l.b16 %v8032
      %v8977 = vunpack.c.h.b16 %v8032
      %v8978 = vunpack.c.l.b16 %v8033
      %v8979 = vunpack.c.h.b16 %v8033
      %v8980 = vunpack.c.l.b16 %v8034
      %v8981 = vunpack.c.h.b16 %v8034
      %v8982 = vunpack.c.l.b16 %v8035
      %v8983 = vunpack.c.h.b16 %v8035
      %v8984 = vunpack.c.l.b16 %v8036
      %v8985 = vunpack.c.h.b16 %v8036
      %v8986 = vunpack.c.l.b16 %v8037
      %v8987 = vunpack.c.h.b16 %v8037
      %v8988 = vunpack.c.l.b16 %v8038
      %v8989 = vunpack.c.h.b16 %v8038
      %v8990 = vunpack.c.l.b16 %v8039
      %v8991 = vunpack.c.h.b16 %v8039
      %v8992 = vunpack.c.l.b16 %v8040
      %v8993 = vunpack.c.h.b16 %v8040
      %v8994 = vunpack.c.l.b16 %v8041
      %v8995 = vunpack.c.h.b16 %v8041
      %v8996 = vunpack.c.l.b16 %v8042
      %v8997 = vunpack.c.h.b16 %v8042
      %v8998 = vunpack.c.l.b16 %v8043
      %v8999 = vunpack.c.h.b16 %v8043
      %v9000 = vunpack.c.l.b16 %v8044
      %v9001 = vunpack.c.h.b16 %v8044
      %v9002 = vunpack.c.l.b16 %v8045
      %v9003 = vunpack.c.h.b16 %v8045
      %v9004 = vunpack.c.l.b16 %v8046
      %v9005 = vunpack.c.h.b16 %v8046
      %v9006 = vunpack.c.l.b16 %v8047
      %v9007 = vunpack.c.h.b16 %v8047
      %v9008 = vunpack.c.l.b16 %v8048
      %v9009 = vunpack.c.h.b16 %v8048
      %v9010 = vunpack.c.l.b16 %v8049
      %v9011 = vunpack.c.h.b16 %v8049
      %v9012 = vunpack.c.l.b16 %v8050
      %v9013 = vunpack.c.h.b16 %v8050
      %v9014 = vunpack.c.l.b16 %v8051
      %v9015 = vunpack.c.h.b16 %v8051
      %v9016 = vunpack.c.l.b16 %v8052
      %v9017 = vunpack.c.h.b16 %v8052
      %v9018 = vunpack.c.l.b16 %v8053
      %v9019 = vunpack.c.h.b16 %v8053
      %v9020 = vunpack.c.l.b16 %v8054
      %v9021 = vunpack.c.h.b16 %v8054
      %v9022 = vunpack.c.l.b16 %v8055
      %v9023 = vunpack.c.h.b16 %v8055
      %v9024 = vunpack.c.l.b16 %v8056
      %v9025 = vunpack.c.h.b16 %v8056
      %v9026 = vunpack.c.l.b16 %v8057
      %v9027 = vunpack.c.h.b16 %v8057
      %v9028 = vunpack.c.l.b16 %v8058
      %v9029 = vunpack.c.h.b16 %v8058
      %v9030 = vunpack.c.l.b16 %v8059
      %v9031 = vunpack.c.h.b16 %v8059
      %v9032 = vunpack.c.l.b16 %v8060
      %v9033 = vunpack.c.h.b16 %v8060
      %v9034 = vunpack.c.l.b16 %v8061
      %v9035 = vunpack.c.h.b16 %v8061
      %v9036 = vunpack.c.l.b16 %v8062
      %v9037 = vunpack.c.h.b16 %v8062
      %v9038 = vunpack.c.l.b16 %v8063
      %v9039 = vunpack.c.h.b16 %v8063
      %v9040 = vunpack.c.l.b16 %v8064
      %v9041 = vunpack.c.h.b16 %v8064
      %v9042 = vunpack.c.l.b16 %v8065
      %v9043 = vunpack.c.h.b16 %v8065
      %v9044 = vunpack.c.l.b16 %v8066
      %v9045 = vunpack.c.h.b16 %v8066
      %v9046 = vunpack.c.l.b16 %v8067
      %v9047 = vunpack.c.h.b16 %v8067
      %v9048 = vunpack.c.l.b16 %v8068
      %v9049 = vunpack.c.h.b16 %v8068
      %v9050 = vunpack.c.l.b16 %v8069
      %v9051 = vunpack.c.h.b16 %v8069
      %v9052 = vunpack.c.l.b16 %v8070
      %v9053 = vunpack.c.h.b16 %v8070
      %v9054 = vunpack.c.l.b16 %v8071
      %v9055 = vunpack.c.h.b16 %v8071
      %v9056 = vunpack.c.l.b16 %v8072
      %v9057 = vunpack.c.h.b16 %v8072
      %v9058 = vunpack.c.l.b16 %v8073
      %v9059 = vunpack.c.h.b16 %v8073
      %v9060 = vunpack.c.l.b16 %v8074
      %v9061 = vunpack.c.h.b16 %v8074
      %v9062 = vunpack.c.l.b16 %v8075
      %v9063 = vunpack.c.h.b16 %v8075
      %v9064 = vunpack.c.l.b16 %v8076
      %v9065 = vunpack.c.h.b16 %v8076
      %v9066 = vunpack.c.l.b16 %v8077
      %v9067 = vunpack.c.h.b16 %v8077
      %v9068 = vunpack.c.l.b16 %v8078
      %v9069 = vunpack.c.h.b16 %v8078
      %v9070 = vunpack.c.l.b16 %v8079
      %v9071 = vunpack.c.h.b16 %v8079
      %v9072 = vunpack.c.l.b16 %v8080
      %v9073 = vunpack.c.h.b16 %v8080
      %v9074 = vunpack.c.l.b16 %v8081
      %v9075 = vunpack.c.h.b16 %v8081
      %v9076 = vunpack.c.l.b16 %v8082
      %v9077 = vunpack.c.h.b16 %v8082
      %v9078 = vunpack.c.l.b16 %v8083
      %v9079 = vunpack.c.h.b16 %v8083
      %v9080 = vunpack.c.l.b16 %v8084
      %v9081 = vunpack.c.h.b16 %v8084
      %v9082 = vunpack.c.l.b16 %v8085
      %v9083 = vunpack.c.h.b16 %v8085
      %v9084 = vunpack.c.l.b16 %v8086
      %v9085 = vunpack.c.h.b16 %v8086
      %v9086 = vunpack.c.l.b16 %v8087
      %v9087 = vunpack.c.h.b16 %v8087
      %v9088 = vunpack.c.l.b16 %v8088
      %v9089 = vunpack.c.h.b16 %v8088
      %v9090 = vunpack.c.l.b16 %v8089
      %v9091 = vunpack.c.h.b16 %v8089
      %v9092 = vunpack.c.l.b16 %v8090
      %v9093 = vunpack.c.h.b16 %v8090
      %v9094 = vunpack.c.l.b16 %v8091
      %v9095 = vunpack.c.h.b16 %v8091
      %v9096 = vunpack.c.l.b16 %v8092
      %v9097 = vunpack.c.h.b16 %v8092
      %v9098 = vunpack.c.l.b16 %v8093
      %v9099 = vunpack.c.h.b16 %v8093
      %v9100 = vunpack.c.l.b16 %v8094
      %v9101 = vunpack.c.h.b16 %v8094
      %v9102 = vunpack.c.l.b16 %v8095
      %v9103 = vunpack.c.h.b16 %v8095
      %v9104 = vunpack.c.l.b16 %v8096
      %v9105 = vunpack.c.h.b16 %v8096
      %v9106 = vunpack.c.l.b16 %v8097
      %v9107 = vunpack.c.h.b16 %v8097
      %v9108 = vunpack.c.l.b16 %v8098
      %v9109 = vunpack.c.h.b16 %v8098
      %v9110 = vunpack.c.l.b16 %v8099
      %v9111 = vunpack.c.h.b16 %v8099
      %v9112 = vunpack.c.l.b16 %v8100
      %v9113 = vunpack.c.h.b16 %v8100
      %v9114 = vunpack.c.l.b16 %v8101
      %v9115 = vunpack.c.h.b16 %v8101
      %v9116 = vunpack.c.l.b16 %v8102
      %v9117 = vunpack.c.h.b16 %v8102
      %v9118 = vunpack.c.l.b16 %v8103
      %v9119 = vunpack.c.h.b16 %v8103
      %v9120 = vunpack.c.l.b16 %v8104
      %v9121 = vunpack.c.h.b16 %v8104
      %v9122 = vunpack.c.l.b16 %v8105
      %v9123 = vunpack.c.h.b16 %v8105
      %v9124 = vunpack.c.l.b16 %v8106
      %v9125 = vunpack.c.h.b16 %v8106
      %v9126 = vunpack.c.l.b16 %v8107
      %v9127 = vunpack.c.h.b16 %v8107
      %v9128 = vunpack.c.l.b16 %v8108
      %v9129 = vunpack.c.h.b16 %v8108
      %v9130 = vunpack.c.l.b16 %v8109
      %v9131 = vunpack.c.h.b16 %v8109
      %v9132 = vunpack.c.l.b16 %v8110
      %v9133 = vunpack.c.h.b16 %v8110
      %v9134 = vunpack.c.l.b16 %v8111
      %v9135 = vunpack.c.h.b16 %v8111
      %v9136 = vunpack.c.l.b16 %v8112
      %v9137 = vunpack.c.h.b16 %v8112
      %v9138 = vunpack.c.l.b16 %v8113
      %v9139 = vunpack.c.h.b16 %v8113
      %v9140 = vunpack.c.l.b16 %v8114
      %v9141 = vunpack.c.h.b16 %v8114
      %v9142 = vunpack.c.l.b16 %v8115
      %v9143 = vunpack.c.h.b16 %v8115
      %v9144 = vunpack.c.l.b16 %v8116
      %v9145 = vunpack.c.h.b16 %v8116
      %v9146 = vunpack.c.l.b16 %v8117
      %v9147 = vunpack.c.h.b16 %v8117
      %v9148 = vunpack.c.l.b16 %v8118
      %v9149 = vunpack.c.h.b16 %v8118
      %v9150 = vunpack.c.l.b16 %v8119
      %v9151 = vunpack.c.h.b16 %v8119
      %v9152 = vunpack.c.l.b16 %v8120
      %v9153 = vunpack.c.h.b16 %v8120
      %v9154 = vunpack.c.l.b16 %v8121
      %v9155 = vunpack.c.h.b16 %v8121
      %v9156 = vunpack.c.l.b16 %v8122
      %v9157 = vunpack.c.h.b16 %v8122
      %v9158 = vunpack.c.l.b16 %v8123
      %v9159 = vunpack.c.h.b16 %v8123
      %v9160 = vunpack.c.l.b16 %v8124
      %v9161 = vunpack.c.h.b16 %v8124
      %v9162 = vunpack.c.l.b16 %v8125
      %v9163 = vunpack.c.h.b16 %v8125
      %v9164 = vunpack.c.l.b16 %v8126
      %v9165 = vunpack.c.h.b16 %v8126
      %v9166 = vunpack.c.l.b16 %v8127
      %v9167 = vunpack.c.h.b16 %v8127
      %v9168 = vunpack.c.l.b16 %v8128
      %v9169 = vunpack.c.h.b16 %v8128
      %v9170 = vunpack.c.l.b16 %v8129
      %v9171 = vunpack.c.h.b16 %v8129
      %v9172 = vunpack.c.l.b16 %v8130
      %v9173 = vunpack.c.h.b16 %v8130
      %v9174 = vunpack.c.l.b16 %v8131
      %v9175 = vunpack.c.h.b16 %v8131
      %v9176 = vunpack.c.l.b16 %v8132
      %v9177 = vunpack.c.h.b16 %v8132
      %v9178 = vunpack.c.l.b16 %v8133
      %v9179 = vunpack.c.h.b16 %v8133
      %v9180 = vunpack.c.l.b16 %v8134
      %v9181 = vunpack.c.h.b16 %v8134
      %v9182 = vunpack.c.l.b16 %v8135
      %v9183 = vunpack.c.h.b16 %v8135
      %v9184 = vunpack.c.l.b16 %v8136
      %v9185 = vunpack.c.h.b16 %v8136
      %v9186 = vunpack.c.l.b16 %v8137
      %v9187 = vunpack.c.h.b16 %v8137
      %v9188 = vunpack.c.l.b16 %v8138
      %v9189 = vunpack.c.h.b16 %v8138
      %v9190 = vunpack.c.l.b16 %v8139
      %v9191 = vunpack.c.h.b16 %v8139
      %v9192 = vunpack.c.l.b16 %v8140
      %v9193 = vunpack.c.h.b16 %v8140
      %v9194 = vunpack.c.l.b16 %v8141
      %v9195 = vunpack.c.h.b16 %v8141
      %v9196 = vunpack.c.l.b16 %v8142
      %v9197 = vunpack.c.h.b16 %v8142
      %v9198 = vunpack.c.l.b16 %v8143
      %v9199 = vunpack.c.h.b16 %v8143
      %v9200 = vunpack.c.l.b16 %v8144
      %v9201 = vunpack.c.h.b16 %v8144
      %v9202 = vunpack.c.l.b16 %v8145
      %v9203 = vunpack.c.h.b16 %v8145
      %v9204 = vunpack.c.l.b16 %v8146
      %v9205 = vunpack.c.h.b16 %v8146
      %v9206 = vunpack.c.l.b16 %v8147
      %v9207 = vunpack.c.h.b16 %v8147
      %v9208 = vunpack.c.l.b16 %v8148
      %v9209 = vunpack.c.h.b16 %v8148
      %v9210 = vunpack.c.l.b16 %v8149
      %v9211 = vunpack.c.h.b16 %v8149
      %v9212 = vunpack.c.l.b16 %v8150
      %v9213 = vunpack.c.h.b16 %v8150
      %v9214 = vunpack.c.l.b16 %v8151
      %v9215 = vunpack.c.h.b16 %v8151
      %v9216 = vunpack.c.l.b16 %v8152
      %v9217 = vunpack.c.h.b16 %v8152
      %v9218 = vunpack.c.l.b16 %v8153
      %v9219 = vunpack.c.h.b16 %v8153
      %v9220 = vunpack.c.l.b16 %v8154
      %v9221 = vunpack.c.h.b16 %v8154
      %v9222 = vunpack.c.l.b16 %v8155
      %v9223 = vunpack.c.h.b16 %v8155
      %v9224 = vunpack.c.l.b16 %v8156
      %v9225 = vunpack.c.h.b16 %v8156
      %v9226 = vunpack.c.l.b16 %v8157
      %v9227 = vunpack.c.h.b16 %v8157
      %v9228 = vunpack.c.l.b16 %v8158
      %v9229 = vunpack.c.h.b16 %v8158
      %v9230 = vunpack.c.l.b16 %v8159
      %v9231 = vunpack.c.h.b16 %v8159
      %v9232 = vunpack.c.l.b16 %v8160
      %v9233 = vunpack.c.h.b16 %v8160
      %v9234 = vunpack.c.l.b16 %v8161
      %v9235 = vunpack.c.h.b16 %v8161
      %v9236 = vunpack.c.l.b16 %v8162
      %v9237 = vunpack.c.h.b16 %v8162
      %v9238 = vunpack.c.l.b16 %v8163
      %v9239 = vunpack.c.h.b16 %v8163
      %v9240 = vunpack.c.l.b16 %v8164
      %v9241 = vunpack.c.h.b16 %v8164
      %v9242 = vunpack.c.l.b16 %v8165
      %v9243 = vunpack.c.h.b16 %v8165
      %v9244 = vunpack.c.l.b16 %v8166
      %v9245 = vunpack.c.h.b16 %v8166
      %v9246 = vunpack.c.l.b16 %v8167
      %v9247 = vunpack.c.h.b16 %v8167
      %v9248 = vunpack.c.l.b16 %v8168
      %v9249 = vunpack.c.h.b16 %v8168
      %v9250 = vunpack.c.l.b16 %v8169
      %v9251 = vunpack.c.h.b16 %v8169
      %v9252 = vunpack.c.l.b16 %v8170
      %v9253 = vunpack.c.h.b16 %v8170
      %v9254 = vunpack.c.l.b16 %v8171
      %v9255 = vunpack.c.h.b16 %v8171
      %v9256 = vunpack.c.l.b16 %v8172
      %v9257 = vunpack.c.h.b16 %v8172
      %v9258 = vunpack.c.l.b16 %v8173
      %v9259 = vunpack.c.h.b16 %v8173
      %v9260 = vunpack.c.l.b16 %v8174
      %v9261 = vunpack.c.h.b16 %v8174
      %v9262 = vunpack.c.l.b16 %v8175
      %v9263 = vunpack.c.h.b16 %v8175
      %v9264 = vunpack.c.l.b16 %v8176
      %v9265 = vunpack.c.h.b16 %v8176
      %v9266 = vunpack.c.l.b16 %v8177
      %v9267 = vunpack.c.h.b16 %v8177
      %v9268 = vunpack.c.l.b16 %v8178
      %v9269 = vunpack.c.h.b16 %v8178
      %v9270 = vunpack.c.l.b16 %v8179
      %v9271 = vunpack.c.h.b16 %v8179
      %v9272 = vunpack.c.l.b16 %v8180
      %v9273 = vunpack.c.h.b16 %v8180
      %v9274 = vunpack.c.l.b16 %v8181
      %v9275 = vunpack.c.h.b16 %v8181
      %v9276 = vunpack.c.l.b16 %v8182
      %v9277 = vunpack.c.h.b16 %v8182
      %v9278 = vunpack.c.l.b16 %v8183
      %v9279 = vunpack.c.h.b16 %v8183
      %v9280 = vunpack.c.l.b16 %v8184
      %v9281 = vunpack.c.h.b16 %v8184
      %v9282 = vunpack.c.l.b16 %v8185
      %v9283 = vunpack.c.h.b16 %v8185
      %v9284 = vunpack.c.l.b16 %v8186
      %v9285 = vunpack.c.h.b16 %v8186
      %v9286 = vunpack.c.l.b16 %v8187
      %v9287 = vunpack.c.h.b16 %v8187
      %v9288 = vunpack.c.l.b16 %v8188
      %v9289 = vunpack.c.h.b16 %v8188
      %v9290 = vunpack.c.l.b16 %v8189
      %v9291 = vunpack.c.h.b16 %v8189
      %v9292 = vunpack.c.l.b16 %v8190
      %v9293 = vunpack.c.h.b16 %v8190
      %v9294 = vunpack.c.l.b16 %v8191
      %v9295 = vunpack.c.h.b16 %v8191
      %v9296 = vunpack.c.l.b16 %v8192
      %v9297 = vunpack.c.h.b16 %v8192
      %v9298 = vunpack.c.l.b16 %v8193
      %v9299 = vunpack.c.h.b16 %v8193
      %v9300 = vunpack.c.l.b16 %v8194
      %v9301 = vunpack.c.h.b16 %v8194
      %v9302 = vunpack.c.l.b16 %v8195
      %v9303 = vunpack.c.h.b16 %v8195
      %v9304 = vunpack.c.l.b16 %v8196
      %v9305 = vunpack.c.h.b16 %v8196
      %v9306 = vunpack.c.l.b16 %v8197
      %v9307 = vunpack.c.h.b16 %v8197
      %v9308 = vunpack.c.l.b16 %v8198
      %v9309 = vunpack.c.h.b16 %v8198
      %v9310 = vunpack.c.l.b16 %v8199
      %v9311 = vunpack.c.h.b16 %v8199
      %v9312 = vunpack.c.l.b16 %v8200
      %v9313 = vunpack.c.h.b16 %v8200
      %v9314 = vunpack.c.l.b16 %v8201
      %v9315 = vunpack.c.h.b16 %v8201
      %v9316 = vunpack.c.l.b16 %v8202
      %v9317 = vunpack.c.h.b16 %v8202
      %v9318 = vunpack.c.l.b16 %v8203
      %v9319 = vunpack.c.h.b16 %v8203
      %v9320 = vunpack.c.l.b16 %v8204
      %v9321 = vunpack.c.h.b16 %v8204
      %v9322 = vunpack.c.l.b16 %v8205
      %v9323 = vunpack.c.h.b16 %v8205
      %v9324 = vunpack.c.l.b16 %v8206
      %v9325 = vunpack.c.h.b16 %v8206
      %v9326 = vunpack.c.l.b16 %v8207
      %v9327 = vunpack.c.h.b16 %v8207
      %v9328 = vunpack.c.l.b16 %v8208
      %v9329 = vunpack.c.h.b16 %v8208
      %v9330 = vunpack.c.l.b16 %v8209
      %v9331 = vunpack.c.h.b16 %v8209
      %v9332 = vunpack.c.l.b16 %v8210
      %v9333 = vunpack.c.h.b16 %v8210
      %v9334 = vunpack.c.l.b16 %v8211
      %v9335 = vunpack.c.h.b16 %v8211
      %v9336 = vunpack.c.l.b16 %v8212
      %v9337 = vunpack.c.h.b16 %v8212
      %v9338 = vunpack.c.l.b16 %v8213
      %v9339 = vunpack.c.h.b16 %v8213
      %v9340 = vunpack.c.l.b16 %v8214
      %v9341 = vunpack.c.h.b16 %v8214
      %v9342 = vunpack.c.l.b16 %v8215
      %v9343 = vunpack.c.h.b16 %v8215
      %v9344 = vunpack.c.l.b16 %v8216
      %v9345 = vunpack.c.h.b16 %v8216
      %v9346 = vunpack.c.l.b16 %v8217
      %v9347 = vunpack.c.h.b16 %v8217
      %v9348 = vunpack.c.l.b16 %v8218
      %v9349 = vunpack.c.h.b16 %v8218
      %v9350 = vunpack.c.l.b16 %v8219
      %v9351 = vunpack.c.h.b16 %v8219
      %v9352 = vunpack.c.l.b16 %v8220
      %v9353 = vunpack.c.h.b16 %v8220
      %v9354 = vunpack.c.l.b16 %v8221
      %v9355 = vunpack.c.h.b16 %v8221
      %v9356 = vunpack.c.l.b16 %v8222
      %v9357 = vunpack.c.h.b16 %v8222
      %v9358 = vunpack.c.l.b16 %v8223
      %v9359 = vunpack.c.h.b16 %v8223
      %v9360 = vunpack.c.l.b16 %v8224
      %v9361 = vunpack.c.h.b16 %v8224
      %v9362 = vunpack.c.l.b16 %v8225
      %v9363 = vunpack.c.h.b16 %v8225
      %v9364 = vunpack.c.l.b16 %v8226
      %v9365 = vunpack.c.h.b16 %v8226
      %v9366 = vunpack.c.l.b16 %v8227
      %v9367 = vunpack.c.h.b16 %v8227
      %v9368 = vunpack.c.l.b16 %v8228
      %v9369 = vunpack.c.h.b16 %v8228
      %v9370 = vunpack.c.l.b16 %v8229
      %v9371 = vunpack.c.h.b16 %v8229
      %v9372 = vunpack.c.l.b16 %v8230
      %v9373 = vunpack.c.h.b16 %v8230
      %v9374 = vpack.c.b16 %v8612, %v8612
      %v9375 = vpack.c.b16 %v8613, %v8613
      %v9376 = vpack.c.b16 %v8614, %v8614
      %v9377 = vpack.c.b16 %v8615, %v8615
      %v9378 = vpack.c.b16 %v8616, %v8616
      %v9379 = vpack.c.b16 %v8617, %v8617
      %v9380 = vpack.c.b16 %v8618, %v8618
      %v9381 = vpack.c.b16 %v8619, %v8619
      %v9382 = vpack.c.b16 %v8620, %v8620
      %v9383 = vpack.c.b16 %v8621, %v8621
      %v9384 = vpack.c.b16 %v8622, %v8622
      %v9385 = vpack.c.b16 %v8623, %v8623
      %v9386 = vpack.c.b16 %v8624, %v8624
      %v9387 = vpack.c.b16 %v8625, %v8625
      %v9388 = vpack.c.b16 %v8626, %v8626
      %v9389 = vpack.c.b16 %v8627, %v8627
      %v9390 = vpack.c.b16 %v8628, %v8628
      %v9391 = vpack.c.b16 %v8629, %v8629
      %v9392 = vpack.c.b16 %v8630, %v8630
      %v9393 = vpack.c.b16 %v8631, %v8631
      %v9394 = vpack.c.b16 %v8632, %v8632
      %v9395 = vpack.c.b16 %v8633, %v8633
      %v9396 = vpack.c.b16 %v8634, %v8634
      %v9397 = vpack.c.b16 %v8635, %v8635
      %v9398 = vpack.c.b16 %v8636, %v8636
      %v9399 = vpack.c.b16 %v8637, %v8637
      %v9400 = vpack.c.b16 %v8638, %v8638
      %v9401 = vpack.c.b16 %v8639, %v8639
      %v9402 = vpack.c.b16 %v8640, %v8640
      %v9403 = vpack.c.b16 %v8641, %v8641
      %v9404 = vpack.c.b16 %v8642, %v8642
      %v9405 = vpack.c.b16 %v8643, %v8643
      %v9406 = vpack.c.b16 %v8644, %v8644
      %v9407 = vpack.c.b16 %v8645, %v8645
      %v9408 = vpack.c.b16 %v8646, %v8646
      %v9409 = vpack.c.b16 %v8647, %v8647
      %v9410 = vpack.c.b16 %v8648, %v8648
      %v9411 = vpack.c.b16 %v8649, %v8649
      %v9412 = vpack.c.b16 %v8650, %v8650
      %v9413 = vpack.c.b16 %v8651, %v8651
      %v9414 = vpack.c.b16 %v8652, %v8652
      %v9415 = vpack.c.b16 %v8653, %v8653
      %v9416 = vpack.c.b16 %v8654, %v8654
      %v9417 = vpack.c.b16 %v8655, %v8655
      %v9418 = vpack.c.b16 %v8656, %v8656
      %v9419 = vpack.c.b16 %v8657, %v8657
      %v9420 = vpack.c.b16 %v8658, %v8658
      %v9421 = vpack.c.b16 %v8659, %v8659
      %v9422 = vpack.c.b16 %v8660, %v8660
      %v9423 = vpack.c.b16 %v8661, %v8661
      %v9424 = vpack.c.b16 %v8662, %v8662
      %v9425 = vpack.c.b16 %v8663, %v8663
      %v9426 = vpack.c.b16 %v8664, %v8664
      %v9427 = vpack.c.b16 %v8665, %v8665
      %v9428 = vpack.c.b16 %v8666, %v8666
      %v9429 = vpack.c.b16 %v8667, %v8667
      %v9430 = vpack.c.b16 %v8668, %v8668
      %v9431 = vpack.c.b16 %v8669, %v8669
      %v9432 = vpack.c.b16 %v8670, %v8670
      %v9433 = vpack.c.b16 %v8671, %v8671
      %v9434 = vpack.c.b16 %v8672, %v8672
      %v9435 = vpack.c.b16 %v8673, %v8673
      %v9436 = vpack.c.b16 %v8674, %v8674
      %v9437 = vpack.c.b16 %v8675, %v8675
      %v9438 = vpack.c.b16 %v8676, %v8676
      %v9439 = vpack.c.b16 %v8677, %v8677
      %v9440 = vpack.c.b16 %v8678, %v8678
      %v9441 = vpack.c.b16 %v8679, %v8679
      %v9442 = vpack.c.b16 %v8680, %v8680
      %v9443 = vpack.c.b16 %v8681, %v8681
      %v9444 = vpack.c.b16 %v8682, %v8682
      %v9445 = vpack.c.b16 %v8683, %v8683
      %v9446 = vpack.c.b16 %v8684, %v8684
      %v9447 = vpack.c.b16 %v8685, %v8685
      %v9448 = vpack.c.b16 %v8686, %v8686
      %v9449 = vpack.c.b16 %v8687, %v8687
      %v9450 = vpack.c.b16 %v8688, %v8688
      %v9451 = vpack.c.b16 %v8689, %v8689
      %v9452 = vpack.c.b16 %v8690, %v8690
      %v9453 = vpack.c.b16 %v8691, %v8691
      %v9454 = vpack.c.b16 %v8692, %v8692
      %v9455 = vpack.c.b16 %v8693, %v8693
      %v9456 = vpack.c.b16 %v8694, %v8694
      %v9457 = vpack.c.b16 %v8695, %v8695
      %v9458 = vpack.c.b16 %v8696, %v8696
      %v9459 = vpack.c.b16 %v8697, %v8697
      %v9460 = vpack.c.b16 %v8698, %v8698
      %v9461 = vpack.c.b16 %v8699, %v8699
      %v9462 = vpack.c.b16 %v8700, %v8700
      %v9463 = vpack.c.b16 %v8701, %v8701
      %v9464 = vpack.c.b16 %v8702, %v8702
      %v9465 = vpack.c.b16 %v8703, %v8703
      %v9466 = vpack.c.b16 %v8704, %v8704
      %v9467 = vpack.c.b16 %v8705, %v8705
      %v9468 = vpack.c.b16 %v8706, %v8706
      %v9469 = vpack.c.b16 %v8707, %v8707
      %v9470 = vpack.c.b16 %v8708, %v8708
      %v9471 = vpack.c.b16 %v8709, %v8709
      %v9472 = vpack.c.b16 %v8710, %v8710
      %v9473 = vpack.c.b16 %v8711, %v8711
      %v9474 = vpack.c.b16 %v8712, %v8712
      %v9475 = vpack.c.b16 %v8713, %v8713
      %v9476 = vpack.c.b16 %v8714, %v8714
      %v9477 = vpack.c.b16 %v8715, %v8715
      %v9478 = vpack.c.b16 %v8716, %v8716
      %v9479 = vpack.c.b16 %v8717, %v8717
      %v9480 = vpack.c.b16 %v8718, %v8718
      %v9481 = vpack.c.b16 %v8719, %v8719
      %v9482 = vpack.c.b16 %v8720, %v8720
      %v9483 = vpack.c.b16 %v8721, %v8721
      %v9484 = vpack.c.b16 %v8722, %v8722
      %v9485 = vpack.c.b16 %v8723, %v8723
      %v9486 = vpack.c.b16 %v8724, %v8724
      %v9487 = vpack.c.b16 %v8725, %v8725
      %v9488 = vpack.c.b16 %v8726, %v8726
      %v9489 = vpack.c.b16 %v8727, %v8727
      %v9490 = vpack.c.b16 %v8728, %v8728
      %v9491 = vpack.c.b16 %v8729, %v8729
      %v9492 = vpack.c.b16 %v8730, %v8730
      %v9493 = vpack.c.b16 %v8731, %v8731
      %v9494 = vpack.c.b16 %v8732, %v8732
      %v9495 = vpack.c.b16 %v8733, %v8733
      %v9496 = vpack.c.b16 %v8734, %v8734
      %v9497 = vpack.c.b16 %v8735, %v8735
      %v9498 = vpack.c.b16 %v8736, %v8736
      %v9499 = vpack.c.b16 %v8737, %v8737
      %v9500 = vpack.c.b16 %v8738, %v8738
      %v9501 = vpack.c.b16 %v8739, %v8739
      %v9502 = vpack.c.b16 %v8740, %v8740
      %v9503 = vpack.c.b16 %v8741, %v8741
      %v9504 = vpack.c.b16 %v8742, %v8742
      %v9505 = vpack.c.b16 %v8743, %v8743
      %v9506 = vpack.c.b16 %v8744, %v8744
      %v9507 = vpack.c.b16 %v8745, %v8745
      %v9508 = vpack.c.b16 %v8746, %v8746
      %v9509 = vpack.c.b16 %v8747, %v8747
      %v9510 = vpack.c.b16 %v8748, %v8748
      %v9511 = vpack.c.b16 %v8749, %v8749
      %v9512 = vpack.c.b16 %v8750, %v8750
      %v9513 = vpack.c.b16 %v8751, %v8751
      %v9514 = vpack.c.b16 %v8752, %v8752
      %v9515 = vpack.c.b16 %v8753, %v8753
      %v9516 = vpack.c.b16 %v8754, %v8754
      %v9517 = vpack.c.b16 %v8755, %v8755
      %v9518 = vpack.c.b16 %v8756, %v8756
      %v9519 = vpack.c.b16 %v8757, %v8757
      %v9520 = vpack.c.b16 %v8758, %v8758
      %v9521 = vpack.c.b16 %v8759, %v8759
      %v9522 = vpack.c.b16 %v8760, %v8760
      %v9523 = vpack.c.b16 %v8761, %v8761
      %v9524 = vpack.c.b16 %v8762, %v8762
      %v9525 = vpack.c.b16 %v8763, %v8763
      %v9526 = vpack.c.b16 %v8764, %v8764
      %v9527 = vpack.c.b16 %v8765, %v8765
      %v9528 = vpack.c.b16 %v8766, %v8766
      %v9529 = vpack.c.b16 %v8767, %v8767
      %v9530 = vpack.c.b16 %v8768, %v8768
      %v9531 = vpack.c.b16 %v8769, %v8769
      %v9532 = vpack.c.b16 %v8770, %v8770
      %v9533 = vpack.c.b16 %v8771, %v8771
      %v9534 = vpack.c.b16 %v8772, %v8772
      %v9535 = vpack.c.b16 %v8773, %v8773
      %v9536 = vpack.c.b16 %v8774, %v8774
      %v9537 = vpack.c.b16 %v8775, %v8775
      %v9538 = vpack.c.b16 %v8776, %v8776
      %v9539 = vpack.c.b16 %v8777, %v8777
      %v9540 = vpack.c.b16 %v8778, %v8778
      %v9541 = vpack.c.b16 %v8779, %v8779
      %v9542 = vpack.c.b16 %v8780, %v8780
      %v9543 = vpack.c.b16 %v8781, %v8781
      %v9544 = vpack.c.b16 %v8782, %v8782
      %v9545 = vpack.c.b16 %v8783, %v8783
      %v9546 = vpack.c.b16 %v8784, %v8784
      %v9547 = vpack.c.b16 %v8785, %v8785
      %v9548 = vpack.c.b16 %v8786, %v8786
      %v9549 = vpack.c.b16 %v8787, %v8787
      %v9550 = vpack.c.b16 %v8788, %v8788
      %v9551 = vpack.c.b16 %v8789, %v8789
      %v9552 = vpack.c.b16 %v8790, %v8790
      %v9553 = vpack.c.b16 %v8791, %v8791
      %v9554 = vpack.c.b16 %v8792, %v8792
      %v9555 = vpack.c.b16 %v8793, %v8793
      %v9556 = vpack.c.b16 %v8794, %v8794
      %v9557 = vpack.c.b16 %v8795, %v8795
      %v9558 = vpack.c.b16 %v8796, %v8796
      %v9559 = vpack.c.b16 %v8797, %v8797
      %v9560 = vpack.c.b16 %v8798, %v8798
      %v9561 = vpack.c.b16 %v8799, %v8799
      %v9562 = vpack.c.b16 %v8800, %v8800
      %v9563 = vpack.c.b16 %v8801, %v8801
      %v9564 = vpack.c.b16 %v8802, %v8802
      %v9565 = vpack.c.b16 %v8803, %v8803
      %v9566 = vpack.c.b16 %v8804, %v8804
      %v9567 = vpack.c.b16 %v8805, %v8805
      %v9568 = vpack.c.b16 %v8806, %v8806
      %v9569 = vpack.c.b16 %v8807, %v8807
      %v9570 = vpack.c.b16 %v8808, %v8808
      %v9571 = vpack.c.b16 %v8809, %v8809
      %v9572 = vpack.c.b16 %v8810, %v8810
      %v9573 = vpack.c.b16 %v8811, %v8811
      %v9574 = vpack.c.b16 %v8812, %v8812
      %v9575 = vpack.c.b16 %v8813, %v8813
      %v9576 = vpack.c.b16 %v8814, %v8814
      %v9577 = vpack.c.b16 %v8815, %v8815
      %v9578 = vpack.c.b16 %v8816, %v8816
      %v9579 = vpack.c.b16 %v8817, %v8817
      %v9580 = vpack.c.b16 %v8818, %v8818
      %v9581 = vpack.c.b16 %v8819, %v8819
      %v9582 = vpack.c.b16 %v8820, %v8820
      %v9583 = vpack.c.b16 %v8821, %v8821
      %v9584 = vpack.c.b16 %v8822, %v8822
      %v9585 = vpack.c.b16 %v8823, %v8823
      %v9586 = vpack.c.b16 %v8824, %v8824
      %v9587 = vpack.c.b16 %v8825, %v8825
      %v9588 = vpack.c.b16 %v8826, %v8826
      %v9589 = vpack.c.b16 %v8827, %v8827
      %v9590 = vpack.c.b16 %v8828, %v8828
      %v9591 = vpack.c.b16 %v8829, %v8829
      %v9592 = vpack.c.b16 %v8830, %v8830
      %v9593 = vpack.c.b16 %v8831, %v8831
      %v9594 = vpack.c.b16 %v8832, %v8832
      %v9595 = vpack.c.b16 %v8833, %v8833
      %v9596 = vpack.c.b16 %v8834, %v8834
      %v9597 = vpack.c.b16 %v8835, %v8835
      %v9598 = vpack.c.b16 %v8836, %v8836
      %v9599 = vpack.c.b16 %v8837, %v8837
      %v9600 = vpack.c.b16 %v8838, %v8838
      %v9601 = vpack.c.b16 %v8839, %v8839
      %v9602 = vpack.c.b16 %v8840, %v8840
      %v9603 = vpack.c.b16 %v8841, %v8841
      %v9604 = vpack.c.b16 %v8842, %v8842
      %v9605 = vpack.c.b16 %v8843, %v8843
      %v9606 = vpack.c.b16 %v8844, %v8844
      %v9607 = vpack.c.b16 %v8845, %v8845
      %v9608 = vpack.c.b16 %v8846, %v8846
      %v9609 = vpack.c.b16 %v8847, %v8847
      %v9610 = vpack.c.b16 %v8848, %v8848
      %v9611 = vpack.c.b16 %v8849, %v8849
      %v9612 = vpack.c.b16 %v8850, %v8850
      %v9613 = vpack.c.b16 %v8851, %v8851
      %v9614 = vpack.c.b16 %v8852, %v8852
      %v9615 = vpack.c.b16 %v8853, %v8853
      %v9616 = vpack.c.b16 %v8854, %v8854
      %v9617 = vpack.c.b16 %v8855, %v8855
      %v9618 = vpack.c.b16 %v8856, %v8856
      %v9619 = vpack.c.b16 %v8857, %v8857
      %v9620 = vpack.c.b16 %v8858, %v8858
      %v9621 = vpack.c.b16 %v8859, %v8859
      %v9622 = vpack.c.b16 %v8860, %v8860
      %v9623 = vpack.c.b16 %v8861, %v8861
      %v9624 = vpack.c.b16 %v8862, %v8862
      %v9625 = vpack.c.b16 %v8863, %v8863
      %v9626 = vpack.c.b16 %v8864, %v8864
      %v9627 = vpack.c.b16 %v8865, %v8865
      %v9628 = vpack.c.b16 %v8866, %v8866
      %v9629 = vpack.c.b16 %v8867, %v8867
      %v9630 = vpack.c.b16 %v8868, %v8868
      %v9631 = vpack.c.b16 %v8869, %v8869
      %v9632 = vpack.c.b16 %v8870, %v8870
      %v9633 = vpack.c.b16 %v8871, %v8871
      %v9634 = vpack.c.b16 %v8872, %v8872
      %v9635 = vpack.c.b16 %v8873, %v8873
      %v9636 = vpack.c.b16 %v8874, %v8874
      %v9637 = vpack.c.b16 %v8875, %v8875
      %v9638 = vpack.c.b16 %v8876, %v8876
      %v9639 = vpack.c.b16 %v8877, %v8877
      %v9640 = vpack.c.b16 %v8878, %v8878
      %v9641 = vpack.c.b16 %v8879, %v8879
      %v9642 = vpack.c.b16 %v8880, %v8880
      %v9643 = vpack.c.b16 %v8881, %v8881
      %v9644 = vpack.c.b16 %v8882, %v8882
      %v9645 = vpack.c.b16 %v8883, %v8883
      %v9646 = vpack.c.b16 %v8884, %v8884
      %v9647 = vpack.c.b16 %v8885, %v8885
      %v9648 = vpack.c.b16 %v8886, %v8886
      %v9649 = vpack.c.b16 %v8887, %v8887
      %v9650 = vpack.c.b16 %v8888, %v8888
      %v9651 = vpack.c.b16 %v8889, %v8889
      %v9652 = vpack.c.b16 %v8890, %v8890
      %v9653 = vpack.c.b16 %v8891, %v8891
      %v9654 = vpack.c.b16 %v8892, %v8892
      %v9655 = vpack.c.b16 %v8893, %v8893
      %v9656 = vpack.c.b16 %v8894, %v8894
      %v9657 = vpack.c.b16 %v8895, %v8895
      %v9658 = vpack.c.b16 %v8896, %v8896
      %v9659 = vpack.c.b16 %v8897, %v8897
      %v9660 = vpack.c.b16 %v8898, %v8898
      %v9661 = vpack.c.b16 %v8899, %v8899
      %v9662 = vpack.c.b16 %v8900, %v8900
      %v9663 = vpack.c.b16 %v8901, %v8901
      %v9664 = vpack.c.b16 %v8902, %v8902
      %v9665 = vpack.c.b16 %v8903, %v8903
      %v9666 = vpack.c.b16 %v8904, %v8904
      %v9667 = vpack.c.b16 %v8905, %v8905
      %v9668 = vpack.c.b16 %v8906, %v8906
      %v9669 = vpack.c.b16 %v8907, %v8907
      %v9670 = vpack.c.b16 %v8908, %v8908
      %v9671 = vpack.c.b16 %v8909, %v8909
      %v9672 = vpack.c.b16 %v8910, %v8910
      %v9673 = vpack.c.b16 %v8911, %v8911
      %v9674 = vpack.c.b16 %v8912, %v8912
      %v9675 = vpack.c.b16 %v8913, %v8913
      %v9676 = vpack.c.b16 %v8914, %v8914
      %v9677 = vpack.c.b16 %v8915, %v8915
      %v9678 = vpack.c.b16 %v8916, %v8916
      %v9679 = vpack.c.b16 %v8917, %v8917
      %v9680 = vpack.c.b16 %v8918, %v8918
      %v9681 = vpack.c.b16 %v8919, %v8919
      %v9682 = vpack.c.b16 %v8920, %v8920
      %v9683 = vpack.c.b16 %v8921, %v8921
      %v9684 = vpack.c.b16 %v8922, %v8922
      %v9685 = vpack.c.b16 %v8923, %v8923
      %v9686 = vpack.c.b16 %v8924, %v8924
      %v9687 = vpack.c.b16 %v8925, %v8925
      %v9688 = vpack.c.b16 %v8926, %v8926
      %v9689 = vpack.c.b16 %v8927, %v8927
      %v9690 = vpack.c.b16 %v8928, %v8928
      %v9691 = vpack.c.b16 %v8929, %v8929
      %v9692 = vpack.c.b16 %v8930, %v8930
      %v9693 = vpack.c.b16 %v8931, %v8931
      %v9694 = vpack.c.b16 %v8932, %v8932
      %v9695 = vpack.c.b16 %v8933, %v8933
      %v9696 = vpack.c.b16 %v8934, %v8934
      %v9697 = vpack.c.b16 %v8935, %v8935
      %v9698 = vpack.c.b16 %v8936, %v8936
      %v9699 = vpack.c.b16 %v8937, %v8937
      %v9700 = vpack.c.b16 %v8938, %v8938
      %v9701 = vpack.c.b16 %v8939, %v8939
      %v9702 = vpack.c.b16 %v8940, %v8940
      %v9703 = vpack.c.b16 %v8941, %v8941
      %v9704 = vpack.c.b16 %v8942, %v8942
      %v9705 = vpack.c.b16 %v8943, %v8943
      %v9706 = vpack.c.b16 %v8944, %v8944
      %v9707 = vpack.c.b16 %v8945, %v8945
      %v9708 = vpack.c.b16 %v8946, %v8946
      %v9709 = vpack.c.b16 %v8947, %v8947
      %v9710 = vpack.c.b16 %v8948, %v8948
      %v9711 = vpack.c.b16 %v8949, %v8949
      %v9712 = vpack.c.b16 %v8950, %v8950
      %v9713 = vpack.c.b16 %v8951, %v8951
      %v9714 = vpack.c.b16 %v8952, %v8952
      %v9715 = vpack.c.b16 %v8953, %v8953
      %v9716 = vpack.c.b16 %v8954, %v8954
      %v9717 = vpack.c.b16 %v8955, %v8955
      %v9718 = vpack.c.b16 %v8956, %v8956
      %v9719 = vpack.c.b16 %v8957, %v8957
      %v9720 = vpack.c.b16 %v8958, %v8958
      %v9721 = vpack.c.b16 %v8959, %v8959
      %v9722 = vpack.c.b16 %v8960, %v8960
      %v9723 = vpack.c.b16 %v8961, %v8961
      %v9724 = vpack.c.b16 %v8962, %v8962
      %v9725 = vpack.c.b16 %v8963, %v8963
      %v9726 = vpack.c.b16 %v8964, %v8964
      %v9727 = vpack.c.b16 %v8965, %v8965
      %v9728 = vpack.c.b16 %v8966, %v8966
      %v9729 = vpack.c.b16 %v8967, %v8967
      %v9730 = vpack.c.b16 %v8968, %v8968
      %v9731 = vpack.c.b16 %v8969, %v8969
      %v9732 = vpack.c.b16 %v8970, %v8970
      %v9733 = vpack.c.b16 %v8971, %v8971
      %v9734 = vpack.c.b16 %v8972, %v8972
      %v9735 = vpack.c.b16 %v8973, %v8973
      %v9736 = vpack.c.b16 %v8974, %v8974
      %v9737 = vpack.c.b16 %v8975, %v8975
      %v9738 = vpack.c.b16 %v8976, %v8976
      %v9739 = vpack.c.b16 %v8977, %v8977
      %v9740 = vpack.c.b16 %v8978, %v8978
      %v9741 = vpack.c.b16 %v8979, %v8979
      %v9742 = vpack.c.b16 %v8980, %v8980
      %v9743 = vpack.c.b16 %v8981, %v8981
      %v9744 = vpack.c.b16 %v8982, %v8982
      %v9745 = vpack.c.b16 %v8983, %v8983
      %v9746 = vpack.c.b16 %v8984, %v8984
      %v9747 = vpack.c.b16 %v8985, %v8985
      %v9748 = vpack.c.b16 %v8986, %v8986
      %v9749 = vpack.c.b16 %v8987, %v8987
      %v9750 = vpack.c.b16 %v8988, %v8988
      %v9751 = vpack.c.b16 %v8989, %v8989
      %v9752 = vpack.c.b16 %v8990, %v8990
      %v9753 = vpack.c.b16 %v8991, %v8991
      %v9754 = vpack.c.b16 %v8992, %v8992
      %v9755 = vpack.c.b16 %v8993, %v8993
      %v9756 = vpack.c.b16 %v8994, %v8994
      %v9757 = vpack.c.b16 %v8995, %v8995
      %v9758 = vpack.c.b16 %v8996, %v8996
      %v9759 = vpack.c.b16 %v8997, %v8997
      %v9760 = vpack.c.b16 %v8998, %v8998
      %v9761 = vpack.c.b16 %v8999, %v8999
      %v9762 = vpack.c.b16 %v9000, %v9000
      %v9763 = vpack.c.b16 %v9001, %v9001
      %v9764 = vpack.c.b16 %v9002, %v9002
      %v9765 = vpack.c.b16 %v9003, %v9003
      %v9766 = vpack.c.b16 %v9004, %v9004
      %v9767 = vpack.c.b16 %v9005, %v9005
      %v9768 = vpack.c.b16 %v9006, %v9006
      %v9769 = vpack.c.b16 %v9007, %v9007
      %v9770 = vpack.c.b16 %v9008, %v9008
      %v9771 = vpack.c.b16 %v9009, %v9009
      %v9772 = vpack.c.b16 %v9010, %v9010
      %v9773 = vpack.c.b16 %v9011, %v9011
      %v9774 = vpack.c.b16 %v9012, %v9012
      %v9775 = vpack.c.b16 %v9013, %v9013
      %v9776 = vpack.c.b16 %v9014, %v9014
      %v9777 = vpack.c.b16 %v9015, %v9015
      %v9778 = vpack.c.b16 %v9016, %v9016
      %v9779 = vpack.c.b16 %v9017, %v9017
      %v9780 = vpack.c.b16 %v9018, %v9018
      %v9781 = vpack.c.b16 %v9019, %v9019
      %v9782 = vpack.c.b16 %v9020, %v9020
      %v9783 = vpack.c.b16 %v9021, %v9021
      %v9784 = vpack.c.b16 %v9022, %v9022
      %v9785 = vpack.c.b16 %v9023, %v9023
      %v9786 = vpack.c.b16 %v9024, %v9024
      %v9787 = vpack.c.b16 %v9025, %v9025
      %v9788 = vpack.c.b16 %v9026, %v9026
      %v9789 = vpack.c.b16 %v9027, %v9027
      %v9790 = vpack.c.b16 %v9028, %v9028
      %v9791 = vpack.c.b16 %v9029, %v9029
      %v9792 = vpack.c.b16 %v9030, %v9030
      %v9793 = vpack.c.b16 %v9031, %v9031
      %v9794 = vpack.c.b16 %v9032, %v9032
      %v9795 = vpack.c.b16 %v9033, %v9033
      %v9796 = vpack.c.b16 %v9034, %v9034
      %v9797 = vpack.c.b16 %v9035, %v9035
      %v9798 = vpack.c.b16 %v9036, %v9036
      %v9799 = vpack.c.b16 %v9037, %v9037
      %v9800 = vpack.c.b16 %v9038, %v9038
      %v9801 = vpack.c.b16 %v9039, %v9039
      %v9802 = vpack.c.b16 %v9040, %v9040
      %v9803 = vpack.c.b16 %v9041, %v9041
      %v9804 = vpack.c.b16 %v9042, %v9042
      %v9805 = vpack.c.b16 %v9043, %v9043
      %v9806 = vpack.c.b16 %v9044, %v9044
      %v9807 = vpack.c.b16 %v9045, %v9045
      %v9808 = vpack.c.b16 %v9046, %v9046
      %v9809 = vpack.c.b16 %v9047, %v9047
      %v9810 = vpack.c.b16 %v9048, %v9048
      %v9811 = vpack.c.b16 %v9049, %v9049
      %v9812 = vpack.c.b16 %v9050, %v9050
      %v9813 = vpack.c.b16 %v9051, %v9051
      %v9814 = vpack.c.b16 %v9052, %v9052
      %v9815 = vpack.c.b16 %v9053, %v9053
      %v9816 = vpack.c.b16 %v9054, %v9054
      %v9817 = vpack.c.b16 %v9055, %v9055
      %v9818 = vpack.c.b16 %v9056, %v9056
      %v9819 = vpack.c.b16 %v9057, %v9057
      %v9820 = vpack.c.b16 %v9058, %v9058
      %v9821 = vpack.c.b16 %v9059, %v9059
      %v9822 = vpack.c.b16 %v9060, %v9060
      %v9823 = vpack.c.b16 %v9061, %v9061
      %v9824 = vpack.c.b16 %v9062, %v9062
      %v9825 = vpack.c.b16 %v9063, %v9063
      %v9826 = vpack.c.b16 %v9064, %v9064
      %v9827 = vpack.c.b16 %v9065, %v9065
      %v9828 = vpack.c.b16 %v9066, %v9066
      %v9829 = vpack.c.b16 %v9067, %v9067
      %v9830 = vpack.c.b16 %v9068, %v9068
      %v9831 = vpack.c.b16 %v9069, %v9069
      %v9832 = vpack.c.b16 %v9070, %v9070
      %v9833 = vpack.c.b16 %v9071, %v9071
      %v9834 = vpack.c.b16 %v9072, %v9072
      %v9835 = vpack.c.b16 %v9073, %v9073
      %v9836 = vpack.c.b16 %v9074, %v9074
      %v9837 = vpack.c.b16 %v9075, %v9075
      %v9838 = vpack.c.b16 %v9076, %v9076
      %v9839 = vpack.c.b16 %v9077, %v9077
      %v9840 = vpack.c.b16 %v9078, %v9078
      %v9841 = vpack.c.b16 %v9079, %v9079
      %v9842 = vpack.c.b16 %v9080, %v9080
      %v9843 = vpack.c.b16 %v9081, %v9081
      %v9844 = vpack.c.b16 %v9082, %v9082
      %v9845 = vpack.c.b16 %v9083, %v9083
      %v9846 = vpack.c.b16 %v9084, %v9084
      %v9847 = vpack.c.b16 %v9085, %v9085
      %v9848 = vpack.c.b16 %v9086, %v9086
      %v9849 = vpack.c.b16 %v9087, %v9087
      %v9850 = vpack.c.b16 %v9088, %v9088
      %v9851 = vpack.c.b16 %v9089, %v9089
      %v9852 = vpack.c.b16 %v9090, %v9090
      %v9853 = vpack.c.b16 %v9091, %v9091
      %v9854 = vpack.c.b16 %v9092, %v9092
      %v9855 = vpack.c.b16 %v9093, %v9093
      %v9856 = vpack.c.b16 %v9094, %v9094
      %v9857 = vpack.c.b16 %v9095, %v9095
      %v9858 = vpack.c.b16 %v9096, %v9096
      %v9859 = vpack.c.b16 %v9097, %v9097
      %v9860 = vpack.c.b16 %v9098, %v9098
      %v9861 = vpack.c.b16 %v9099, %v9099
      %v9862 = vpack.c.b16 %v9100, %v9100
      %v9863 = vpack.c.b16 %v9101, %v9101
      %v9864 = vpack.c.b16 %v9102, %v9102
      %v9865 = vpack.c.b16 %v9103, %v9103
      %v9866 = vpack.c.b16 %v9104, %v9104
      %v9867 = vpack.c.b16 %v9105, %v9105
      %v9868 = vpack.c.b16 %v9106, %v9106
      %v9869 = vpack.c.b16 %v9107, %v9107
      %v9870 = vpack.c.b16 %v9108, %v9108
      %v9871 = vpack.c.b16 %v9109, %v9109
      %v9872 = vpack.c.b16 %v9110, %v9110
      %v9873 = vpack.c.b16 %v9111, %v9111
      %v9874 = vpack.c.b16 %v9112, %v9112
      %v9875 = vpack.c.b16 %v9113, %v9113
      %v9876 = vpack.c.b16 %v9114, %v9114
      %v9877 = vpack.c.b16 %v9115, %v9115
      %v9878 = vpack.c.b16 %v9116, %v9116
      %v9879 = vpack.c.b16 %v9117, %v9117
      %v9880 = vpack.c.b16 %v9118, %v9118
      %v9881 = vpack.c.b16 %v9119, %v9119
      %v9882 = vpack.c.b16 %v9120, %v9120
      %v9883 = vpack.c.b16 %v9121, %v9121
      %v9884 = vpack.c.b16 %v9122, %v9122
      %v9885 = vpack.c.b16 %v9123, %v9123
      %v9886 = vpack.c.b16 %v9124, %v9124
      %v9887 = vpack.c.b16 %v9125, %v9125
      %v9888 = vpack.c.b16 %v9126, %v9126
      %v9889 = vpack.c.b16 %v9127, %v9127
      %v9890 = vpack.c.b16 %v9128, %v9128
      %v9891 = vpack.c.b16 %v9129, %v9129
      %v9892 = vpack.c.b16 %v9130, %v9130
      %v9893 = vpack.c.b16 %v9131, %v9131
      %v9894 = vpack.c.b16 %v9132, %v9132
      %v9895 = vpack.c.b16 %v9133, %v9133
      %v9896 = vpack.c.b16 %v9134, %v9134
      %v9897 = vpack.c.b16 %v9135, %v9135
      %v9898 = vpack.c.b16 %v9136, %v9136
      %v9899 = vpack.c.b16 %v9137, %v9137
      %v9900 = vpack.c.b16 %v9138, %v9138
      %v9901 = vpack.c.b16 %v9139, %v9139
      %v9902 = vpack.c.b16 %v9140, %v9140
      %v9903 = vpack.c.b16 %v9141, %v9141
      %v9904 = vpack.c.b16 %v9142, %v9142
      %v9905 = vpack.c.b16 %v9143, %v9143
      %v9906 = vpack.c.b16 %v9144, %v9144
      %v9907 = vpack.c.b16 %v9145, %v9145
      %v9908 = vpack.c.b16 %v9146, %v9146
      %v9909 = vpack.c.b16 %v9147, %v9147
      %v9910 = vpack.c.b16 %v9148, %v9148
      %v9911 = vpack.c.b16 %v9149, %v9149
      %v9912 = vpack.c.b16 %v9150, %v9150
      %v9913 = vpack.c.b16 %v9151, %v9151
      %v9914 = vpack.c.b16 %v9152, %v9152
      %v9915 = vpack.c.b16 %v9153, %v9153
      %v9916 = vpack.c.b16 %v9154, %v9154
      %v9917 = vpack.c.b16 %v9155, %v9155
      %v9918 = vpack.c.b16 %v9156, %v9156
      %v9919 = vpack.c.b16 %v9157, %v9157
      %v9920 = vpack.c.b16 %v9158, %v9158
      %v9921 = vpack.c.b16 %v9159, %v9159
      %v9922 = vpack.c.b16 %v9160, %v9160
      %v9923 = vpack.c.b16 %v9161, %v9161
      %v9924 = vpack.c.b16 %v9162, %v9162
      %v9925 = vpack.c.b16 %v9163, %v9163
      %v9926 = vpack.c.b16 %v9164, %v9164
      %v9927 = vpack.c.b16 %v9165, %v9165
      %v9928 = vpack.c.b16 %v9166, %v9166
      %v9929 = vpack.c.b16 %v9167, %v9167
      %v9930 = vpack.c.b16 %v9168, %v9168
      %v9931 = vpack.c.b16 %v9169, %v9169
      %v9932 = vpack.c.b16 %v9170, %v9170
      %v9933 = vpack.c.b16 %v9171, %v9171
      %v9934 = vpack.c.b16 %v9172, %v9172
      %v9935 = vpack.c.b16 %v9173, %v9173
      %v9936 = vpack.c.b16 %v9174, %v9174
      %v9937 = vpack.c.b16 %v9175, %v9175
      %v9938 = vpack.c.b16 %v9176, %v9176
      %v9939 = vpack.c.b16 %v9177, %v9177
      %v9940 = vpack.c.b16 %v9178, %v9178
      %v9941 = vpack.c.b16 %v9179, %v9179
      %v9942 = vpack.c.b16 %v9180, %v9180
      %v9943 = vpack.c.b16 %v9181, %v9181
      %v9944 = vpack.c.b16 %v9182, %v9182
      %v9945 = vpack.c.b16 %v9183, %v9183
      %v9946 = vpack.c.b16 %v9184, %v9184
      %v9947 = vpack.c.b16 %v9185, %v9185
      %v9948 = vpack.c.b16 %v9186, %v9186
      %v9949 = vpack.c.b16 %v9187, %v9187
      %v9950 = vpack.c.b16 %v9188, %v9188
      %v9951 = vpack.c.b16 %v9189, %v9189
      %v9952 = vpack.c.b16 %v9190, %v9190
      %v9953 = vpack.c.b16 %v9191, %v9191
      %v9954 = vpack.c.b16 %v9192, %v9192
      %v9955 = vpack.c.b16 %v9193, %v9193
      %v9956 = vpack.c.b16 %v9194, %v9194
      %v9957 = vpack.c.b16 %v9195, %v9195
      %v9958 = vpack.c.b16 %v9196, %v9196
      %v9959 = vpack.c.b16 %v9197, %v9197
      %v9960 = vpack.c.b16 %v9198, %v9198
      %v9961 = vpack.c.b16 %v9199, %v9199
      %v9962 = vpack.c.b16 %v9200, %v9200
      %v9963 = vpack.c.b16 %v9201, %v9201
      %v9964 = vpack.c.b16 %v9202, %v9202
      %v9965 = vpack.c.b16 %v9203, %v9203
      %v9966 = vpack.c.b16 %v9204, %v9204
      %v9967 = vpack.c.b16 %v9205, %v9205
      %v9968 = vpack.c.b16 %v9206, %v9206
      %v9969 = vpack.c.b16 %v9207, %v9207
      %v9970 = vpack.c.b16 %v9208, %v9208
      %v9971 = vpack.c.b16 %v9209, %v9209
      %v9972 = vpack.c.b16 %v9210, %v9210
      %v9973 = vpack.c.b16 %v9211, %v9211
      %v9974 = vpack.c.b16 %v9212, %v9212
      %v9975 = vpack.c.b16 %v9213, %v9213
      %v9976 = vpack.c.b16 %v9214, %v9214
      %v9977 = vpack.c.b16 %v9215, %v9215
      %v9978 = vpack.c.b16 %v9216, %v9216
      %v9979 = vpack.c.b16 %v9217, %v9217
      %v9980 = vpack.c.b16 %v9218, %v9218
      %v9981 = vpack.c.b16 %v9219, %v9219
      %v9982 = vpack.c.b16 %v9220, %v9220
      %v9983 = vpack.c.b16 %v9221, %v9221
      %v9984 = vpack.c.b16 %v9222, %v9222
      %v9985 = vpack.c.b16 %v9223, %v9223
      %v9986 = vpack.c.b16 %v9224, %v9224
      %v9987 = vpack.c.b16 %v9225, %v9225
      %v9988 = vpack.c.b16 %v9226, %v9226
      %v9989 = vpack.c.b16 %v9227, %v9227
      %v9990 = vpack.c.b16 %v9228, %v9228
      %v9991 = vpack.c.b16 %v9229, %v9229
      %v9992 = vpack.c.b16 %v9230, %v9230
      %v9993 = vpack.c.b16 %v9231, %v9231
      %v9994 = vpack.c.b16 %v9232, %v9232
      %v9995 = vpack.c.b16 %v9233, %v9233
      %v9996 = vpack.c.b16 %v9234, %v9234
      %v9997 = vpack.c.b16 %v9235, %v9235
      %v9998 = vpack.c.b16 %v9236, %v9236
      %v9999 = vpack.c.b16 %v9237, %v9237
      %v10000 = vpack.c.b16 %v9238, %v9238
      %v10001 = vpack.c.b16 %v9239, %v9239
      %v10002 = vpack.c.b16 %v9240, %v9240
      %v10003 = vpack.c.b16 %v9241, %v9241
      %v10004 = vpack.c.b16 %v9242, %v9242
      %v10005 = vpack.c.b16 %v9243, %v9243
      %v10006 = vpack.c.b16 %v9244, %v9244
      %v10007 = vpack.c.b16 %v9245, %v9245
      %v10008 = vpack.c.b16 %v9246, %v9246
      %v10009 = vpack.c.b16 %v9247, %v9247
      %v10010 = vpack.c.b16 %v9248, %v9248
      %v10011 = vpack.c.b16 %v9249, %v9249
      %v10012 = vpack.c.b16 %v9250, %v9250
      %v10013 = vpack.c.b16 %v9251, %v9251
      %v10014 = vpack.c.b16 %v9252, %v9252
      %v10015 = vpack.c.b16 %v9253, %v9253
      %v10016 = vpack.c.b16 %v9254, %v9254
      %v10017 = vpack.c.b16 %v9255, %v9255
      %v10018 = vpack.c.b16 %v9256, %v9256
      %v10019 = vpack.c.b16 %v9257, %v9257
      %v10020 = vpack.c.b16 %v9258, %v9258
      %v10021 = vpack.c.b16 %v9259, %v9259
      %v10022 = vpack.c.b16 %v9260, %v9260
      %v10023 = vpack.c.b16 %v9261, %v9261
      %v10024 = vpack.c.b16 %v9262, %v9262
      %v10025 = vpack.c.b16 %v9263, %v9263
      %v10026 = vpack.c.b16 %v9264, %v9264
      %v10027 = vpack.c.b16 %v9265, %v9265
      %v10028 = vpack.c.b16 %v9266, %v9266
      %v10029 = vpack.c.b16 %v9267, %v9267
      %v10030 = vpack.c.b16 %v9268, %v9268
      %v10031 = vpack.c.b16 %v9269, %v9269
      %v10032 = vpack.c.b16 %v9270, %v9270
      %v10033 = vpack.c.b16 %v9271, %v9271
      %v10034 = vpack.c.b16 %v9272, %v9272
      %v10035 = vpack.c.b16 %v9273, %v9273
      %v10036 = vpack.c.b16 %v9274, %v9274
      %v10037 = vpack.c.b16 %v9275, %v9275
      %v10038 = vpack.c.b16 %v9276, %v9276
      %v10039 = vpack.c.b16 %v9277, %v9277
      %v10040 = vpack.c.b16 %v9278, %v9278
      %v10041 = vpack.c.b16 %v9279, %v9279
      %v10042 = vpack.c.b16 %v9280, %v9280
      %v10043 = vpack.c.b16 %v9281, %v9281
      %v10044 = vpack.c.b16 %v9282, %v9282
      %v10045 = vpack.c.b16 %v9283, %v9283
      %v10046 = vpack.c.b16 %v9284, %v9284
      %v10047 = vpack.c.b16 %v9285, %v9285
      %v10048 = vpack.c.b16 %v9286, %v9286
      %v10049 = vpack.c.b16 %v9287, %v9287
      %v10050 = vpack.c.b16 %v9288, %v9288
      %v10051 = vpack.c.b16 %v9289, %v9289
      %v10052 = vpack.c.b16 %v9290, %v9290
      %v10053 = vpack.c.b16 %v9291, %v9291
      %v10054 = vpack.c.b16 %v9292, %v9292
      %v10055 = vpack.c.b16 %v9293, %v9293
      %v10056 = vpack.c.b16 %v9294, %v9294
      %v10057 = vpack.c.b16 %v9295, %v9295
      %v10058 = vpack.c.b16 %v9296, %v9296
      %v10059 = vpack.c.b16 %v9297, %v9297
      %v10060 = vpack.c.b16 %v9298, %v9298
      %v10061 = vpack.c.b16 %v9299, %v9299
      %v10062 = vpack.c.b16 %v9300, %v9300
      %v10063 = vpack.c.b16 %v9301, %v9301
      %v10064 = vpack.c.b16 %v9302, %v9302
      %v10065 = vpack.c.b16 %v9303, %v9303
      %v10066 = vpack.c.b16 %v9304, %v9304
      %v10067 = vpack.c.b16 %v9305, %v9305
      %v10068 = vpack.c.b16 %v9306, %v9306
      %v10069 = vpack.c.b16 %v9307, %v9307
      %v10070 = vpack.c.b16 %v9308, %v9308
      %v10071 = vpack.c.b16 %v9309, %v9309
      %v10072 = vpack.c.b16 %v9310, %v9310
      %v10073 = vpack.c.b16 %v9311, %v9311
      %v10074 = vpack.c.b16 %v9312, %v9312
      %v10075 = vpack.c.b16 %v9313, %v9313
      %v10076 = vpack.c.b16 %v9314, %v9314
      %v10077 = vpack.c.b16 %v9315, %v9315
      %v10078 = vpack.c.b16 %v9316, %v9316
      %v10079 = vpack.c.b16 %v9317, %v9317
      %v10080 = vpack.c.b16 %v9318, %v9318
      %v10081 = vpack.c.b16 %v9319, %v9319
      %v10082 = vpack.c.b16 %v9320, %v9320
      %v10083 = vpack.c.b16 %v9321, %v9321
      %v10084 = vpack.c.b16 %v9322, %v9322
      %v10085 = vpack.c.b16 %v9323, %v9323
      %v10086 = vpack.c.b16 %v9324, %v9324
      %v10087 = vpack.c.b16 %v9325, %v9325
      %v10088 = vpack.c.b16 %v9326, %v9326
      %v10089 = vpack.c.b16 %v9327, %v9327
      %v10090 = vpack.c.b16 %v9328, %v9328
      %v10091 = vpack.c.b16 %v9329, %v9329
      %v10092 = vpack.c.b16 %v9330, %v9330
      %v10093 = vpack.c.b16 %v9331, %v9331
      %v10094 = vpack.c.b16 %v9332, %v9332
      %v10095 = vpack.c.b16 %v9333, %v9333
      %v10096 = vpack.c.b16 %v9334, %v9334
      %v10097 = vpack.c.b16 %v9335, %v9335
      %v10098 = vpack.c.b16 %v9336, %v9336
      %v10099 = vpack.c.b16 %v9337, %v9337
      %v10100 = vpack.c.b16 %v9338, %v9338
      %v10101 = vpack.c.b16 %v9339, %v9339
      %v10102 = vpack.c.b16 %v9340, %v9340
      %v10103 = vpack.c.b16 %v9341, %v9341
      %v10104 = vpack.c.b16 %v9342, %v9342
      %v10105 = vpack.c.b16 %v9343, %v9343
      %v10106 = vpack.c.b16 %v9344, %v9344
      %v10107 = vpack.c.b16 %v9345, %v9345
      %v10108 = vpack.c.b16 %v9346, %v9346
      %v10109 = vpack.c.b16 %v9347, %v9347
      %v10110 = vpack.c.b16 %v9348, %v9348
      %v10111 = vpack.c.b16 %v9349, %v9349
      %v10112 = vpack.c.b16 %v9350, %v9350
      %v10113 = vpack.c.b16 %v9351, %v9351
      %v10114 = vpack.c.b16 %v9352, %v9352
      %v10115 = vpack.c.b16 %v9353, %v9353
      %v10116 = vpack.c.b16 %v9354, %v9354
      %v10117 = vpack.c.b16 %v9355, %v9355
      %v10118 = vpack.c.b16 %v9356, %v9356
      %v10119 = vpack.c.b16 %v9357, %v9357
      %v10120 = vpack.c.b16 %v9358, %v9358
      %v10121 = vpack.c.b16 %v9359, %v9359
      %v10122 = vpack.c.b16 %v9360, %v9360
      %v10123 = vpack.c.b16 %v9361, %v9361
      %v10124 = vpack.c.b16 %v9362, %v9362
      %v10125 = vpack.c.b16 %v9363, %v9363
      %v10126 = vpack.c.b16 %v9364, %v9364
      %v10127 = vpack.c.b16 %v9365, %v9365
      %v10128 = vpack.c.b16 %v9366, %v9366
      %v10129 = vpack.c.b16 %v9367, %v9367
      %v10130 = vpack.c.b16 %v9368, %v9368
      %v10131 = vpack.c.b16 %v9369, %v9369
      %v10132 = vpack.c.b16 %v9370, %v9370
      %v10133 = vpack.c.b16 %v9371, %v9371
      %v10134 = vpack.c.b16 %v9372, %v9372
      %v10135 = vpack.c.b16 %v9373, %v9373
      %vm10898 = vcmask 257024
      %10899 = vst.msk [vmem:[%s172] sm:$0xf] %vm10898, %v9374
      %10900 = vst.msk [vmem:[%s172 + $0x4] sm:$0xf] %vm10898, %v9375
      %10901 = vst.msk [vmem:[%s172 + $0x8] sm:$0xf] %vm10898, %v9376
      %10902 = vst.msk [vmem:[%s172 + $0xc] sm:$0xf] %vm10898, %v9377
      %10903 = vst.msk [vmem:[%s172 + $0x10] sm:$0xf] %vm10898, %v9378
      %10904 = vst.msk [vmem:[%s172 + $0x14] sm:$0xf] %vm10898, %v9379
      %10905 = vst.msk [vmem:[%s172 + $0x18] sm:$0xf] %vm10898, %v9380
      %10906 = vst.msk [vmem:[%s172 + $0x1c] sm:$0xf] %vm10898, %v9381
      %10907 = vst.msk [vmem:[%s172 + $0x20] sm:$0xf] %vm10898, %v9382
      %10908 = vst.msk [vmem:[%s172 + $0x24] sm:$0xf] %vm10898, %v9383
      %10909 = vst.msk [vmem:[%s172 + $0x28] sm:$0xf] %vm10898, %v9384
      %10910 = vst.msk [vmem:[%s172 + $0x2c] sm:$0xf] %vm10898, %v9385
      %10911 = vst.msk [vmem:[%s172 + $0x30] sm:$0xf] %vm10898, %v9386
      %10912 = vst.msk [vmem:[%s172 + $0x34] sm:$0xf] %vm10898, %v9387
      %10913 = vst.msk [vmem:[%s172 + $0x38] sm:$0xf] %vm10898, %v9388
      %10914 = vst.msk [vmem:[%s172 + $0x3c] sm:$0xf] %vm10898, %v9389
      %10915 = vst.msk [vmem:[%s172 + $0x40] sm:$0xf] %vm10898, %v9390
      %10916 = vst.msk [vmem:[%s172 + $0x44] sm:$0xf] %vm10898, %v9391
      %10917 = vst.msk [vmem:[%s172 + $0x48] sm:$0xf] %vm10898, %v9392
      %10918 = vst.msk [vmem:[%s172 + $0x4c] sm:$0xf] %vm10898, %v9393
      %10919 = vst.msk [vmem:[%s172 + $0x50] sm:$0xf] %vm10898, %v9394
      %10920 = vst.msk [vmem:[%s172 + $0x54] sm:$0xf] %vm10898, %v9395
      %10921 = vst.msk [vmem:[%s172 + $0x58] sm:$0xf] %vm10898, %v9396
      %10922 = vst.msk [vmem:[%s172 + $0x5c] sm:$0xf] %vm10898, %v9397
      %10923 = vst.msk [vmem:[%s172 + $0x60] sm:$0xf] %vm10898, %v9398
      %10924 = vst.msk [vmem:[%s172 + $0x64] sm:$0xf] %vm10898, %v9399
      %10925 = vst.msk [vmem:[%s172 + $0x68] sm:$0xf] %vm10898, %v9400
      %10926 = vst.msk [vmem:[%s172 + $0x6c] sm:$0xf] %vm10898, %v9401
      %10927 = vst.msk [vmem:[%s172 + $0x70] sm:$0xf] %vm10898, %v9402
      %10928 = vst.msk [vmem:[%s172 + $0x74] sm:$0xf] %vm10898, %v9403
      %10929 = vst.msk [vmem:[%s172 + $0x78] sm:$0xf] %vm10898, %v9404
      %10930 = vst.msk [vmem:[%s172 + $0x7c] sm:$0xf] %vm10898, %v9405
      %10931 = vst.msk [vmem:[%s172 + $0x80] sm:$0xf] %vm10898, %v9406
      %10932 = vst.msk [vmem:[%s172 + $0x84] sm:$0xf] %vm10898, %v9407
      %10933 = vst.msk [vmem:[%s172 + $0x88] sm:$0xf] %vm10898, %v9408
      %10934 = vst.msk [vmem:[%s172 + $0x8c] sm:$0xf] %vm10898, %v9409
      %10935 = vst.msk [vmem:[%s172 + $0x90] sm:$0xf] %vm10898, %v9410
      %10936 = vst.msk [vmem:[%s172 + $0x94] sm:$0xf] %vm10898, %v9411
      %10937 = vst.msk [vmem:[%s172 + $0x98] sm:$0xf] %vm10898, %v9412
      %10938 = vst.msk [vmem:[%s172 + $0x9c] sm:$0xf] %vm10898, %v9413
      %10939 = vst.msk [vmem:[%s172 + $0xa0] sm:$0xf] %vm10898, %v9414
      %10940 = vst.msk [vmem:[%s172 + $0xa4] sm:$0xf] %vm10898, %v9415
      %10941 = vst.msk [vmem:[%s172 + $0xa8] sm:$0xf] %vm10898, %v9416
      %10942 = vst.msk [vmem:[%s172 + $0xac] sm:$0xf] %vm10898, %v9417
      %10943 = vst.msk [vmem:[%s172 + $0xb0] sm:$0xf] %vm10898, %v9418
      %10944 = vst.msk [vmem:[%s172 + $0xb4] sm:$0xf] %vm10898, %v9419
      %10945 = vst.msk [vmem:[%s172 + $0xb8] sm:$0xf] %vm10898, %v9420
      %10946 = vst.msk [vmem:[%s172 + $0xbc] sm:$0xf] %vm10898, %v9421
      %10947 = vst.msk [vmem:[%s172 + $0xc0] sm:$0xf] %vm10898, %v9422
      %10948 = vst.msk [vmem:[%s172 + $0xc4] sm:$0xf] %vm10898, %v9423
      %10949 = vst.msk [vmem:[%s172 + $0xc8] sm:$0xf] %vm10898, %v9424
      %10950 = vst.msk [vmem:[%s172 + $0xcc] sm:$0xf] %vm10898, %v9425
      %10951 = vst.msk [vmem:[%s172 + $0xd0] sm:$0xf] %vm10898, %v9426
      %10952 = vst.msk [vmem:[%s172 + $0xd4] sm:$0xf] %vm10898, %v9427
      %10953 = vst.msk [vmem:[%s172 + $0xd8] sm:$0xf] %vm10898, %v9428
      %10954 = vst.msk [vmem:[%s172 + $0xdc] sm:$0xf] %vm10898, %v9429
      %10955 = vst.msk [vmem:[%s172 + $0xe0] sm:$0xf] %vm10898, %v9430
      %10956 = vst.msk [vmem:[%s172 + $0xe4] sm:$0xf] %vm10898, %v9431
      %10957 = vst.msk [vmem:[%s172 + $0xe8] sm:$0xf] %vm10898, %v9432
      %10958 = vst.msk [vmem:[%s172 + $0xec] sm:$0xf] %vm10898, %v9433
      %10959 = vst.msk [vmem:[%s172 + $0xf0] sm:$0xf] %vm10898, %v9434
      %10960 = vst.msk [vmem:[%s172 + $0xf4] sm:$0xf] %vm10898, %v9435
      %10961 = vst.msk [vmem:[%s172 + $0xf8] sm:$0xf] %vm10898, %v9436
      %10962 = vst.msk [vmem:[%s172 + $0xfc] sm:$0xf] %vm10898, %v9437
      %10963 = vst.msk [vmem:[%s172 + $0x100] sm:$0xf] %vm10898, %v9438
      %10964 = vst.msk [vmem:[%s172 + $0x104] sm:$0xf] %vm10898, %v9439
      %10965 = vst.msk [vmem:[%s172 + $0x108] sm:$0xf] %vm10898, %v9440
      %10966 = vst.msk [vmem:[%s172 + $0x10c] sm:$0xf] %vm10898, %v9441
      %10967 = vst.msk [vmem:[%s172 + $0x110] sm:$0xf] %vm10898, %v9442
      %10968 = vst.msk [vmem:[%s172 + $0x114] sm:$0xf] %vm10898, %v9443
      %10969 = vst.msk [vmem:[%s172 + $0x118] sm:$0xf] %vm10898, %v9444
      %10970 = vst.msk [vmem:[%s172 + $0x11c] sm:$0xf] %vm10898, %v9445
      %10971 = vst.msk [vmem:[%s172 + $0x120] sm:$0xf] %vm10898, %v9446
      %10972 = vst.msk [vmem:[%s172 + $0x124] sm:$0xf] %vm10898, %v9447
      %10973 = vst.msk [vmem:[%s172 + $0x128] sm:$0xf] %vm10898, %v9448
      %10974 = vst.msk [vmem:[%s172 + $0x12c] sm:$0xf] %vm10898, %v9449
      %10975 = vst.msk [vmem:[%s172 + $0x130] sm:$0xf] %vm10898, %v9450
      %10976 = vst.msk [vmem:[%s172 + $0x134] sm:$0xf] %vm10898, %v9451
      %10977 = vst.msk [vmem:[%s172 + $0x138] sm:$0xf] %vm10898, %v9452
      %10978 = vst.msk [vmem:[%s172 + $0x13c] sm:$0xf] %vm10898, %v9453
      %10979 = vst.msk [vmem:[%s172 + $0x140] sm:$0xf] %vm10898, %v9454
      %10980 = vst.msk [vmem:[%s172 + $0x144] sm:$0xf] %vm10898, %v9455
      %10981 = vst.msk [vmem:[%s172 + $0x148] sm:$0xf] %vm10898, %v9456
      %10982 = vst.msk [vmem:[%s172 + $0x14c] sm:$0xf] %vm10898, %v9457
      %10983 = vst.msk [vmem:[%s172 + $0x150] sm:$0xf] %vm10898, %v9458
      %10984 = vst.msk [vmem:[%s172 + $0x154] sm:$0xf] %vm10898, %v9459
      %10985 = vst.msk [vmem:[%s172 + $0x158] sm:$0xf] %vm10898, %v9460
      %10986 = vst.msk [vmem:[%s172 + $0x15c] sm:$0xf] %vm10898, %v9461
      %10987 = vst.msk [vmem:[%s172 + $0x160] sm:$0xf] %vm10898, %v9462
      %10988 = vst.msk [vmem:[%s172 + $0x164] sm:$0xf] %vm10898, %v9463
      %10989 = vst.msk [vmem:[%s172 + $0x168] sm:$0xf] %vm10898, %v9464
      %10990 = vst.msk [vmem:[%s172 + $0x16c] sm:$0xf] %vm10898, %v9465
      %10991 = vst.msk [vmem:[%s172 + $0x170] sm:$0xf] %vm10898, %v9466
      %10992 = vst.msk [vmem:[%s172 + $0x174] sm:$0xf] %vm10898, %v9467
      %10993 = vst.msk [vmem:[%s172 + $0x178] sm:$0xf] %vm10898, %v9468
      %10994 = vst.msk [vmem:[%s172 + $0x17c] sm:$0xf] %vm10898, %v9469
      %10995 = vst.msk [vmem:[%s172 + $0x180] sm:$0xf] %vm10898, %v9470
      %10996 = vst.msk [vmem:[%s172 + $0x184] sm:$0xf] %vm10898, %v9471
      %10997 = vst.msk [vmem:[%s172 + $0x188] sm:$0xf] %vm10898, %v9472
      %10998 = vst.msk [vmem:[%s172 + $0x18c] sm:$0xf] %vm10898, %v9473
      %10999 = vst.msk [vmem:[%s172 + $0x190] sm:$0xf] %vm10898, %v9474
      %11000 = vst.msk [vmem:[%s172 + $0x194] sm:$0xf] %vm10898, %v9475
      %11001 = vst.msk [vmem:[%s172 + $0x198] sm:$0xf] %vm10898, %v9476
      %11002 = vst.msk [vmem:[%s172 + $0x19c] sm:$0xf] %vm10898, %v9477
      %11003 = vst.msk [vmem:[%s172 + $0x1a0] sm:$0xf] %vm10898, %v9478
      %11004 = vst.msk [vmem:[%s172 + $0x1a4] sm:$0xf] %vm10898, %v9479
      %11005 = vst.msk [vmem:[%s172 + $0x1a8] sm:$0xf] %vm10898, %v9480
      %11006 = vst.msk [vmem:[%s172 + $0x1ac] sm:$0xf] %vm10898, %v9481
      %11007 = vst.msk [vmem:[%s172 + $0x1b0] sm:$0xf] %vm10898, %v9482
      %11008 = vst.msk [vmem:[%s172 + $0x1b4] sm:$0xf] %vm10898, %v9483
      %11009 = vst.msk [vmem:[%s172 + $0x1b8] sm:$0xf] %vm10898, %v9484
      %11010 = vst.msk [vmem:[%s172 + $0x1bc] sm:$0xf] %vm10898, %v9485
      %11011 = vst.msk [vmem:[%s172 + $0x1c0] sm:$0xf] %vm10898, %v9486
      %11012 = vst.msk [vmem:[%s172 + $0x1c4] sm:$0xf] %vm10898, %v9487
      %11013 = vst.msk [vmem:[%s172 + $0x1c8] sm:$0xf] %vm10898, %v9488
      %11014 = vst.msk [vmem:[%s172 + $0x1cc] sm:$0xf] %vm10898, %v9489
      %11015 = vst.msk [vmem:[%s172 + $0x1d0] sm:$0xf] %vm10898, %v9490
      %11016 = vst.msk [vmem:[%s172 + $0x1d4] sm:$0xf] %vm10898, %v9491
      %11017 = vst.msk [vmem:[%s172 + $0x1d8] sm:$0xf] %vm10898, %v9492
      %11018 = vst.msk [vmem:[%s172 + $0x1dc] sm:$0xf] %vm10898, %v9493
      %11019 = vst.msk [vmem:[%s172 + $0x1e0] sm:$0xf] %vm10898, %v9494
      %11020 = vst.msk [vmem:[%s172 + $0x1e4] sm:$0xf] %vm10898, %v9495
      %11021 = vst.msk [vmem:[%s172 + $0x1e8] sm:$0xf] %vm10898, %v9496
      %11022 = vst.msk [vmem:[%s172 + $0x1ec] sm:$0xf] %vm10898, %v9497
      %11023 = vst.msk [vmem:[%s172 + $0x1f0] sm:$0xf] %vm10898, %v9498
      %11024 = vst.msk [vmem:[%s172 + $0x1f4] sm:$0xf] %vm10898, %v9499
      %11025 = vst.msk [vmem:[%s172 + $0x1f8] sm:$0xf] %vm10898, %v9500
      %11026 = vst.msk [vmem:[%s172 + $0x1fc] sm:$0xf] %vm10898, %v9501
      %11027 = vst.msk [vmem:[%s172 + $0x200] sm:$0xf] %vm10898, %v9502
      %11028 = vst.msk [vmem:[%s172 + $0x204] sm:$0xf] %vm10898, %v9503
      %11029 = vst.msk [vmem:[%s172 + $0x208] sm:$0xf] %vm10898, %v9504
      %11030 = vst.msk [vmem:[%s172 + $0x20c] sm:$0xf] %vm10898, %v9505
      %11031 = vst.msk [vmem:[%s172 + $0x210] sm:$0xf] %vm10898, %v9506
      %11032 = vst.msk [vmem:[%s172 + $0x214] sm:$0xf] %vm10898, %v9507
      %11033 = vst.msk [vmem:[%s172 + $0x218] sm:$0xf] %vm10898, %v9508
      %11034 = vst.msk [vmem:[%s172 + $0x21c] sm:$0xf] %vm10898, %v9509
      %11035 = vst.msk [vmem:[%s172 + $0x220] sm:$0xf] %vm10898, %v9510
      %11036 = vst.msk [vmem:[%s172 + $0x224] sm:$0xf] %vm10898, %v9511
      %11037 = vst.msk [vmem:[%s172 + $0x228] sm:$0xf] %vm10898, %v9512
      %11038 = vst.msk [vmem:[%s172 + $0x22c] sm:$0xf] %vm10898, %v9513
      %11039 = vst.msk [vmem:[%s172 + $0x230] sm:$0xf] %vm10898, %v9514
      %11040 = vst.msk [vmem:[%s172 + $0x234] sm:$0xf] %vm10898, %v9515
      %11041 = vst.msk [vmem:[%s172 + $0x238] sm:$0xf] %vm10898, %v9516
      %11042 = vst.msk [vmem:[%s172 + $0x23c] sm:$0xf] %vm10898, %v9517
      %11043 = vst.msk [vmem:[%s172 + $0x240] sm:$0xf] %vm10898, %v9518
      %11044 = vst.msk [vmem:[%s172 + $0x244] sm:$0xf] %vm10898, %v9519
      %11045 = vst.msk [vmem:[%s172 + $0x248] sm:$0xf] %vm10898, %v9520
      %11046 = vst.msk [vmem:[%s172 + $0x24c] sm:$0xf] %vm10898, %v9521
      %11047 = vst.msk [vmem:[%s172 + $0x250] sm:$0xf] %vm10898, %v9522
      %11048 = vst.msk [vmem:[%s172 + $0x254] sm:$0xf] %vm10898, %v9523
      %11049 = vst.msk [vmem:[%s172 + $0x258] sm:$0xf] %vm10898, %v9524
      %11050 = vst.msk [vmem:[%s172 + $0x25c] sm:$0xf] %vm10898, %v9525
      %11051 = vst.msk [vmem:[%s172 + $0x260] sm:$0xf] %vm10898, %v9526
      %11052 = vst.msk [vmem:[%s172 + $0x264] sm:$0xf] %vm10898, %v9527
      %11053 = vst.msk [vmem:[%s172 + $0x268] sm:$0xf] %vm10898, %v9528
      %11054 = vst.msk [vmem:[%s172 + $0x26c] sm:$0xf] %vm10898, %v9529
      %11055 = vst.msk [vmem:[%s172 + $0x270] sm:$0xf] %vm10898, %v9530
      %11056 = vst.msk [vmem:[%s172 + $0x274] sm:$0xf] %vm10898, %v9531
      %11057 = vst.msk [vmem:[%s172 + $0x278] sm:$0xf] %vm10898, %v9532
      %11058 = vst.msk [vmem:[%s172 + $0x27c] sm:$0xf] %vm10898, %v9533
      %11059 = vst.msk [vmem:[%s172 + $0x280] sm:$0xf] %vm10898, %v9534
      %11060 = vst.msk [vmem:[%s172 + $0x284] sm:$0xf] %vm10898, %v9535
      %11061 = vst.msk [vmem:[%s172 + $0x288] sm:$0xf] %vm10898, %v9536
      %11062 = vst.msk [vmem:[%s172 + $0x28c] sm:$0xf] %vm10898, %v9537
      %11063 = vst.msk [vmem:[%s172 + $0x290] sm:$0xf] %vm10898, %v9538
      %11064 = vst.msk [vmem:[%s172 + $0x294] sm:$0xf] %vm10898, %v9539
      %11065 = vst.msk [vmem:[%s172 + $0x298] sm:$0xf] %vm10898, %v9540
      %11066 = vst.msk [vmem:[%s172 + $0x29c] sm:$0xf] %vm10898, %v9541
      %11067 = vst.msk [vmem:[%s172 + $0x2a0] sm:$0xf] %vm10898, %v9542
      %11068 = vst.msk [vmem:[%s172 + $0x2a4] sm:$0xf] %vm10898, %v9543
      %11069 = vst.msk [vmem:[%s172 + $0x2a8] sm:$0xf] %vm10898, %v9544
      %11070 = vst.msk [vmem:[%s172 + $0x2ac] sm:$0xf] %vm10898, %v9545
      %11071 = vst.msk [vmem:[%s172 + $0x2b0] sm:$0xf] %vm10898, %v9546
      %11072 = vst.msk [vmem:[%s172 + $0x2b4] sm:$0xf] %vm10898, %v9547
      %11073 = vst.msk [vmem:[%s172 + $0x2b8] sm:$0xf] %vm10898, %v9548
      %11074 = vst.msk [vmem:[%s172 + $0x2bc] sm:$0xf] %vm10898, %v9549
      %11075 = vst.msk [vmem:[%s172 + $0x2c0] sm:$0xf] %vm10898, %v9550
      %11076 = vst.msk [vmem:[%s172 + $0x2c4] sm:$0xf] %vm10898, %v9551
      %11077 = vst.msk [vmem:[%s172 + $0x2c8] sm:$0xf] %vm10898, %v9552
      %11078 = vst.msk [vmem:[%s172 + $0x2cc] sm:$0xf] %vm10898, %v9553
      %11079 = vst.msk [vmem:[%s172 + $0x2d0] sm:$0xf] %vm10898, %v9554
      %11080 = vst.msk [vmem:[%s172 + $0x2d4] sm:$0xf] %vm10898, %v9555
      %11081 = vst.msk [vmem:[%s172 + $0x2d8] sm:$0xf] %vm10898, %v9556
      %11082 = vst.msk [vmem:[%s172 + $0x2dc] sm:$0xf] %vm10898, %v9557
      %11083 = vst.msk [vmem:[%s172 + $0x2e0] sm:$0xf] %vm10898, %v9558
      %11084 = vst.msk [vmem:[%s172 + $0x2e4] sm:$0xf] %vm10898, %v9559
      %11085 = vst.msk [vmem:[%s172 + $0x2e8] sm:$0xf] %vm10898, %v9560
      %11086 = vst.msk [vmem:[%s172 + $0x2ec] sm:$0xf] %vm10898, %v9561
      %11087 = vst.msk [vmem:[%s172 + $0x2f0] sm:$0xf] %vm10898, %v9562
      %11088 = vst.msk [vmem:[%s172 + $0x2f4] sm:$0xf] %vm10898, %v9563
      %11089 = vst.msk [vmem:[%s172 + $0x2f8] sm:$0xf] %vm10898, %v9564
      %11090 = vst.msk [vmem:[%s172 + $0x2fc] sm:$0xf] %vm10898, %v9565
      %11091 = vst.msk [vmem:[%s172 + $0x300] sm:$0xf] %vm10898, %v9566
      %11092 = vst.msk [vmem:[%s172 + $0x304] sm:$0xf] %vm10898, %v9567
      %11093 = vst.msk [vmem:[%s172 + $0x308] sm:$0xf] %vm10898, %v9568
      %11094 = vst.msk [vmem:[%s172 + $0x30c] sm:$0xf] %vm10898, %v9569
      %11095 = vst.msk [vmem:[%s172 + $0x310] sm:$0xf] %vm10898, %v9570
      %11096 = vst.msk [vmem:[%s172 + $0x314] sm:$0xf] %vm10898, %v9571
      %11097 = vst.msk [vmem:[%s172 + $0x318] sm:$0xf] %vm10898, %v9572
      %11098 = vst.msk [vmem:[%s172 + $0x31c] sm:$0xf] %vm10898, %v9573
      %11099 = vst.msk [vmem:[%s172 + $0x320] sm:$0xf] %vm10898, %v9574
      %11100 = vst.msk [vmem:[%s172 + $0x324] sm:$0xf] %vm10898, %v9575
      %11101 = vst.msk [vmem:[%s172 + $0x328] sm:$0xf] %vm10898, %v9576
      %11102 = vst.msk [vmem:[%s172 + $0x32c] sm:$0xf] %vm10898, %v9577
      %11103 = vst.msk [vmem:[%s172 + $0x330] sm:$0xf] %vm10898, %v9578
      %11104 = vst.msk [vmem:[%s172 + $0x334] sm:$0xf] %vm10898, %v9579
      %11105 = vst.msk [vmem:[%s172 + $0x338] sm:$0xf] %vm10898, %v9580
      %11106 = vst.msk [vmem:[%s172 + $0x33c] sm:$0xf] %vm10898, %v9581
      %11107 = vst.msk [vmem:[%s172 + $0x340] sm:$0xf] %vm10898, %v9582
      %11108 = vst.msk [vmem:[%s172 + $0x344] sm:$0xf] %vm10898, %v9583
      %11109 = vst.msk [vmem:[%s172 + $0x348] sm:$0xf] %vm10898, %v9584
      %11110 = vst.msk [vmem:[%s172 + $0x34c] sm:$0xf] %vm10898, %v9585
      %11111 = vst.msk [vmem:[%s172 + $0x350] sm:$0xf] %vm10898, %v9586
      %11112 = vst.msk [vmem:[%s172 + $0x354] sm:$0xf] %vm10898, %v9587
      %11113 = vst.msk [vmem:[%s172 + $0x358] sm:$0xf] %vm10898, %v9588
      %11114 = vst.msk [vmem:[%s172 + $0x35c] sm:$0xf] %vm10898, %v9589
      %11115 = vst.msk [vmem:[%s172 + $0x360] sm:$0xf] %vm10898, %v9590
      %11116 = vst.msk [vmem:[%s172 + $0x364] sm:$0xf] %vm10898, %v9591
      %11117 = vst.msk [vmem:[%s172 + $0x368] sm:$0xf] %vm10898, %v9592
      %11118 = vst.msk [vmem:[%s172 + $0x36c] sm:$0xf] %vm10898, %v9593
      %11119 = vst.msk [vmem:[%s172 + $0x370] sm:$0xf] %vm10898, %v9594
      %11120 = vst.msk [vmem:[%s172 + $0x374] sm:$0xf] %vm10898, %v9595
      %11121 = vst.msk [vmem:[%s172 + $0x378] sm:$0xf] %vm10898, %v9596
      %11122 = vst.msk [vmem:[%s172 + $0x37c] sm:$0xf] %vm10898, %v9597
      %11123 = vst.msk [vmem:[%s172 + $0x380] sm:$0xf] %vm10898, %v9598
      %11124 = vst.msk [vmem:[%s172 + $0x384] sm:$0xf] %vm10898, %v9599
      %11125 = vst.msk [vmem:[%s172 + $0x388] sm:$0xf] %vm10898, %v9600
      %11126 = vst.msk [vmem:[%s172 + $0x38c] sm:$0xf] %vm10898, %v9601
      %11127 = vst.msk [vmem:[%s172 + $0x390] sm:$0xf] %vm10898, %v9602
      %11128 = vst.msk [vmem:[%s172 + $0x394] sm:$0xf] %vm10898, %v9603
      %11129 = vst.msk [vmem:[%s172 + $0x398] sm:$0xf] %vm10898, %v9604
      %11130 = vst.msk [vmem:[%s172 + $0x39c] sm:$0xf] %vm10898, %v9605
      %11131 = vst.msk [vmem:[%s172 + $0x3a0] sm:$0xf] %vm10898, %v9606
      %11132 = vst.msk [vmem:[%s172 + $0x3a4] sm:$0xf] %vm10898, %v9607
      %11133 = vst.msk [vmem:[%s172 + $0x3a8] sm:$0xf] %vm10898, %v9608
      %11134 = vst.msk [vmem:[%s172 + $0x3ac] sm:$0xf] %vm10898, %v9609
      %11135 = vst.msk [vmem:[%s172 + $0x3b0] sm:$0xf] %vm10898, %v9610
      %11136 = vst.msk [vmem:[%s172 + $0x3b4] sm:$0xf] %vm10898, %v9611
      %11137 = vst.msk [vmem:[%s172 + $0x3b8] sm:$0xf] %vm10898, %v9612
      %11138 = vst.msk [vmem:[%s172 + $0x3bc] sm:$0xf] %vm10898, %v9613
      %11139 = vst.msk [vmem:[%s172 + $0x3c0] sm:$0xf] %vm10898, %v9614
      %11140 = vst.msk [vmem:[%s172 + $0x3c4] sm:$0xf] %vm10898, %v9615
      %11141 = vst.msk [vmem:[%s172 + $0x3c8] sm:$0xf] %vm10898, %v9616
      %11142 = vst.msk [vmem:[%s172 + $0x3cc] sm:$0xf] %vm10898, %v9617
      %11143 = vst.msk [vmem:[%s172 + $0x3d0] sm:$0xf] %vm10898, %v9618
      %11144 = vst.msk [vmem:[%s172 + $0x3d4] sm:$0xf] %vm10898, %v9619
      %11145 = vst.msk [vmem:[%s172 + $0x3d8] sm:$0xf] %vm10898, %v9620
      %11146 = vst.msk [vmem:[%s172 + $0x3dc] sm:$0xf] %vm10898, %v9621
      %11147 = vst.msk [vmem:[%s172 + $0x3e0] sm:$0xf] %vm10898, %v9622
      %11148 = vst.msk [vmem:[%s172 + $0x3e4] sm:$0xf] %vm10898, %v9623
      %11149 = vst.msk [vmem:[%s172 + $0x3e8] sm:$0xf] %vm10898, %v9624
      %11150 = vst.msk [vmem:[%s172 + $0x3ec] sm:$0xf] %vm10898, %v9625
      %11151 = vst.msk [vmem:[%s172 + $0x3f0] sm:$0xf] %vm10898, %v9626
      %11152 = vst.msk [vmem:[%s172 + $0x3f4] sm:$0xf] %vm10898, %v9627
      %11153 = vst.msk [vmem:[%s172 + $0x3f8] sm:$0xf] %vm10898, %v9628
      %11154 = vst.msk [vmem:[%s172 + $0x3fc] sm:$0xf] %vm10898, %v9629
      %11155 = vst.msk [vmem:[%s172 + $0x400] sm:$0xf] %vm10898, %v9630
      %11156 = vst.msk [vmem:[%s172 + $0x404] sm:$0xf] %vm10898, %v9631
      %11157 = vst.msk [vmem:[%s172 + $0x408] sm:$0xf] %vm10898, %v9632
      %11158 = vst.msk [vmem:[%s172 + $0x40c] sm:$0xf] %vm10898, %v9633
      %11159 = vst.msk [vmem:[%s172 + $0x410] sm:$0xf] %vm10898, %v9634
      %11160 = vst.msk [vmem:[%s172 + $0x414] sm:$0xf] %vm10898, %v9635
      %11161 = vst.msk [vmem:[%s172 + $0x418] sm:$0xf] %vm10898, %v9636
      %11162 = vst.msk [vmem:[%s172 + $0x41c] sm:$0xf] %vm10898, %v9637
      %11163 = vst.msk [vmem:[%s172 + $0x420] sm:$0xf] %vm10898, %v9638
      %11164 = vst.msk [vmem:[%s172 + $0x424] sm:$0xf] %vm10898, %v9639
      %11165 = vst.msk [vmem:[%s172 + $0x428] sm:$0xf] %vm10898, %v9640
      %11166 = vst.msk [vmem:[%s172 + $0x42c] sm:$0xf] %vm10898, %v9641
      %11167 = vst.msk [vmem:[%s172 + $0x430] sm:$0xf] %vm10898, %v9642
      %11168 = vst.msk [vmem:[%s172 + $0x434] sm:$0xf] %vm10898, %v9643
      %11169 = vst.msk [vmem:[%s172 + $0x438] sm:$0xf] %vm10898, %v9644
      %11170 = vst.msk [vmem:[%s172 + $0x43c] sm:$0xf] %vm10898, %v9645
      %11171 = vst.msk [vmem:[%s172 + $0x440] sm:$0xf] %vm10898, %v9646
      %11172 = vst.msk [vmem:[%s172 + $0x444] sm:$0xf] %vm10898, %v9647
      %11173 = vst.msk [vmem:[%s172 + $0x448] sm:$0xf] %vm10898, %v9648
      %11174 = vst.msk [vmem:[%s172 + $0x44c] sm:$0xf] %vm10898, %v9649
      %11175 = vst.msk [vmem:[%s172 + $0x450] sm:$0xf] %vm10898, %v9650
      %11176 = vst.msk [vmem:[%s172 + $0x454] sm:$0xf] %vm10898, %v9651
      %11177 = vst.msk [vmem:[%s172 + $0x458] sm:$0xf] %vm10898, %v9652
      %11178 = vst.msk [vmem:[%s172 + $0x45c] sm:$0xf] %vm10898, %v9653
      %11179 = vst.msk [vmem:[%s172 + $0x460] sm:$0xf] %vm10898, %v9654
      %11180 = vst.msk [vmem:[%s172 + $0x464] sm:$0xf] %vm10898, %v9655
      %11181 = vst.msk [vmem:[%s172 + $0x468] sm:$0xf] %vm10898, %v9656
      %11182 = vst.msk [vmem:[%s172 + $0x46c] sm:$0xf] %vm10898, %v9657
      %11183 = vst.msk [vmem:[%s172 + $0x470] sm:$0xf] %vm10898, %v9658
      %11184 = vst.msk [vmem:[%s172 + $0x474] sm:$0xf] %vm10898, %v9659
      %11185 = vst.msk [vmem:[%s172 + $0x478] sm:$0xf] %vm10898, %v9660
      %11186 = vst.msk [vmem:[%s172 + $0x47c] sm:$0xf] %vm10898, %v9661
      %11187 = vst.msk [vmem:[%s172 + $0x480] sm:$0xf] %vm10898, %v9662
      %11188 = vst.msk [vmem:[%s172 + $0x484] sm:$0xf] %vm10898, %v9663
      %11189 = vst.msk [vmem:[%s172 + $0x488] sm:$0xf] %vm10898, %v9664
      %11190 = vst.msk [vmem:[%s172 + $0x48c] sm:$0xf] %vm10898, %v9665
      %11191 = vst.msk [vmem:[%s172 + $0x490] sm:$0xf] %vm10898, %v9666
      %11192 = vst.msk [vmem:[%s172 + $0x494] sm:$0xf] %vm10898, %v9667
      %11193 = vst.msk [vmem:[%s172 + $0x498] sm:$0xf] %vm10898, %v9668
      %11194 = vst.msk [vmem:[%s172 + $0x49c] sm:$0xf] %vm10898, %v9669
      %11195 = vst.msk [vmem:[%s172 + $0x4a0] sm:$0xf] %vm10898, %v9670
      %11196 = vst.msk [vmem:[%s172 + $0x4a4] sm:$0xf] %vm10898, %v9671
      %11197 = vst.msk [vmem:[%s172 + $0x4a8] sm:$0xf] %vm10898, %v9672
      %11198 = vst.msk [vmem:[%s172 + $0x4ac] sm:$0xf] %vm10898, %v9673
      %11199 = vst.msk [vmem:[%s172 + $0x4b0] sm:$0xf] %vm10898, %v9674
      %11200 = vst.msk [vmem:[%s172 + $0x4b4] sm:$0xf] %vm10898, %v9675
      %11201 = vst.msk [vmem:[%s172 + $0x4b8] sm:$0xf] %vm10898, %v9676
      %11202 = vst.msk [vmem:[%s172 + $0x4bc] sm:$0xf] %vm10898, %v9677
      %11203 = vst.msk [vmem:[%s172 + $0x4c0] sm:$0xf] %vm10898, %v9678
      %11204 = vst.msk [vmem:[%s172 + $0x4c4] sm:$0xf] %vm10898, %v9679
      %11205 = vst.msk [vmem:[%s172 + $0x4c8] sm:$0xf] %vm10898, %v9680
      %11206 = vst.msk [vmem:[%s172 + $0x4cc] sm:$0xf] %vm10898, %v9681
      %11207 = vst.msk [vmem:[%s172 + $0x4d0] sm:$0xf] %vm10898, %v9682
      %11208 = vst.msk [vmem:[%s172 + $0x4d4] sm:$0xf] %vm10898, %v9683
      %11209 = vst.msk [vmem:[%s172 + $0x4d8] sm:$0xf] %vm10898, %v9684
      %11210 = vst.msk [vmem:[%s172 + $0x4dc] sm:$0xf] %vm10898, %v9685
      %11211 = vst.msk [vmem:[%s172 + $0x4e0] sm:$0xf] %vm10898, %v9686
      %11212 = vst.msk [vmem:[%s172 + $0x4e4] sm:$0xf] %vm10898, %v9687
      %11213 = vst.msk [vmem:[%s172 + $0x4e8] sm:$0xf] %vm10898, %v9688
      %11214 = vst.msk [vmem:[%s172 + $0x4ec] sm:$0xf] %vm10898, %v9689
      %11215 = vst.msk [vmem:[%s172 + $0x4f0] sm:$0xf] %vm10898, %v9690
      %11216 = vst.msk [vmem:[%s172 + $0x4f4] sm:$0xf] %vm10898, %v9691
      %11217 = vst.msk [vmem:[%s172 + $0x4f8] sm:$0xf] %vm10898, %v9692
      %11218 = vst.msk [vmem:[%s172 + $0x4fc] sm:$0xf] %vm10898, %v9693
      %11219 = vst.msk [vmem:[%s172 + $0x500] sm:$0xf] %vm10898, %v9694
      %11220 = vst.msk [vmem:[%s172 + $0x504] sm:$0xf] %vm10898, %v9695
      %11221 = vst.msk [vmem:[%s172 + $0x508] sm:$0xf] %vm10898, %v9696
      %11222 = vst.msk [vmem:[%s172 + $0x50c] sm:$0xf] %vm10898, %v9697
      %11223 = vst.msk [vmem:[%s172 + $0x510] sm:$0xf] %vm10898, %v9698
      %11224 = vst.msk [vmem:[%s172 + $0x514] sm:$0xf] %vm10898, %v9699
      %11225 = vst.msk [vmem:[%s172 + $0x518] sm:$0xf] %vm10898, %v9700
      %11226 = vst.msk [vmem:[%s172 + $0x51c] sm:$0xf] %vm10898, %v9701
      %11227 = vst.msk [vmem:[%s172 + $0x520] sm:$0xf] %vm10898, %v9702
      %11228 = vst.msk [vmem:[%s172 + $0x524] sm:$0xf] %vm10898, %v9703
      %11229 = vst.msk [vmem:[%s172 + $0x528] sm:$0xf] %vm10898, %v9704
      %11230 = vst.msk [vmem:[%s172 + $0x52c] sm:$0xf] %vm10898, %v9705
      %11231 = vst.msk [vmem:[%s172 + $0x530] sm:$0xf] %vm10898, %v9706
      %11232 = vst.msk [vmem:[%s172 + $0x534] sm:$0xf] %vm10898, %v9707
      %11233 = vst.msk [vmem:[%s172 + $0x538] sm:$0xf] %vm10898, %v9708
      %11234 = vst.msk [vmem:[%s172 + $0x53c] sm:$0xf] %vm10898, %v9709
      %11235 = vst.msk [vmem:[%s172 + $0x540] sm:$0xf] %vm10898, %v9710
      %11236 = vst.msk [vmem:[%s172 + $0x544] sm:$0xf] %vm10898, %v9711
      %11237 = vst.msk [vmem:[%s172 + $0x548] sm:$0xf] %vm10898, %v9712
      %11238 = vst.msk [vmem:[%s172 + $0x54c] sm:$0xf] %vm10898, %v9713
      %11239 = vst.msk [vmem:[%s172 + $0x550] sm:$0xf] %vm10898, %v9714
      %11240 = vst.msk [vmem:[%s172 + $0x554] sm:$0xf] %vm10898, %v9715
      %11241 = vst.msk [vmem:[%s172 + $0x558] sm:$0xf] %vm10898, %v9716
      %11242 = vst.msk [vmem:[%s172 + $0x55c] sm:$0xf] %vm10898, %v9717
      %11243 = vst.msk [vmem:[%s172 + $0x560] sm:$0xf] %vm10898, %v9718
      %11244 = vst.msk [vmem:[%s172 + $0x564] sm:$0xf] %vm10898, %v9719
      %11245 = vst.msk [vmem:[%s172 + $0x568] sm:$0xf] %vm10898, %v9720
      %11246 = vst.msk [vmem:[%s172 + $0x56c] sm:$0xf] %vm10898, %v9721
      %11247 = vst.msk [vmem:[%s172 + $0x570] sm:$0xf] %vm10898, %v9722
      %11248 = vst.msk [vmem:[%s172 + $0x574] sm:$0xf] %vm10898, %v9723
      %11249 = vst.msk [vmem:[%s172 + $0x578] sm:$0xf] %vm10898, %v9724
      %11250 = vst.msk [vmem:[%s172 + $0x57c] sm:$0xf] %vm10898, %v9725
      %11251 = vst.msk [vmem:[%s172 + $0x580] sm:$0xf] %vm10898, %v9726
      %11252 = vst.msk [vmem:[%s172 + $0x584] sm:$0xf] %vm10898, %v9727
      %11253 = vst.msk [vmem:[%s172 + $0x588] sm:$0xf] %vm10898, %v9728
      %11254 = vst.msk [vmem:[%s172 + $0x58c] sm:$0xf] %vm10898, %v9729
      %11255 = vst.msk [vmem:[%s172 + $0x590] sm:$0xf] %vm10898, %v9730
      %11256 = vst.msk [vmem:[%s172 + $0x594] sm:$0xf] %vm10898, %v9731
      %11257 = vst.msk [vmem:[%s172 + $0x598] sm:$0xf] %vm10898, %v9732
      %11258 = vst.msk [vmem:[%s172 + $0x59c] sm:$0xf] %vm10898, %v9733
      %11259 = vst.msk [vmem:[%s172 + $0x5a0] sm:$0xf] %vm10898, %v9734
      %11260 = vst.msk [vmem:[%s172 + $0x5a4] sm:$0xf] %vm10898, %v9735
      %11261 = vst.msk [vmem:[%s172 + $0x5a8] sm:$0xf] %vm10898, %v9736
      %11262 = vst.msk [vmem:[%s172 + $0x5ac] sm:$0xf] %vm10898, %v9737
      %11263 = vst.msk [vmem:[%s172 + $0x5b0] sm:$0xf] %vm10898, %v9738
      %11264 = vst.msk [vmem:[%s172 + $0x5b4] sm:$0xf] %vm10898, %v9739
      %11265 = vst.msk [vmem:[%s172 + $0x5b8] sm:$0xf] %vm10898, %v9740
      %11266 = vst.msk [vmem:[%s172 + $0x5bc] sm:$0xf] %vm10898, %v9741
      %11267 = vst.msk [vmem:[%s172 + $0x5c0] sm:$0xf] %vm10898, %v9742
      %11268 = vst.msk [vmem:[%s172 + $0x5c4] sm:$0xf] %vm10898, %v9743
      %11269 = vst.msk [vmem:[%s172 + $0x5c8] sm:$0xf] %vm10898, %v9744
      %11270 = vst.msk [vmem:[%s172 + $0x5cc] sm:$0xf] %vm10898, %v9745
      %11271 = vst.msk [vmem:[%s172 + $0x5d0] sm:$0xf] %vm10898, %v9746
      %11272 = vst.msk [vmem:[%s172 + $0x5d4] sm:$0xf] %vm10898, %v9747
      %11273 = vst.msk [vmem:[%s172 + $0x5d8] sm:$0xf] %vm10898, %v9748
      %11274 = vst.msk [vmem:[%s172 + $0x5dc] sm:$0xf] %vm10898, %v9749
      %11275 = vst.msk [vmem:[%s172 + $0x5e0] sm:$0xf] %vm10898, %v9750
      %11276 = vst.msk [vmem:[%s172 + $0x5e4] sm:$0xf] %vm10898, %v9751
      %11277 = vst.msk [vmem:[%s172 + $0x5e8] sm:$0xf] %vm10898, %v9752
      %11278 = vst.msk [vmem:[%s172 + $0x5ec] sm:$0xf] %vm10898, %v9753
      %11279 = vst.msk [vmem:[%s172 + $0x5f0] sm:$0xf] %vm10898, %v9754
      %11280 = vst.msk [vmem:[%s172 + $0x5f4] sm:$0xf] %vm10898, %v9755
      %11281 = vst.msk [vmem:[%s172 + $0x5f8] sm:$0xf] %vm10898, %v9756
      %11282 = vst.msk [vmem:[%s172 + $0x5fc] sm:$0xf] %vm10898, %v9757
      %11283 = vst.msk [vmem:[%s172 + $0x600] sm:$0xf] %vm10898, %v9758
      %11284 = vst.msk [vmem:[%s172 + $0x604] sm:$0xf] %vm10898, %v9759
      %11285 = vst.msk [vmem:[%s172 + $0x608] sm:$0xf] %vm10898, %v9760
      %11286 = vst.msk [vmem:[%s172 + $0x60c] sm:$0xf] %vm10898, %v9761
      %11287 = vst.msk [vmem:[%s172 + $0x610] sm:$0xf] %vm10898, %v9762
      %11288 = vst.msk [vmem:[%s172 + $0x614] sm:$0xf] %vm10898, %v9763
      %11289 = vst.msk [vmem:[%s172 + $0x618] sm:$0xf] %vm10898, %v9764
      %11290 = vst.msk [vmem:[%s172 + $0x61c] sm:$0xf] %vm10898, %v9765
      %11291 = vst.msk [vmem:[%s172 + $0x620] sm:$0xf] %vm10898, %v9766
      %11292 = vst.msk [vmem:[%s172 + $0x624] sm:$0xf] %vm10898, %v9767
      %11293 = vst.msk [vmem:[%s172 + $0x628] sm:$0xf] %vm10898, %v9768
      %11294 = vst.msk [vmem:[%s172 + $0x62c] sm:$0xf] %vm10898, %v9769
      %11295 = vst.msk [vmem:[%s172 + $0x630] sm:$0xf] %vm10898, %v9770
      %11296 = vst.msk [vmem:[%s172 + $0x634] sm:$0xf] %vm10898, %v9771
      %11297 = vst.msk [vmem:[%s172 + $0x638] sm:$0xf] %vm10898, %v9772
      %11298 = vst.msk [vmem:[%s172 + $0x63c] sm:$0xf] %vm10898, %v9773
      %11299 = vst.msk [vmem:[%s172 + $0x640] sm:$0xf] %vm10898, %v9774
      %11300 = vst.msk [vmem:[%s172 + $0x644] sm:$0xf] %vm10898, %v9775
      %11301 = vst.msk [vmem:[%s172 + $0x648] sm:$0xf] %vm10898, %v9776
      %11302 = vst.msk [vmem:[%s172 + $0x64c] sm:$0xf] %vm10898, %v9777
      %11303 = vst.msk [vmem:[%s172 + $0x650] sm:$0xf] %vm10898, %v9778
      %11304 = vst.msk [vmem:[%s172 + $0x654] sm:$0xf] %vm10898, %v9779
      %11305 = vst.msk [vmem:[%s172 + $0x658] sm:$0xf] %vm10898, %v9780
      %11306 = vst.msk [vmem:[%s172 + $0x65c] sm:$0xf] %vm10898, %v9781
      %11307 = vst.msk [vmem:[%s172 + $0x660] sm:$0xf] %vm10898, %v9782
      %11308 = vst.msk [vmem:[%s172 + $0x664] sm:$0xf] %vm10898, %v9783
      %11309 = vst.msk [vmem:[%s172 + $0x668] sm:$0xf] %vm10898, %v9784
      %11310 = vst.msk [vmem:[%s172 + $0x66c] sm:$0xf] %vm10898, %v9785
      %11311 = vst.msk [vmem:[%s172 + $0x670] sm:$0xf] %vm10898, %v9786
      %11312 = vst.msk [vmem:[%s172 + $0x674] sm:$0xf] %vm10898, %v9787
      %11313 = vst.msk [vmem:[%s172 + $0x678] sm:$0xf] %vm10898, %v9788
      %11314 = vst.msk [vmem:[%s172 + $0x67c] sm:$0xf] %vm10898, %v9789
      %11315 = vst.msk [vmem:[%s172 + $0x680] sm:$0xf] %vm10898, %v9790
      %11316 = vst.msk [vmem:[%s172 + $0x684] sm:$0xf] %vm10898, %v9791
      %11317 = vst.msk [vmem:[%s172 + $0x688] sm:$0xf] %vm10898, %v9792
      %11318 = vst.msk [vmem:[%s172 + $0x68c] sm:$0xf] %vm10898, %v9793
      %11319 = vst.msk [vmem:[%s172 + $0x690] sm:$0xf] %vm10898, %v9794
      %11320 = vst.msk [vmem:[%s172 + $0x694] sm:$0xf] %vm10898, %v9795
      %11321 = vst.msk [vmem:[%s172 + $0x698] sm:$0xf] %vm10898, %v9796
      %11322 = vst.msk [vmem:[%s172 + $0x69c] sm:$0xf] %vm10898, %v9797
      %11323 = vst.msk [vmem:[%s172 + $0x6a0] sm:$0xf] %vm10898, %v9798
      %11324 = vst.msk [vmem:[%s172 + $0x6a4] sm:$0xf] %vm10898, %v9799
      %11325 = vst.msk [vmem:[%s172 + $0x6a8] sm:$0xf] %vm10898, %v9800
      %11326 = vst.msk [vmem:[%s172 + $0x6ac] sm:$0xf] %vm10898, %v9801
      %11327 = vst.msk [vmem:[%s172 + $0x6b0] sm:$0xf] %vm10898, %v9802
      %11328 = vst.msk [vmem:[%s172 + $0x6b4] sm:$0xf] %vm10898, %v9803
      %11329 = vst.msk [vmem:[%s172 + $0x6b8] sm:$0xf] %vm10898, %v9804
      %11330 = vst.msk [vmem:[%s172 + $0x6bc] sm:$0xf] %vm10898, %v9805
      %11331 = vst.msk [vmem:[%s172 + $0x6c0] sm:$0xf] %vm10898, %v9806
      %11332 = vst.msk [vmem:[%s172 + $0x6c4] sm:$0xf] %vm10898, %v9807
      %11333 = vst.msk [vmem:[%s172 + $0x6c8] sm:$0xf] %vm10898, %v9808
      %11334 = vst.msk [vmem:[%s172 + $0x6cc] sm:$0xf] %vm10898, %v9809
      %11335 = vst.msk [vmem:[%s172 + $0x6d0] sm:$0xf] %vm10898, %v9810
      %11336 = vst.msk [vmem:[%s172 + $0x6d4] sm:$0xf] %vm10898, %v9811
      %11337 = vst.msk [vmem:[%s172 + $0x6d8] sm:$0xf] %vm10898, %v9812
      %11338 = vst.msk [vmem:[%s172 + $0x6dc] sm:$0xf] %vm10898, %v9813
      %11339 = vst.msk [vmem:[%s172 + $0x6e0] sm:$0xf] %vm10898, %v9814
      %11340 = vst.msk [vmem:[%s172 + $0x6e4] sm:$0xf] %vm10898, %v9815
      %11341 = vst.msk [vmem:[%s172 + $0x6e8] sm:$0xf] %vm10898, %v9816
      %11342 = vst.msk [vmem:[%s172 + $0x6ec] sm:$0xf] %vm10898, %v9817
      %11343 = vst.msk [vmem:[%s172 + $0x6f0] sm:$0xf] %vm10898, %v9818
      %11344 = vst.msk [vmem:[%s172 + $0x6f4] sm:$0xf] %vm10898, %v9819
      %11345 = vst.msk [vmem:[%s172 + $0x6f8] sm:$0xf] %vm10898, %v9820
      %11346 = vst.msk [vmem:[%s172 + $0x6fc] sm:$0xf] %vm10898, %v9821
      %11347 = vst.msk [vmem:[%s172 + $0x700] sm:$0xf] %vm10898, %v9822
      %11348 = vst.msk [vmem:[%s172 + $0x704] sm:$0xf] %vm10898, %v9823
      %11349 = vst.msk [vmem:[%s172 + $0x708] sm:$0xf] %vm10898, %v9824
      %11350 = vst.msk [vmem:[%s172 + $0x70c] sm:$0xf] %vm10898, %v9825
      %11351 = vst.msk [vmem:[%s172 + $0x710] sm:$0xf] %vm10898, %v9826
      %11352 = vst.msk [vmem:[%s172 + $0x714] sm:$0xf] %vm10898, %v9827
      %11353 = vst.msk [vmem:[%s172 + $0x718] sm:$0xf] %vm10898, %v9828
      %11354 = vst.msk [vmem:[%s172 + $0x71c] sm:$0xf] %vm10898, %v9829
      %11355 = vst.msk [vmem:[%s172 + $0x720] sm:$0xf] %vm10898, %v9830
      %11356 = vst.msk [vmem:[%s172 + $0x724] sm:$0xf] %vm10898, %v9831
      %11357 = vst.msk [vmem:[%s172 + $0x728] sm:$0xf] %vm10898, %v9832
      %11358 = vst.msk [vmem:[%s172 + $0x72c] sm:$0xf] %vm10898, %v9833
      %11359 = vst.msk [vmem:[%s172 + $0x730] sm:$0xf] %vm10898, %v9834
      %11360 = vst.msk [vmem:[%s172 + $0x734] sm:$0xf] %vm10898, %v9835
      %11361 = vst.msk [vmem:[%s172 + $0x738] sm:$0xf] %vm10898, %v9836
      %11362 = vst.msk [vmem:[%s172 + $0x73c] sm:$0xf] %vm10898, %v9837
      %11363 = vst.msk [vmem:[%s172 + $0x740] sm:$0xf] %vm10898, %v9838
      %11364 = vst.msk [vmem:[%s172 + $0x744] sm:$0xf] %vm10898, %v9839
      %11365 = vst.msk [vmem:[%s172 + $0x748] sm:$0xf] %vm10898, %v9840
      %11366 = vst.msk [vmem:[%s172 + $0x74c] sm:$0xf] %vm10898, %v9841
      %11367 = vst.msk [vmem:[%s172 + $0x750] sm:$0xf] %vm10898, %v9842
      %11368 = vst.msk [vmem:[%s172 + $0x754] sm:$0xf] %vm10898, %v9843
      %11369 = vst.msk [vmem:[%s172 + $0x758] sm:$0xf] %vm10898, %v9844
      %11370 = vst.msk [vmem:[%s172 + $0x75c] sm:$0xf] %vm10898, %v9845
      %11371 = vst.msk [vmem:[%s172 + $0x760] sm:$0xf] %vm10898, %v9846
      %11372 = vst.msk [vmem:[%s172 + $0x764] sm:$0xf] %vm10898, %v9847
      %11373 = vst.msk [vmem:[%s172 + $0x768] sm:$0xf] %vm10898, %v9848
      %11374 = vst.msk [vmem:[%s172 + $0x76c] sm:$0xf] %vm10898, %v9849
      %11375 = vst.msk [vmem:[%s172 + $0x770] sm:$0xf] %vm10898, %v9850
      %11376 = vst.msk [vmem:[%s172 + $0x774] sm:$0xf] %vm10898, %v9851
      %11377 = vst.msk [vmem:[%s172 + $0x778] sm:$0xf] %vm10898, %v9852
      %11378 = vst.msk [vmem:[%s172 + $0x77c] sm:$0xf] %vm10898, %v9853
      %11379 = vst.msk [vmem:[%s172 + $0x780] sm:$0xf] %vm10898, %v9854
      %11380 = vst.msk [vmem:[%s172 + $0x784] sm:$0xf] %vm10898, %v9855
      %11381 = vst.msk [vmem:[%s172 + $0x788] sm:$0xf] %vm10898, %v9856
      %11382 = vst.msk [vmem:[%s172 + $0x78c] sm:$0xf] %vm10898, %v9857
      %11383 = vst.msk [vmem:[%s172 + $0x790] sm:$0xf] %vm10898, %v9858
      %11384 = vst.msk [vmem:[%s172 + $0x794] sm:$0xf] %vm10898, %v9859
      %11385 = vst.msk [vmem:[%s172 + $0x798] sm:$0xf] %vm10898, %v9860
      %11386 = vst.msk [vmem:[%s172 + $0x79c] sm:$0xf] %vm10898, %v9861
      %11387 = vst.msk [vmem:[%s172 + $0x7a0] sm:$0xf] %vm10898, %v9862
      %11388 = vst.msk [vmem:[%s172 + $0x7a4] sm:$0xf] %vm10898, %v9863
      %11389 = vst.msk [vmem:[%s172 + $0x7a8] sm:$0xf] %vm10898, %v9864
      %11390 = vst.msk [vmem:[%s172 + $0x7ac] sm:$0xf] %vm10898, %v9865
      %11391 = vst.msk [vmem:[%s172 + $0x7b0] sm:$0xf] %vm10898, %v9866
      %11392 = vst.msk [vmem:[%s172 + $0x7b4] sm:$0xf] %vm10898, %v9867
      %11393 = vst.msk [vmem:[%s172 + $0x7b8] sm:$0xf] %vm10898, %v9868
      %11394 = vst.msk [vmem:[%s172 + $0x7bc] sm:$0xf] %vm10898, %v9869
      %11395 = vst.msk [vmem:[%s172 + $0x7c0] sm:$0xf] %vm10898, %v9870
      %11396 = vst.msk [vmem:[%s172 + $0x7c4] sm:$0xf] %vm10898, %v9871
      %11397 = vst.msk [vmem:[%s172 + $0x7c8] sm:$0xf] %vm10898, %v9872
      %11398 = vst.msk [vmem:[%s172 + $0x7cc] sm:$0xf] %vm10898, %v9873
      %11399 = vst.msk [vmem:[%s172 + $0x7d0] sm:$0xf] %vm10898, %v9874
      %11400 = vst.msk [vmem:[%s172 + $0x7d4] sm:$0xf] %vm10898, %v9875
      %11401 = vst.msk [vmem:[%s172 + $0x7d8] sm:$0xf] %vm10898, %v9876
      %11402 = vst.msk [vmem:[%s172 + $0x7dc] sm:$0xf] %vm10898, %v9877
      %11403 = vst.msk [vmem:[%s172 + $0x7e0] sm:$0xf] %vm10898, %v9878
      %11404 = vst.msk [vmem:[%s172 + $0x7e4] sm:$0xf] %vm10898, %v9879
      %11405 = vst.msk [vmem:[%s172 + $0x7e8] sm:$0xf] %vm10898, %v9880
      %11406 = vst.msk [vmem:[%s172 + $0x7ec] sm:$0xf] %vm10898, %v9881
      %11407 = vst.msk [vmem:[%s172 + $0x7f0] sm:$0xf] %vm10898, %v9882
      %11408 = vst.msk [vmem:[%s172 + $0x7f4] sm:$0xf] %vm10898, %v9883
      %11409 = vst.msk [vmem:[%s172 + $0x7f8] sm:$0xf] %vm10898, %v9884
      %11410 = vst.msk [vmem:[%s172 + $0x7fc] sm:$0xf] %vm10898, %v9885
      %11411 = vst.msk [vmem:[%s172 + $0x800] sm:$0xf] %vm10898, %v9886
      %11412 = vst.msk [vmem:[%s172 + $0x804] sm:$0xf] %vm10898, %v9887
      %11413 = vst.msk [vmem:[%s172 + $0x808] sm:$0xf] %vm10898, %v9888
      %11414 = vst.msk [vmem:[%s172 + $0x80c] sm:$0xf] %vm10898, %v9889
      %11415 = vst.msk [vmem:[%s172 + $0x810] sm:$0xf] %vm10898, %v9890
      %11416 = vst.msk [vmem:[%s172 + $0x814] sm:$0xf] %vm10898, %v9891
      %11417 = vst.msk [vmem:[%s172 + $0x818] sm:$0xf] %vm10898, %v9892
      %11418 = vst.msk [vmem:[%s172 + $0x81c] sm:$0xf] %vm10898, %v9893
      %11419 = vst.msk [vmem:[%s172 + $0x820] sm:$0xf] %vm10898, %v9894
      %11420 = vst.msk [vmem:[%s172 + $0x824] sm:$0xf] %vm10898, %v9895
      %11421 = vst.msk [vmem:[%s172 + $0x828] sm:$0xf] %vm10898, %v9896
      %11422 = vst.msk [vmem:[%s172 + $0x82c] sm:$0xf] %vm10898, %v9897
      %11423 = vst.msk [vmem:[%s172 + $0x830] sm:$0xf] %vm10898, %v9898
      %11424 = vst.msk [vmem:[%s172 + $0x834] sm:$0xf] %vm10898, %v9899
      %11425 = vst.msk [vmem:[%s172 + $0x838] sm:$0xf] %vm10898, %v9900
      %11426 = vst.msk [vmem:[%s172 + $0x83c] sm:$0xf] %vm10898, %v9901
      %11427 = vst.msk [vmem:[%s172 + $0x840] sm:$0xf] %vm10898, %v9902
      %11428 = vst.msk [vmem:[%s172 + $0x844] sm:$0xf] %vm10898, %v9903
      %11429 = vst.msk [vmem:[%s172 + $0x848] sm:$0xf] %vm10898, %v9904
      %11430 = vst.msk [vmem:[%s172 + $0x84c] sm:$0xf] %vm10898, %v9905
      %11431 = vst.msk [vmem:[%s172 + $0x850] sm:$0xf] %vm10898, %v9906
      %11432 = vst.msk [vmem:[%s172 + $0x854] sm:$0xf] %vm10898, %v9907
      %11433 = vst.msk [vmem:[%s172 + $0x858] sm:$0xf] %vm10898, %v9908
      %11434 = vst.msk [vmem:[%s172 + $0x85c] sm:$0xf] %vm10898, %v9909
      %11435 = vst.msk [vmem:[%s172 + $0x860] sm:$0xf] %vm10898, %v9910
      %11436 = vst.msk [vmem:[%s172 + $0x864] sm:$0xf] %vm10898, %v9911
      %11437 = vst.msk [vmem:[%s172 + $0x868] sm:$0xf] %vm10898, %v9912
      %11438 = vst.msk [vmem:[%s172 + $0x86c] sm:$0xf] %vm10898, %v9913
      %11439 = vst.msk [vmem:[%s172 + $0x870] sm:$0xf] %vm10898, %v9914
      %11440 = vst.msk [vmem:[%s172 + $0x874] sm:$0xf] %vm10898, %v9915
      %11441 = vst.msk [vmem:[%s172 + $0x878] sm:$0xf] %vm10898, %v9916
      %11442 = vst.msk [vmem:[%s172 + $0x87c] sm:$0xf] %vm10898, %v9917
      %11443 = vst.msk [vmem:[%s172 + $0x880] sm:$0xf] %vm10898, %v9918
      %11444 = vst.msk [vmem:[%s172 + $0x884] sm:$0xf] %vm10898, %v9919
      %11445 = vst.msk [vmem:[%s172 + $0x888] sm:$0xf] %vm10898, %v9920
      %11446 = vst.msk [vmem:[%s172 + $0x88c] sm:$0xf] %vm10898, %v9921
      %11447 = vst.msk [vmem:[%s172 + $0x890] sm:$0xf] %vm10898, %v9922
      %11448 = vst.msk [vmem:[%s172 + $0x894] sm:$0xf] %vm10898, %v9923
      %11449 = vst.msk [vmem:[%s172 + $0x898] sm:$0xf] %vm10898, %v9924
      %11450 = vst.msk [vmem:[%s172 + $0x89c] sm:$0xf] %vm10898, %v9925
      %11451 = vst.msk [vmem:[%s172 + $0x8a0] sm:$0xf] %vm10898, %v9926
      %11452 = vst.msk [vmem:[%s172 + $0x8a4] sm:$0xf] %vm10898, %v9927
      %11453 = vst.msk [vmem:[%s172 + $0x8a8] sm:$0xf] %vm10898, %v9928
      %11454 = vst.msk [vmem:[%s172 + $0x8ac] sm:$0xf] %vm10898, %v9929
      %11455 = vst.msk [vmem:[%s172 + $0x8b0] sm:$0xf] %vm10898, %v9930
      %11456 = vst.msk [vmem:[%s172 + $0x8b4] sm:$0xf] %vm10898, %v9931
      %11457 = vst.msk [vmem:[%s172 + $0x8b8] sm:$0xf] %vm10898, %v9932
      %11458 = vst.msk [vmem:[%s172 + $0x8bc] sm:$0xf] %vm10898, %v9933
      %11459 = vst.msk [vmem:[%s172 + $0x8c0] sm:$0xf] %vm10898, %v9934
      %11460 = vst.msk [vmem:[%s172 + $0x8c4] sm:$0xf] %vm10898, %v9935
      %11461 = vst.msk [vmem:[%s172 + $0x8c8] sm:$0xf] %vm10898, %v9936
      %11462 = vst.msk [vmem:[%s172 + $0x8cc] sm:$0xf] %vm10898, %v9937
      %11463 = vst.msk [vmem:[%s172 + $0x8d0] sm:$0xf] %vm10898, %v9938
      %11464 = vst.msk [vmem:[%s172 + $0x8d4] sm:$0xf] %vm10898, %v9939
      %11465 = vst.msk [vmem:[%s172 + $0x8d8] sm:$0xf] %vm10898, %v9940
      %11466 = vst.msk [vmem:[%s172 + $0x8dc] sm:$0xf] %vm10898, %v9941
      %11467 = vst.msk [vmem:[%s172 + $0x8e0] sm:$0xf] %vm10898, %v9942
      %11468 = vst.msk [vmem:[%s172 + $0x8e4] sm:$0xf] %vm10898, %v9943
      %11469 = vst.msk [vmem:[%s172 + $0x8e8] sm:$0xf] %vm10898, %v9944
      %11470 = vst.msk [vmem:[%s172 + $0x8ec] sm:$0xf] %vm10898, %v9945
      %11471 = vst.msk [vmem:[%s172 + $0x8f0] sm:$0xf] %vm10898, %v9946
      %11472 = vst.msk [vmem:[%s172 + $0x8f4] sm:$0xf] %vm10898, %v9947
      %11473 = vst.msk [vmem:[%s172 + $0x8f8] sm:$0xf] %vm10898, %v9948
      %11474 = vst.msk [vmem:[%s172 + $0x8fc] sm:$0xf] %vm10898, %v9949
      %11475 = vst.msk [vmem:[%s172 + $0x900] sm:$0xf] %vm10898, %v9950
      %11476 = vst.msk [vmem:[%s172 + $0x904] sm:$0xf] %vm10898, %v9951
      %11477 = vst.msk [vmem:[%s172 + $0x908] sm:$0xf] %vm10898, %v9952
      %11478 = vst.msk [vmem:[%s172 + $0x90c] sm:$0xf] %vm10898, %v9953
      %11479 = vst.msk [vmem:[%s172 + $0x910] sm:$0xf] %vm10898, %v9954
      %11480 = vst.msk [vmem:[%s172 + $0x914] sm:$0xf] %vm10898, %v9955
      %11481 = vst.msk [vmem:[%s172 + $0x918] sm:$0xf] %vm10898, %v9956
      %11482 = vst.msk [vmem:[%s172 + $0x91c] sm:$0xf] %vm10898, %v9957
      %11483 = vst.msk [vmem:[%s172 + $0x920] sm:$0xf] %vm10898, %v9958
      %11484 = vst.msk [vmem:[%s172 + $0x924] sm:$0xf] %vm10898, %v9959
      %11485 = vst.msk [vmem:[%s172 + $0x928] sm:$0xf] %vm10898, %v9960
      %11486 = vst.msk [vmem:[%s172 + $0x92c] sm:$0xf] %vm10898, %v9961
      %11487 = vst.msk [vmem:[%s172 + $0x930] sm:$0xf] %vm10898, %v9962
      %11488 = vst.msk [vmem:[%s172 + $0x934] sm:$0xf] %vm10898, %v9963
      %11489 = vst.msk [vmem:[%s172 + $0x938] sm:$0xf] %vm10898, %v9964
      %11490 = vst.msk [vmem:[%s172 + $0x93c] sm:$0xf] %vm10898, %v9965
      %11491 = vst.msk [vmem:[%s172 + $0x940] sm:$0xf] %vm10898, %v9966
      %11492 = vst.msk [vmem:[%s172 + $0x944] sm:$0xf] %vm10898, %v9967
      %11493 = vst.msk [vmem:[%s172 + $0x948] sm:$0xf] %vm10898, %v9968
      %11494 = vst.msk [vmem:[%s172 + $0x94c] sm:$0xf] %vm10898, %v9969
      %11495 = vst.msk [vmem:[%s172 + $0x950] sm:$0xf] %vm10898, %v9970
      %11496 = vst.msk [vmem:[%s172 + $0x954] sm:$0xf] %vm10898, %v9971
      %11497 = vst.msk [vmem:[%s172 + $0x958] sm:$0xf] %vm10898, %v9972
      %11498 = vst.msk [vmem:[%s172 + $0x95c] sm:$0xf] %vm10898, %v9973
      %11499 = vst.msk [vmem:[%s172 + $0x960] sm:$0xf] %vm10898, %v9974
      %11500 = vst.msk [vmem:[%s172 + $0x964] sm:$0xf] %vm10898, %v9975
      %11501 = vst.msk [vmem:[%s172 + $0x968] sm:$0xf] %vm10898, %v9976
      %11502 = vst.msk [vmem:[%s172 + $0x96c] sm:$0xf] %vm10898, %v9977
      %11503 = vst.msk [vmem:[%s172 + $0x970] sm:$0xf] %vm10898, %v9978
      %11504 = vst.msk [vmem:[%s172 + $0x974] sm:$0xf] %vm10898, %v9979
      %11505 = vst.msk [vmem:[%s172 + $0x978] sm:$0xf] %vm10898, %v9980
      %11506 = vst.msk [vmem:[%s172 + $0x97c] sm:$0xf] %vm10898, %v9981
      %11507 = vst.msk [vmem:[%s172 + $0x980] sm:$0xf] %vm10898, %v9982
      %11508 = vst.msk [vmem:[%s172 + $0x984] sm:$0xf] %vm10898, %v9983
      %11509 = vst.msk [vmem:[%s172 + $0x988] sm:$0xf] %vm10898, %v9984
      %11510 = vst.msk [vmem:[%s172 + $0x98c] sm:$0xf] %vm10898, %v9985
      %11511 = vst.msk [vmem:[%s172 + $0x990] sm:$0xf] %vm10898, %v9986
      %11512 = vst.msk [vmem:[%s172 + $0x994] sm:$0xf] %vm10898, %v9987
      %11513 = vst.msk [vmem:[%s172 + $0x998] sm:$0xf] %vm10898, %v9988
      %11514 = vst.msk [vmem:[%s172 + $0x99c] sm:$0xf] %vm10898, %v9989
      %11515 = vst.msk [vmem:[%s172 + $0x9a0] sm:$0xf] %vm10898, %v9990
      %11516 = vst.msk [vmem:[%s172 + $0x9a4] sm:$0xf] %vm10898, %v9991
      %11517 = vst.msk [vmem:[%s172 + $0x9a8] sm:$0xf] %vm10898, %v9992
      %11518 = vst.msk [vmem:[%s172 + $0x9ac] sm:$0xf] %vm10898, %v9993
      %11519 = vst.msk [vmem:[%s172 + $0x9b0] sm:$0xf] %vm10898, %v9994
      %11520 = vst.msk [vmem:[%s172 + $0x9b4] sm:$0xf] %vm10898, %v9995
      %11521 = vst.msk [vmem:[%s172 + $0x9b8] sm:$0xf] %vm10898, %v9996
      %11522 = vst.msk [vmem:[%s172 + $0x9bc] sm:$0xf] %vm10898, %v9997
      %11523 = vst.msk [vmem:[%s172 + $0x9c0] sm:$0xf] %vm10898, %v9998
      %11524 = vst.msk [vmem:[%s172 + $0x9c4] sm:$0xf] %vm10898, %v9999
      %11525 = vst.msk [vmem:[%s172 + $0x9c8] sm:$0xf] %vm10898, %v10000
      %11526 = vst.msk [vmem:[%s172 + $0x9cc] sm:$0xf] %vm10898, %v10001
      %11527 = vst.msk [vmem:[%s172 + $0x9d0] sm:$0xf] %vm10898, %v10002
      %11528 = vst.msk [vmem:[%s172 + $0x9d4] sm:$0xf] %vm10898, %v10003
      %11529 = vst.msk [vmem:[%s172 + $0x9d8] sm:$0xf] %vm10898, %v10004
      %11530 = vst.msk [vmem:[%s172 + $0x9dc] sm:$0xf] %vm10898, %v10005
      %11531 = vst.msk [vmem:[%s172 + $0x9e0] sm:$0xf] %vm10898, %v10006
      %11532 = vst.msk [vmem:[%s172 + $0x9e4] sm:$0xf] %vm10898, %v10007
      %11533 = vst.msk [vmem:[%s172 + $0x9e8] sm:$0xf] %vm10898, %v10008
      %11534 = vst.msk [vmem:[%s172 + $0x9ec] sm:$0xf] %vm10898, %v10009
      %11535 = vst.msk [vmem:[%s172 + $0x9f0] sm:$0xf] %vm10898, %v10010
      %11536 = vst.msk [vmem:[%s172 + $0x9f4] sm:$0xf] %vm10898, %v10011
      %11537 = vst.msk [vmem:[%s172 + $0x9f8] sm:$0xf] %vm10898, %v10012
      %11538 = vst.msk [vmem:[%s172 + $0x9fc] sm:$0xf] %vm10898, %v10013
      %11539 = vst.msk [vmem:[%s172 + $0xa00] sm:$0xf] %vm10898, %v10014
      %11540 = vst.msk [vmem:[%s172 + $0xa04] sm:$0xf] %vm10898, %v10015
      %11541 = vst.msk [vmem:[%s172 + $0xa08] sm:$0xf] %vm10898, %v10016
      %11542 = vst.msk [vmem:[%s172 + $0xa0c] sm:$0xf] %vm10898, %v10017
      %11543 = vst.msk [vmem:[%s172 + $0xa10] sm:$0xf] %vm10898, %v10018
      %11544 = vst.msk [vmem:[%s172 + $0xa14] sm:$0xf] %vm10898, %v10019
      %11545 = vst.msk [vmem:[%s172 + $0xa18] sm:$0xf] %vm10898, %v10020
      %11546 = vst.msk [vmem:[%s172 + $0xa1c] sm:$0xf] %vm10898, %v10021
      %11547 = vst.msk [vmem:[%s172 + $0xa20] sm:$0xf] %vm10898, %v10022
      %11548 = vst.msk [vmem:[%s172 + $0xa24] sm:$0xf] %vm10898, %v10023
      %11549 = vst.msk [vmem:[%s172 + $0xa28] sm:$0xf] %vm10898, %v10024
      %11550 = vst.msk [vmem:[%s172 + $0xa2c] sm:$0xf] %vm10898, %v10025
      %11551 = vst.msk [vmem:[%s172 + $0xa30] sm:$0xf] %vm10898, %v10026
      %11552 = vst.msk [vmem:[%s172 + $0xa34] sm:$0xf] %vm10898, %v10027
      %11553 = vst.msk [vmem:[%s172 + $0xa38] sm:$0xf] %vm10898, %v10028
      %11554 = vst.msk [vmem:[%s172 + $0xa3c] sm:$0xf] %vm10898, %v10029
      %11555 = vst.msk [vmem:[%s172 + $0xa40] sm:$0xf] %vm10898, %v10030
      %11556 = vst.msk [vmem:[%s172 + $0xa44] sm:$0xf] %vm10898, %v10031
      %11557 = vst.msk [vmem:[%s172 + $0xa48] sm:$0xf] %vm10898, %v10032
      %11558 = vst.msk [vmem:[%s172 + $0xa4c] sm:$0xf] %vm10898, %v10033
      %11559 = vst.msk [vmem:[%s172 + $0xa50] sm:$0xf] %vm10898, %v10034
      %11560 = vst.msk [vmem:[%s172 + $0xa54] sm:$0xf] %vm10898, %v10035
      %11561 = vst.msk [vmem:[%s172 + $0xa58] sm:$0xf] %vm10898, %v10036
      %11562 = vst.msk [vmem:[%s172 + $0xa5c] sm:$0xf] %vm10898, %v10037
      %11563 = vst.msk [vmem:[%s172 + $0xa60] sm:$0xf] %vm10898, %v10038
      %11564 = vst.msk [vmem:[%s172 + $0xa64] sm:$0xf] %vm10898, %v10039
      %11565 = vst.msk [vmem:[%s172 + $0xa68] sm:$0xf] %vm10898, %v10040
      %11566 = vst.msk [vmem:[%s172 + $0xa6c] sm:$0xf] %vm10898, %v10041
      %11567 = vst.msk [vmem:[%s172 + $0xa70] sm:$0xf] %vm10898, %v10042
      %11568 = vst.msk [vmem:[%s172 + $0xa74] sm:$0xf] %vm10898, %v10043
      %11569 = vst.msk [vmem:[%s172 + $0xa78] sm:$0xf] %vm10898, %v10044
      %11570 = vst.msk [vmem:[%s172 + $0xa7c] sm:$0xf] %vm10898, %v10045
      %11571 = vst.msk [vmem:[%s172 + $0xa80] sm:$0xf] %vm10898, %v10046
      %11572 = vst.msk [vmem:[%s172 + $0xa84] sm:$0xf] %vm10898, %v10047
      %11573 = vst.msk [vmem:[%s172 + $0xa88] sm:$0xf] %vm10898, %v10048
      %11574 = vst.msk [vmem:[%s172 + $0xa8c] sm:$0xf] %vm10898, %v10049
      %11575 = vst.msk [vmem:[%s172 + $0xa90] sm:$0xf] %vm10898, %v10050
      %11576 = vst.msk [vmem:[%s172 + $0xa94] sm:$0xf] %vm10898, %v10051
      %11577 = vst.msk [vmem:[%s172 + $0xa98] sm:$0xf] %vm10898, %v10052
      %11578 = vst.msk [vmem:[%s172 + $0xa9c] sm:$0xf] %vm10898, %v10053
      %11579 = vst.msk [vmem:[%s172 + $0xaa0] sm:$0xf] %vm10898, %v10054
      %11580 = vst.msk [vmem:[%s172 + $0xaa4] sm:$0xf] %vm10898, %v10055
      %11581 = vst.msk [vmem:[%s172 + $0xaa8] sm:$0xf] %vm10898, %v10056
      %11582 = vst.msk [vmem:[%s172 + $0xaac] sm:$0xf] %vm10898, %v10057
      %11583 = vst.msk [vmem:[%s172 + $0xab0] sm:$0xf] %vm10898, %v10058
      %11584 = vst.msk [vmem:[%s172 + $0xab4] sm:$0xf] %vm10898, %v10059
      %11585 = vst.msk [vmem:[%s172 + $0xab8] sm:$0xf] %vm10898, %v10060
      %11586 = vst.msk [vmem:[%s172 + $0xabc] sm:$0xf] %vm10898, %v10061
      %11587 = vst.msk [vmem:[%s172 + $0xac0] sm:$0xf] %vm10898, %v10062
      %11588 = vst.msk [vmem:[%s172 + $0xac4] sm:$0xf] %vm10898, %v10063
      %11589 = vst.msk [vmem:[%s172 + $0xac8] sm:$0xf] %vm10898, %v10064
      %11590 = vst.msk [vmem:[%s172 + $0xacc] sm:$0xf] %vm10898, %v10065
      %11591 = vst.msk [vmem:[%s172 + $0xad0] sm:$0xf] %vm10898, %v10066
      %11592 = vst.msk [vmem:[%s172 + $0xad4] sm:$0xf] %vm10898, %v10067
      %11593 = vst.msk [vmem:[%s172 + $0xad8] sm:$0xf] %vm10898, %v10068
      %11594 = vst.msk [vmem:[%s172 + $0xadc] sm:$0xf] %vm10898, %v10069
      %11595 = vst.msk [vmem:[%s172 + $0xae0] sm:$0xf] %vm10898, %v10070
      %11596 = vst.msk [vmem:[%s172 + $0xae4] sm:$0xf] %vm10898, %v10071
      %11597 = vst.msk [vmem:[%s172 + $0xae8] sm:$0xf] %vm10898, %v10072
      %11598 = vst.msk [vmem:[%s172 + $0xaec] sm:$0xf] %vm10898, %v10073
      %11599 = vst.msk [vmem:[%s172 + $0xaf0] sm:$0xf] %vm10898, %v10074
      %11600 = vst.msk [vmem:[%s172 + $0xaf4] sm:$0xf] %vm10898, %v10075
      %11601 = vst.msk [vmem:[%s172 + $0xaf8] sm:$0xf] %vm10898, %v10076
      %11602 = vst.msk [vmem:[%s172 + $0xafc] sm:$0xf] %vm10898, %v10077
      %11603 = vst.msk [vmem:[%s172 + $0xb00] sm:$0xf] %vm10898, %v10078
      %11604 = vst.msk [vmem:[%s172 + $0xb04] sm:$0xf] %vm10898, %v10079
      %11605 = vst.msk [vmem:[%s172 + $0xb08] sm:$0xf] %vm10898, %v10080
      %11606 = vst.msk [vmem:[%s172 + $0xb0c] sm:$0xf] %vm10898, %v10081
      %11607 = vst.msk [vmem:[%s172 + $0xb10] sm:$0xf] %vm10898, %v10082
      %11608 = vst.msk [vmem:[%s172 + $0xb14] sm:$0xf] %vm10898, %v10083
      %11609 = vst.msk [vmem:[%s172 + $0xb18] sm:$0xf] %vm10898, %v10084
      %11610 = vst.msk [vmem:[%s172 + $0xb1c] sm:$0xf] %vm10898, %v10085
      %11611 = vst.msk [vmem:[%s172 + $0xb20] sm:$0xf] %vm10898, %v10086
      %11612 = vst.msk [vmem:[%s172 + $0xb24] sm:$0xf] %vm10898, %v10087
      %11613 = vst.msk [vmem:[%s172 + $0xb28] sm:$0xf] %vm10898, %v10088
      %11614 = vst.msk [vmem:[%s172 + $0xb2c] sm:$0xf] %vm10898, %v10089
      %11615 = vst.msk [vmem:[%s172 + $0xb30] sm:$0xf] %vm10898, %v10090
      %11616 = vst.msk [vmem:[%s172 + $0xb34] sm:$0xf] %vm10898, %v10091
      %11617 = vst.msk [vmem:[%s172 + $0xb38] sm:$0xf] %vm10898, %v10092
      %11618 = vst.msk [vmem:[%s172 + $0xb3c] sm:$0xf] %vm10898, %v10093
      %11619 = vst.msk [vmem:[%s172 + $0xb40] sm:$0xf] %vm10898, %v10094
      %11620 = vst.msk [vmem:[%s172 + $0xb44] sm:$0xf] %vm10898, %v10095
      %11621 = vst.msk [vmem:[%s172 + $0xb48] sm:$0xf] %vm10898, %v10096
      %11622 = vst.msk [vmem:[%s172 + $0xb4c] sm:$0xf] %vm10898, %v10097
      %11623 = vst.msk [vmem:[%s172 + $0xb50] sm:$0xf] %vm10898, %v10098
      %11624 = vst.msk [vmem:[%s172 + $0xb54] sm:$0xf] %vm10898, %v10099
      %11625 = vst.msk [vmem:[%s172 + $0xb58] sm:$0xf] %vm10898, %v10100
      %11626 = vst.msk [vmem:[%s172 + $0xb5c] sm:$0xf] %vm10898, %v10101
      %11627 = vst.msk [vmem:[%s172 + $0xb60] sm:$0xf] %vm10898, %v10102
      %11628 = vst.msk [vmem:[%s172 + $0xb64] sm:$0xf] %vm10898, %v10103
      %11629 = vst.msk [vmem:[%s172 + $0xb68] sm:$0xf] %vm10898, %v10104
      %11630 = vst.msk [vmem:[%s172 + $0xb6c] sm:$0xf] %vm10898, %v10105
      %11631 = vst.msk [vmem:[%s172 + $0xb70] sm:$0xf] %vm10898, %v10106
      %11632 = vst.msk [vmem:[%s172 + $0xb74] sm:$0xf] %vm10898, %v10107
      %11633 = vst.msk [vmem:[%s172 + $0xb78] sm:$0xf] %vm10898, %v10108
      %11634 = vst.msk [vmem:[%s172 + $0xb7c] sm:$0xf] %vm10898, %v10109
      %11635 = vst.msk [vmem:[%s172 + $0xb80] sm:$0xf] %vm10898, %v10110
      %11636 = vst.msk [vmem:[%s172 + $0xb84] sm:$0xf] %vm10898, %v10111
      %11637 = vst.msk [vmem:[%s172 + $0xb88] sm:$0xf] %vm10898, %v10112
      %11638 = vst.msk [vmem:[%s172 + $0xb8c] sm:$0xf] %vm10898, %v10113
      %11639 = vst.msk [vmem:[%s172 + $0xb90] sm:$0xf] %vm10898, %v10114
      %11640 = vst.msk [vmem:[%s172 + $0xb94] sm:$0xf] %vm10898, %v10115
      %11641 = vst.msk [vmem:[%s172 + $0xb98] sm:$0xf] %vm10898, %v10116
      %11642 = vst.msk [vmem:[%s172 + $0xb9c] sm:$0xf] %vm10898, %v10117
      %11643 = vst.msk [vmem:[%s172 + $0xba0] sm:$0xf] %vm10898, %v10118
      %11644 = vst.msk [vmem:[%s172 + $0xba4] sm:$0xf] %vm10898, %v10119
      %11645 = vst.msk [vmem:[%s172 + $0xba8] sm:$0xf] %vm10898, %v10120
      %11646 = vst.msk [vmem:[%s172 + $0xbac] sm:$0xf] %vm10898, %v10121
      %11647 = vst.msk [vmem:[%s172 + $0xbb0] sm:$0xf] %vm10898, %v10122
      %11648 = vst.msk [vmem:[%s172 + $0xbb4] sm:$0xf] %vm10898, %v10123
      %11649 = vst.msk [vmem:[%s172 + $0xbb8] sm:$0xf] %vm10898, %v10124
      %11650 = vst.msk [vmem:[%s172 + $0xbbc] sm:$0xf] %vm10898, %v10125
      %11651 = vst.msk [vmem:[%s172 + $0xbc0] sm:$0xf] %vm10898, %v10126
      %11652 = vst.msk [vmem:[%s172 + $0xbc4] sm:$0xf] %vm10898, %v10127
      %11653 = vst.msk [vmem:[%s172 + $0xbc8] sm:$0xf] %vm10898, %v10128
      %11654 = vst.msk [vmem:[%s172 + $0xbcc] sm:$0xf] %vm10898, %v10129
      %11655 = vst.msk [vmem:[%s172 + $0xbd0] sm:$0xf] %vm10898, %v10130
      %11656 = vst.msk [vmem:[%s172 + $0xbd4] sm:$0xf] %vm10898, %v10131
      %11657 = vst.msk [vmem:[%s172 + $0xbd8] sm:$0xf] %vm10898, %v10132
      %11658 = vst.msk [vmem:[%s172 + $0xbdc] sm:$0xf] %vm10898, %v10133
      %11659 = vst.msk [vmem:[%s172 + $0xbe0] sm:$0xf] %vm10898, %v10134
      %11660 = vst.msk [vmem:[%s172 + $0xbe4] sm:$0xf] %vm10898, %v10135
      %s11661 = smul.u32 762, %s14
      %p11662 = scmp.lt.s32.totalorder %s11661, 1523
      %s11663 = scalar_select %p11662, %s11661, 1523
      %s11664 = smul.addr %s11663, 4
      %s11665 = scalar_lea.vmem %s3, %s11664
      // Predicated region
      $region33: #{tpu_custom_call.1} parent=31 // pred_check
        %p11666 = pneg %p100
      $region34: #{tpu_custom_call.1} parent=31 // pred_check_branch
        %11668 = sbr.rel (%p11666) target = $region36
      $region35: #{tpu_custom_call.1} parent=31 // pred_region
        %s11669 = smul.u32 762, %s14
      $region36: #{tpu_custom_call.1} parent=31 // pred_fallthru
        _
    $region32: #{tpu_custom_call.1} parent=5 // pred_fallthru
      _
    %p11670 = scmp.le.s32.totalorder 2, %s9
    // Predicated region
    $region37: #{tpu_custom_call.1} parent=5 // pred_check
      %p11671 = pneg %p11670
    $region38: #{tpu_custom_call.1} parent=5 // pred_check_branch
      %11673 = sbr.rel (%p11671) target = $region40
    $region39: #{tpu_custom_call.1} parent=5 // pred_region
      %s11674 = ssub.s32 %s9, 2
      // Predicated region
      $region41: #{tpu_custom_call.1} parent=39 // pred_check
        %p11675 = pneg %p106
      $region42: #{tpu_custom_call.1} parent=39 // pred_check_branch
        %11677 = sbr.rel (%p11675) target = $region44
      $region43: #{tpu_custom_call.1} parent=39 // pred_region
        %s11678 = smul.u32 762, %s15
        %p11679 = scmp.lt.s32.totalorder %s11678, 1523
        %s11680 = scalar_select %p11679, %s11678, 1523
        %s11681 = smul.addr %s11680, 4
        %s11682 = scalar_lea.vmem %s3, %s11681
      $region44: #{tpu_custom_call.1} parent=39 // pred_fallthru
        _
    $region40: #{tpu_custom_call.1} parent=5 // pred_fallthru
      _
  $region6: #{tpu_custom_call.1} parent=0 // loop_footer
    %s13 = sadd.s32 1, %s9
  $region7: #{tpu_custom_call.1} parent=0 // loop_footer_branch
    %8 = sbr.rel target = $region3
  $region8: #{tpu_custom_call.1} parent=0 // loop_exit
    _

</llo_original>
